<compile_context>
chip_gen: v6e
topology: v6e:2x2x1
jax: 0.10.0
libtpu: 0.0.40
codegen_flags: <defaults>
</compile_context>

<pallas_src>
import numpy as np

import jax
import jax.numpy as jnp
from jax.experimental import pallas as pl
from jax.experimental.pallas import tpu as pltpu


# --------------------------------------------------------------------------- #
# Kernel
# --------------------------------------------------------------------------- #
def _make_twoconv_kernel(nb, H, W, cin, cout, compute_dtype):
    """Fused two-conv kernel processing `nb` images per grid step.

    Layout: channels on lanes everywhere.  Per image, a flat padded buffer of
    (H+2)*(W+2) rows is used; tap (dy, dx) of the 3x3 conv reads the rows
    shifted by dy*(W+2)+dx, so every tap is a contiguous sublane slice and the
    conv is 9 accumulating (M, C) x (C, Cout) MXU matmuls with zero reshapes.
    """
    Wp = W + 2
    M = (H + 2) * Wp            # padded rows per image
    Mtot = nb * M               # rows the matmuls cover (all nb images)
    tail = 2 * Wp + 2           # guard rows, read only by discarded tap rows

    def kernel(x_ref, w1_ref, s1_ref, b1_ref, w2_ref, s2_ref, b2_ref,
               mask_ref, o_ref, xp1_ref, xp2_ref):
        f32 = jnp.float32
        zero2 = jnp.zeros((2, cin), compute_dtype)       # hoisted (no per-iter
        ztop1 = jnp.zeros((Wp + 1, cin), compute_dtype)  #  broadcast rebuilds)
        zbot1 = jnp.zeros((W + 1, cin), compute_dtype)

        # ---- conv1 input: fill interiors, zero ONLY the 1-px border --------
        for b in range(nb):
            base = b * M
            xp1_ref[pl.ds(base, Wp + 1), :] = ztop1               # top row + (1,0)
            for h in range(H):
                r = base + (h + 1) * Wp + 1
                xp1_ref[pl.ds(r, W), :] = x_ref[b, pl.ds(h * W, W), :]
                xp1_ref[pl.ds(r + W, 2), :] = zero2               # right/left border pair
            xp1_ref[pl.ds(base + (H + 1) * Wp + 1, W + 1), :] = zbot1
        xp1_ref[pl.ds(Mtot, tail), :] = jnp.zeros((tail, cin), compute_dtype)

        valid = mask_ref[...] != 0.0                              # (Mtot, 1) bool

        def conv_bn_relu(xp_ref, w_ref, s_ref, b_ref):
            c_out = w_ref.shape[2]
            acc = jnp.zeros((Mtot, c_out), f32)
            for t in range(9):                                    # 9 taps, K = C each
                dy, dx = divmod(t, 3)
                off = dy * Wp + dx                                # contiguous row shift
                acc = acc + jnp.dot(xp_ref[pl.ds(off, Mtot), :], w_ref[t],
                                    preferred_element_type=f32)
            y = acc * s_ref[...] + b_ref[...]                     # folded eval-mode BN (f32)
            return jnp.maximum(y, 0.0)                            # fused ReLU (f32)

        # ---- conv1 + BN1 + ReLU: result never leaves VMEM -------------------
        y1 = jnp.where(valid, conv_bn_relu(xp1_ref, w1_ref, s1_ref, b1_ref), 0.0)
        # One contiguous store writes every interior pixel of conv2's padded
        # input; the masked (zeroed) rows land exactly on its left/right and
        # bottom / next-image-top borders.  Only tiny strips remain to zero.
        xp2_ref[pl.ds(0, Wp + 1), :] = jnp.zeros((Wp + 1, cout), compute_dtype)
        xp2_ref[pl.ds(Wp + 1, Mtot), :] = y1.astype(compute_dtype)
        xp2_ref[pl.ds(Mtot + Wp + 1, Wp + 1), :] = jnp.zeros((Wp + 1, cout),
                                                             compute_dtype)

        # ---- conv2 + BN2 + ReLU ---------------------------------------------
        y2 = conv_bn_relu(xp2_ref, w2_ref, s2_ref, b2_ref).astype(o_ref.dtype)

        # ---- write valid rows back (channels stay on lanes == NHWC) ---------
        for b in range(nb):
            base = b * M
            for h in range(H):
                o_ref[b, pl.ds(h * W, W), :] = y2[base + h * Wp:
                                                  base + h * Wp + W, :]

    return kernel


# --------------------------------------------------------------------------- #
# VMEM budgeting / step-size heuristics
# --------------------------------------------------------------------------- #
def _round_up(x, m):
    return -(-x // m) * m


def _tile_bytes(rows, ch, dtype):
    it = jnp.dtype(dtype).itemsize
    sub = max(8, 32 // it)                      # 8 (f32) / 16 (bf16) sublanes
    return _round_up(max(rows, 1), sub) * _round_up(max(ch, 1), 128) * it


def _estimate_vmem_bytes(nb, H, W, cin, cout, compute_dtype, out_dtype):
    Wp = W + 2
    M = (H + 2) * Wp
    rows = nb * M + 2 * Wp + 2
    hw = H * W
    total = 0
    total += 2 * _tile_bytes(nb * hw, cin, compute_dtype)       # input block (x2 buf)
    total += 2 * _tile_bytes(nb * hw, cout, out_dtype)          # output block (x2 buf)
    total += 2 * (_tile_bytes(9 * cin, cout, compute_dtype) +
                  _tile_bytes(9 * cout, cout, compute_dtype))   # weights
    total += _tile_bytes(rows, cin, compute_dtype)              # xp1 scratch
    total += _tile_bytes(rows, cout, compute_dtype)             # xp2 scratch
    total += 6 * _tile_bytes(nb * M, cout, jnp.float32)         # f32 epilogue transients
    return total


def _vmem_capacity_bytes(default=64 * 1024 * 1024):
    # 64 MiB default is safe on every generation (v7x per-core capacity).
    try:
        return int(pltpu.get_tpu_info().vmem_capacity_bytes)
    except Exception:
        return default


def _pick_images_per_step(N, H, W, cin, cout, compute_dtype, out_dtype, cap):
    """Largest divisor of N that fits the budget, keeping >=2 grid steps
    when N >= 2 so both v7x TensorCores get work on the parallel axis."""
    budget = min(cap // 6, 16 * 1024 * 1024)
    best = 1
    for nb in range(1, N + 1):
        if N % nb:
            continue
        if N >= 2 and N // nb < 2:
            continue
        if _estimate_vmem_bytes(nb, H, W, cin, cout, compute_dtype,
                                out_dtype) > budget:
            continue
        best = nb
    return best


# --------------------------------------------------------------------------- #
# Wrapper (NHWC core path — only free reshapes around the pallas_call)
# --------------------------------------------------------------------------- #
def twoconv_fused_nhwc(x_nhwc, w1_hwio, scale1, bias1, w2_hwio, scale2, bias2,
                       *, compute_dtype=jnp.bfloat16, images_per_step=None):
    """Fused Conv3x3+BN+ReLU x2 in a single pallas_call.  NHWC in/out."""
    N, H, W, cin = x_nhwc.shape
    cout = w1_hwio.shape[-1]
    out_dtype = x_nhwc.dtype
    Wp = W + 2
    M = (H + 2) * Wp

    cap = _vmem_capacity_bytes()
    nb = images_per_step
    if nb is None:
        nb = _pick_images_per_step(N, H, W, cin, cout, compute_dtype,
                                   out_dtype, cap)
    assert N % nb == 0, (N, nb)
    grid = (N // nb,)
    Mtot = nb * M

    # Per-generation VMEM request derived from the real footprint (no fixed 48 MiB).
    need = _estimate_vmem_bytes(nb, H, W, cin, cout, compute_dtype, out_dtype)
    vmem_limit = int(min(max(2 * need + (8 << 20), 24 << 20), int(0.45 * cap)))
    vmem_limit = int(max(vmem_limit, need + (2 << 20)))

    # Lane-on-channel operands; bf16 by default, BN/ReLU epilogue stays f32.
    x_flat = x_nhwc.reshape(N, H * W, cin).astype(compute_dtype)   # free reshape
    w1 = w1_hwio.reshape(9, cin, cout).astype(compute_dtype)       # (dy,dx) taps
    w2 = w2_hwio.reshape(9, cout, cout).astype(compute_dtype)
    s1 = scale1.reshape(1, cout).astype(jnp.float32)
    b1 = bias1.reshape(1, cout).astype(jnp.float32)
    s2 = scale2.reshape(1, cout).astype(jnp.float32)
    b2 = bias2.reshape(1, cout).astype(jnp.float32)

    # Host-built validity mask over the padded-width grid: row q is a real
    # output pixel iff it is not in a wrapped column (w >= W) nor in the two
    # trailing padded rows of its image.
    q = np.arange(Mtot)
    valid_np = ((q % M) < H * Wp) & ((q % Wp) < W)
    mask = jnp.asarray(valid_np.reshape(Mtot, 1).astype(np.float32))

    kernel = _make_twoconv_kernel(nb, H, W, cin, cout, compute_dtype)

    out_flat = pl.pallas_call(
        kernel,
        out_shape=jax.ShapeDtypeStruct((N, H * W, cout), out_dtype),
        grid=grid,
        in_specs=[
            pl.BlockSpec((nb, H * W, cin), lambda n: (n, 0, 0)),
            pl.BlockSpec((9, cin, cout), lambda n: (0, 0, 0)),
            pl.BlockSpec((1, cout), lambda n: (0, 0)),
            pl.BlockSpec((1, cout), lambda n: (0, 0)),
            pl.BlockSpec((9, cout, cout), lambda n: (0, 0, 0)),
            pl.BlockSpec((1, cout), lambda n: (0, 0)),
            pl.BlockSpec((1, cout), lambda n: (0, 0)),
            pl.BlockSpec((Mtot, 1), lambda n: (0, 0)),
        ],
        out_specs=pl.BlockSpec((nb, H * W, cout), lambda n: (n, 0, 0)),
        scratch_shapes=[
            pltpu.VMEM((Mtot + 2 * Wp + 2, cin), compute_dtype),   # padded conv1 input
            pltpu.VMEM((Mtot + 2 * Wp + 2, cout), compute_dtype),  # padded conv2 input
        ],
        compiler_params=pltpu.CompilerParams(
            dimension_semantics=("parallel",),
            vmem_limit_bytes=vmem_limit,
        ),
    )(x_flat, w1, s1, b1, w2, s2, b2, mask)

    # Free reshape: (N, H*W, Cout) has the same memory layout as NHWC.
    return out_flat.reshape(N, H, W, cout)


# --------------------------------------------------------------------------- #
# BN folding, params, PyTorch-compatible (NCHW) wrapper, reference
# --------------------------------------------------------------------------- #
def _fold_bn(conv_bias, gamma, beta, running_mean, running_var, eps=1e-5):
    scale = gamma / jnp.sqrt(running_var + eps)
    bias = (conv_bias - running_mean) * scale + beta
    return scale, bias


def make_params(key, in_ch, out_ch):
    ks = jax.random.split(key, 12)
    p = {}
    for i, (cin, cout) in enumerate([(in_ch, out_ch), (out_ch, out_ch)]):
        k = ks[6 * i: 6 * (i + 1)]
        fan_in = cin * 9
        bound = 1.0 / jnp.sqrt(fan_in)
        p[f"w{i}"] = jax.random.uniform(k[0], (cout, cin, 3, 3),
                                        jnp.float32, -bound, bound)   # OIHW
        p[f"b{i}"] = jax.random.uniform(k[1], (cout,), jnp.float32, -bound, bound)
        p[f"gamma{i}"] = 1.0 + 0.1 * jax.random.normal(k[2], (cout,), jnp.float32)
        p[f"beta{i}"] = 0.1 * jax.random.normal(k[3], (cout,), jnp.float32)
        p[f"mean{i}"] = 0.1 * jax.random.normal(k[4], (cout,), jnp.float32)
        p[f"var{i}"] = jax.random.uniform(k[5], (cout,), jnp.float32, 0.5, 1.5)
    return p


def twoconv_forward(x_nchw, params, *, compute_dtype=jnp.bfloat16):
    """Pallas implementation of twoconv.forward.  Input/output are NCHW.

    TODO(synk): the two edge transposes below are full HBM round trips; if the
    surrounding model stays NHWC, call twoconv_fused_nhwc directly and they
    disappear entirely.
    """
    x = jnp.transpose(x_nchw, (0, 2, 3, 1))          # NCHW -> NHWC
    w1 = jnp.transpose(params["w0"], (2, 3, 1, 0))   # OIHW -> HWIO
    w2 = jnp.transpose(params["w1"], (2, 3, 1, 0))
    s1, b1 = _fold_bn(params["b0"], params["gamma0"], params["beta0"],
                      params["mean0"], params["var0"])
    s2, b2 = _fold_bn(params["b1"], params["gamma1"], params["beta1"],
                      params["mean1"], params["var1"])
    y = twoconv_fused_nhwc(x, w1, s1, b1, w2, s2, b2,
                           compute_dtype=compute_dtype)
    return jnp.transpose(y, (0, 3, 1, 2))            # NHWC -> NCHW


def twoconv_reference(x_nchw, params):
    """Pure-JAX/XLA reference (eval-mode BN), NCHW throughout."""
    x = x_nchw
    for i in range(2):
        w = params[f"w{i}"]
        y = jax.lax.conv_general_dilated(
            x, w, window_strides=(1, 1), padding="SAME",
            dimension_numbers=("NCHW", "OIHW", "NCHW"))
        y = y + params[f"b{i}"][None, :, None, None]
        scale, bias = _fold_bn(jnp.zeros_like(params[f"b{i}"]),
                               params[f"gamma{i}"], params[f"beta{i}"],
                               params[f"mean{i}"], params[f"var{i}"])
        y = y * scale[None, :, None, None] + bias[None, :, None, None]
        x = jnp.maximum(y, 0.0)
    return x


if __name__ == "__main__":
    key = jax.random.PRNGKey(0)
    k_x, k_p = jax.random.split(key)

    N, in_ch, out_ch, H, W = 2, 4, 8, 16, 16
    x = jax.random.normal(k_x, (N, in_ch, H, W), jnp.float32)
    params = make_params(k_p, in_ch, out_ch)

    ref = jax.block_until_ready(twoconv_reference(x, params))

    # f32 operands: algorithmic correctness against the XLA reference.
    out_f32 = jax.block_until_ready(
        twoconv_forward(x, params, compute_dtype=jnp.float32))
    assert out_f32.shape == (N, out_ch, H, W), out_f32.shape
    assert jnp.allclose(out_f32, ref, atol=1e-4, rtol=1e-4), \
        float(jnp.max(jnp.abs(out_f32 - ref)))

    # Default path: bf16 MXU operands on all generations, f32 accumulation and
    # f32 BN/ReLU epilogue.  Error compounds across both convs (inference-ok).
    out_bf16 = jax.block_until_ready(twoconv_forward(x, params))
    assert out_bf16.shape == (N, out_ch, H, W), out_bf16.shape
    assert jnp.allclose(out_bf16, ref, atol=5e-2, rtol=5e-2), \
        float(jnp.max(jnp.abs(out_bf16 - ref)))

    print("KERNEL_OK")
</pallas_src>

<mosaic_0001>
module attributes {stable_mosaic.version = 11 : i64} {
  func.func @kernel(%arg0: i32, %arg1: memref<1x256x4xf32, #tpu.memory_space<vmem>>, %arg2: memref<9x4x8xf32, #tpu.memory_space<vmem>>, %arg3: memref<1x8xf32, #tpu.memory_space<vmem>>, %arg4: memref<1x8xf32, #tpu.memory_space<vmem>>, %arg5: memref<9x8x8xf32, #tpu.memory_space<vmem>>, %arg6: memref<1x8xf32, #tpu.memory_space<vmem>>, %arg7: memref<1x8xf32, #tpu.memory_space<vmem>>, %arg8: memref<324x1xf32, #tpu.memory_space<vmem>>, %arg9: memref<1x256x8xf32, #tpu.memory_space<vmem>>, %arg10: memref<362x4xf32, #tpu.memory_space<vmem>>, %arg11: memref<362x8xf32, #tpu.memory_space<vmem>>) attributes {dimension_semantics = [#tpu.dimension_semantics<parallel>], iteration_bounds = array<i64: 2>, scalar_prefetch = 0 : i64, scratch_operands = 2 : i64, tpu.core_type = #tpu.core_type<tc>, window_params = [{transform_indices = @transform_0, window_bounds = array<i64: 1, 256, 4>}, {pipeline_mode = #tpu.pipeline_mode<synchronous>, transform_indices = @transform_1, window_bounds = array<i64: 9, 4, 8>}, {pipeline_mode = #tpu.pipeline_mode<synchronous>, transform_indices = @transform_2, window_bounds = array<i64: 1, 8>}, {pipeline_mode = #tpu.pipeline_mode<synchronous>, transform_indices = @transform_3, window_bounds = array<i64: 1, 8>}, {pipeline_mode = #tpu.pipeline_mode<synchronous>, transform_indices = @transform_4, window_bounds = array<i64: 9, 8, 8>}, {pipeline_mode = #tpu.pipeline_mode<synchronous>, transform_indices = @transform_5, window_bounds = array<i64: 1, 8>}, {pipeline_mode = #tpu.pipeline_mode<synchronous>, transform_indices = @transform_6, window_bounds = array<i64: 1, 8>}, {pipeline_mode = #tpu.pipeline_mode<synchronous>, transform_indices = @transform_7, window_bounds = array<i64: 324, 1>}, {transform_indices = @transform_8, window_bounds = array<i64: 1, 256, 8>}]} {
    %cst = arith.constant 0.000000e+00 : f32
    %0 = vector.broadcast %cst : f32 to vector<2x4xf32>
    %cst_0 = arith.constant 0.000000e+00 : f32
    %1 = vector.broadcast %cst_0 : f32 to vector<19x4xf32>
    %cst_1 = arith.constant 0.000000e+00 : f32
    %2 = vector.broadcast %cst_1 : f32 to vector<17x4xf32>
    %c0 = arith.constant 0 : index
    %c0_2 = arith.constant 0 : index
    %3 = vector.load %arg10[%c0, %c0_2] : memref<362x4xf32, #tpu.memory_space<vmem>>, vector<19x4xf32>
    tpu.vector_store %arg10[%c0, %c0_2], %1 {strides = array<i32>} : memref<362x4xf32, #tpu.memory_space<vmem>>, vector<19x4xf32>,
    %c0_3 = arith.constant 0 : index
    %c0_4 = arith.constant 0 : index
    %c0_5 = arith.constant 0 : index
    %4 = vector.load %arg1[%c0_3, %c0_4, %c0_5] : memref<1x256x4xf32, #tpu.memory_space<vmem>>, vector<1x16x4xf32>
    %5 = vector.shape_cast %4 : vector<1x16x4xf32> to vector<16x4xf32>
    %c19 = arith.constant 19 : index
    %c0_6 = arith.constant 0 : index
    %6 = vector.load %arg10[%c19, %c0_6] : memref<362x4xf32, #tpu.memory_space<vmem>>, vector<16x4xf32>
    tpu.vector_store %arg10[%c19, %c0_6], %5 {strides = array<i32>} : memref<362x4xf32, #tpu.memory_space<vmem>>, vector<16x4xf32>,
    %c35 = arith.constant 35 : index
    %c0_7 = arith.constant 0 : index
    %7 = vector.load %arg10[%c35, %c0_7] : memref<362x4xf32, #tpu.memory_space<vmem>>, vector<2x4xf32>
    tpu.vector_store %arg10[%c35, %c0_7], %0 {strides = array<i32>} : memref<362x4xf32, #tpu.memory_space<vmem>>, vector<2x4xf32>,
    %c0_8 = arith.constant 0 : index
    %c16 = arith.constant 16 : index
    %c0_9 = arith.constant 0 : index
    %8 = vector.load %arg1[%c0_8, %c16, %c0_9] : memref<1x256x4xf32, #tpu.memory_space<vmem>>, vector<1x16x4xf32>
    %9 = vector.shape_cast %8 : vector<1x16x4xf32> to vector<16x4xf32>
    %c37 = arith.constant 37 : index
    %c0_10 = arith.constant 0 : index
    %10 = vector.load %arg10[%c37, %c0_10] : memref<362x4xf32, #tpu.memory_space<vmem>>, vector<16x4xf32>
    tpu.vector_store %arg10[%c37, %c0_10], %9 {strides = array<i32>} : memref<362x4xf32, #tpu.memory_space<vmem>>, vector<16x4xf32>,
    %c53 = arith.constant 53 : index
    %c0_11 = arith.constant 0 : index
    %11 = vector.load %arg10[%c53, %c0_11] : memref<362x4xf32, #tpu.memory_space<vmem>>, vector<2x4xf32>
    tpu.vector_store %arg10[%c53, %c0_11], %0 {strides = array<i32>} : memref<362x4xf32, #tpu.memory_space<vmem>>, vector<2x4xf32>,
    %c0_12 = arith.constant 0 : index
    %c32 = arith.constant 32 : index
    %c0_13 = arith.constant 0 : index
    %12 = vector.load %arg1[%c0_12, %c32, %c0_13] : memref<1x256x4xf32, #tpu.memory_space<vmem>>, vector<1x16x4xf32>
    %13 = vector.shape_cast %12 : vector<1x16x4xf32> to vector<16x4xf32>
    %c55 = arith.constant 55 : index
    %c0_14 = arith.constant 0 : index
    %14 = vector.load %arg10[%c55, %c0_14] : memref<362x4xf32, #tpu.memory_space<vmem>>, vector<16x4xf32>
    tpu.vector_store %arg10[%c55, %c0_14], %13 {strides = array<i32>} : memref<362x4xf32, #tpu.memory_space<vmem>>, vector<16x4xf32>,
    %c71 = arith.constant 71 : index
    %c0_15 = arith.constant 0 : index
    %15 = vector.load %arg10[%c71, %c0_15] : memref<362x4xf32, #tpu.memory_space<vmem>>, vector<2x4xf32>
    tpu.vector_store %arg10[%c71, %c0_15], %0 {strides = array<i32>} : memref<362x4xf32, #tpu.memory_space<vmem>>, vector<2x4xf32>,
    %c0_16 = arith.constant 0 : index
    %c48 = arith.constant 48 : index
    %c0_17 = arith.constant 0 : index
    %16 = vector.load %arg1[%c0_16, %c48, %c0_17] : memref<1x256x4xf32, #tpu.memory_space<vmem>>, vector<1x16x4xf32>
    %17 = vector.shape_cast %16 : vector<1x16x4xf32> to vector<16x4xf32>
    %c73 = arith.constant 73 : index
    %c0_18 = arith.constant 0 : index
    %18 = vector.load %arg10[%c73, %c0_18] : memref<362x4xf32, #tpu.memory_space<vmem>>, vector<16x4xf32>
    tpu.vector_store %arg10[%c73, %c0_18], %17 {strides = array<i32>} : memref<362x4xf32, #tpu.memory_space<vmem>>, vector<16x4xf32>,
    %c89 = arith.constant 89 : index
    %c0_19 = arith.constant 0 : index
    %19 = vector.load %arg10[%c89, %c0_19] : memref<362x4xf32, #tpu.memory_space<vmem>>, vector<2x4xf32>
    tpu.vector_store %arg10[%c89, %c0_19], %0 {strides = array<i32>} : memref<362x4xf32, #tpu.memory_space<vmem>>, vector<2x4xf32>,
    %c0_20 = arith.constant 0 : index
    %c64 = arith.constant 64 : index
    %c0_21 = arith.constant 0 : index
    %20 = vector.load %arg1[%c0_20, %c64, %c0_21] : memref<1x256x4xf32, #tpu.memory_space<vmem>>, vector<1x16x4xf32>
    %21 = vector.shape_cast %20 : vector<1x16x4xf32> to vector<16x4xf32>
    %c91 = arith.constant 91 : index
    %c0_22 = arith.constant 0 : index
    %22 = vector.load %arg10[%c91, %c0_22] : memref<362x4xf32, #tpu.memory_space<vmem>>, vector<16x4xf32>
    tpu.vector_store %arg10[%c91, %c0_22], %21 {strides = array<i32>} : memref<362x4xf32, #tpu.memory_space<vmem>>, vector<16x4xf32>,
    %c107 = arith.constant 107 : index
    %c0_23 = arith.constant 0 : index
    %23 = vector.load %arg10[%c107, %c0_23] : memref<362x4xf32, #tpu.memory_space<vmem>>, vector<2x4xf32>
    tpu.vector_store %arg10[%c107, %c0_23], %0 {strides = array<i32>} : memref<362x4xf32, #tpu.memory_space<vmem>>, vector<2x4xf32>,
    %c0_24 = arith.constant 0 : index
    %c80 = arith.constant 80 : index
    %c0_25 = arith.constant 0 : index
    %24 = vector.load %arg1[%c0_24, %c80, %c0_25] : memref<1x256x4xf32, #tpu.memory_space<vmem>>, vector<1x16x4xf32>
    %25 = vector.shape_cast %24 : vector<1x16x4xf32> to vector<16x4xf32>
    %c109 = arith.constant 109 : index
    %c0_26 = arith.constant 0 : index
    %26 = vector.load %arg10[%c109, %c0_26] : memref<362x4xf32, #tpu.memory_space<vmem>>, vector<16x4xf32>
    tpu.vector_store %arg10[%c109, %c0_26], %25 {strides = array<i32>} : memref<362x4xf32, #tpu.memory_space<vmem>>, vector<16x4xf32>,
    %c125 = arith.constant 125 : index
    %c0_27 = arith.constant 0 : index
    %27 = vector.load %arg10[%c125, %c0_27] : memref<362x4xf32, #tpu.memory_space<vmem>>, vector<2x4xf32>
    tpu.vector_store %arg10[%c125, %c0_27], %0 {strides = array<i32>} : memref<362x4xf32, #tpu.memory_space<vmem>>, vector<2x4xf32>,
    %c0_28 = arith.constant 0 : index
    %c96 = arith.constant 96 : index
    %c0_29 = arith.constant 0 : index
    %28 = vector.load %arg1[%c0_28, %c96, %c0_29] : memref<1x256x4xf32, #tpu.memory_space<vmem>>, vector<1x16x4xf32>
    %29 = vector.shape_cast %28 : vector<1x16x4xf32> to vector<16x4xf32>
    %c127 = arith.constant 127 : index
    %c0_30 = arith.constant 0 : index
    %30 = vector.load %arg10[%c127, %c0_30] : memref<362x4xf32, #tpu.memory_space<vmem>>, vector<16x4xf32>
    tpu.vector_store %arg10[%c127, %c0_30], %29 {strides = array<i32>} : memref<362x4xf32, #tpu.memory_space<vmem>>, vector<16x4xf32>,
    %c143 = arith.constant 143 : index
    %c0_31 = arith.constant 0 : index
    %31 = vector.load %arg10[%c143, %c0_31] : memref<362x4xf32, #tpu.memory_space<vmem>>, vector<2x4xf32>
    tpu.vector_store %arg10[%c143, %c0_31], %0 {strides = array<i32>} : memref<362x4xf32, #tpu.memory_space<vmem>>, vector<2x4xf32>,
    %c0_32 = arith.constant 0 : index
    %c112 = arith.constant 112 : index
    %c0_33 = arith.constant 0 : index
    %32 = vector.load %arg1[%c0_32, %c112, %c0_33] : memref<1x256x4xf32, #tpu.memory_space<vmem>>, vector<1x16x4xf32>
    %33 = vector.shape_cast %32 : vector<1x16x4xf32> to vector<16x4xf32>
    %c145 = arith.constant 145 : index
    %c0_34 = arith.constant 0 : index
    %34 = vector.load %arg10[%c145, %c0_34] : memref<362x4xf32, #tpu.memory_space<vmem>>, vector<16x4xf32>
    tpu.vector_store %arg10[%c145, %c0_34], %33 {strides = array<i32>} : memref<362x4xf32, #tpu.memory_space<vmem>>, vector<16x4xf32>,
    %c161 = arith.constant 161 : index
    %c0_35 = arith.constant 0 : index
    %35 = vector.load %arg10[%c161, %c0_35] : memref<362x4xf32, #tpu.memory_space<vmem>>, vector<2x4xf32>
    tpu.vector_store %arg10[%c161, %c0_35], %0 {strides = array<i32>} : memref<362x4xf32, #tpu.memory_space<vmem>>, vector<2x4xf32>,
    %c0_36 = arith.constant 0 : index
    %c128 = arith.constant 128 : index
    %c0_37 = arith.constant 0 : index
    %36 = vector.load %arg1[%c0_36, %c128, %c0_37] : memref<1x256x4xf32, #tpu.memory_space<vmem>>, vector<1x16x4xf32>
    %37 = vector.shape_cast %36 : vector<1x16x4xf32> to vector<16x4xf32>
    %c163 = arith.constant 163 : index
    %c0_38 = arith.constant 0 : index
    %38 = vector.load %arg10[%c163, %c0_38] : memref<362x4xf32, #tpu.memory_space<vmem>>, vector<16x4xf32>
    tpu.vector_store %arg10[%c163, %c0_38], %37 {strides = array<i32>} : memref<362x4xf32, #tpu.memory_space<vmem>>, vector<16x4xf32>,
    %c179 = arith.constant 179 : index
    %c0_39 = arith.constant 0 : index
    %39 = vector.load %arg10[%c179, %c0_39] : memref<362x4xf32, #tpu.memory_space<vmem>>, vector<2x4xf32>
    tpu.vector_store %arg10[%c179, %c0_39], %0 {strides = array<i32>} : memref<362x4xf32, #tpu.memory_space<vmem>>, vector<2x4xf32>,
    %c0_40 = arith.constant 0 : index
    %c144 = arith.constant 144 : index
    %c0_41 = arith.constant 0 : index
    %40 = vector.load %arg1[%c0_40, %c144, %c0_41] : memref<1x256x4xf32, #tpu.memory_space<vmem>>, vector<1x16x4xf32>
    %41 = vector.shape_cast %40 : vector<1x16x4xf32> to vector<16x4xf32>
    %c181 = arith.constant 181 : index
    %c0_42 = arith.constant 0 : index
    %42 = vector.load %arg10[%c181, %c0_42] : memref<362x4xf32, #tpu.memory_space<vmem>>, vector<16x4xf32>
    tpu.vector_store %arg10[%c181, %c0_42], %41 {strides = array<i32>} : memref<362x4xf32, #tpu.memory_space<vmem>>, vector<16x4xf32>,
    %c197 = arith.constant 197 : index
    %c0_43 = arith.constant 0 : index
    %43 = vector.load %arg10[%c197, %c0_43] : memref<362x4xf32, #tpu.memory_space<vmem>>, vector<2x4xf32>
    tpu.vector_store %arg10[%c197, %c0_43], %0 {strides = array<i32>} : memref<362x4xf32, #tpu.memory_space<vmem>>, vector<2x4xf32>,
    %c0_44 = arith.constant 0 : index
    %c160 = arith.constant 160 : index
    %c0_45 = arith.constant 0 : index
    %44 = vector.load %arg1[%c0_44, %c160, %c0_45] : memref<1x256x4xf32, #tpu.memory_space<vmem>>, vector<1x16x4xf32>
    %45 = vector.shape_cast %44 : vector<1x16x4xf32> to vector<16x4xf32>
    %c199 = arith.constant 199 : index
    %c0_46 = arith.constant 0 : index
    %46 = vector.load %arg10[%c199, %c0_46] : memref<362x4xf32, #tpu.memory_space<vmem>>, vector<16x4xf32>
    tpu.vector_store %arg10[%c199, %c0_46], %45 {strides = array<i32>} : memref<362x4xf32, #tpu.memory_space<vmem>>, vector<16x4xf32>,
    %c215 = arith.constant 215 : index
    %c0_47 = arith.constant 0 : index
    %47 = vector.load %arg10[%c215, %c0_47] : memref<362x4xf32, #tpu.memory_space<vmem>>, vector<2x4xf32>
    tpu.vector_store %arg10[%c215, %c0_47], %0 {strides = array<i32>} : memref<362x4xf32, #tpu.memory_space<vmem>>, vector<2x4xf32>,
    %c0_48 = arith.constant 0 : index
    %c176 = arith.constant 176 : index
    %c0_49 = arith.constant 0 : index
    %48 = vector.load %arg1[%c0_48, %c176, %c0_49] : memref<1x256x4xf32, #tpu.memory_space<vmem>>, vector<1x16x4xf32>
    %49 = vector.shape_cast %48 : vector<1x16x4xf32> to vector<16x4xf32>
    %c217 = arith.constant 217 : index
    %c0_50 = arith.constant 0 : index
    %50 = vector.load %arg10[%c217, %c0_50] : memref<362x4xf32, #tpu.memory_space<vmem>>, vector<16x4xf32>
    tpu.vector_store %arg10[%c217, %c0_50], %49 {strides = array<i32>} : memref<362x4xf32, #tpu.memory_space<vmem>>, vector<16x4xf32>,
    %c233 = arith.constant 233 : index
    %c0_51 = arith.constant 0 : index
    %51 = vector.load %arg10[%c233, %c0_51] : memref<362x4xf32, #tpu.memory_space<vmem>>, vector<2x4xf32>
    tpu.vector_store %arg10[%c233, %c0_51], %0 {strides = array<i32>} : memref<362x4xf32, #tpu.memory_space<vmem>>, vector<2x4xf32>,
    %c0_52 = arith.constant 0 : index
    %c192 = arith.constant 192 : index
    %c0_53 = arith.constant 0 : index
    %52 = vector.load %arg1[%c0_52, %c192, %c0_53] : memref<1x256x4xf32, #tpu.memory_space<vmem>>, vector<1x16x4xf32>
    %53 = vector.shape_cast %52 : vector<1x16x4xf32> to vector<16x4xf32>
    %c235 = arith.constant 235 : index
    %c0_54 = arith.constant 0 : index
    %54 = vector.load %arg10[%c235, %c0_54] : memref<362x4xf32, #tpu.memory_space<vmem>>, vector<16x4xf32>
    tpu.vector_store %arg10[%c235, %c0_54], %53 {strides = array<i32>} : memref<362x4xf32, #tpu.memory_space<vmem>>, vector<16x4xf32>,
    %c251 = arith.constant 251 : index
    %c0_55 = arith.constant 0 : index
    %55 = vector.load %arg10[%c251, %c0_55] : memref<362x4xf32, #tpu.memory_space<vmem>>, vector<2x4xf32>
    tpu.vector_store %arg10[%c251, %c0_55], %0 {strides = array<i32>} : memref<362x4xf32, #tpu.memory_space<vmem>>, vector<2x4xf32>,
    %c0_56 = arith.constant 0 : index
    %c208 = arith.constant 208 : index
    %c0_57 = arith.constant 0 : index
    %56 = vector.load %arg1[%c0_56, %c208, %c0_57] : memref<1x256x4xf32, #tpu.memory_space<vmem>>, vector<1x16x4xf32>
    %57 = vector.shape_cast %56 : vector<1x16x4xf32> to vector<16x4xf32>
    %c253 = arith.constant 253 : index
    %c0_58 = arith.constant 0 : index
    %58 = vector.load %arg10[%c253, %c0_58] : memref<362x4xf32, #tpu.memory_space<vmem>>, vector<16x4xf32>
    tpu.vector_store %arg10[%c253, %c0_58], %57 {strides = array<i32>} : memref<362x4xf32, #tpu.memory_space<vmem>>, vector<16x4xf32>,
    %c269 = arith.constant 269 : index
    %c0_59 = arith.constant 0 : index
    %59 = vector.load %arg10[%c269, %c0_59] : memref<362x4xf32, #tpu.memory_space<vmem>>, vector<2x4xf32>
    tpu.vector_store %arg10[%c269, %c0_59], %0 {strides = array<i32>} : memref<362x4xf32, #tpu.memory_space<vmem>>, vector<2x4xf32>,
    %c0_60 = arith.constant 0 : index
    %c224 = arith.constant 224 : index
    %c0_61 = arith.constant 0 : index
    %60 = vector.load %arg1[%c0_60, %c224, %c0_61] : memref<1x256x4xf32, #tpu.memory_space<vmem>>, vector<1x16x4xf32>
    %61 = vector.shape_cast %60 : vector<1x16x4xf32> to vector<16x4xf32>
    %c271 = arith.constant 271 : index
    %c0_62 = arith.constant 0 : index
    %62 = vector.load %arg10[%c271, %c0_62] : memref<362x4xf32, #tpu.memory_space<vmem>>, vector<16x4xf32>
    tpu.vector_store %arg10[%c271, %c0_62], %61 {strides = array<i32>} : memref<362x4xf32, #tpu.memory_space<vmem>>, vector<16x4xf32>,
    %c287 = arith.constant 287 : index
    %c0_63 = arith.constant 0 : index
    %63 = vector.load %arg10[%c287, %c0_63] : memref<362x4xf32, #tpu.memory_space<vmem>>, vector<2x4xf32>
    tpu.vector_store %arg10[%c287, %c0_63], %0 {strides = array<i32>} : memref<362x4xf32, #tpu.memory_space<vmem>>, vector<2x4xf32>,
    %c0_64 = arith.constant 0 : index
    %c240 = arith.constant 240 : index
    %c0_65 = arith.constant 0 : index
    %64 = vector.load %arg1[%c0_64, %c240, %c0_65] : memref<1x256x4xf32, #tpu.memory_space<vmem>>, vector<1x16x4xf32>
    %65 = vector.shape_cast %64 : vector<1x16x4xf32> to vector<16x4xf32>
    %c289 = arith.constant 289 : index
    %c0_66 = arith.constant 0 : index
    %66 = vector.load %arg10[%c289, %c0_66] : memref<362x4xf32, #tpu.memory_space<vmem>>, vector<16x4xf32>
    tpu.vector_store %arg10[%c289, %c0_66], %65 {strides = array<i32>} : memref<362x4xf32, #tpu.memory_space<vmem>>, vector<16x4xf32>,
    %c305 = arith.constant 305 : index
    %c0_67 = arith.constant 0 : index
    %67 = vector.load %arg10[%c305, %c0_67] : memref<362x4xf32, #tpu.memory_space<vmem>>, vector<2x4xf32>
    tpu.vector_store %arg10[%c305, %c0_67], %0 {strides = array<i32>} : memref<362x4xf32, #tpu.memory_space<vmem>>, vector<2x4xf32>,
    %c307 = arith.constant 307 : index
    %c0_68 = arith.constant 0 : index
    %68 = vector.load %arg10[%c307, %c0_68] : memref<362x4xf32, #tpu.memory_space<vmem>>, vector<17x4xf32>
    tpu.vector_store %arg10[%c307, %c0_68], %2 {strides = array<i32>} : memref<362x4xf32, #tpu.memory_space<vmem>>, vector<17x4xf32>,
    %cst_69 = arith.constant 0.000000e+00 : f32
    %69 = vector.broadcast %cst_69 : f32 to vector<38x4xf32>
    %c324 = arith.constant 324 : index
    %c0_70 = arith.constant 0 : index
    %70 = vector.load %arg10[%c324, %c0_70] : memref<362x4xf32, #tpu.memory_space<vmem>>, vector<38x4xf32>
    tpu.vector_store %arg10[%c324, %c0_70], %69 {strides = array<i32>} : memref<362x4xf32, #tpu.memory_space<vmem>>, vector<38x4xf32>,
    %c0_71 = arith.constant 0 : index
    %c0_72 = arith.constant 0 : index
    %71 = vector.load %arg8[%c0_71, %c0_72] : memref<324x1xf32, #tpu.memory_space<vmem>>, vector<324x1xf32>
    %cst_73 = arith.constant 0.000000e+00 : f32
    %72 = vector.broadcast %cst_73 : f32 to vector<324x1xf32>
    %73 = arith.cmpf one, %71, %72 : vector<324x1xf32>
    %cst_74 = arith.constant 0.000000e+00 : f32
    %74 = vector.broadcast %cst_74 : f32 to vector<324x8xf32>
    %c0_75 = arith.constant 0 : index
    %c0_76 = arith.constant 0 : index
    %75 = vector.load %arg10[%c0_75, %c0_76] : memref<362x4xf32, #tpu.memory_space<vmem>>, vector<324x4xf32>
    %c0_77 = arith.constant 0 : index
    %c0_78 = arith.constant 0 : index
    %c0_79 = arith.constant 0 : index
    %76 = vector.load %arg2[%c0_77, %c0_78, %c0_79] : memref<9x4x8xf32, #tpu.memory_space<vmem>>, vector<1x4x8xf32>
    %77 = vector.shape_cast %76 : vector<1x4x8xf32> to vector<4x8xf32>
    %cst_80 = arith.constant dense<0.000000e+00> : vector<324x8xf32>
    %78 = tpu.matmul %75, %77, %cst_80 {dimension_numbers = #tpu.dot_dimension_numbers<[1], [0], [0], [1], [0, 0, 1, 1], [], []>} : vector<324x4xf32>, vector<4x8xf32>, vector<324x8xf32> -> vector<324x8xf32>
    %79 = arith.addf %74, %78 : vector<324x8xf32>
    %c1 = arith.constant 1 : index
    %c0_81 = arith.constant 0 : index
    %80 = vector.load %arg10[%c1, %c0_81] : memref<362x4xf32, #tpu.memory_space<vmem>>, vector<324x4xf32>
    %c1_82 = arith.constant 1 : index
    %c0_83 = arith.constant 0 : index
    %c0_84 = arith.constant 0 : index
    %81 = vector.load %arg2[%c1_82, %c0_83, %c0_84] : memref<9x4x8xf32, #tpu.memory_space<vmem>>, vector<1x4x8xf32>
    %82 = vector.shape_cast %81 : vector<1x4x8xf32> to vector<4x8xf32>
    %cst_85 = arith.constant dense<0.000000e+00> : vector<324x8xf32>
    %83 = tpu.matmul %80, %82, %cst_85 {dimension_numbers = #tpu.dot_dimension_numbers<[1], [0], [0], [1], [0, 0, 1, 1], [], []>} : vector<324x4xf32>, vector<4x8xf32>, vector<324x8xf32> -> vector<324x8xf32>
    %84 = arith.addf %79, %83 : vector<324x8xf32>
    %c2 = arith.constant 2 : index
    %c0_86 = arith.constant 0 : index
    %85 = vector.load %arg10[%c2, %c0_86] : memref<362x4xf32, #tpu.memory_space<vmem>>, vector<324x4xf32>
    %c2_87 = arith.constant 2 : index
    %c0_88 = arith.constant 0 : index
    %c0_89 = arith.constant 0 : index
    %86 = vector.load %arg2[%c2_87, %c0_88, %c0_89] : memref<9x4x8xf32, #tpu.memory_space<vmem>>, vector<1x4x8xf32>
    %87 = vector.shape_cast %86 : vector<1x4x8xf32> to vector<4x8xf32>
    %cst_90 = arith.constant dense<0.000000e+00> : vector<324x8xf32>
    %88 = tpu.matmul %85, %87, %cst_90 {dimension_numbers = #tpu.dot_dimension_numbers<[1], [0], [0], [1], [0, 0, 1, 1], [], []>} : vector<324x4xf32>, vector<4x8xf32>, vector<324x8xf32> -> vector<324x8xf32>
    %89 = arith.addf %84, %88 : vector<324x8xf32>
    %c18 = arith.constant 18 : index
    %c0_91 = arith.constant 0 : index
    %90 = vector.load %arg10[%c18, %c0_91] : memref<362x4xf32, #tpu.memory_space<vmem>>, vector<324x4xf32>
    %c3 = arith.constant 3 : index
    %c0_92 = arith.constant 0 : index
    %c0_93 = arith.constant 0 : index
    %91 = vector.load %arg2[%c3, %c0_92, %c0_93] : memref<9x4x8xf32, #tpu.memory_space<vmem>>, vector<1x4x8xf32>
    %92 = vector.shape_cast %91 : vector<1x4x8xf32> to vector<4x8xf32>
    %cst_94 = arith.constant dense<0.000000e+00> : vector<324x8xf32>
    %93 = tpu.matmul %90, %92, %cst_94 {dimension_numbers = #tpu.dot_dimension_numbers<[1], [0], [0], [1], [0, 0, 1, 1], [], []>} : vector<324x4xf32>, vector<4x8xf32>, vector<324x8xf32> -> vector<324x8xf32>
    %94 = arith.addf %89, %93 : vector<324x8xf32>
    %c19_95 = arith.constant 19 : index
    %c0_96 = arith.constant 0 : index
    %95 = vector.load %arg10[%c19_95, %c0_96] : memref<362x4xf32, #tpu.memory_space<vmem>>, vector<324x4xf32>
    %c4 = arith.constant 4 : index
    %c0_97 = arith.constant 0 : index
    %c0_98 = arith.constant 0 : index
    %96 = vector.load %arg2[%c4, %c0_97, %c0_98] : memref<9x4x8xf32, #tpu.memory_space<vmem>>, vector<1x4x8xf32>
    %97 = vector.shape_cast %96 : vector<1x4x8xf32> to vector<4x8xf32>
    %cst_99 = arith.constant dense<0.000000e+00> : vector<324x8xf32>
    %98 = tpu.matmul %95, %97, %cst_99 {dimension_numbers = #tpu.dot_dimension_numbers<[1], [0], [0], [1], [0, 0, 1, 1], [], []>} : vector<324x4xf32>, vector<4x8xf32>, vector<324x8xf32> -> vector<324x8xf32>
    %99 = arith.addf %94, %98 : vector<324x8xf32>
    %c20 = arith.constant 20 : index
    %c0_100 = arith.constant 0 : index
    %100 = vector.load %arg10[%c20, %c0_100] : memref<362x4xf32, #tpu.memory_space<vmem>>, vector<324x4xf32>
    %c5 = arith.constant 5 : index
    %c0_101 = arith.constant 0 : index
    %c0_102 = arith.constant 0 : index
    %101 = vector.load %arg2[%c5, %c0_101, %c0_102] : memref<9x4x8xf32, #tpu.memory_space<vmem>>, vector<1x4x8xf32>
    %102 = vector.shape_cast %101 : vector<1x4x8xf32> to vector<4x8xf32>
    %cst_103 = arith.constant dense<0.000000e+00> : vector<324x8xf32>
    %103 = tpu.matmul %100, %102, %cst_103 {dimension_numbers = #tpu.dot_dimension_numbers<[1], [0], [0], [1], [0, 0, 1, 1], [], []>} : vector<324x4xf32>, vector<4x8xf32>, vector<324x8xf32> -> vector<324x8xf32>
    %104 = arith.addf %99, %103 : vector<324x8xf32>
    %c36 = arith.constant 36 : index
    %c0_104 = arith.constant 0 : index
    %105 = vector.load %arg10[%c36, %c0_104] : memref<362x4xf32, #tpu.memory_space<vmem>>, vector<324x4xf32>
    %c6 = arith.constant 6 : index
    %c0_105 = arith.constant 0 : index
    %c0_106 = arith.constant 0 : index
    %106 = vector.load %arg2[%c6, %c0_105, %c0_106] : memref<9x4x8xf32, #tpu.memory_space<vmem>>, vector<1x4x8xf32>
    %107 = vector.shape_cast %106 : vector<1x4x8xf32> to vector<4x8xf32>
    %cst_107 = arith.constant dense<0.000000e+00> : vector<324x8xf32>
    %108 = tpu.matmul %105, %107, %cst_107 {dimension_numbers = #tpu.dot_dimension_numbers<[1], [0], [0], [1], [0, 0, 1, 1], [], []>} : vector<324x4xf32>, vector<4x8xf32>, vector<324x8xf32> -> vector<324x8xf32>
    %109 = arith.addf %104, %108 : vector<324x8xf32>
    %c37_108 = arith.constant 37 : index
    %c0_109 = arith.constant 0 : index
    %110 = vector.load %arg10[%c37_108, %c0_109] : memref<362x4xf32, #tpu.memory_space<vmem>>, vector<324x4xf32>
    %c7 = arith.constant 7 : index
    %c0_110 = arith.constant 0 : index
    %c0_111 = arith.constant 0 : index
    %111 = vector.load %arg2[%c7, %c0_110, %c0_111] : memref<9x4x8xf32, #tpu.memory_space<vmem>>, vector<1x4x8xf32>
    %112 = vector.shape_cast %111 : vector<1x4x8xf32> to vector<4x8xf32>
    %cst_112 = arith.constant dense<0.000000e+00> : vector<324x8xf32>
    %113 = tpu.matmul %110, %112, %cst_112 {dimension_numbers = #tpu.dot_dimension_numbers<[1], [0], [0], [1], [0, 0, 1, 1], [], []>} : vector<324x4xf32>, vector<4x8xf32>, vector<324x8xf32> -> vector<324x8xf32>
    %114 = arith.addf %109, %113 : vector<324x8xf32>
    %c38 = arith.constant 38 : index
    %c0_113 = arith.constant 0 : index
    %115 = vector.load %arg10[%c38, %c0_113] : memref<362x4xf32, #tpu.memory_space<vmem>>, vector<324x4xf32>
    %c8 = arith.constant 8 : index
    %c0_114 = arith.constant 0 : index
    %c0_115 = arith.constant 0 : index
    %116 = vector.load %arg2[%c8, %c0_114, %c0_115] : memref<9x4x8xf32, #tpu.memory_space<vmem>>, vector<1x4x8xf32>
    %117 = vector.shape_cast %116 : vector<1x4x8xf32> to vector<4x8xf32>
    %cst_116 = arith.constant dense<0.000000e+00> : vector<324x8xf32>
    %118 = tpu.matmul %115, %117, %cst_116 {dimension_numbers = #tpu.dot_dimension_numbers<[1], [0], [0], [1], [0, 0, 1, 1], [], []>} : vector<324x4xf32>, vector<4x8xf32>, vector<324x8xf32> -> vector<324x8xf32>
    %119 = arith.addf %114, %118 : vector<324x8xf32>
    %c0_117 = arith.constant 0 : index
    %c0_118 = arith.constant 0 : index
    %120 = vector.load %arg3[%c0_117, %c0_118] : memref<1x8xf32, #tpu.memory_space<vmem>>, vector<1x8xf32>
    %121 = vector.broadcast %120 : vector<1x8xf32> to vector<324x8xf32>
    %122 = arith.mulf %119, %121 : vector<324x8xf32>
    %c0_119 = arith.constant 0 : index
    %c0_120 = arith.constant 0 : index
    %123 = vector.load %arg4[%c0_119, %c0_120] : memref<1x8xf32, #tpu.memory_space<vmem>>, vector<1x8xf32>
    %124 = vector.broadcast %123 : vector<1x8xf32> to vector<324x8xf32>
    %125 = arith.addf %122, %124 : vector<324x8xf32>
    %cst_121 = arith.constant 0.000000e+00 : f32
    %126 = vector.broadcast %cst_121 : f32 to vector<324x8xf32>
    %127 = arith.maximumf %125, %126 : vector<324x8xf32>
    %cst_122 = arith.constant 0.000000e+00 : f32
    %128 = vector.shape_cast %73 : vector<324x1xi1> to vector<324x1xi1>
    %129 = vector.broadcast %128 : vector<324x1xi1> to vector<324x8xi1>
    %130 = vector.broadcast %cst_122 : f32 to vector<324x8xf32>
    %131 = arith.select %129, %127, %130 : vector<324x8xi1>, vector<324x8xf32>
    %cst_123 = arith.constant 0.000000e+00 : f32
    %132 = vector.broadcast %cst_123 : f32 to vector<19x8xf32>
    %c0_124 = arith.constant 0 : index
    %c0_125 = arith.constant 0 : index
    %133 = vector.load %arg11[%c0_124, %c0_125] : memref<362x8xf32, #tpu.memory_space<vmem>>, vector<19x8xf32>
    tpu.vector_store %arg11[%c0_124, %c0_125], %132 {strides = array<i32>} : memref<362x8xf32, #tpu.memory_space<vmem>>, vector<19x8xf32>,
    %c19_126 = arith.constant 19 : index
    %c0_127 = arith.constant 0 : index
    %134 = vector.load %arg11[%c19_126, %c0_127] : memref<362x8xf32, #tpu.memory_space<vmem>>, vector<324x8xf32>
    tpu.vector_store %arg11[%c19_126, %c0_127], %131 {strides = array<i32>} : memref<362x8xf32, #tpu.memory_space<vmem>>, vector<324x8xf32>,
    %cst_128 = arith.constant 0.000000e+00 : f32
    %135 = vector.broadcast %cst_128 : f32 to vector<19x8xf32>
    %c343 = arith.constant 343 : index
    %c0_129 = arith.constant 0 : index
    %136 = vector.load %arg11[%c343, %c0_129] : memref<362x8xf32, #tpu.memory_space<vmem>>, vector<19x8xf32>
    tpu.vector_store %arg11[%c343, %c0_129], %135 {strides = array<i32>} : memref<362x8xf32, #tpu.memory_space<vmem>>, vector<19x8xf32>,
    %cst_130 = arith.constant 0.000000e+00 : f32
    %137 = vector.broadcast %cst_130 : f32 to vector<324x8xf32>
    %c0_131 = arith.constant 0 : index
    %c0_132 = arith.constant 0 : index
    %138 = vector.load %arg11[%c0_131, %c0_132] : memref<362x8xf32, #tpu.memory_space<vmem>>, vector<324x8xf32>
    %c0_133 = arith.constant 0 : index
    %c0_134 = arith.constant 0 : index
    %c0_135 = arith.constant 0 : index
    %139 = vector.load %arg5[%c0_133, %c0_134, %c0_135] : memref<9x8x8xf32, #tpu.memory_space<vmem>>, vector<1x8x8xf32>
    %140 = vector.shape_cast %139 : vector<1x8x8xf32> to vector<8x8xf32>
    %cst_136 = arith.constant dense<0.000000e+00> : vector<324x8xf32>
    %141 = tpu.matmul %138, %140, %cst_136 {dimension_numbers = #tpu.dot_dimension_numbers<[1], [0], [0], [1], [0, 0, 1, 1], [], []>} : vector<324x8xf32>, vector<8x8xf32>, vector<324x8xf32> -> vector<324x8xf32>
    %142 = arith.addf %137, %141 : vector<324x8xf32>
    %c1_137 = arith.constant 1 : index
    %c0_138 = arith.constant 0 : index
    %143 = vector.load %arg11[%c1_137, %c0_138] : memref<362x8xf32, #tpu.memory_space<vmem>>, vector<324x8xf32>
    %c1_139 = arith.constant 1 : index
    %c0_140 = arith.constant 0 : index
    %c0_141 = arith.constant 0 : index
    %144 = vector.load %arg5[%c1_139, %c0_140, %c0_141] : memref<9x8x8xf32, #tpu.memory_space<vmem>>, vector<1x8x8xf32>
    %145 = vector.shape_cast %144 : vector<1x8x8xf32> to vector<8x8xf32>
    %cst_142 = arith.constant dense<0.000000e+00> : vector<324x8xf32>
    %146 = tpu.matmul %143, %145, %cst_142 {dimension_numbers = #tpu.dot_dimension_numbers<[1], [0], [0], [1], [0, 0, 1, 1], [], []>} : vector<324x8xf32>, vector<8x8xf32>, vector<324x8xf32> -> vector<324x8xf32>
    %147 = arith.addf %142, %146 : vector<324x8xf32>
    %c2_143 = arith.constant 2 : index
    %c0_144 = arith.constant 0 : index
    %148 = vector.load %arg11[%c2_143, %c0_144] : memref<362x8xf32, #tpu.memory_space<vmem>>, vector<324x8xf32>
    %c2_145 = arith.constant 2 : index
    %c0_146 = arith.constant 0 : index
    %c0_147 = arith.constant 0 : index
    %149 = vector.load %arg5[%c2_145, %c0_146, %c0_147] : memref<9x8x8xf32, #tpu.memory_space<vmem>>, vector<1x8x8xf32>
    %150 = vector.shape_cast %149 : vector<1x8x8xf32> to vector<8x8xf32>
    %cst_148 = arith.constant dense<0.000000e+00> : vector<324x8xf32>
    %151 = tpu.matmul %148, %150, %cst_148 {dimension_numbers = #tpu.dot_dimension_numbers<[1], [0], [0], [1], [0, 0, 1, 1], [], []>} : vector<324x8xf32>, vector<8x8xf32>, vector<324x8xf32> -> vector<324x8xf32>
    %152 = arith.addf %147, %151 : vector<324x8xf32>
    %c18_149 = arith.constant 18 : index
    %c0_150 = arith.constant 0 : index
    %153 = vector.load %arg11[%c18_149, %c0_150] : memref<362x8xf32, #tpu.memory_space<vmem>>, vector<324x8xf32>
    %c3_151 = arith.constant 3 : index
    %c0_152 = arith.constant 0 : index
    %c0_153 = arith.constant 0 : index
    %154 = vector.load %arg5[%c3_151, %c0_152, %c0_153] : memref<9x8x8xf32, #tpu.memory_space<vmem>>, vector<1x8x8xf32>
    %155 = vector.shape_cast %154 : vector<1x8x8xf32> to vector<8x8xf32>
    %cst_154 = arith.constant dense<0.000000e+00> : vector<324x8xf32>
    %156 = tpu.matmul %153, %155, %cst_154 {dimension_numbers = #tpu.dot_dimension_numbers<[1], [0], [0], [1], [0, 0, 1, 1], [], []>} : vector<324x8xf32>, vector<8x8xf32>, vector<324x8xf32> -> vector<324x8xf32>
    %157 = arith.addf %152, %156 : vector<324x8xf32>
    %c19_155 = arith.constant 19 : index
    %c0_156 = arith.constant 0 : index
    %158 = vector.load %arg11[%c19_155, %c0_156] : memref<362x8xf32, #tpu.memory_space<vmem>>, vector<324x8xf32>
    %c4_157 = arith.constant 4 : index
    %c0_158 = arith.constant 0 : index
    %c0_159 = arith.constant 0 : index
    %159 = vector.load %arg5[%c4_157, %c0_158, %c0_159] : memref<9x8x8xf32, #tpu.memory_space<vmem>>, vector<1x8x8xf32>
    %160 = vector.shape_cast %159 : vector<1x8x8xf32> to vector<8x8xf32>
    %cst_160 = arith.constant dense<0.000000e+00> : vector<324x8xf32>
    %161 = tpu.matmul %158, %160, %cst_160 {dimension_numbers = #tpu.dot_dimension_numbers<[1], [0], [0], [1], [0, 0, 1, 1], [], []>} : vector<324x8xf32>, vector<8x8xf32>, vector<324x8xf32> -> vector<324x8xf32>
    %162 = arith.addf %157, %161 : vector<324x8xf32>
    %c20_161 = arith.constant 20 : index
    %c0_162 = arith.constant 0 : index
    %163 = vector.load %arg11[%c20_161, %c0_162] : memref<362x8xf32, #tpu.memory_space<vmem>>, vector<324x8xf32>
    %c5_163 = arith.constant 5 : index
    %c0_164 = arith.constant 0 : index
    %c0_165 = arith.constant 0 : index
    %164 = vector.load %arg5[%c5_163, %c0_164, %c0_165] : memref<9x8x8xf32, #tpu.memory_space<vmem>>, vector<1x8x8xf32>
    %165 = vector.shape_cast %164 : vector<1x8x8xf32> to vector<8x8xf32>
    %cst_166 = arith.constant dense<0.000000e+00> : vector<324x8xf32>
    %166 = tpu.matmul %163, %165, %cst_166 {dimension_numbers = #tpu.dot_dimension_numbers<[1], [0], [0], [1], [0, 0, 1, 1], [], []>} : vector<324x8xf32>, vector<8x8xf32>, vector<324x8xf32> -> vector<324x8xf32>
    %167 = arith.addf %162, %166 : vector<324x8xf32>
    %c36_167 = arith.constant 36 : index
    %c0_168 = arith.constant 0 : index
    %168 = vector.load %arg11[%c36_167, %c0_168] : memref<362x8xf32, #tpu.memory_space<vmem>>, vector<324x8xf32>
    %c6_169 = arith.constant 6 : index
    %c0_170 = arith.constant 0 : index
    %c0_171 = arith.constant 0 : index
    %169 = vector.load %arg5[%c6_169, %c0_170, %c0_171] : memref<9x8x8xf32, #tpu.memory_space<vmem>>, vector<1x8x8xf32>
    %170 = vector.shape_cast %169 : vector<1x8x8xf32> to vector<8x8xf32>
    %cst_172 = arith.constant dense<0.000000e+00> : vector<324x8xf32>
    %171 = tpu.matmul %168, %170, %cst_172 {dimension_numbers = #tpu.dot_dimension_numbers<[1], [0], [0], [1], [0, 0, 1, 1], [], []>} : vector<324x8xf32>, vector<8x8xf32>, vector<324x8xf32> -> vector<324x8xf32>
    %172 = arith.addf %167, %171 : vector<324x8xf32>
    %c37_173 = arith.constant 37 : index
    %c0_174 = arith.constant 0 : index
    %173 = vector.load %arg11[%c37_173, %c0_174] : memref<362x8xf32, #tpu.memory_space<vmem>>, vector<324x8xf32>
    %c7_175 = arith.constant 7 : index
    %c0_176 = arith.constant 0 : index
    %c0_177 = arith.constant 0 : index
    %174 = vector.load %arg5[%c7_175, %c0_176, %c0_177] : memref<9x8x8xf32, #tpu.memory_space<vmem>>, vector<1x8x8xf32>
    %175 = vector.shape_cast %174 : vector<1x8x8xf32> to vector<8x8xf32>
    %cst_178 = arith.constant dense<0.000000e+00> : vector<324x8xf32>
    %176 = tpu.matmul %173, %175, %cst_178 {dimension_numbers = #tpu.dot_dimension_numbers<[1], [0], [0], [1], [0, 0, 1, 1], [], []>} : vector<324x8xf32>, vector<8x8xf32>, vector<324x8xf32> -> vector<324x8xf32>
    %177 = arith.addf %172, %176 : vector<324x8xf32>
    %c38_179 = arith.constant 38 : index
    %c0_180 = arith.constant 0 : index
    %178 = vector.load %arg11[%c38_179, %c0_180] : memref<362x8xf32, #tpu.memory_space<vmem>>, vector<324x8xf32>
    %c8_181 = arith.constant 8 : index
    %c0_182 = arith.constant 0 : index
    %c0_183 = arith.constant 0 : index
    %179 = vector.load %arg5[%c8_181, %c0_182, %c0_183] : memref<9x8x8xf32, #tpu.memory_space<vmem>>, vector<1x8x8xf32>
    %180 = vector.shape_cast %179 : vector<1x8x8xf32> to vector<8x8xf32>
    %cst_184 = arith.constant dense<0.000000e+00> : vector<324x8xf32>
    %181 = tpu.matmul %178, %180, %cst_184 {dimension_numbers = #tpu.dot_dimension_numbers<[1], [0], [0], [1], [0, 0, 1, 1], [], []>} : vector<324x8xf32>, vector<8x8xf32>, vector<324x8xf32> -> vector<324x8xf32>
    %182 = arith.addf %177, %181 : vector<324x8xf32>
    %c0_185 = arith.constant 0 : index
    %c0_186 = arith.constant 0 : index
    %183 = vector.load %arg6[%c0_185, %c0_186] : memref<1x8xf32, #tpu.memory_space<vmem>>, vector<1x8xf32>
    %184 = vector.broadcast %183 : vector<1x8xf32> to vector<324x8xf32>
    %185 = arith.mulf %182, %184 : vector<324x8xf32>
    %c0_187 = arith.constant 0 : index
    %c0_188 = arith.constant 0 : index
    %186 = vector.load %arg7[%c0_187, %c0_188] : memref<1x8xf32, #tpu.memory_space<vmem>>, vector<1x8xf32>
    %187 = vector.broadcast %186 : vector<1x8xf32> to vector<324x8xf32>
    %188 = arith.addf %185, %187 : vector<324x8xf32>
    %cst_189 = arith.constant 0.000000e+00 : f32
    %189 = vector.broadcast %cst_189 : f32 to vector<324x8xf32>
    %190 = arith.maximumf %188, %189 : vector<324x8xf32>
    %191 = vector.extract_strided_slice %190 {offsets = [0, 0], sizes = [16, 8], strides = [1, 1]} : vector<324x8xf32> to vector<16x8xf32>
    %c0_190 = arith.constant 0 : index
    %c0_191 = arith.constant 0 : index
    %c0_192 = arith.constant 0 : index
    %192 = vector.load %arg9[%c0_190, %c0_191, %c0_192] : memref<1x256x8xf32, #tpu.memory_space<vmem>>, vector<1x16x8xf32>
    %193 = vector.shape_cast %192 : vector<1x16x8xf32> to vector<16x8xf32>
    %194 = vector.shape_cast %191 : vector<16x8xf32> to vector<1x16x8xf32>
    tpu.vector_store %arg9[%c0_190, %c0_191, %c0_192], %194 {strides = array<i32>} : memref<1x256x8xf32, #tpu.memory_space<vmem>>, vector<1x16x8xf32>,
    %195 = vector.extract_strided_slice %190 {offsets = [18, 0], sizes = [16, 8], strides = [1, 1]} : vector<324x8xf32> to vector<16x8xf32>
    %c0_193 = arith.constant 0 : index
    %c16_194 = arith.constant 16 : index
    %c0_195 = arith.constant 0 : index
    %196 = vector.load %arg9[%c0_193, %c16_194, %c0_195] : memref<1x256x8xf32, #tpu.memory_space<vmem>>, vector<1x16x8xf32>
    %197 = vector.shape_cast %196 : vector<1x16x8xf32> to vector<16x8xf32>
    %198 = vector.shape_cast %195 : vector<16x8xf32> to vector<1x16x8xf32>
    tpu.vector_store %arg9[%c0_193, %c16_194, %c0_195], %198 {strides = array<i32>} : memref<1x256x8xf32, #tpu.memory_space<vmem>>, vector<1x16x8xf32>,
    %199 = vector.extract_strided_slice %190 {offsets = [36, 0], sizes = [16, 8], strides = [1, 1]} : vector<324x8xf32> to vector<16x8xf32>
    %c0_196 = arith.constant 0 : index
    %c32_197 = arith.constant 32 : index
    %c0_198 = arith.constant 0 : index
    %200 = vector.load %arg9[%c0_196, %c32_197, %c0_198] : memref<1x256x8xf32, #tpu.memory_space<vmem>>, vector<1x16x8xf32>
    %201 = vector.shape_cast %200 : vector<1x16x8xf32> to vector<16x8xf32>
    %202 = vector.shape_cast %199 : vector<16x8xf32> to vector<1x16x8xf32>
    tpu.vector_store %arg9[%c0_196, %c32_197, %c0_198], %202 {strides = array<i32>} : memref<1x256x8xf32, #tpu.memory_space<vmem>>, vector<1x16x8xf32>,
    %203 = vector.extract_strided_slice %190 {offsets = [54, 0], sizes = [16, 8], strides = [1, 1]} : vector<324x8xf32> to vector<16x8xf32>
    %c0_199 = arith.constant 0 : index
    %c48_200 = arith.constant 48 : index
    %c0_201 = arith.constant 0 : index
    %204 = vector.load %arg9[%c0_199, %c48_200, %c0_201] : memref<1x256x8xf32, #tpu.memory_space<vmem>>, vector<1x16x8xf32>
    %205 = vector.shape_cast %204 : vector<1x16x8xf32> to vector<16x8xf32>
    %206 = vector.shape_cast %203 : vector<16x8xf32> to vector<1x16x8xf32>
    tpu.vector_store %arg9[%c0_199, %c48_200, %c0_201], %206 {strides = array<i32>} : memref<1x256x8xf32, #tpu.memory_space<vmem>>, vector<1x16x8xf32>,
    %207 = vector.extract_strided_slice %190 {offsets = [72, 0], sizes = [16, 8], strides = [1, 1]} : vector<324x8xf32> to vector<16x8xf32>
    %c0_202 = arith.constant 0 : index
    %c64_203 = arith.constant 64 : index
    %c0_204 = arith.constant 0 : index
    %208 = vector.load %arg9[%c0_202, %c64_203, %c0_204] : memref<1x256x8xf32, #tpu.memory_space<vmem>>, vector<1x16x8xf32>
    %209 = vector.shape_cast %208 : vector<1x16x8xf32> to vector<16x8xf32>
    %210 = vector.shape_cast %207 : vector<16x8xf32> to vector<1x16x8xf32>
    tpu.vector_store %arg9[%c0_202, %c64_203, %c0_204], %210 {strides = array<i32>} : memref<1x256x8xf32, #tpu.memory_space<vmem>>, vector<1x16x8xf32>,
    %211 = vector.extract_strided_slice %190 {offsets = [90, 0], sizes = [16, 8], strides = [1, 1]} : vector<324x8xf32> to vector<16x8xf32>
    %c0_205 = arith.constant 0 : index
    %c80_206 = arith.constant 80 : index
    %c0_207 = arith.constant 0 : index
    %212 = vector.load %arg9[%c0_205, %c80_206, %c0_207] : memref<1x256x8xf32, #tpu.memory_space<vmem>>, vector<1x16x8xf32>
    %213 = vector.shape_cast %212 : vector<1x16x8xf32> to vector<16x8xf32>
    %214 = vector.shape_cast %211 : vector<16x8xf32> to vector<1x16x8xf32>
    tpu.vector_store %arg9[%c0_205, %c80_206, %c0_207], %214 {strides = array<i32>} : memref<1x256x8xf32, #tpu.memory_space<vmem>>, vector<1x16x8xf32>,
    %215 = vector.extract_strided_slice %190 {offsets = [108, 0], sizes = [16, 8], strides = [1, 1]} : vector<324x8xf32> to vector<16x8xf32>
    %c0_208 = arith.constant 0 : index
    %c96_209 = arith.constant 96 : index
    %c0_210 = arith.constant 0 : index
    %216 = vector.load %arg9[%c0_208, %c96_209, %c0_210] : memref<1x256x8xf32, #tpu.memory_space<vmem>>, vector<1x16x8xf32>
    %217 = vector.shape_cast %216 : vector<1x16x8xf32> to vector<16x8xf32>
    %218 = vector.shape_cast %215 : vector<16x8xf32> to vector<1x16x8xf32>
    tpu.vector_store %arg9[%c0_208, %c96_209, %c0_210], %218 {strides = array<i32>} : memref<1x256x8xf32, #tpu.memory_space<vmem>>, vector<1x16x8xf32>,
    %219 = vector.extract_strided_slice %190 {offsets = [126, 0], sizes = [16, 8], strides = [1, 1]} : vector<324x8xf32> to vector<16x8xf32>
    %c0_211 = arith.constant 0 : index
    %c112_212 = arith.constant 112 : index
    %c0_213 = arith.constant 0 : index
    %220 = vector.load %arg9[%c0_211, %c112_212, %c0_213] : memref<1x256x8xf32, #tpu.memory_space<vmem>>, vector<1x16x8xf32>
    %221 = vector.shape_cast %220 : vector<1x16x8xf32> to vector<16x8xf32>
    %222 = vector.shape_cast %219 : vector<16x8xf32> to vector<1x16x8xf32>
    tpu.vector_store %arg9[%c0_211, %c112_212, %c0_213], %222 {strides = array<i32>} : memref<1x256x8xf32, #tpu.memory_space<vmem>>, vector<1x16x8xf32>,
    %223 = vector.extract_strided_slice %190 {offsets = [144, 0], sizes = [16, 8], strides = [1, 1]} : vector<324x8xf32> to vector<16x8xf32>
    %c0_214 = arith.constant 0 : index
    %c128_215 = arith.constant 128 : index
    %c0_216 = arith.constant 0 : index
    %224 = vector.load %arg9[%c0_214, %c128_215, %c0_216] : memref<1x256x8xf32, #tpu.memory_space<vmem>>, vector<1x16x8xf32>
    %225 = vector.shape_cast %224 : vector<1x16x8xf32> to vector<16x8xf32>
    %226 = vector.shape_cast %223 : vector<16x8xf32> to vector<1x16x8xf32>
    tpu.vector_store %arg9[%c0_214, %c128_215, %c0_216], %226 {strides = array<i32>} : memref<1x256x8xf32, #tpu.memory_space<vmem>>, vector<1x16x8xf32>,
    %227 = vector.extract_strided_slice %190 {offsets = [162, 0], sizes = [16, 8], strides = [1, 1]} : vector<324x8xf32> to vector<16x8xf32>
    %c0_217 = arith.constant 0 : index
    %c144_218 = arith.constant 144 : index
    %c0_219 = arith.constant 0 : index
    %228 = vector.load %arg9[%c0_217, %c144_218, %c0_219] : memref<1x256x8xf32, #tpu.memory_space<vmem>>, vector<1x16x8xf32>
    %229 = vector.shape_cast %228 : vector<1x16x8xf32> to vector<16x8xf32>
    %230 = vector.shape_cast %227 : vector<16x8xf32> to vector<1x16x8xf32>
    tpu.vector_store %arg9[%c0_217, %c144_218, %c0_219], %230 {strides = array<i32>} : memref<1x256x8xf32, #tpu.memory_space<vmem>>, vector<1x16x8xf32>,
    %231 = vector.extract_strided_slice %190 {offsets = [180, 0], sizes = [16, 8], strides = [1, 1]} : vector<324x8xf32> to vector<16x8xf32>
    %c0_220 = arith.constant 0 : index
    %c160_221 = arith.constant 160 : index
    %c0_222 = arith.constant 0 : index
    %232 = vector.load %arg9[%c0_220, %c160_221, %c0_222] : memref<1x256x8xf32, #tpu.memory_space<vmem>>, vector<1x16x8xf32>
    %233 = vector.shape_cast %232 : vector<1x16x8xf32> to vector<16x8xf32>
    %234 = vector.shape_cast %231 : vector<16x8xf32> to vector<1x16x8xf32>
    tpu.vector_store %arg9[%c0_220, %c160_221, %c0_222], %234 {strides = array<i32>} : memref<1x256x8xf32, #tpu.memory_space<vmem>>, vector<1x16x8xf32>,
    %235 = vector.extract_strided_slice %190 {offsets = [198, 0], sizes = [16, 8], strides = [1, 1]} : vector<324x8xf32> to vector<16x8xf32>
    %c0_223 = arith.constant 0 : index
    %c176_224 = arith.constant 176 : index
    %c0_225 = arith.constant 0 : index
    %236 = vector.load %arg9[%c0_223, %c176_224, %c0_225] : memref<1x256x8xf32, #tpu.memory_space<vmem>>, vector<1x16x8xf32>
    %237 = vector.shape_cast %236 : vector<1x16x8xf32> to vector<16x8xf32>
    %238 = vector.shape_cast %235 : vector<16x8xf32> to vector<1x16x8xf32>
    tpu.vector_store %arg9[%c0_223, %c176_224, %c0_225], %238 {strides = array<i32>} : memref<1x256x8xf32, #tpu.memory_space<vmem>>, vector<1x16x8xf32>,
    %239 = vector.extract_strided_slice %190 {offsets = [216, 0], sizes = [16, 8], strides = [1, 1]} : vector<324x8xf32> to vector<16x8xf32>
    %c0_226 = arith.constant 0 : index
    %c192_227 = arith.constant 192 : index
    %c0_228 = arith.constant 0 : index
    %240 = vector.load %arg9[%c0_226, %c192_227, %c0_228] : memref<1x256x8xf32, #tpu.memory_space<vmem>>, vector<1x16x8xf32>
    %241 = vector.shape_cast %240 : vector<1x16x8xf32> to vector<16x8xf32>
    %242 = vector.shape_cast %239 : vector<16x8xf32> to vector<1x16x8xf32>
    tpu.vector_store %arg9[%c0_226, %c192_227, %c0_228], %242 {strides = array<i32>} : memref<1x256x8xf32, #tpu.memory_space<vmem>>, vector<1x16x8xf32>,
    %243 = vector.extract_strided_slice %190 {offsets = [234, 0], sizes = [16, 8], strides = [1, 1]} : vector<324x8xf32> to vector<16x8xf32>
    %c0_229 = arith.constant 0 : index
    %c208_230 = arith.constant 208 : index
    %c0_231 = arith.constant 0 : index
    %244 = vector.load %arg9[%c0_229, %c208_230, %c0_231] : memref<1x256x8xf32, #tpu.memory_space<vmem>>, vector<1x16x8xf32>
    %245 = vector.shape_cast %244 : vector<1x16x8xf32> to vector<16x8xf32>
    %246 = vector.shape_cast %243 : vector<16x8xf32> to vector<1x16x8xf32>
    tpu.vector_store %arg9[%c0_229, %c208_230, %c0_231], %246 {strides = array<i32>} : memref<1x256x8xf32, #tpu.memory_space<vmem>>, vector<1x16x8xf32>,
    %247 = vector.extract_strided_slice %190 {offsets = [252, 0], sizes = [16, 8], strides = [1, 1]} : vector<324x8xf32> to vector<16x8xf32>
    %c0_232 = arith.constant 0 : index
    %c224_233 = arith.constant 224 : index
    %c0_234 = arith.constant 0 : index
    %248 = vector.load %arg9[%c0_232, %c224_233, %c0_234] : memref<1x256x8xf32, #tpu.memory_space<vmem>>, vector<1x16x8xf32>
    %249 = vector.shape_cast %248 : vector<1x16x8xf32> to vector<16x8xf32>
    %250 = vector.shape_cast %247 : vector<16x8xf32> to vector<1x16x8xf32>
    tpu.vector_store %arg9[%c0_232, %c224_233, %c0_234], %250 {strides = array<i32>} : memref<1x256x8xf32, #tpu.memory_space<vmem>>, vector<1x16x8xf32>,
    %251 = vector.extract_strided_slice %190 {offsets = [270, 0], sizes = [16, 8], strides = [1, 1]} : vector<324x8xf32> to vector<16x8xf32>
    %c0_235 = arith.constant 0 : index
    %c240_236 = arith.constant 240 : index
    %c0_237 = arith.constant 0 : index
    %252 = vector.load %arg9[%c0_235, %c240_236, %c0_237] : memref<1x256x8xf32, #tpu.memory_space<vmem>>, vector<1x16x8xf32>
    %253 = vector.shape_cast %252 : vector<1x16x8xf32> to vector<16x8xf32>
    %254 = vector.shape_cast %251 : vector<16x8xf32> to vector<1x16x8xf32>
    tpu.vector_store %arg9[%c0_235, %c240_236, %c0_237], %254 {strides = array<i32>} : memref<1x256x8xf32, #tpu.memory_space<vmem>>, vector<1x16x8xf32>,
    return
  }
  func.func @transform_0(%arg0: i32) -> (i32, i32, i32) {
    %c0_i32 = arith.constant 0 : i32
    %c0_i32_0 = arith.constant 0 : i32
    %c0_i32_1 = arith.constant 0 : i32
    return %arg0, %c0_i32, %c0_i32_0 : i32, i32, i32
  }
  func.func @transform_1(%arg0: i32) -> (i32, i32, i32) {
    %c0_i32 = arith.constant 0 : i32
    %c0_i32_0 = arith.constant 0 : i32
    %c0_i32_1 = arith.constant 0 : i32
    %c0_i32_2 = arith.constant 0 : i32
    return %c0_i32, %c0_i32_0, %c0_i32_1 : i32, i32, i32
  }
  func.func @transform_2(%arg0: i32) -> (i32, i32) {
    %c0_i32 = arith.constant 0 : i32
    %c0_i32_0 = arith.constant 0 : i32
    %c0_i32_1 = arith.constant 0 : i32
    return %c0_i32, %c0_i32_0 : i32, i32
  }
  func.func @transform_3(%arg0: i32) -> (i32, i32) {
    %c0_i32 = arith.constant 0 : i32
    %c0_i32_0 = arith.constant 0 : i32
    %c0_i32_1 = arith.constant 0 : i32
    return %c0_i32, %c0_i32_0 : i32, i32
  }
  func.func @transform_4(%arg0: i32) -> (i32, i32, i32) {
    %c0_i32 = arith.constant 0 : i32
    %c0_i32_0 = arith.constant 0 : i32
    %c0_i32_1 = arith.constant 0 : i32
    %c0_i32_2 = arith.constant 0 : i32
    return %c0_i32, %c0_i32_0, %c0_i32_1 : i32, i32, i32
  }
  func.func @transform_5(%arg0: i32) -> (i32, i32) {
    %c0_i32 = arith.constant 0 : i32
    %c0_i32_0 = arith.constant 0 : i32
    %c0_i32_1 = arith.constant 0 : i32
    return %c0_i32, %c0_i32_0 : i32, i32
  }
  func.func @transform_6(%arg0: i32) -> (i32, i32) {
    %c0_i32 = arith.constant 0 : i32
    %c0_i32_0 = arith.constant 0 : i32
    %c0_i32_1 = arith.constant 0 : i32
    return %c0_i32, %c0_i32_0 : i32, i32
  }
  func.func @transform_7(%arg0: i32) -> (i32, i32) {
    %c0_i32 = arith.constant 0 : i32
    %c0_i32_0 = arith.constant 0 : i32
    %c0_i32_1 = arith.constant 0 : i32
    return %c0_i32, %c0_i32_0 : i32, i32
  }
  func.func @transform_8(%arg0: i32) -> (i32, i32, i32) {
    %c0_i32 = arith.constant 0 : i32
    %c0_i32_0 = arith.constant 0 : i32
    %c0_i32_1 = arith.constant 0 : i32
    return %arg0, %c0_i32, %c0_i32_0 : i32, i32, i32
  }
}

</mosaic_0001>

<llo_original>
// kernel: tpu_custom_call.1
$region0: #{tpu_custom_call.1}
  #allocation0 [shape = 'u32[]', space=smem, size = 0x4, offset = 0x4, fixed_abs, tag = 'smem constant byte address 0x4 - core index']
  #allocation1 [shape = 'u32[144,128]{1,0:T(1,128)}', space=vmem, size = 0x12000, scoped, tag = 'internal scratch']
  #allocation2 [shape = 'f32[362,4]{1,0:T(8,128)}', space=vmem, size = 0x2e000, scoped, tag = 'scratch operand']
  #allocation3 [shape = 'f32[362,8]{1,0:T(8,128)}', space=vmem, size = 0x2e000, scoped, tag = 'scratch operand']
  %s0 = inlined_call_operand.vmem [shape: f32[2,256,4], index: 0, kind: input, shape index: {}]
  %s1 = inlined_call_operand.vmem [shape: f32[9,4,8], index: 1, kind: input, shape index: {}]
  %s2 = inlined_call_operand.vmem [shape: f32[1,8], index: 2, kind: input, shape index: {}]
  %s3 = inlined_call_operand.vmem [shape: f32[1,8], index: 3, kind: input, shape index: {}]
  %s4 = inlined_call_operand.vmem [shape: f32[9,8,8], index: 4, kind: input, shape index: {}]
  %s5 = inlined_call_operand.vmem [shape: f32[1,8], index: 5, kind: input, shape index: {}]
  %s6 = inlined_call_operand.vmem [shape: f32[1,8], index: 6, kind: input, shape index: {}]
  %s7 = inlined_call_operand.vmem [shape: f32[324,1], index: 7, kind: input, shape index: {}]
  %s8 = inlined_call_operand.vmem [shape: f32[2,256,8], index: 8, kind: output, shape index: {}]
  %s9 = sld [smem:[#allocation0]]
  $region65: #{tpu_custom_call.1} parent=0
    _
  %s11 = ssub.s32 1, %s9
  %s12 = scalar_select 0, %s11, %s9
  loop: start=0, step=1, limit=4
  $region2: #{tpu_custom_call.1} parent=0 // loop_pre_header
    _
  $region3: #{tpu_custom_call.1} parent=0 // loop_header
    %s14 = sphi 0, %s18
    %p15 = scmp.ge.s32.totalorder %s14, 4
    %s24 = sphi 0, %s26
    %s27 = sphi 0, %s24
    %s28 = sphi 0, %s27
    %s44 = sphi 0, %s28
    %s48 = sphi 0, %s48
    %s50 = sphi 0, %s48
    %s51 = sphi 0, %s50
    %s65 = sphi 0, %s51
    %s69 = sphi 0, %s69
    %s71 = sphi 0, %s69
    %s72 = sphi 0, %s71
    %s86 = sphi 0, %s72
    %s90 = sphi 0, %s90
    %s92 = sphi 0, %s90
    %s93 = sphi 0, %s92
    %s107 = sphi 0, %s93
    %s111 = sphi 0, %s111
    %s113 = sphi 0, %s111
    %s114 = sphi 0, %s113
    %s128 = sphi 0, %s114
    %s132 = sphi 0, %s132
    %s134 = sphi 0, %s132
    %s135 = sphi 0, %s134
    %s149 = sphi 0, %s135
    %s153 = sphi 0, %s153
    %s155 = sphi 0, %s153
    %s156 = sphi 0, %s155
    %s170 = sphi 0, %s156
    %s174 = sphi 0, %s174
    %s176 = sphi 0, %s174
    %s177 = sphi 0, %s176
    %s191 = sphi 0, %s177
    %s197 = sphi 0, %s199
    %s200 = sphi 0, %s197
    %s201 = sphi 0, %s200
    %s217 = sphi 0, %s201
  $region4: #{tpu_custom_call.1} parent=0 // loop_header_branch
    %17 = sbr.rel (%p15) target = $region8
  $region5: #{tpu_custom_call.1} parent=0 // loop_body
    %s19 = ssub.s32 %s14, 1
    %s20 = ssub.s32 %s14, 2
    %s21 = sadd.s32 %s14, 1
    %s22 = ssub.s32 %s14, %s21
    %p23 = scmp.eq.s32.totalorder %s22, 0
    %s25 = sadd.s32 %s24, 1
    %s26 = scalar_select %p23, %s24, %s25
    %p29 = pneg %p23
    %p30 = scmp.eq.s32.totalorder %s14, 1
    %p31 = por %p29, %p30
    %p32 = scmp.ne.s32.totalorder %s24, %s27
    %p33 = scmp.eq.s32.totalorder %s14, 0
    %p34 = por %p32, %p33
    %p35 = scmp.ne.s32.totalorder %s24, %s27
    %p36 = scmp.eq.s32.totalorder %s19, 1
    %p37 = por %p35, %p36
    %p38 = scmp.ne.s32.totalorder %s27, %s28
    %p39 = scmp.eq.s32.totalorder %s19, 0
    %p40 = por %p38, %p39
    %p41 = scmp.ne.s32.totalorder %s27, %s28
    %p42 = scmp.eq.s32.totalorder %s20, 1
    %p43 = por %p41, %p42
    %p45 = scmp.ne.s32.totalorder %s28, %s44
    %p46 = scmp.eq.s32.totalorder %s20, 0
    %p47 = por %p45, %p46
    %s49 = sadd.s32 %s48, 1
    %p52 = scmp.eq.s32.totalorder %s14, 1
    %p53 = scmp.ne.s32.totalorder %s48, %s50
    %p54 = scmp.eq.s32.totalorder %s14, 0
    %p55 = por %p53, %p54
    %p56 = scmp.ne.s32.totalorder %s48, %s50
    %p57 = scmp.eq.s32.totalorder %s19, 1
    %p58 = por %p56, %p57
    %p59 = scmp.ne.s32.totalorder %s50, %s51
    %p60 = scmp.eq.s32.totalorder %s19, 0
    %p61 = por %p59, %p60
    %p62 = scmp.ne.s32.totalorder %s50, %s51
    %p63 = scmp.eq.s32.totalorder %s20, 1
    %p64 = por %p62, %p63
    %p66 = scmp.ne.s32.totalorder %s51, %s65
    %p67 = scmp.eq.s32.totalorder %s20, 0
    %p68 = por %p66, %p67
    %s70 = sadd.s32 %s69, 1
    %p73 = scmp.eq.s32.totalorder %s14, 1
    %p74 = scmp.ne.s32.totalorder %s69, %s71
    %p75 = scmp.eq.s32.totalorder %s14, 0
    %p76 = por %p74, %p75
    %p77 = scmp.ne.s32.totalorder %s69, %s71
    %p78 = scmp.eq.s32.totalorder %s19, 1
    %p79 = por %p77, %p78
    %p80 = scmp.ne.s32.totalorder %s71, %s72
    %p81 = scmp.eq.s32.totalorder %s19, 0
    %p82 = por %p80, %p81
    %p83 = scmp.ne.s32.totalorder %s71, %s72
    %p84 = scmp.eq.s32.totalorder %s20, 1
    %p85 = por %p83, %p84
    %p87 = scmp.ne.s32.totalorder %s72, %s86
    %p88 = scmp.eq.s32.totalorder %s20, 0
    %p89 = por %p87, %p88
    %s91 = sadd.s32 %s90, 1
    %p94 = scmp.eq.s32.totalorder %s14, 1
    %p95 = scmp.ne.s32.totalorder %s90, %s92
    %p96 = scmp.eq.s32.totalorder %s14, 0
    %p97 = por %p95, %p96
    %p98 = scmp.ne.s32.totalorder %s90, %s92
    %p99 = scmp.eq.s32.totalorder %s19, 1
    %p100 = por %p98, %p99
    %p101 = scmp.ne.s32.totalorder %s92, %s93
    %p102 = scmp.eq.s32.totalorder %s19, 0
    %p103 = por %p101, %p102
    %p104 = scmp.ne.s32.totalorder %s92, %s93
    %p105 = scmp.eq.s32.totalorder %s20, 1
    %p106 = por %p104, %p105
    %p108 = scmp.ne.s32.totalorder %s93, %s107
    %p109 = scmp.eq.s32.totalorder %s20, 0
    %p110 = por %p108, %p109
    %s112 = sadd.s32 %s111, 1
    %p115 = scmp.eq.s32.totalorder %s14, 1
    %p116 = scmp.ne.s32.totalorder %s111, %s113
    %p117 = scmp.eq.s32.totalorder %s14, 0
    %p118 = por %p116, %p117
    %p119 = scmp.ne.s32.totalorder %s111, %s113
    %p120 = scmp.eq.s32.totalorder %s19, 1
    %p121 = por %p119, %p120
    %p122 = scmp.ne.s32.totalorder %s113, %s114
    %p123 = scmp.eq.s32.totalorder %s19, 0
    %p124 = por %p122, %p123
    %p125 = scmp.ne.s32.totalorder %s113, %s114
    %p126 = scmp.eq.s32.totalorder %s20, 1
    %p127 = por %p125, %p126
    %p129 = scmp.ne.s32.totalorder %s114, %s128
    %p130 = scmp.eq.s32.totalorder %s20, 0
    %p131 = por %p129, %p130
    %s133 = sadd.s32 %s132, 1
    %p136 = scmp.eq.s32.totalorder %s14, 1
    %p137 = scmp.ne.s32.totalorder %s132, %s134
    %p138 = scmp.eq.s32.totalorder %s14, 0
    %p139 = por %p137, %p138
    %p140 = scmp.ne.s32.totalorder %s132, %s134
    %p141 = scmp.eq.s32.totalorder %s19, 1
    %p142 = por %p140, %p141
    %p143 = scmp.ne.s32.totalorder %s134, %s135
    %p144 = scmp.eq.s32.totalorder %s19, 0
    %p145 = por %p143, %p144
    %p146 = scmp.ne.s32.totalorder %s134, %s135
    %p147 = scmp.eq.s32.totalorder %s20, 1
    %p148 = por %p146, %p147
    %p150 = scmp.ne.s32.totalorder %s135, %s149
    %p151 = scmp.eq.s32.totalorder %s20, 0
    %p152 = por %p150, %p151
    %s154 = sadd.s32 %s153, 1
    %p157 = scmp.eq.s32.totalorder %s14, 1
    %p158 = scmp.ne.s32.totalorder %s153, %s155
    %p159 = scmp.eq.s32.totalorder %s14, 0
    %p160 = por %p158, %p159
    %p161 = scmp.ne.s32.totalorder %s153, %s155
    %p162 = scmp.eq.s32.totalorder %s19, 1
    %p163 = por %p161, %p162
    %p164 = scmp.ne.s32.totalorder %s155, %s156
    %p165 = scmp.eq.s32.totalorder %s19, 0
    %p166 = por %p164, %p165
    %p167 = scmp.ne.s32.totalorder %s155, %s156
    %p168 = scmp.eq.s32.totalorder %s20, 1
    %p169 = por %p167, %p168
    %p171 = scmp.ne.s32.totalorder %s156, %s170
    %p172 = scmp.eq.s32.totalorder %s20, 0
    %p173 = por %p171, %p172
    %s175 = sadd.s32 %s174, 1
    %p178 = scmp.eq.s32.totalorder %s14, 1
    %p179 = scmp.ne.s32.totalorder %s174, %s176
    %p180 = scmp.eq.s32.totalorder %s14, 0
    %p181 = por %p179, %p180
    %p182 = scmp.ne.s32.totalorder %s174, %s176
    %p183 = scmp.eq.s32.totalorder %s19, 1
    %p184 = por %p182, %p183
    %p185 = scmp.ne.s32.totalorder %s176, %s177
    %p186 = scmp.eq.s32.totalorder %s19, 0
    %p187 = por %p185, %p186
    %p188 = scmp.ne.s32.totalorder %s176, %s177
    %p189 = scmp.eq.s32.totalorder %s20, 1
    %p190 = por %p188, %p189
    %p192 = scmp.ne.s32.totalorder %s177, %s191
    %p193 = scmp.eq.s32.totalorder %s20, 0
    %p194 = por %p192, %p193
    %s195 = ssub.s32 %s14, %s21
    %p196 = scmp.eq.s32.totalorder %s195, 0
    %s198 = sadd.s32 %s197, 1
    %s199 = scalar_select %p196, %s197, %s198
    %p202 = pneg %p196
    %p203 = scmp.eq.s32.totalorder %s14, 1
    %p204 = por %p202, %p203
    %p205 = scmp.ne.s32.totalorder %s197, %s200
    %p206 = scmp.eq.s32.totalorder %s14, 0
    %p207 = por %p205, %p206
    %p208 = scmp.ne.s32.totalorder %s197, %s200
    %p209 = scmp.eq.s32.totalorder %s19, 1
    %p210 = por %p208, %p209
    %p211 = scmp.ne.s32.totalorder %s200, %s201
    %p212 = scmp.eq.s32.totalorder %s19, 0
    %p213 = por %p211, %p212
    %p214 = scmp.ne.s32.totalorder %s200, %s201
    %p215 = scmp.eq.s32.totalorder %s20, 1
    %p216 = por %p214, %p215
    %p218 = scmp.ne.s32.totalorder %s201, %s217
    %p219 = scmp.eq.s32.totalorder %s20, 0
    %p220 = por %p218, %p219
    %p221 = scmp.le.s32.totalorder 1, %s14
    %p222 = scmp.lt.s32.totalorder %s14, 3
    %p223 = pnand %p221, %p222
    %p224 = pneg %p223
    // Predicated region
    $region9: #{tpu_custom_call.1} parent=5 // pred_check
      _
    $region10: #{tpu_custom_call.1} parent=5 // pred_check_branch
      %226 = sbr.rel (%p223) target = $region12
    $region11: #{tpu_custom_call.1} parent=5 // pred_region
      %s227 = ssub.s32 %s14, 1
      // Predicated region
      $region13: #{tpu_custom_call.1} parent=11 // pred_check
        %p228 = pneg %p61
      $region14: #{tpu_custom_call.1} parent=11 // pred_check_branch
        %230 = sbr.rel (%p228) target = $region16
      $region15: #{tpu_custom_call.1} parent=11 // pred_region
        _
      $region16: #{tpu_custom_call.1} parent=11 // pred_fallthru
        _
      // Predicated region
      $region17: #{tpu_custom_call.1} parent=11 // pred_check
        %p231 = pneg %p82
      $region18: #{tpu_custom_call.1} parent=11 // pred_check_branch
        %233 = sbr.rel (%p231) target = $region20
      $region19: #{tpu_custom_call.1} parent=11 // pred_region
        _
      $region20: #{tpu_custom_call.1} parent=11 // pred_fallthru
        _
      // Predicated region
      $region21: #{tpu_custom_call.1} parent=11 // pred_check
        %p234 = pneg %p103
      $region22: #{tpu_custom_call.1} parent=11 // pred_check_branch
        %236 = sbr.rel (%p234) target = $region24
      $region23: #{tpu_custom_call.1} parent=11 // pred_region
        _
      $region24: #{tpu_custom_call.1} parent=11 // pred_fallthru
        _
      // Predicated region
      $region25: #{tpu_custom_call.1} parent=11 // pred_check
        %p237 = pneg %p124
      $region26: #{tpu_custom_call.1} parent=11 // pred_check_branch
        %239 = sbr.rel (%p237) target = $region28
      $region27: #{tpu_custom_call.1} parent=11 // pred_region
        _
      $region28: #{tpu_custom_call.1} parent=11 // pred_fallthru
        _
      // Predicated region
      $region29: #{tpu_custom_call.1} parent=11 // pred_check
        %p240 = pneg %p145
      $region30: #{tpu_custom_call.1} parent=11 // pred_check_branch
        %242 = sbr.rel (%p240) target = $region32
      $region31: #{tpu_custom_call.1} parent=11 // pred_region
        _
      $region32: #{tpu_custom_call.1} parent=11 // pred_fallthru
        _
      // Predicated region
      $region33: #{tpu_custom_call.1} parent=11 // pred_check
        %p243 = pneg %p166
      $region34: #{tpu_custom_call.1} parent=11 // pred_check_branch
        %245 = sbr.rel (%p243) target = $region36
      $region35: #{tpu_custom_call.1} parent=11 // pred_region
        _
      $region36: #{tpu_custom_call.1} parent=11 // pred_fallthru
        _
      // Predicated region
      $region37: #{tpu_custom_call.1} parent=11 // pred_check
        %p246 = pneg %p187
      $region38: #{tpu_custom_call.1} parent=11 // pred_check_branch
        %248 = sbr.rel (%p246) target = $region40
      $region39: #{tpu_custom_call.1} parent=11 // pred_region
        _
      $region40: #{tpu_custom_call.1} parent=11 // pred_fallthru
        _
    $region12: #{tpu_custom_call.1} parent=5 // pred_fallthru
      _
    %p249 = scmp.lt.s32.totalorder %s14, 2
    // Predicated region
    $region41: #{tpu_custom_call.1} parent=5 // pred_check
      %p250 = pneg %p249
    $region42: #{tpu_custom_call.1} parent=5 // pred_check_branch
      %252 = sbr.rel (%p250) target = $region44
    $region43: #{tpu_custom_call.1} parent=5 // pred_region
      // Predicated region
      $region45: #{tpu_custom_call.1} parent=43 // pred_check
        %p253 = pneg %p34
      $region46: #{tpu_custom_call.1} parent=43 // pred_check_branch
        %255 = sbr.rel (%p253) target = $region48
      $region47: #{tpu_custom_call.1} parent=43 // pred_region
        %p256 = scmp.lt.s32.totalorder %s14, 1
        %s257 = scalar_select %p256, %s14, 1
        %s258 = smul.addr %s257, 32
        %s259 = smul.addr %s258, 8
        %s260 = scalar_lea.vmem %s0, %s259
      $region48: #{tpu_custom_call.1} parent=43 // pred_fallthru
        _
    $region44: #{tpu_custom_call.1} parent=5 // pred_fallthru
      _
    %p261 = scmp.le.s32.totalorder 1, %s14
    %p262 = scmp.lt.s32.totalorder %s14, 3
    %p263 = pnand %p261, %p262
    %p264 = pneg %p263
    // Predicated region
    $region49: #{tpu_custom_call.1} parent=5 // pred_check
      _
    $region50: #{tpu_custom_call.1} parent=5 // pred_check_branch
      %266 = sbr.rel (%p263) target = $region52
    $region51: #{tpu_custom_call.1} parent=5 // pred_region
      %s267 = ssub.s32 %s14, 1
      %p268 = scmp.lt.s32.totalorder %s19, 1
      %s269 = scalar_select %p268, %s19, 1
      %s270 = smul.addr %s269, 32
      %s271 = smul.addr %s270, 8
      %s272 = scalar_lea.vmem %s0, %s271
      %p273 = pneg %p40
      %p274 = pneg %p37
      %p275 = pneg %p61
      %p276 = pneg %p58
      %p277 = pneg %p82
      %p278 = pneg %p79
      %p279 = pneg %p103
      %p280 = pneg %p100
      %p281 = pneg %p124
      %p282 = pneg %p121
      %p283 = pneg %p145
      %p284 = pneg %p142
      %p285 = pneg %p166
      %p286 = pneg %p163
      %p287 = pneg %p187
      %p288 = pneg %p184
      %p289 = pneg %p213
      %p290 = pneg %p210
      %p291 = scmp.lt.s32.totalorder %s19, 1
      %s292 = scalar_select %p291, %s19, 1
      %s293 = smul.addr %s292, 32
      %s294 = smul.addr %s293, 8
      %s295 = scalar_lea.vmem %s8, %s294
      %p296 = scmp.lt.s32.totalorder %s19, 1
      %s297 = scalar_select %p296, %s19, 1
      %s298 = smul.addr %s297, 32
      %s299 = smul.addr %s298, 8
      %s300 = scalar_lea.vmem %s0, %s299
      %p301 = scmp.lt.s32.totalorder %s19, 1
      %s302 = scalar_select %p301, %s19, 1
      %s303 = smul.addr %s302, 32
      %s304 = smul.addr %s303, 8
      %s305 = scalar_lea.vmem %s8, %s304
      %vm306 = vcmask 31744
      %307 = vst.msk [vmem:[#allocation2] sm:$0xff] %vm306, 0.0
      %308 = vst.msk [vmem:[#allocation2 + $0x8] sm:$0xff] %vm306, 0.0
      %vm309 = vcmask 26624
      %310 = vst.msk [vmem:[#allocation2 + $0x10] sm:$0x7] %vm309, 0.0
      %v311 = vld [vmem:[%s300] sm:$0xff]
      %v312 = vld [vmem:[%s300 + $0x8] sm:$0xff]
      %313 = vst.msk [vmem:[#allocation2 + $0x13] sm:$0xff] %vm306, %v311
      %314 = vst.msk [vmem:[#allocation2 + $0x1b] sm:$0xff] %vm306, %v312
      %vm315 = vcmask 25600
      %316 = vst.msk [vmem:[#allocation2 + $0x23] sm:$0x3] %vm315, 0.0
      %v317 = vld [vmem:[%s300 + $0x10] sm:$0xff]
      %v318 = vld [vmem:[%s300 + $0x18] sm:$0xff]
      %319 = vst.msk [vmem:[#allocation2 + $0x25] sm:$0xff] %vm306, %v317
      %320 = vst.msk [vmem:[#allocation2 + $0x2d] sm:$0xff] %vm306, %v318
      %321 = vst.msk [vmem:[#allocation2 + $0x35] sm:$0x3] %vm315, 0.0
      %v322 = vld [vmem:[%s300 + $0x20] sm:$0xff]
      %v323 = vld [vmem:[%s300 + $0x28] sm:$0xff]
      %324 = vst.msk [vmem:[#allocation2 + $0x37] sm:$0xff] %vm306, %v322
      %325 = vst.msk [vmem:[#allocation2 + $0x3f] sm:$0xff] %vm306, %v323
      %326 = vst.msk [vmem:[#allocation2 + $0x47] sm:$0x3] %vm315, 0.0
      %v327 = vld [vmem:[%s300 + $0x30] sm:$0xff]
      %v328 = vld [vmem:[%s300 + $0x38] sm:$0xff]
      %329 = vst.msk [vmem:[#allocation2 + $0x49] sm:$0xff] %vm306, %v327
      %330 = vst.msk [vmem:[#allocation2 + $0x51] sm:$0xff] %vm306, %v328
      %331 = vst.msk [vmem:[#allocation2 + $0x59] sm:$0x3] %vm315, 0.0
      %v332 = vld [vmem:[%s300 + $0x40] sm:$0xff]
      %v333 = vld [vmem:[%s300 + $0x48] sm:$0xff]
      %334 = vst.msk [vmem:[#allocation2 + $0x5b] sm:$0xff] %vm306, %v332
      %335 = vst.msk [vmem:[#allocation2 + $0x63] sm:$0xff] %vm306, %v333
      %336 = vst.msk [vmem:[#allocation2 + $0x6b] sm:$0x3] %vm315, 0.0
      %v337 = vld [vmem:[%s300 + $0x50] sm:$0xff]
      %v338 = vld [vmem:[%s300 + $0x58] sm:$0xff]
      %339 = vst.msk [vmem:[#allocation2 + $0x6d] sm:$0xff] %vm306, %v337
      %340 = vst.msk [vmem:[#allocation2 + $0x75] sm:$0xff] %vm306, %v338
      %341 = vst.msk [vmem:[#allocation2 + $0x7d] sm:$0x3] %vm315, 0.0
      %v342 = vld [vmem:[%s300 + $0x60] sm:$0xff]
      %v343 = vld [vmem:[%s300 + $0x68] sm:$0xff]
      %344 = vst.msk [vmem:[#allocation2 + $0x7f] sm:$0xff] %vm306, %v342
      %345 = vst.msk [vmem:[#allocation2 + $0x87] sm:$0xff] %vm306, %v343
      %346 = vst.msk [vmem:[#allocation2 + $0x8f] sm:$0x3] %vm315, 0.0
      %v347 = vld [vmem:[%s300 + $0x70] sm:$0xff]
      %v348 = vld [vmem:[%s300 + $0x78] sm:$0xff]
      %349 = vst.msk [vmem:[#allocation2 + $0x91] sm:$0xff] %vm306, %v347
      %350 = vst.msk [vmem:[#allocation2 + $0x99] sm:$0xff] %vm306, %v348
      %351 = vst.msk [vmem:[#allocation2 + $0xa1] sm:$0x3] %vm315, 0.0
      %v352 = vld [vmem:[%s300 + $0x80] sm:$0xff]
      %v353 = vld [vmem:[%s300 + $0x88] sm:$0xff]
      %354 = vst.msk [vmem:[#allocation2 + $0xa3] sm:$0xff] %vm306, %v352
      %355 = vst.msk [vmem:[#allocation2 + $0xab] sm:$0xff] %vm306, %v353
      %356 = vst.msk [vmem:[#allocation2 + $0xb3] sm:$0x3] %vm315, 0.0
      %v357 = vld [vmem:[%s300 + $0x90] sm:$0xff]
      %v358 = vld [vmem:[%s300 + $0x98] sm:$0xff]
      %359 = vst.msk [vmem:[#allocation2 + $0xb5] sm:$0xff] %vm306, %v357
      %360 = vst.msk [vmem:[#allocation2 + $0xbd] sm:$0xff] %vm306, %v358
      %361 = vst.msk [vmem:[#allocation2 + $0xc5] sm:$0x3] %vm315, 0.0
      %v362 = vld [vmem:[%s300 + $0xa0] sm:$0xff]
      %v363 = vld [vmem:[%s300 + $0xa8] sm:$0xff]
      %364 = vst.msk [vmem:[#allocation2 + $0xc7] sm:$0xff] %vm306, %v362
      %365 = vst.msk [vmem:[#allocation2 + $0xcf] sm:$0xff] %vm306, %v363
      %366 = vst.msk [vmem:[#allocation2 + $0xd7] sm:$0x3] %vm315, 0.0
      %v367 = vld [vmem:[%s300 + $0xb0] sm:$0xff]
      %v368 = vld [vmem:[%s300 + $0xb8] sm:$0xff]
      %369 = vst.msk [vmem:[#allocation2 + $0xd9] sm:$0xff] %vm306, %v367
      %370 = vst.msk [vmem:[#allocation2 + $0xe1] sm:$0xff] %vm306, %v368
      %371 = vst.msk [vmem:[#allocation2 + $0xe9] sm:$0x3] %vm315, 0.0
      %v372 = vld [vmem:[%s300 + $0xc0] sm:$0xff]
      %v373 = vld [vmem:[%s300 + $0xc8] sm:$0xff]
      %374 = vst.msk [vmem:[#allocation2 + $0xeb] sm:$0xff] %vm306, %v372
      %375 = vst.msk [vmem:[#allocation2 + $0xf3] sm:$0xff] %vm306, %v373
      %376 = vst.msk [vmem:[#allocation2 + $0xfb] sm:$0x3] %vm315, 0.0
      %v377 = vld [vmem:[%s300 + $0xd0] sm:$0xff]
      %v378 = vld [vmem:[%s300 + $0xd8] sm:$0xff]
      %379 = vst.msk [vmem:[#allocation2 + $0xfd] sm:$0xff] %vm306, %v377
      %380 = vst.msk [vmem:[#allocation2 + $0x105] sm:$0xff] %vm306, %v378
      %381 = vst.msk [vmem:[#allocation2 + $0x10d] sm:$0x3] %vm315, 0.0
      %v382 = vld [vmem:[%s300 + $0xe0] sm:$0xff]
      %v383 = vld [vmem:[%s300 + $0xe8] sm:$0xff]
      %384 = vst.msk [vmem:[#allocation2 + $0x10f] sm:$0xff] %vm306, %v382
      %385 = vst.msk [vmem:[#allocation2 + $0x117] sm:$0xff] %vm306, %v383
      %386 = vst.msk [vmem:[#allocation2 + $0x11f] sm:$0x3] %vm315, 0.0
      %v387 = vld [vmem:[%s300 + $0xf0] sm:$0xff]
      %v388 = vld [vmem:[%s300 + $0xf8] sm:$0xff]
      %389 = vst.msk [vmem:[#allocation2 + $0x121] sm:$0xff] %vm306, %v387
      %390 = vst.msk [vmem:[#allocation2 + $0x129] sm:$0xff] %vm306, %v388
      %391 = vst.msk [vmem:[#allocation2 + $0x131] sm:$0x3] %vm315, 0.0
      %392 = vst.msk [vmem:[#allocation2 + $0x133] sm:$0xff] %vm306, 0.0
      %393 = vst.msk [vmem:[#allocation2 + $0x13b] sm:$0xff] %vm306, 0.0
      %vm394 = vcmask 24576
      %395 = vst.msk [vmem:[#allocation2 + $0x143] sm:$0x1] %vm394, 0.0
      %396 = vst.msk [vmem:[#allocation2 + $0x144] sm:$0xff] %vm306, 0.0
      %397 = vst.msk [vmem:[#allocation2 + $0x14c] sm:$0xff] %vm306, 0.0
      %398 = vst.msk [vmem:[#allocation2 + $0x154] sm:$0xff] %vm306, 0.0
      %399 = vst.msk [vmem:[#allocation2 + $0x15c] sm:$0xff] %vm306, 0.0
      %vm400 = vcmask 29696
      %401 = vst.msk [vmem:[#allocation2 + $0x164] sm:$0x3f] %vm400, 0.0
      %v402 = vld [vmem:[%s7] sm:$0xff]
      %v403 = vld [vmem:[%s7 + $0x8] sm:$0xff]
      %v404 = vld [vmem:[%s7 + $0x10] sm:$0xff]
      %v405 = vld [vmem:[%s7 + $0x18] sm:$0xff]
      %v406 = vld [vmem:[%s7 + $0x20] sm:$0xff]
      %v407 = vld [vmem:[%s7 + $0x28] sm:$0xff]
      %v408 = vld [vmem:[%s7 + $0x30] sm:$0xff]
      %v409 = vld [vmem:[%s7 + $0x38] sm:$0xff]
      %v410 = vld [vmem:[%s7 + $0x40] sm:$0xff]
      %v411 = vld [vmem:[%s7 + $0x48] sm:$0xff]
      %v412 = vld [vmem:[%s7 + $0x50] sm:$0xff]
      %v413 = vld [vmem:[%s7 + $0x58] sm:$0xff]
      %v414 = vld [vmem:[%s7 + $0x60] sm:$0xff]
      %v415 = vld [vmem:[%s7 + $0x68] sm:$0xff]
      %v416 = vld [vmem:[%s7 + $0x70] sm:$0xff]
      %v417 = vld [vmem:[%s7 + $0x78] sm:$0xff]
      %v418 = vld [vmem:[%s7 + $0x80] sm:$0xff]
      %v419 = vld [vmem:[%s7 + $0x88] sm:$0xff]
      %v420 = vld [vmem:[%s7 + $0x90] sm:$0xff]
      %v421 = vld [vmem:[%s7 + $0x98] sm:$0xff]
      %v422 = vld [vmem:[%s7 + $0xa0] sm:$0xff]
      %v423 = vld [vmem:[%s7 + $0xa8] sm:$0xff]
      %v424 = vld [vmem:[%s7 + $0xb0] sm:$0xff]
      %v425 = vld [vmem:[%s7 + $0xb8] sm:$0xff]
      %v426 = vld [vmem:[%s7 + $0xc0] sm:$0xff]
      %v427 = vld [vmem:[%s7 + $0xc8] sm:$0xff]
      %v428 = vld [vmem:[%s7 + $0xd0] sm:$0xff]
      %v429 = vld [vmem:[%s7 + $0xd8] sm:$0xff]
      %v430 = vld [vmem:[%s7 + $0xe0] sm:$0xff]
      %v431 = vld [vmem:[%s7 + $0xe8] sm:$0xff]
      %v432 = vld [vmem:[%s7 + $0xf0] sm:$0xff]
      %v433 = vld [vmem:[%s7 + $0xf8] sm:$0xff]
      %v434 = vld [vmem:[%s7 + $0x100] sm:$0xff]
      %v435 = vld [vmem:[%s7 + $0x108] sm:$0xff]
      %v436 = vld [vmem:[%s7 + $0x110] sm:$0xff]
      %v437 = vld [vmem:[%s7 + $0x118] sm:$0xff]
      %v438 = vld [vmem:[%s7 + $0x120] sm:$0xff]
      %v439 = vld [vmem:[%s7 + $0x128] sm:$0xff]
      %v440 = vld [vmem:[%s7 + $0x130] sm:$0xff]
      %v441 = vld [vmem:[%s7 + $0x138] sm:$0xff]
      %v442 = vld [vmem:[%s7 + $0x140] sm:$0xf]
      %vm443 = vcmp.ne.f32.partialorder %v402, 0.0
      %vm444 = vcmp.ne.f32.partialorder %v403, 0.0
      %vm445 = vcmp.ne.f32.partialorder %v404, 0.0
      %vm446 = vcmp.ne.f32.partialorder %v405, 0.0
      %vm447 = vcmp.ne.f32.partialorder %v406, 0.0
      %vm448 = vcmp.ne.f32.partialorder %v407, 0.0
      %vm449 = vcmp.ne.f32.partialorder %v408, 0.0
      %vm450 = vcmp.ne.f32.partialorder %v409, 0.0
      %vm451 = vcmp.ne.f32.partialorder %v410, 0.0
      %vm452 = vcmp.ne.f32.partialorder %v411, 0.0
      %vm453 = vcmp.ne.f32.partialorder %v412, 0.0
      %vm454 = vcmp.ne.f32.partialorder %v413, 0.0
      %vm455 = vcmp.ne.f32.partialorder %v414, 0.0
      %vm456 = vcmp.ne.f32.partialorder %v415, 0.0
      %vm457 = vcmp.ne.f32.partialorder %v416, 0.0
      %vm458 = vcmp.ne.f32.partialorder %v417, 0.0
      %vm459 = vcmp.ne.f32.partialorder %v418, 0.0
      %vm460 = vcmp.ne.f32.partialorder %v419, 0.0
      %vm461 = vcmp.ne.f32.partialorder %v420, 0.0
      %vm462 = vcmp.ne.f32.partialorder %v421, 0.0
      %vm463 = vcmp.ne.f32.partialorder %v422, 0.0
      %vm464 = vcmp.ne.f32.partialorder %v423, 0.0
      %vm465 = vcmp.ne.f32.partialorder %v424, 0.0
      %vm466 = vcmp.ne.f32.partialorder %v425, 0.0
      %vm467 = vcmp.ne.f32.partialorder %v426, 0.0
      %vm468 = vcmp.ne.f32.partialorder %v427, 0.0
      %vm469 = vcmp.ne.f32.partialorder %v428, 0.0
      %vm470 = vcmp.ne.f32.partialorder %v429, 0.0
      %vm471 = vcmp.ne.f32.partialorder %v430, 0.0
      %vm472 = vcmp.ne.f32.partialorder %v431, 0.0
      %vm473 = vcmp.ne.f32.partialorder %v432, 0.0
      %vm474 = vcmp.ne.f32.partialorder %v433, 0.0
      %vm475 = vcmp.ne.f32.partialorder %v434, 0.0
      %vm476 = vcmp.ne.f32.partialorder %v435, 0.0
      %vm477 = vcmp.ne.f32.partialorder %v436, 0.0
      %vm478 = vcmp.ne.f32.partialorder %v437, 0.0
      %vm479 = vcmp.ne.f32.partialorder %v438, 0.0
      %vm480 = vcmp.ne.f32.partialorder %v439, 0.0
      %vm481 = vcmp.ne.f32.partialorder %v440, 0.0
      %vm482 = vcmp.ne.f32.partialorder %v441, 0.0
      %vm483 = vcmp.ne.f32.partialorder %v442, 0.0
      %v484 = vld [vmem:[#allocation2] sm:$0xff]
      %v485 = vld [vmem:[#allocation2 + $0x8] sm:$0xff]
      %v486 = vld [vmem:[#allocation2 + $0x10] sm:$0xff]
      %v487 = vld [vmem:[#allocation2 + $0x18] sm:$0xff]
      %v488 = vld [vmem:[#allocation2 + $0x20] sm:$0xff]
      %v489 = vld [vmem:[#allocation2 + $0x28] sm:$0xff]
      %v490 = vld [vmem:[#allocation2 + $0x30] sm:$0xff]
      %v491 = vld [vmem:[#allocation2 + $0x38] sm:$0xff]
      %v492 = vld [vmem:[#allocation2 + $0x40] sm:$0xff]
      %v493 = vld [vmem:[#allocation2 + $0x48] sm:$0xff]
      %v494 = vld [vmem:[#allocation2 + $0x50] sm:$0xff]
      %v495 = vld [vmem:[#allocation2 + $0x58] sm:$0xff]
      %v496 = vld [vmem:[#allocation2 + $0x60] sm:$0xff]
      %v497 = vld [vmem:[#allocation2 + $0x68] sm:$0xff]
      %v498 = vld [vmem:[#allocation2 + $0x70] sm:$0xff]
      %v499 = vld [vmem:[#allocation2 + $0x78] sm:$0xff]
      %v500 = vld [vmem:[#allocation2 + $0x80] sm:$0xff]
      %v501 = vld [vmem:[#allocation2 + $0x88] sm:$0xff]
      %v502 = vld [vmem:[#allocation2 + $0x90] sm:$0xff]
      %v503 = vld [vmem:[#allocation2 + $0x98] sm:$0xff]
      %v504 = vld [vmem:[#allocation2 + $0xa0] sm:$0xff]
      %v505 = vld [vmem:[#allocation2 + $0xa8] sm:$0xff]
      %v506 = vld [vmem:[#allocation2 + $0xb0] sm:$0xff]
      %v507 = vld [vmem:[#allocation2 + $0xb8] sm:$0xff]
      %v508 = vld [vmem:[#allocation2 + $0xc0] sm:$0xff]
      %v509 = vld [vmem:[#allocation2 + $0xc8] sm:$0xff]
      %v510 = vld [vmem:[#allocation2 + $0xd0] sm:$0xff]
      %v511 = vld [vmem:[#allocation2 + $0xd8] sm:$0xff]
      %v512 = vld [vmem:[#allocation2 + $0xe0] sm:$0xff]
      %v513 = vld [vmem:[#allocation2 + $0xe8] sm:$0xff]
      %v514 = vld [vmem:[#allocation2 + $0xf0] sm:$0xff]
      %v515 = vld [vmem:[#allocation2 + $0xf8] sm:$0xff]
      %v516 = vld [vmem:[#allocation2 + $0x100] sm:$0xff]
      %v517 = vld [vmem:[#allocation2 + $0x108] sm:$0xff]
      %v518 = vld [vmem:[#allocation2 + $0x110] sm:$0xff]
      %v519 = vld [vmem:[#allocation2 + $0x118] sm:$0xff]
      %v520 = vld [vmem:[#allocation2 + $0x120] sm:$0xff]
      %v521 = vld [vmem:[#allocation2 + $0x128] sm:$0xff]
      %v522 = vld [vmem:[#allocation2 + $0x130] sm:$0xff]
      %v523 = vld [vmem:[#allocation2 + $0x138] sm:$0xff]
      %v524 = vld [vmem:[#allocation2 + $0x140] sm:$0xf]
      %v525 = vld [vmem:[%s1] sm:$0xf]
      %v526 = vld [vmem:[#allocation2 + $0x1] sm:$0xff]
      %v527 = vld [vmem:[#allocation2 + $0x9] sm:$0xff]
      %v528 = vld [vmem:[#allocation2 + $0x11] sm:$0xff]
      %v529 = vld [vmem:[#allocation2 + $0x19] sm:$0xff]
      %v530 = vld [vmem:[#allocation2 + $0x21] sm:$0xff]
      %v531 = vld [vmem:[#allocation2 + $0x29] sm:$0xff]
      %v532 = vld [vmem:[#allocation2 + $0x31] sm:$0xff]
      %v533 = vld [vmem:[#allocation2 + $0x39] sm:$0xff]
      %v534 = vld [vmem:[#allocation2 + $0x41] sm:$0xff]
      %v535 = vld [vmem:[#allocation2 + $0x49] sm:$0xff]
      %v536 = vld [vmem:[#allocation2 + $0x51] sm:$0xff]
      %v537 = vld [vmem:[#allocation2 + $0x59] sm:$0xff]
      %v538 = vld [vmem:[#allocation2 + $0x61] sm:$0xff]
      %v539 = vld [vmem:[#allocation2 + $0x69] sm:$0xff]
      %v540 = vld [vmem:[#allocation2 + $0x71] sm:$0xff]
      %v541 = vld [vmem:[#allocation2 + $0x79] sm:$0xff]
      %v542 = vld [vmem:[#allocation2 + $0x81] sm:$0xff]
      %v543 = vld [vmem:[#allocation2 + $0x89] sm:$0xff]
      %v544 = vld [vmem:[#allocation2 + $0x91] sm:$0xff]
      %v545 = vld [vmem:[#allocation2 + $0x99] sm:$0xff]
      %v546 = vld [vmem:[#allocation2 + $0xa1] sm:$0xff]
      %v547 = vld [vmem:[#allocation2 + $0xa9] sm:$0xff]
      %v548 = vld [vmem:[#allocation2 + $0xb1] sm:$0xff]
      %v549 = vld [vmem:[#allocation2 + $0xb9] sm:$0xff]
      %v550 = vld [vmem:[#allocation2 + $0xc1] sm:$0xff]
      %v551 = vld [vmem:[#allocation2 + $0xc9] sm:$0xff]
      %v552 = vld [vmem:[#allocation2 + $0xd1] sm:$0xff]
      %v553 = vld [vmem:[#allocation2 + $0xd9] sm:$0xff]
      %v554 = vld [vmem:[#allocation2 + $0xe1] sm:$0xff]
      %v555 = vld [vmem:[#allocation2 + $0xe9] sm:$0xff]
      %v556 = vld [vmem:[#allocation2 + $0xf1] sm:$0xff]
      %v557 = vld [vmem:[#allocation2 + $0xf9] sm:$0xff]
      %v558 = vld [vmem:[#allocation2 + $0x101] sm:$0xff]
      %v559 = vld [vmem:[#allocation2 + $0x109] sm:$0xff]
      %v560 = vld [vmem:[#allocation2 + $0x111] sm:$0xff]
      %v561 = vld [vmem:[#allocation2 + $0x119] sm:$0xff]
      %v562 = vld [vmem:[#allocation2 + $0x121] sm:$0xff]
      %v563 = vld [vmem:[#allocation2 + $0x129] sm:$0xff]
      %v564 = vld [vmem:[#allocation2 + $0x131] sm:$0xff]
      %v565 = vld [vmem:[#allocation2 + $0x139] sm:$0xff]
      %v566 = vld [vmem:[#allocation2 + $0x141] sm:$0xf]
      %s567 = scalar_lea.vmem %s1, 4
      %v568 = vld [vmem:[%s567] sm:$0xf]
      %v570 = vsel %vm306, %v526, 0
      %v573 = vsel %vm306, %v527, 0
      %v576 = vsel %vm306, %v528, 0
      %v579 = vsel %vm306, %v529, 0
      %v582 = vsel %vm306, %v530, 0
      %v585 = vsel %vm306, %v531, 0
      %v588 = vsel %vm306, %v532, 0
      %v591 = vsel %vm306, %v533, 0
      %v594 = vsel %vm306, %v534, 0
      %v597 = vsel %vm306, %v535, 0
      %v600 = vsel %vm306, %v536, 0
      %v603 = vsel %vm306, %v537, 0
      %v606 = vsel %vm306, %v538, 0
      %v609 = vsel %vm306, %v539, 0
      %v612 = vsel %vm306, %v540, 0
      %v615 = vsel %vm306, %v541, 0
      %v618 = vsel %vm306, %v542, 0
      %v621 = vsel %vm306, %v543, 0
      %v624 = vsel %vm306, %v544, 0
      %v627 = vsel %vm306, %v545, 0
      %v630 = vsel %vm306, %v546, 0
      %v633 = vsel %vm306, %v547, 0
      %v636 = vsel %vm306, %v548, 0
      %v639 = vsel %vm306, %v549, 0
      %v642 = vsel %vm306, %v550, 0
      %v645 = vsel %vm306, %v551, 0
      %v648 = vsel %vm306, %v552, 0
      %v651 = vsel %vm306, %v553, 0
      %v654 = vsel %vm306, %v554, 0
      %v657 = vsel %vm306, %v555, 0
      %v660 = vsel %vm306, %v556, 0
      %v663 = vsel %vm306, %v557, 0
      %v666 = vsel %vm306, %v558, 0
      %v669 = vsel %vm306, %v559, 0
      %v672 = vsel %vm306, %v560, 0
      %v675 = vsel %vm306, %v561, 0
      %v678 = vsel %vm306, %v562, 0
      %v681 = vsel %vm306, %v563, 0
      %v684 = vsel %vm306, %v564, 0
      %v687 = vsel %vm306, %v565, 0
      %v690 = vsel %vm306, %v566, 0
      %vm692 = vcmask 1043456
      %v694 = vsel %vm692, %v568, 0
      %696 = vmatprep.subr.mxu0 0.0
      %697 = vmatpush1.msra.mxu0 0.0
      %698 = vmatprep.subr.mxu0 0.0
      %699 = vmatpush1.msra.mxu0 0.0
      %700 = vmatprep.subr.mxu0 0.0
      %701 = vmatpush1.msra.mxu0 0.0
      %702 = vmatprep.subr.mxu0 0.0
      %703 = vmatpush1.msra.mxu0 0.0
      %704 = vmatprep.subr.mxu0 0.0
      %705 = vmatpush1.msra.mxu0 0.0
      %706 = vmatprep.subr.mxu0 0.0
      %707 = vmatpush1.msra.mxu0 0.0
      %708 = vmatprep.subr.mxu0 0.0
      %709 = vmatpush1.msra.mxu0 0.0
      %710 = vmatprep.subr.mxu0 0.0
      %711 = vmatpush1.msra.mxu0 0.0
      %712 = vmatprep.subr.mxu0 0.0
      %713 = vmatpush1.msra.mxu0 0.0
      %714 = vmatprep.subr.mxu0 0.0
      %715 = vmatpush1.msra.mxu0 0.0
      %716 = vmatprep.subr.mxu0 0.0
      %717 = vmatpush1.msra.mxu0 0.0
      %718 = vmatprep.subr.mxu0 0.0
      %719 = vmatpush1.msra.mxu0 0.0
      %720 = vmatprep.subr.mxu0 0.0
      %721 = vmatpush1.msra.mxu0 0.0
      %722 = vmatprep.subr.mxu0 0.0
      %723 = vmatpush1.msra.mxu0 0.0
      %724 = vmatprep.subr.mxu0 0.0
      %725 = vmatpush1.msra.mxu0 0.0
      %726 = vmatprep.subr.mxu0 0.0
      %727 = vmatpush1.msra.mxu0 %v694
      %728 = vmatprep.subr.mxu0 0.0
      %729 = vmatpush2.msra.mxu0 0.0
      %730 = vmatprep.subr.mxu0 0.0
      %731 = vmatpush2.msra.mxu0 0.0
      %732 = vmatprep.subr.mxu0 0.0
      %733 = vmatpush2.msra.mxu0 0.0
      %734 = vmatprep.subr.mxu0 0.0
      %735 = vmatpush2.msra.mxu0 0.0
      %736 = vmatprep.subr.mxu0 0.0
      %737 = vmatpush2.msra.mxu0 0.0
      %738 = vmatprep.subr.mxu0 0.0
      %739 = vmatpush2.msra.mxu0 0.0
      %740 = vmatprep.subr.mxu0 0.0
      %741 = vmatpush2.msra.mxu0 0.0
      %742 = vmatprep.subr.mxu0 0.0
      %743 = vmatpush2.msra.mxu0 0.0
      %744 = vmatprep.subr.mxu0 0.0
      %745 = vmatpush2.msra.mxu0 0.0
      %746 = vmatprep.subr.mxu0 0.0
      %747 = vmatpush2.msra.mxu0 0.0
      %748 = vmatprep.subr.mxu0 0.0
      %749 = vmatpush2.msra.mxu0 0.0
      %750 = vmatprep.subr.mxu0 0.0
      %751 = vmatpush2.msra.mxu0 0.0
      %752 = vmatprep.subr.mxu0 0.0
      %753 = vmatpush2.msra.mxu0 0.0
      %754 = vmatprep.subr.mxu0 0.0
      %755 = vmatpush2.msra.mxu0 0.0
      %756 = vmatprep.subr.mxu0 0.0
      %757 = vmatpush2.msra.mxu0 0.0
      %758 = vmatprep.subr.mxu0 0.0
      %759 = vmatpush2.msra.mxu0 0.0
      %760 = vmatprep.mubr.f32.mxu0 0.0
      %761 = vmatmul.mubr.f32.gmra.mxu0 %v570
      %v762 = vpop.f32.mrf.mxu0
      %v763 = vadd.f32 0.0, %v762
      %v764 = vpop.f32.mrf.mxu0
      %765 = vmatprep.mubr.f32.mxu0 0.0
      %766 = vmatmul.mubr.f32.gmra.mxu0 %v573
      %v767 = vpop.f32.mrf.mxu0
      %v768 = vadd.f32 0.0, %v767
      %v769 = vpop.f32.mrf.mxu0
      %770 = vmatprep.mubr.f32.mxu0 0.0
      %771 = vmatmul.mubr.f32.gmra.mxu0 %v576
      %v772 = vpop.f32.mrf.mxu0
      %v773 = vadd.f32 0.0, %v772
      %v774 = vpop.f32.mrf.mxu0
      %775 = vmatprep.mubr.f32.mxu0 0.0
      %776 = vmatmul.mubr.f32.gmra.mxu0 %v579
      %v777 = vpop.f32.mrf.mxu0
      %v778 = vadd.f32 0.0, %v777
      %v779 = vpop.f32.mrf.mxu0
      %780 = vmatprep.mubr.f32.mxu0 0.0
      %781 = vmatmul.mubr.f32.gmra.mxu0 %v582
      %v782 = vpop.f32.mrf.mxu0
      %v783 = vadd.f32 0.0, %v782
      %v784 = vpop.f32.mrf.mxu0
      %785 = vmatprep.mubr.f32.mxu0 0.0
      %786 = vmatmul.mubr.f32.gmra.mxu0 %v585
      %v787 = vpop.f32.mrf.mxu0
      %v788 = vadd.f32 0.0, %v787
      %v789 = vpop.f32.mrf.mxu0
      %790 = vmatprep.mubr.f32.mxu0 0.0
      %791 = vmatmul.mubr.f32.gmra.mxu0 %v588
      %v792 = vpop.f32.mrf.mxu0
      %v793 = vadd.f32 0.0, %v792
      %v794 = vpop.f32.mrf.mxu0
      %795 = vmatprep.mubr.f32.mxu0 0.0
      %796 = vmatmul.mubr.f32.gmra.mxu0 %v591
      %v797 = vpop.f32.mrf.mxu0
      %v798 = vadd.f32 0.0, %v797
      %v799 = vpop.f32.mrf.mxu0
      %800 = vmatprep.mubr.f32.mxu0 0.0
      %801 = vmatmul.mubr.f32.gmra.mxu0 %v594
      %v802 = vpop.f32.mrf.mxu0
      %v803 = vadd.f32 0.0, %v802
      %v804 = vpop.f32.mrf.mxu0
      %805 = vmatprep.mubr.f32.mxu0 0.0
      %806 = vmatmul.mubr.f32.gmra.mxu0 %v597
      %v807 = vpop.f32.mrf.mxu0
      %v808 = vadd.f32 0.0, %v807
      %v809 = vpop.f32.mrf.mxu0
      %810 = vmatprep.mubr.f32.mxu0 0.0
      %811 = vmatmul.mubr.f32.gmra.mxu0 %v600
      %v812 = vpop.f32.mrf.mxu0
      %v813 = vadd.f32 0.0, %v812
      %v814 = vpop.f32.mrf.mxu0
      %815 = vmatprep.mubr.f32.mxu0 0.0
      %816 = vmatmul.mubr.f32.gmra.mxu0 %v603
      %v817 = vpop.f32.mrf.mxu0
      %v818 = vadd.f32 0.0, %v817
      %v819 = vpop.f32.mrf.mxu0
      %820 = vmatprep.mubr.f32.mxu0 0.0
      %821 = vmatmul.mubr.f32.gmra.mxu0 %v606
      %v822 = vpop.f32.mrf.mxu0
      %v823 = vadd.f32 0.0, %v822
      %v824 = vpop.f32.mrf.mxu0
      %825 = vmatprep.mubr.f32.mxu0 0.0
      %826 = vmatmul.mubr.f32.gmra.mxu0 %v609
      %v827 = vpop.f32.mrf.mxu0
      %v828 = vadd.f32 0.0, %v827
      %v829 = vpop.f32.mrf.mxu0
      %830 = vmatprep.mubr.f32.mxu0 0.0
      %831 = vmatmul.mubr.f32.gmra.mxu0 %v612
      %v832 = vpop.f32.mrf.mxu0
      %v833 = vadd.f32 0.0, %v832
      %v834 = vpop.f32.mrf.mxu0
      %835 = vmatprep.mubr.f32.mxu0 0.0
      %836 = vmatmul.mubr.f32.gmra.mxu0 %v615
      %v837 = vpop.f32.mrf.mxu0
      %v838 = vadd.f32 0.0, %v837
      %v839 = vpop.f32.mrf.mxu0
      %840 = vmatprep.mubr.f32.mxu0 0.0
      %841 = vmatmul.mubr.f32.gmra.mxu0 %v618
      %v842 = vpop.f32.mrf.mxu0
      %v843 = vadd.f32 0.0, %v842
      %v844 = vpop.f32.mrf.mxu0
      %845 = vmatprep.mubr.f32.mxu0 0.0
      %846 = vmatmul.mubr.f32.gmra.mxu0 %v621
      %v847 = vpop.f32.mrf.mxu0
      %v848 = vadd.f32 0.0, %v847
      %v849 = vpop.f32.mrf.mxu0
      %850 = vmatprep.mubr.f32.mxu0 0.0
      %851 = vmatmul.mubr.f32.gmra.mxu0 %v624
      %v852 = vpop.f32.mrf.mxu0
      %v853 = vadd.f32 0.0, %v852
      %v854 = vpop.f32.mrf.mxu0
      %855 = vmatprep.mubr.f32.mxu0 0.0
      %856 = vmatmul.mubr.f32.gmra.mxu0 %v627
      %v857 = vpop.f32.mrf.mxu0
      %v858 = vadd.f32 0.0, %v857
      %v859 = vpop.f32.mrf.mxu0
      %860 = vmatprep.mubr.f32.mxu0 0.0
      %861 = vmatmul.mubr.f32.gmra.mxu0 %v630
      %v862 = vpop.f32.mrf.mxu0
      %v863 = vadd.f32 0.0, %v862
      %v864 = vpop.f32.mrf.mxu0
      %865 = vmatprep.mubr.f32.mxu0 0.0
      %866 = vmatmul.mubr.f32.gmra.mxu0 %v633
      %v867 = vpop.f32.mrf.mxu0
      %v868 = vadd.f32 0.0, %v867
      %v869 = vpop.f32.mrf.mxu0
      %870 = vmatprep.mubr.f32.mxu0 0.0
      %871 = vmatmul.mubr.f32.gmra.mxu0 %v636
      %v872 = vpop.f32.mrf.mxu0
      %v873 = vadd.f32 0.0, %v872
      %v874 = vpop.f32.mrf.mxu0
      %875 = vmatprep.mubr.f32.mxu0 0.0
      %876 = vmatmul.mubr.f32.gmra.mxu0 %v639
      %v877 = vpop.f32.mrf.mxu0
      %v878 = vadd.f32 0.0, %v877
      %v879 = vpop.f32.mrf.mxu0
      %880 = vmatprep.mubr.f32.mxu0 0.0
      %881 = vmatmul.mubr.f32.gmra.mxu0 %v642
      %v882 = vpop.f32.mrf.mxu0
      %v883 = vadd.f32 0.0, %v882
      %v884 = vpop.f32.mrf.mxu0
      %885 = vmatprep.mubr.f32.mxu0 0.0
      %886 = vmatmul.mubr.f32.gmra.mxu0 %v645
      %v887 = vpop.f32.mrf.mxu0
      %v888 = vadd.f32 0.0, %v887
      %v889 = vpop.f32.mrf.mxu0
      %890 = vmatprep.mubr.f32.mxu0 0.0
      %891 = vmatmul.mubr.f32.gmra.mxu0 %v648
      %v892 = vpop.f32.mrf.mxu0
      %v893 = vadd.f32 0.0, %v892
      %v894 = vpop.f32.mrf.mxu0
      %895 = vmatprep.mubr.f32.mxu0 0.0
      %896 = vmatmul.mubr.f32.gmra.mxu0 %v651
      %v897 = vpop.f32.mrf.mxu0
      %v898 = vadd.f32 0.0, %v897
      %v899 = vpop.f32.mrf.mxu0
      %900 = vmatprep.mubr.f32.mxu0 0.0
      %901 = vmatmul.mubr.f32.gmra.mxu0 %v654
      %v902 = vpop.f32.mrf.mxu0
      %v903 = vadd.f32 0.0, %v902
      %v904 = vpop.f32.mrf.mxu0
      %905 = vmatprep.mubr.f32.mxu0 0.0
      %906 = vmatmul.mubr.f32.gmra.mxu0 %v657
      %v907 = vpop.f32.mrf.mxu0
      %v908 = vadd.f32 0.0, %v907
      %v909 = vpop.f32.mrf.mxu0
      %910 = vmatprep.mubr.f32.mxu0 0.0
      %911 = vmatmul.mubr.f32.gmra.mxu0 %v660
      %v912 = vpop.f32.mrf.mxu0
      %v913 = vadd.f32 0.0, %v912
      %v914 = vpop.f32.mrf.mxu0
      %915 = vmatprep.mubr.f32.mxu0 0.0
      %916 = vmatmul.mubr.f32.gmra.mxu0 %v663
      %v917 = vpop.f32.mrf.mxu0
      %v918 = vadd.f32 0.0, %v917
      %v919 = vpop.f32.mrf.mxu0
      %920 = vmatprep.mubr.f32.mxu0 0.0
      %921 = vmatmul.mubr.f32.gmra.mxu0 %v666
      %v922 = vpop.f32.mrf.mxu0
      %v923 = vadd.f32 0.0, %v922
      %v924 = vpop.f32.mrf.mxu0
      %925 = vmatprep.mubr.f32.mxu0 0.0
      %926 = vmatmul.mubr.f32.gmra.mxu0 %v669
      %v927 = vpop.f32.mrf.mxu0
      %v928 = vadd.f32 0.0, %v927
      %v929 = vpop.f32.mrf.mxu0
      %930 = vmatprep.mubr.f32.mxu0 0.0
      %931 = vmatmul.mubr.f32.gmra.mxu0 %v672
      %v932 = vpop.f32.mrf.mxu0
      %v933 = vadd.f32 0.0, %v932
      %v934 = vpop.f32.mrf.mxu0
      %935 = vmatprep.mubr.f32.mxu0 0.0
      %936 = vmatmul.mubr.f32.gmra.mxu0 %v675
      %v937 = vpop.f32.mrf.mxu0
      %v938 = vadd.f32 0.0, %v937
      %v939 = vpop.f32.mrf.mxu0
      %940 = vmatprep.mubr.f32.mxu0 0.0
      %941 = vmatmul.mubr.f32.gmra.mxu0 %v678
      %v942 = vpop.f32.mrf.mxu0
      %v943 = vadd.f32 0.0, %v942
      %v944 = vpop.f32.mrf.mxu0
      %945 = vmatprep.mubr.f32.mxu0 0.0
      %946 = vmatmul.mubr.f32.gmra.mxu0 %v681
      %v947 = vpop.f32.mrf.mxu0
      %v948 = vadd.f32 0.0, %v947
      %v949 = vpop.f32.mrf.mxu0
      %950 = vmatprep.mubr.f32.mxu0 0.0
      %951 = vmatmul.mubr.f32.gmra.mxu0 %v684
      %v952 = vpop.f32.mrf.mxu0
      %v953 = vadd.f32 0.0, %v952
      %v954 = vpop.f32.mrf.mxu0
      %955 = vmatprep.mubr.f32.mxu0 0.0
      %956 = vmatmul.mubr.f32.gmra.mxu0 %v687
      %v957 = vpop.f32.mrf.mxu0
      %v958 = vadd.f32 0.0, %v957
      %v959 = vpop.f32.mrf.mxu0
      %960 = vmatprep.mubr.f32.mxu0 0.0
      %961 = vmatmul.mubr.f32.gmra.mxu0 %v690
      %v962 = vpop.f32.mrf.mxu0
      %v963 = vadd.f32 0.0, %v962
      %v964 = vpop.f32.mrf.mxu0
      %965 = vdwg.mxu0
      %v967 = vsel %vm306, %v484, 0
      %v970 = vsel %vm306, %v485, 0
      %v973 = vsel %vm306, %v486, 0
      %v976 = vsel %vm306, %v487, 0
      %v979 = vsel %vm306, %v488, 0
      %v982 = vsel %vm306, %v489, 0
      %v985 = vsel %vm306, %v490, 0
      %v988 = vsel %vm306, %v491, 0
      %v991 = vsel %vm306, %v492, 0
      %v994 = vsel %vm306, %v493, 0
      %v997 = vsel %vm306, %v494, 0
      %v1000 = vsel %vm306, %v495, 0
      %v1003 = vsel %vm306, %v496, 0
      %v1006 = vsel %vm306, %v497, 0
      %v1009 = vsel %vm306, %v498, 0
      %v1012 = vsel %vm306, %v499, 0
      %v1015 = vsel %vm306, %v500, 0
      %v1018 = vsel %vm306, %v501, 0
      %v1021 = vsel %vm306, %v502, 0
      %v1024 = vsel %vm306, %v503, 0
      %v1027 = vsel %vm306, %v504, 0
      %v1030 = vsel %vm306, %v505, 0
      %v1033 = vsel %vm306, %v506, 0
      %v1036 = vsel %vm306, %v507, 0
      %v1039 = vsel %vm306, %v508, 0
      %v1042 = vsel %vm306, %v509, 0
      %v1045 = vsel %vm306, %v510, 0
      %v1048 = vsel %vm306, %v511, 0
      %v1051 = vsel %vm306, %v512, 0
      %v1054 = vsel %vm306, %v513, 0
      %v1057 = vsel %vm306, %v514, 0
      %v1060 = vsel %vm306, %v515, 0
      %v1063 = vsel %vm306, %v516, 0
      %v1066 = vsel %vm306, %v517, 0
      %v1069 = vsel %vm306, %v518, 0
      %v1072 = vsel %vm306, %v519, 0
      %v1075 = vsel %vm306, %v520, 0
      %v1078 = vsel %vm306, %v521, 0
      %v1081 = vsel %vm306, %v522, 0
      %v1084 = vsel %vm306, %v523, 0
      %v1087 = vsel %vm306, %v524, 0
      %v1090 = vsel %vm692, %v525, 0
      %1092 = vmatprep.subr.mxu0 0.0
      %1093 = vmatpush1.msra.mxu0 0.0
      %1094 = vmatprep.subr.mxu0 0.0
      %1095 = vmatpush1.msra.mxu0 0.0
      %1096 = vmatprep.subr.mxu0 0.0
      %1097 = vmatpush1.msra.mxu0 0.0
      %1098 = vmatprep.subr.mxu0 0.0
      %1099 = vmatpush1.msra.mxu0 0.0
      %1100 = vmatprep.subr.mxu0 0.0
      %1101 = vmatpush1.msra.mxu0 0.0
      %1102 = vmatprep.subr.mxu0 0.0
      %1103 = vmatpush1.msra.mxu0 0.0
      %1104 = vmatprep.subr.mxu0 0.0
      %1105 = vmatpush1.msra.mxu0 0.0
      %1106 = vmatprep.subr.mxu0 0.0
      %1107 = vmatpush1.msra.mxu0 0.0
      %1108 = vmatprep.subr.mxu0 0.0
      %1109 = vmatpush1.msra.mxu0 0.0
      %1110 = vmatprep.subr.mxu0 0.0
      %1111 = vmatpush1.msra.mxu0 0.0
      %1112 = vmatprep.subr.mxu0 0.0
      %1113 = vmatpush1.msra.mxu0 0.0
      %1114 = vmatprep.subr.mxu0 0.0
      %1115 = vmatpush1.msra.mxu0 0.0
      %1116 = vmatprep.subr.mxu0 0.0
      %1117 = vmatpush1.msra.mxu0 0.0
      %1118 = vmatprep.subr.mxu0 0.0
      %1119 = vmatpush1.msra.mxu0 0.0
      %1120 = vmatprep.subr.mxu0 0.0
      %1121 = vmatpush1.msra.mxu0 0.0
      %1122 = vmatprep.subr.mxu0 0.0
      %1123 = vmatpush1.msra.mxu0 %v1090
      %1124 = vmatprep.subr.mxu0 0.0
      %1125 = vmatpush2.msra.mxu0 0.0
      %1126 = vmatprep.subr.mxu0 0.0
      %1127 = vmatpush2.msra.mxu0 0.0
      %1128 = vmatprep.subr.mxu0 0.0
      %1129 = vmatpush2.msra.mxu0 0.0
      %1130 = vmatprep.subr.mxu0 0.0
      %1131 = vmatpush2.msra.mxu0 0.0
      %1132 = vmatprep.subr.mxu0 0.0
      %1133 = vmatpush2.msra.mxu0 0.0
      %1134 = vmatprep.subr.mxu0 0.0
      %1135 = vmatpush2.msra.mxu0 0.0
      %1136 = vmatprep.subr.mxu0 0.0
      %1137 = vmatpush2.msra.mxu0 0.0
      %1138 = vmatprep.subr.mxu0 0.0
      %1139 = vmatpush2.msra.mxu0 0.0
      %1140 = vmatprep.subr.mxu0 0.0
      %1141 = vmatpush2.msra.mxu0 0.0
      %1142 = vmatprep.subr.mxu0 0.0
      %1143 = vmatpush2.msra.mxu0 0.0
      %1144 = vmatprep.subr.mxu0 0.0
      %1145 = vmatpush2.msra.mxu0 0.0
      %1146 = vmatprep.subr.mxu0 0.0
      %1147 = vmatpush2.msra.mxu0 0.0
      %1148 = vmatprep.subr.mxu0 0.0
      %1149 = vmatpush2.msra.mxu0 0.0
      %1150 = vmatprep.subr.mxu0 0.0
      %1151 = vmatpush2.msra.mxu0 0.0
      %1152 = vmatprep.subr.mxu0 0.0
      %1153 = vmatpush2.msra.mxu0 0.0
      %1154 = vmatprep.subr.mxu0 0.0
      %1155 = vmatpush2.msra.mxu0 0.0
      %1156 = vmatprep.mubr.f32.mxu0 0.0
      %1157 = vmatmul.mubr.f32.gmra.mxu0 %v967
      %v1158 = vpop.f32.mrf.mxu0
      %v1159 = vadd.f32 %v763, %v1158
      %v1160 = vpop.f32.mrf.mxu0
      %1161 = vmatprep.mubr.f32.mxu0 0.0
      %1162 = vmatmul.mubr.f32.gmra.mxu0 %v970
      %v1163 = vpop.f32.mrf.mxu0
      %v1164 = vadd.f32 %v768, %v1163
      %v1165 = vpop.f32.mrf.mxu0
      %1166 = vmatprep.mubr.f32.mxu0 0.0
      %1167 = vmatmul.mubr.f32.gmra.mxu0 %v973
      %v1168 = vpop.f32.mrf.mxu0
      %v1169 = vadd.f32 %v773, %v1168
      %v1170 = vpop.f32.mrf.mxu0
      %1171 = vmatprep.mubr.f32.mxu0 0.0
      %1172 = vmatmul.mubr.f32.gmra.mxu0 %v976
      %v1173 = vpop.f32.mrf.mxu0
      %v1174 = vadd.f32 %v778, %v1173
      %v1175 = vpop.f32.mrf.mxu0
      %1176 = vmatprep.mubr.f32.mxu0 0.0
      %1177 = vmatmul.mubr.f32.gmra.mxu0 %v979
      %v1178 = vpop.f32.mrf.mxu0
      %v1179 = vadd.f32 %v783, %v1178
      %v1180 = vpop.f32.mrf.mxu0
      %1181 = vmatprep.mubr.f32.mxu0 0.0
      %1182 = vmatmul.mubr.f32.gmra.mxu0 %v982
      %v1183 = vpop.f32.mrf.mxu0
      %v1184 = vadd.f32 %v788, %v1183
      %v1185 = vpop.f32.mrf.mxu0
      %1186 = vmatprep.mubr.f32.mxu0 0.0
      %1187 = vmatmul.mubr.f32.gmra.mxu0 %v985
      %v1188 = vpop.f32.mrf.mxu0
      %v1189 = vadd.f32 %v793, %v1188
      %v1190 = vpop.f32.mrf.mxu0
      %1191 = vmatprep.mubr.f32.mxu0 0.0
      %1192 = vmatmul.mubr.f32.gmra.mxu0 %v988
      %v1193 = vpop.f32.mrf.mxu0
      %v1194 = vadd.f32 %v798, %v1193
      %v1195 = vpop.f32.mrf.mxu0
      %1196 = vmatprep.mubr.f32.mxu0 0.0
      %1197 = vmatmul.mubr.f32.gmra.mxu0 %v991
      %v1198 = vpop.f32.mrf.mxu0
      %v1199 = vadd.f32 %v803, %v1198
      %v1200 = vpop.f32.mrf.mxu0
      %1201 = vmatprep.mubr.f32.mxu0 0.0
      %1202 = vmatmul.mubr.f32.gmra.mxu0 %v994
      %v1203 = vpop.f32.mrf.mxu0
      %v1204 = vadd.f32 %v808, %v1203
      %v1205 = vpop.f32.mrf.mxu0
      %1206 = vmatprep.mubr.f32.mxu0 0.0
      %1207 = vmatmul.mubr.f32.gmra.mxu0 %v997
      %v1208 = vpop.f32.mrf.mxu0
      %v1209 = vadd.f32 %v813, %v1208
      %v1210 = vpop.f32.mrf.mxu0
      %1211 = vmatprep.mubr.f32.mxu0 0.0
      %1212 = vmatmul.mubr.f32.gmra.mxu0 %v1000
      %v1213 = vpop.f32.mrf.mxu0
      %v1214 = vadd.f32 %v818, %v1213
      %v1215 = vpop.f32.mrf.mxu0
      %1216 = vmatprep.mubr.f32.mxu0 0.0
      %1217 = vmatmul.mubr.f32.gmra.mxu0 %v1003
      %v1218 = vpop.f32.mrf.mxu0
      %v1219 = vadd.f32 %v823, %v1218
      %v1220 = vpop.f32.mrf.mxu0
      %1221 = vmatprep.mubr.f32.mxu0 0.0
      %1222 = vmatmul.mubr.f32.gmra.mxu0 %v1006
      %v1223 = vpop.f32.mrf.mxu0
      %v1224 = vadd.f32 %v828, %v1223
      %v1225 = vpop.f32.mrf.mxu0
      %1226 = vmatprep.mubr.f32.mxu0 0.0
      %1227 = vmatmul.mubr.f32.gmra.mxu0 %v1009
      %v1228 = vpop.f32.mrf.mxu0
      %v1229 = vadd.f32 %v833, %v1228
      %v1230 = vpop.f32.mrf.mxu0
      %1231 = vmatprep.mubr.f32.mxu0 0.0
      %1232 = vmatmul.mubr.f32.gmra.mxu0 %v1012
      %v1233 = vpop.f32.mrf.mxu0
      %v1234 = vadd.f32 %v838, %v1233
      %v1235 = vpop.f32.mrf.mxu0
      %1236 = vmatprep.mubr.f32.mxu0 0.0
      %1237 = vmatmul.mubr.f32.gmra.mxu0 %v1015
      %v1238 = vpop.f32.mrf.mxu0
      %v1239 = vadd.f32 %v843, %v1238
      %v1240 = vpop.f32.mrf.mxu0
      %1241 = vmatprep.mubr.f32.mxu0 0.0
      %1242 = vmatmul.mubr.f32.gmra.mxu0 %v1018
      %v1243 = vpop.f32.mrf.mxu0
      %v1244 = vadd.f32 %v848, %v1243
      %v1245 = vpop.f32.mrf.mxu0
      %1246 = vmatprep.mubr.f32.mxu0 0.0
      %1247 = vmatmul.mubr.f32.gmra.mxu0 %v1021
      %v1248 = vpop.f32.mrf.mxu0
      %v1249 = vadd.f32 %v853, %v1248
      %v1250 = vpop.f32.mrf.mxu0
      %1251 = vmatprep.mubr.f32.mxu0 0.0
      %1252 = vmatmul.mubr.f32.gmra.mxu0 %v1024
      %v1253 = vpop.f32.mrf.mxu0
      %v1254 = vadd.f32 %v858, %v1253
      %v1255 = vpop.f32.mrf.mxu0
      %1256 = vmatprep.mubr.f32.mxu0 0.0
      %1257 = vmatmul.mubr.f32.gmra.mxu0 %v1027
      %v1258 = vpop.f32.mrf.mxu0
      %v1259 = vadd.f32 %v863, %v1258
      %v1260 = vpop.f32.mrf.mxu0
      %1261 = vmatprep.mubr.f32.mxu0 0.0
      %1262 = vmatmul.mubr.f32.gmra.mxu0 %v1030
      %v1263 = vpop.f32.mrf.mxu0
      %v1264 = vadd.f32 %v868, %v1263
      %v1265 = vpop.f32.mrf.mxu0
      %1266 = vmatprep.mubr.f32.mxu0 0.0
      %1267 = vmatmul.mubr.f32.gmra.mxu0 %v1033
      %v1268 = vpop.f32.mrf.mxu0
      %v1269 = vadd.f32 %v873, %v1268
      %v1270 = vpop.f32.mrf.mxu0
      %1271 = vmatprep.mubr.f32.mxu0 0.0
      %1272 = vmatmul.mubr.f32.gmra.mxu0 %v1036
      %v1273 = vpop.f32.mrf.mxu0
      %v1274 = vadd.f32 %v878, %v1273
      %v1275 = vpop.f32.mrf.mxu0
      %1276 = vmatprep.mubr.f32.mxu0 0.0
      %1277 = vmatmul.mubr.f32.gmra.mxu0 %v1039
      %v1278 = vpop.f32.mrf.mxu0
      %v1279 = vadd.f32 %v883, %v1278
      %v1280 = vpop.f32.mrf.mxu0
      %1281 = vmatprep.mubr.f32.mxu0 0.0
      %1282 = vmatmul.mubr.f32.gmra.mxu0 %v1042
      %v1283 = vpop.f32.mrf.mxu0
      %v1284 = vadd.f32 %v888, %v1283
      %v1285 = vpop.f32.mrf.mxu0
      %1286 = vmatprep.mubr.f32.mxu0 0.0
      %1287 = vmatmul.mubr.f32.gmra.mxu0 %v1045
      %v1288 = vpop.f32.mrf.mxu0
      %v1289 = vadd.f32 %v893, %v1288
      %v1290 = vpop.f32.mrf.mxu0
      %1291 = vmatprep.mubr.f32.mxu0 0.0
      %1292 = vmatmul.mubr.f32.gmra.mxu0 %v1048
      %v1293 = vpop.f32.mrf.mxu0
      %v1294 = vadd.f32 %v898, %v1293
      %v1295 = vpop.f32.mrf.mxu0
      %1296 = vmatprep.mubr.f32.mxu0 0.0
      %1297 = vmatmul.mubr.f32.gmra.mxu0 %v1051
      %v1298 = vpop.f32.mrf.mxu0
      %v1299 = vadd.f32 %v903, %v1298
      %v1300 = vpop.f32.mrf.mxu0
      %1301 = vmatprep.mubr.f32.mxu0 0.0
      %1302 = vmatmul.mubr.f32.gmra.mxu0 %v1054
      %v1303 = vpop.f32.mrf.mxu0
      %v1304 = vadd.f32 %v908, %v1303
      %v1305 = vpop.f32.mrf.mxu0
      %1306 = vmatprep.mubr.f32.mxu0 0.0
      %1307 = vmatmul.mubr.f32.gmra.mxu0 %v1057
      %v1308 = vpop.f32.mrf.mxu0
      %v1309 = vadd.f32 %v913, %v1308
      %v1310 = vpop.f32.mrf.mxu0
      %1311 = vmatprep.mubr.f32.mxu0 0.0
      %1312 = vmatmul.mubr.f32.gmra.mxu0 %v1060
      %v1313 = vpop.f32.mrf.mxu0
      %v1314 = vadd.f32 %v918, %v1313
      %v1315 = vpop.f32.mrf.mxu0
      %1316 = vmatprep.mubr.f32.mxu0 0.0
      %1317 = vmatmul.mubr.f32.gmra.mxu0 %v1063
      %v1318 = vpop.f32.mrf.mxu0
      %v1319 = vadd.f32 %v923, %v1318
      %v1320 = vpop.f32.mrf.mxu0
      %1321 = vmatprep.mubr.f32.mxu0 0.0
      %1322 = vmatmul.mubr.f32.gmra.mxu0 %v1066
      %v1323 = vpop.f32.mrf.mxu0
      %v1324 = vadd.f32 %v928, %v1323
      %v1325 = vpop.f32.mrf.mxu0
      %1326 = vmatprep.mubr.f32.mxu0 0.0
      %1327 = vmatmul.mubr.f32.gmra.mxu0 %v1069
      %v1328 = vpop.f32.mrf.mxu0
      %v1329 = vadd.f32 %v933, %v1328
      %v1330 = vpop.f32.mrf.mxu0
      %1331 = vmatprep.mubr.f32.mxu0 0.0
      %1332 = vmatmul.mubr.f32.gmra.mxu0 %v1072
      %v1333 = vpop.f32.mrf.mxu0
      %v1334 = vadd.f32 %v938, %v1333
      %v1335 = vpop.f32.mrf.mxu0
      %1336 = vmatprep.mubr.f32.mxu0 0.0
      %1337 = vmatmul.mubr.f32.gmra.mxu0 %v1075
      %v1338 = vpop.f32.mrf.mxu0
      %v1339 = vadd.f32 %v943, %v1338
      %v1340 = vpop.f32.mrf.mxu0
      %1341 = vmatprep.mubr.f32.mxu0 0.0
      %1342 = vmatmul.mubr.f32.gmra.mxu0 %v1078
      %v1343 = vpop.f32.mrf.mxu0
      %v1344 = vadd.f32 %v948, %v1343
      %v1345 = vpop.f32.mrf.mxu0
      %1346 = vmatprep.mubr.f32.mxu0 0.0
      %1347 = vmatmul.mubr.f32.gmra.mxu0 %v1081
      %v1348 = vpop.f32.mrf.mxu0
      %v1349 = vadd.f32 %v953, %v1348
      %v1350 = vpop.f32.mrf.mxu0
      %1351 = vmatprep.mubr.f32.mxu0 0.0
      %1352 = vmatmul.mubr.f32.gmra.mxu0 %v1084
      %v1353 = vpop.f32.mrf.mxu0
      %v1354 = vadd.f32 %v958, %v1353
      %v1355 = vpop.f32.mrf.mxu0
      %1356 = vmatprep.mubr.f32.mxu0 0.0
      %1357 = vmatmul.mubr.f32.gmra.mxu0 %v1087
      %v1358 = vpop.f32.mrf.mxu0
      %v1359 = vadd.f32 %v963, %v1358
      %v1360 = vpop.f32.mrf.mxu0
      %1361 = vdwg.mxu0
      %v1362 = vld [vmem:[#allocation2 + $0x2] sm:$0xff]
      %v1363 = vld [vmem:[#allocation2 + $0xa] sm:$0xff]
      %v1364 = vld [vmem:[#allocation2 + $0x12] sm:$0xff]
      %v1365 = vld [vmem:[#allocation2 + $0x1a] sm:$0xff]
      %v1366 = vld [vmem:[#allocation2 + $0x22] sm:$0xff]
      %v1367 = vld [vmem:[#allocation2 + $0x2a] sm:$0xff]
      %v1368 = vld [vmem:[#allocation2 + $0x32] sm:$0xff]
      %v1369 = vld [vmem:[#allocation2 + $0x3a] sm:$0xff]
      %v1370 = vld [vmem:[#allocation2 + $0x42] sm:$0xff]
      %v1371 = vld [vmem:[#allocation2 + $0x4a] sm:$0xff]
      %v1372 = vld [vmem:[#allocation2 + $0x52] sm:$0xff]
      %v1373 = vld [vmem:[#allocation2 + $0x5a] sm:$0xff]
      %v1374 = vld [vmem:[#allocation2 + $0x62] sm:$0xff]
      %v1375 = vld [vmem:[#allocation2 + $0x6a] sm:$0xff]
      %v1376 = vld [vmem:[#allocation2 + $0x72] sm:$0xff]
      %v1377 = vld [vmem:[#allocation2 + $0x7a] sm:$0xff]
      %v1378 = vld [vmem:[#allocation2 + $0x82] sm:$0xff]
      %v1379 = vld [vmem:[#allocation2 + $0x8a] sm:$0xff]
      %v1380 = vld [vmem:[#allocation2 + $0x92] sm:$0xff]
      %v1381 = vld [vmem:[#allocation2 + $0x9a] sm:$0xff]
      %v1382 = vld [vmem:[#allocation2 + $0xa2] sm:$0xff]
      %v1383 = vld [vmem:[#allocation2 + $0xaa] sm:$0xff]
      %v1384 = vld [vmem:[#allocation2 + $0xb2] sm:$0xff]
      %v1385 = vld [vmem:[#allocation2 + $0xba] sm:$0xff]
      %v1386 = vld [vmem:[#allocation2 + $0xc2] sm:$0xff]
      %v1387 = vld [vmem:[#allocation2 + $0xca] sm:$0xff]
      %v1388 = vld [vmem:[#allocation2 + $0xd2] sm:$0xff]
      %v1389 = vld [vmem:[#allocation2 + $0xda] sm:$0xff]
      %v1390 = vld [vmem:[#allocation2 + $0xe2] sm:$0xff]
      %v1391 = vld [vmem:[#allocation2 + $0xea] sm:$0xff]
      %v1392 = vld [vmem:[#allocation2 + $0xf2] sm:$0xff]
      %v1393 = vld [vmem:[#allocation2 + $0xfa] sm:$0xff]
      %v1394 = vld [vmem:[#allocation2 + $0x102] sm:$0xff]
      %v1395 = vld [vmem:[#allocation2 + $0x10a] sm:$0xff]
      %v1396 = vld [vmem:[#allocation2 + $0x112] sm:$0xff]
      %v1397 = vld [vmem:[#allocation2 + $0x11a] sm:$0xff]
      %v1398 = vld [vmem:[#allocation2 + $0x122] sm:$0xff]
      %v1399 = vld [vmem:[#allocation2 + $0x12a] sm:$0xff]
      %v1400 = vld [vmem:[#allocation2 + $0x132] sm:$0xff]
      %v1401 = vld [vmem:[#allocation2 + $0x13a] sm:$0xff]
      %v1402 = vld [vmem:[#allocation2 + $0x142] sm:$0xf]
      %s1403 = scalar_lea.vmem %s1, 8
      %v1404 = vld [vmem:[%s1403] sm:$0xf]
      %v1406 = vsel %vm306, %v1362, 0
      %v1409 = vsel %vm306, %v1363, 0
      %v1412 = vsel %vm306, %v1364, 0
      %v1415 = vsel %vm306, %v1365, 0
      %v1418 = vsel %vm306, %v1366, 0
      %v1421 = vsel %vm306, %v1367, 0
      %v1424 = vsel %vm306, %v1368, 0
      %v1427 = vsel %vm306, %v1369, 0
      %v1430 = vsel %vm306, %v1370, 0
      %v1433 = vsel %vm306, %v1371, 0
      %v1436 = vsel %vm306, %v1372, 0
      %v1439 = vsel %vm306, %v1373, 0
      %v1442 = vsel %vm306, %v1374, 0
      %v1445 = vsel %vm306, %v1375, 0
      %v1448 = vsel %vm306, %v1376, 0
      %v1451 = vsel %vm306, %v1377, 0
      %v1454 = vsel %vm306, %v1378, 0
      %v1457 = vsel %vm306, %v1379, 0
      %v1460 = vsel %vm306, %v1380, 0
      %v1463 = vsel %vm306, %v1381, 0
      %v1466 = vsel %vm306, %v1382, 0
      %v1469 = vsel %vm306, %v1383, 0
      %v1472 = vsel %vm306, %v1384, 0
      %v1475 = vsel %vm306, %v1385, 0
      %v1478 = vsel %vm306, %v1386, 0
      %v1481 = vsel %vm306, %v1387, 0
      %v1484 = vsel %vm306, %v1388, 0
      %v1487 = vsel %vm306, %v1389, 0
      %v1490 = vsel %vm306, %v1390, 0
      %v1493 = vsel %vm306, %v1391, 0
      %v1496 = vsel %vm306, %v1392, 0
      %v1499 = vsel %vm306, %v1393, 0
      %v1502 = vsel %vm306, %v1394, 0
      %v1505 = vsel %vm306, %v1395, 0
      %v1508 = vsel %vm306, %v1396, 0
      %v1511 = vsel %vm306, %v1397, 0
      %v1514 = vsel %vm306, %v1398, 0
      %v1517 = vsel %vm306, %v1399, 0
      %v1520 = vsel %vm306, %v1400, 0
      %v1523 = vsel %vm306, %v1401, 0
      %v1526 = vsel %vm306, %v1402, 0
      %v1529 = vsel %vm692, %v1404, 0
      %1531 = vmatprep.subr.mxu0 0.0
      %1532 = vmatpush1.msra.mxu0 0.0
      %1533 = vmatprep.subr.mxu0 0.0
      %1534 = vmatpush1.msra.mxu0 0.0
      %1535 = vmatprep.subr.mxu0 0.0
      %1536 = vmatpush1.msra.mxu0 0.0
      %1537 = vmatprep.subr.mxu0 0.0
      %1538 = vmatpush1.msra.mxu0 0.0
      %1539 = vmatprep.subr.mxu0 0.0
      %1540 = vmatpush1.msra.mxu0 0.0
      %1541 = vmatprep.subr.mxu0 0.0
      %1542 = vmatpush1.msra.mxu0 0.0
      %1543 = vmatprep.subr.mxu0 0.0
      %1544 = vmatpush1.msra.mxu0 0.0
      %1545 = vmatprep.subr.mxu0 0.0
      %1546 = vmatpush1.msra.mxu0 0.0
      %1547 = vmatprep.subr.mxu0 0.0
      %1548 = vmatpush1.msra.mxu0 0.0
      %1549 = vmatprep.subr.mxu0 0.0
      %1550 = vmatpush1.msra.mxu0 0.0
      %1551 = vmatprep.subr.mxu0 0.0
      %1552 = vmatpush1.msra.mxu0 0.0
      %1553 = vmatprep.subr.mxu0 0.0
      %1554 = vmatpush1.msra.mxu0 0.0
      %1555 = vmatprep.subr.mxu0 0.0
      %1556 = vmatpush1.msra.mxu0 0.0
      %1557 = vmatprep.subr.mxu0 0.0
      %1558 = vmatpush1.msra.mxu0 0.0
      %1559 = vmatprep.subr.mxu0 0.0
      %1560 = vmatpush1.msra.mxu0 0.0
      %1561 = vmatprep.subr.mxu0 0.0
      %1562 = vmatpush1.msra.mxu0 %v1529
      %1563 = vmatprep.subr.mxu0 0.0
      %1564 = vmatpush2.msra.mxu0 0.0
      %1565 = vmatprep.subr.mxu0 0.0
      %1566 = vmatpush2.msra.mxu0 0.0
      %1567 = vmatprep.subr.mxu0 0.0
      %1568 = vmatpush2.msra.mxu0 0.0
      %1569 = vmatprep.subr.mxu0 0.0
      %1570 = vmatpush2.msra.mxu0 0.0
      %1571 = vmatprep.subr.mxu0 0.0
      %1572 = vmatpush2.msra.mxu0 0.0
      %1573 = vmatprep.subr.mxu0 0.0
      %1574 = vmatpush2.msra.mxu0 0.0
      %1575 = vmatprep.subr.mxu0 0.0
      %1576 = vmatpush2.msra.mxu0 0.0
      %1577 = vmatprep.subr.mxu0 0.0
      %1578 = vmatpush2.msra.mxu0 0.0
      %1579 = vmatprep.subr.mxu0 0.0
      %1580 = vmatpush2.msra.mxu0 0.0
      %1581 = vmatprep.subr.mxu0 0.0
      %1582 = vmatpush2.msra.mxu0 0.0
      %1583 = vmatprep.subr.mxu0 0.0
      %1584 = vmatpush2.msra.mxu0 0.0
      %1585 = vmatprep.subr.mxu0 0.0
      %1586 = vmatpush2.msra.mxu0 0.0
      %1587 = vmatprep.subr.mxu0 0.0
      %1588 = vmatpush2.msra.mxu0 0.0
      %1589 = vmatprep.subr.mxu0 0.0
      %1590 = vmatpush2.msra.mxu0 0.0
      %1591 = vmatprep.subr.mxu0 0.0
      %1592 = vmatpush2.msra.mxu0 0.0
      %1593 = vmatprep.subr.mxu0 0.0
      %1594 = vmatpush2.msra.mxu0 0.0
      %1595 = vmatprep.mubr.f32.mxu0 0.0
      %1596 = vmatmul.mubr.f32.gmra.mxu0 %v1406
      %v1597 = vpop.f32.mrf.mxu0
      %v1598 = vadd.f32 0.0, %v1597
      %v1599 = vpop.f32.mrf.mxu0
      %1600 = vmatprep.mubr.f32.mxu0 0.0
      %1601 = vmatmul.mubr.f32.gmra.mxu0 %v1409
      %v1602 = vpop.f32.mrf.mxu0
      %v1603 = vadd.f32 0.0, %v1602
      %v1604 = vpop.f32.mrf.mxu0
      %1605 = vmatprep.mubr.f32.mxu0 0.0
      %1606 = vmatmul.mubr.f32.gmra.mxu0 %v1412
      %v1607 = vpop.f32.mrf.mxu0
      %v1608 = vadd.f32 0.0, %v1607
      %v1609 = vpop.f32.mrf.mxu0
      %1610 = vmatprep.mubr.f32.mxu0 0.0
      %1611 = vmatmul.mubr.f32.gmra.mxu0 %v1415
      %v1612 = vpop.f32.mrf.mxu0
      %v1613 = vadd.f32 0.0, %v1612
      %v1614 = vpop.f32.mrf.mxu0
      %1615 = vmatprep.mubr.f32.mxu0 0.0
      %1616 = vmatmul.mubr.f32.gmra.mxu0 %v1418
      %v1617 = vpop.f32.mrf.mxu0
      %v1618 = vadd.f32 0.0, %v1617
      %v1619 = vpop.f32.mrf.mxu0
      %1620 = vmatprep.mubr.f32.mxu0 0.0
      %1621 = vmatmul.mubr.f32.gmra.mxu0 %v1421
      %v1622 = vpop.f32.mrf.mxu0
      %v1623 = vadd.f32 0.0, %v1622
      %v1624 = vpop.f32.mrf.mxu0
      %1625 = vmatprep.mubr.f32.mxu0 0.0
      %1626 = vmatmul.mubr.f32.gmra.mxu0 %v1424
      %v1627 = vpop.f32.mrf.mxu0
      %v1628 = vadd.f32 0.0, %v1627
      %v1629 = vpop.f32.mrf.mxu0
      %1630 = vmatprep.mubr.f32.mxu0 0.0
      %1631 = vmatmul.mubr.f32.gmra.mxu0 %v1427
      %v1632 = vpop.f32.mrf.mxu0
      %v1633 = vadd.f32 0.0, %v1632
      %v1634 = vpop.f32.mrf.mxu0
      %1635 = vmatprep.mubr.f32.mxu0 0.0
      %1636 = vmatmul.mubr.f32.gmra.mxu0 %v1430
      %v1637 = vpop.f32.mrf.mxu0
      %v1638 = vadd.f32 0.0, %v1637
      %v1639 = vpop.f32.mrf.mxu0
      %1640 = vmatprep.mubr.f32.mxu0 0.0
      %1641 = vmatmul.mubr.f32.gmra.mxu0 %v1433
      %v1642 = vpop.f32.mrf.mxu0
      %v1643 = vadd.f32 0.0, %v1642
      %v1644 = vpop.f32.mrf.mxu0
      %1645 = vmatprep.mubr.f32.mxu0 0.0
      %1646 = vmatmul.mubr.f32.gmra.mxu0 %v1436
      %v1647 = vpop.f32.mrf.mxu0
      %v1648 = vadd.f32 0.0, %v1647
      %v1649 = vpop.f32.mrf.mxu0
      %1650 = vmatprep.mubr.f32.mxu0 0.0
      %1651 = vmatmul.mubr.f32.gmra.mxu0 %v1439
      %v1652 = vpop.f32.mrf.mxu0
      %v1653 = vadd.f32 0.0, %v1652
      %v1654 = vpop.f32.mrf.mxu0
      %1655 = vmatprep.mubr.f32.mxu0 0.0
      %1656 = vmatmul.mubr.f32.gmra.mxu0 %v1442
      %v1657 = vpop.f32.mrf.mxu0
      %v1658 = vadd.f32 0.0, %v1657
      %v1659 = vpop.f32.mrf.mxu0
      %1660 = vmatprep.mubr.f32.mxu0 0.0
      %1661 = vmatmul.mubr.f32.gmra.mxu0 %v1445
      %v1662 = vpop.f32.mrf.mxu0
      %v1663 = vadd.f32 0.0, %v1662
      %v1664 = vpop.f32.mrf.mxu0
      %1665 = vmatprep.mubr.f32.mxu0 0.0
      %1666 = vmatmul.mubr.f32.gmra.mxu0 %v1448
      %v1667 = vpop.f32.mrf.mxu0
      %v1668 = vadd.f32 0.0, %v1667
      %v1669 = vpop.f32.mrf.mxu0
      %1670 = vmatprep.mubr.f32.mxu0 0.0
      %1671 = vmatmul.mubr.f32.gmra.mxu0 %v1451
      %v1672 = vpop.f32.mrf.mxu0
      %v1673 = vadd.f32 0.0, %v1672
      %v1674 = vpop.f32.mrf.mxu0
      %1675 = vmatprep.mubr.f32.mxu0 0.0
      %1676 = vmatmul.mubr.f32.gmra.mxu0 %v1454
      %v1677 = vpop.f32.mrf.mxu0
      %v1678 = vadd.f32 0.0, %v1677
      %v1679 = vpop.f32.mrf.mxu0
      %1680 = vmatprep.mubr.f32.mxu0 0.0
      %1681 = vmatmul.mubr.f32.gmra.mxu0 %v1457
      %v1682 = vpop.f32.mrf.mxu0
      %v1683 = vadd.f32 0.0, %v1682
      %v1684 = vpop.f32.mrf.mxu0
      %1685 = vmatprep.mubr.f32.mxu0 0.0
      %1686 = vmatmul.mubr.f32.gmra.mxu0 %v1460
      %v1687 = vpop.f32.mrf.mxu0
      %v1688 = vadd.f32 0.0, %v1687
      %v1689 = vpop.f32.mrf.mxu0
      %1690 = vmatprep.mubr.f32.mxu0 0.0
      %1691 = vmatmul.mubr.f32.gmra.mxu0 %v1463
      %v1692 = vpop.f32.mrf.mxu0
      %v1693 = vadd.f32 0.0, %v1692
      %v1694 = vpop.f32.mrf.mxu0
      %1695 = vmatprep.mubr.f32.mxu0 0.0
      %1696 = vmatmul.mubr.f32.gmra.mxu0 %v1466
      %v1697 = vpop.f32.mrf.mxu0
      %v1698 = vadd.f32 0.0, %v1697
      %v1699 = vpop.f32.mrf.mxu0
      %1700 = vmatprep.mubr.f32.mxu0 0.0
      %1701 = vmatmul.mubr.f32.gmra.mxu0 %v1469
      %v1702 = vpop.f32.mrf.mxu0
      %v1703 = vadd.f32 0.0, %v1702
      %v1704 = vpop.f32.mrf.mxu0
      %1705 = vmatprep.mubr.f32.mxu0 0.0
      %1706 = vmatmul.mubr.f32.gmra.mxu0 %v1472
      %v1707 = vpop.f32.mrf.mxu0
      %v1708 = vadd.f32 0.0, %v1707
      %v1709 = vpop.f32.mrf.mxu0
      %1710 = vmatprep.mubr.f32.mxu0 0.0
      %1711 = vmatmul.mubr.f32.gmra.mxu0 %v1475
      %v1712 = vpop.f32.mrf.mxu0
      %v1713 = vadd.f32 0.0, %v1712
      %v1714 = vpop.f32.mrf.mxu0
      %1715 = vmatprep.mubr.f32.mxu0 0.0
      %1716 = vmatmul.mubr.f32.gmra.mxu0 %v1478
      %v1717 = vpop.f32.mrf.mxu0
      %v1718 = vadd.f32 0.0, %v1717
      %v1719 = vpop.f32.mrf.mxu0
      %1720 = vmatprep.mubr.f32.mxu0 0.0
      %1721 = vmatmul.mubr.f32.gmra.mxu0 %v1481
      %v1722 = vpop.f32.mrf.mxu0
      %v1723 = vadd.f32 0.0, %v1722
      %v1724 = vpop.f32.mrf.mxu0
      %1725 = vmatprep.mubr.f32.mxu0 0.0
      %1726 = vmatmul.mubr.f32.gmra.mxu0 %v1484
      %v1727 = vpop.f32.mrf.mxu0
      %v1728 = vadd.f32 0.0, %v1727
      %v1729 = vpop.f32.mrf.mxu0
      %1730 = vmatprep.mubr.f32.mxu0 0.0
      %1731 = vmatmul.mubr.f32.gmra.mxu0 %v1487
      %v1732 = vpop.f32.mrf.mxu0
      %v1733 = vadd.f32 0.0, %v1732
      %v1734 = vpop.f32.mrf.mxu0
      %1735 = vmatprep.mubr.f32.mxu0 0.0
      %1736 = vmatmul.mubr.f32.gmra.mxu0 %v1490
      %v1737 = vpop.f32.mrf.mxu0
      %v1738 = vadd.f32 0.0, %v1737
      %v1739 = vpop.f32.mrf.mxu0
      %1740 = vmatprep.mubr.f32.mxu0 0.0
      %1741 = vmatmul.mubr.f32.gmra.mxu0 %v1493
      %v1742 = vpop.f32.mrf.mxu0
      %v1743 = vadd.f32 0.0, %v1742
      %v1744 = vpop.f32.mrf.mxu0
      %1745 = vmatprep.mubr.f32.mxu0 0.0
      %1746 = vmatmul.mubr.f32.gmra.mxu0 %v1496
      %v1747 = vpop.f32.mrf.mxu0
      %v1748 = vadd.f32 0.0, %v1747
      %v1749 = vpop.f32.mrf.mxu0
      %1750 = vmatprep.mubr.f32.mxu0 0.0
      %1751 = vmatmul.mubr.f32.gmra.mxu0 %v1499
      %v1752 = vpop.f32.mrf.mxu0
      %v1753 = vadd.f32 0.0, %v1752
      %v1754 = vpop.f32.mrf.mxu0
      %1755 = vmatprep.mubr.f32.mxu0 0.0
      %1756 = vmatmul.mubr.f32.gmra.mxu0 %v1502
      %v1757 = vpop.f32.mrf.mxu0
      %v1758 = vadd.f32 0.0, %v1757
      %v1759 = vpop.f32.mrf.mxu0
      %1760 = vmatprep.mubr.f32.mxu0 0.0
      %1761 = vmatmul.mubr.f32.gmra.mxu0 %v1505
      %v1762 = vpop.f32.mrf.mxu0
      %v1763 = vadd.f32 0.0, %v1762
      %v1764 = vpop.f32.mrf.mxu0
      %1765 = vmatprep.mubr.f32.mxu0 0.0
      %1766 = vmatmul.mubr.f32.gmra.mxu0 %v1508
      %v1767 = vpop.f32.mrf.mxu0
      %v1768 = vadd.f32 0.0, %v1767
      %v1769 = vpop.f32.mrf.mxu0
      %1770 = vmatprep.mubr.f32.mxu0 0.0
      %1771 = vmatmul.mubr.f32.gmra.mxu0 %v1511
      %v1772 = vpop.f32.mrf.mxu0
      %v1773 = vadd.f32 0.0, %v1772
      %v1774 = vpop.f32.mrf.mxu0
      %1775 = vmatprep.mubr.f32.mxu0 0.0
      %1776 = vmatmul.mubr.f32.gmra.mxu0 %v1514
      %v1777 = vpop.f32.mrf.mxu0
      %v1778 = vadd.f32 0.0, %v1777
      %v1779 = vpop.f32.mrf.mxu0
      %1780 = vmatprep.mubr.f32.mxu0 0.0
      %1781 = vmatmul.mubr.f32.gmra.mxu0 %v1517
      %v1782 = vpop.f32.mrf.mxu0
      %v1783 = vadd.f32 0.0, %v1782
      %v1784 = vpop.f32.mrf.mxu0
      %1785 = vmatprep.mubr.f32.mxu0 0.0
      %1786 = vmatmul.mubr.f32.gmra.mxu0 %v1520
      %v1787 = vpop.f32.mrf.mxu0
      %v1788 = vadd.f32 0.0, %v1787
      %v1789 = vpop.f32.mrf.mxu0
      %1790 = vmatprep.mubr.f32.mxu0 0.0
      %1791 = vmatmul.mubr.f32.gmra.mxu0 %v1523
      %v1792 = vpop.f32.mrf.mxu0
      %v1793 = vadd.f32 0.0, %v1792
      %v1794 = vpop.f32.mrf.mxu0
      %1795 = vmatprep.mubr.f32.mxu0 0.0
      %1796 = vmatmul.mubr.f32.gmra.mxu0 %v1526
      %v1797 = vpop.f32.mrf.mxu0
      %v1798 = vadd.f32 0.0, %v1797
      %v1799 = vpop.f32.mrf.mxu0
      %1800 = vdwg.mxu0
      %v1801 = vadd.f32 %v1159, %v1598
      %v1802 = vadd.f32 %v1164, %v1603
      %v1803 = vadd.f32 %v1169, %v1608
      %v1804 = vadd.f32 %v1174, %v1613
      %v1805 = vadd.f32 %v1179, %v1618
      %v1806 = vadd.f32 %v1184, %v1623
      %v1807 = vadd.f32 %v1189, %v1628
      %v1808 = vadd.f32 %v1194, %v1633
      %v1809 = vadd.f32 %v1199, %v1638
      %v1810 = vadd.f32 %v1204, %v1643
      %v1811 = vadd.f32 %v1209, %v1648
      %v1812 = vadd.f32 %v1214, %v1653
      %v1813 = vadd.f32 %v1219, %v1658
      %v1814 = vadd.f32 %v1224, %v1663
      %v1815 = vadd.f32 %v1229, %v1668
      %v1816 = vadd.f32 %v1234, %v1673
      %v1817 = vadd.f32 %v1239, %v1678
      %v1818 = vadd.f32 %v1244, %v1683
      %v1819 = vadd.f32 %v1249, %v1688
      %v1820 = vadd.f32 %v1254, %v1693
      %v1821 = vadd.f32 %v1259, %v1698
      %v1822 = vadd.f32 %v1264, %v1703
      %v1823 = vadd.f32 %v1269, %v1708
      %v1824 = vadd.f32 %v1274, %v1713
      %v1825 = vadd.f32 %v1279, %v1718
      %v1826 = vadd.f32 %v1284, %v1723
      %v1827 = vadd.f32 %v1289, %v1728
      %v1828 = vadd.f32 %v1294, %v1733
      %v1829 = vadd.f32 %v1299, %v1738
      %v1830 = vadd.f32 %v1304, %v1743
      %v1831 = vadd.f32 %v1309, %v1748
      %v1832 = vadd.f32 %v1314, %v1753
      %v1833 = vadd.f32 %v1319, %v1758
      %v1834 = vadd.f32 %v1324, %v1763
      %v1835 = vadd.f32 %v1329, %v1768
      %v1836 = vadd.f32 %v1334, %v1773
      %v1837 = vadd.f32 %v1339, %v1778
      %v1838 = vadd.f32 %v1344, %v1783
      %v1839 = vadd.f32 %v1349, %v1788
      %v1840 = vadd.f32 %v1354, %v1793
      %v1841 = vadd.f32 %v1359, %v1798
      %v1842 = vld [vmem:[#allocation2 + $0x12] sm:$0xff]
      %v1843 = vld [vmem:[#allocation2 + $0x1a] sm:$0xff]
      %v1844 = vld [vmem:[#allocation2 + $0x22] sm:$0xff]
      %v1845 = vld [vmem:[#allocation2 + $0x2a] sm:$0xff]
      %v1846 = vld [vmem:[#allocation2 + $0x32] sm:$0xff]
      %v1847 = vld [vmem:[#allocation2 + $0x3a] sm:$0xff]
      %v1848 = vld [vmem:[#allocation2 + $0x42] sm:$0xff]
      %v1849 = vld [vmem:[#allocation2 + $0x4a] sm:$0xff]
      %v1850 = vld [vmem:[#allocation2 + $0x52] sm:$0xff]
      %v1851 = vld [vmem:[#allocation2 + $0x5a] sm:$0xff]
      %v1852 = vld [vmem:[#allocation2 + $0x62] sm:$0xff]
      %v1853 = vld [vmem:[#allocation2 + $0x6a] sm:$0xff]
      %v1854 = vld [vmem:[#allocation2 + $0x72] sm:$0xff]
      %v1855 = vld [vmem:[#allocation2 + $0x7a] sm:$0xff]
      %v1856 = vld [vmem:[#allocation2 + $0x82] sm:$0xff]
      %v1857 = vld [vmem:[#allocation2 + $0x8a] sm:$0xff]
      %v1858 = vld [vmem:[#allocation2 + $0x92] sm:$0xff]
      %v1859 = vld [vmem:[#allocation2 + $0x9a] sm:$0xff]
      %v1860 = vld [vmem:[#allocation2 + $0xa2] sm:$0xff]
      %v1861 = vld [vmem:[#allocation2 + $0xaa] sm:$0xff]
      %v1862 = vld [vmem:[#allocation2 + $0xb2] sm:$0xff]
      %v1863 = vld [vmem:[#allocation2 + $0xba] sm:$0xff]
      %v1864 = vld [vmem:[#allocation2 + $0xc2] sm:$0xff]
      %v1865 = vld [vmem:[#allocation2 + $0xca] sm:$0xff]
      %v1866 = vld [vmem:[#allocation2 + $0xd2] sm:$0xff]
      %v1867 = vld [vmem:[#allocation2 + $0xda] sm:$0xff]
      %v1868 = vld [vmem:[#allocation2 + $0xe2] sm:$0xff]
      %v1869 = vld [vmem:[#allocation2 + $0xea] sm:$0xff]
      %v1870 = vld [vmem:[#allocation2 + $0xf2] sm:$0xff]
      %v1871 = vld [vmem:[#allocation2 + $0xfa] sm:$0xff]
      %v1872 = vld [vmem:[#allocation2 + $0x102] sm:$0xff]
      %v1873 = vld [vmem:[#allocation2 + $0x10a] sm:$0xff]
      %v1874 = vld [vmem:[#allocation2 + $0x112] sm:$0xff]
      %v1875 = vld [vmem:[#allocation2 + $0x11a] sm:$0xff]
      %v1876 = vld [vmem:[#allocation2 + $0x122] sm:$0xff]
      %v1877 = vld [vmem:[#allocation2 + $0x12a] sm:$0xff]
      %v1878 = vld [vmem:[#allocation2 + $0x132] sm:$0xff]
      %v1879 = vld [vmem:[#allocation2 + $0x13a] sm:$0xff]
      %v1880 = vld [vmem:[#allocation2 + $0x142] sm:$0xff]
      %v1881 = vld [vmem:[#allocation2 + $0x14a] sm:$0xff]
      %v1882 = vld [vmem:[#allocation2 + $0x152] sm:$0xf]
      %s1883 = scalar_lea.vmem %s1, 12
      %v1884 = vld [vmem:[%s1883] sm:$0xf]
      %v1886 = vsel %vm306, %v1842, 0
      %v1889 = vsel %vm306, %v1843, 0
      %v1892 = vsel %vm306, %v1844, 0
      %v1895 = vsel %vm306, %v1845, 0
      %v1898 = vsel %vm306, %v1846, 0
      %v1901 = vsel %vm306, %v1847, 0
      %v1904 = vsel %vm306, %v1848, 0
      %v1907 = vsel %vm306, %v1849, 0
      %v1910 = vsel %vm306, %v1850, 0
      %v1913 = vsel %vm306, %v1851, 0
      %v1916 = vsel %vm306, %v1852, 0
      %v1919 = vsel %vm306, %v1853, 0
      %v1922 = vsel %vm306, %v1854, 0
      %v1925 = vsel %vm306, %v1855, 0
      %v1928 = vsel %vm306, %v1856, 0
      %v1931 = vsel %vm306, %v1857, 0
      %v1934 = vsel %vm306, %v1858, 0
      %v1937 = vsel %vm306, %v1859, 0
      %v1940 = vsel %vm306, %v1860, 0
      %v1943 = vsel %vm306, %v1861, 0
      %v1946 = vsel %vm306, %v1862, 0
      %v1949 = vsel %vm306, %v1863, 0
      %v1952 = vsel %vm306, %v1864, 0
      %v1955 = vsel %vm306, %v1865, 0
      %v1958 = vsel %vm306, %v1866, 0
      %v1961 = vsel %vm306, %v1867, 0
      %v1964 = vsel %vm306, %v1868, 0
      %v1967 = vsel %vm306, %v1869, 0
      %v1970 = vsel %vm306, %v1870, 0
      %v1973 = vsel %vm306, %v1871, 0
      %v1976 = vsel %vm306, %v1872, 0
      %v1979 = vsel %vm306, %v1873, 0
      %v1982 = vsel %vm306, %v1874, 0
      %v1985 = vsel %vm306, %v1875, 0
      %v1988 = vsel %vm306, %v1876, 0
      %v1991 = vsel %vm306, %v1877, 0
      %v1994 = vsel %vm306, %v1878, 0
      %v1997 = vsel %vm306, %v1879, 0
      %v2000 = vsel %vm306, %v1880, 0
      %v2003 = vsel %vm306, %v1881, 0
      %v2006 = vsel %vm306, %v1882, 0
      %v2009 = vsel %vm692, %v1884, 0
      %2011 = vmatprep.subr.mxu0 0.0
      %2012 = vmatpush1.msra.mxu0 0.0
      %2013 = vmatprep.subr.mxu0 0.0
      %2014 = vmatpush1.msra.mxu0 0.0
      %2015 = vmatprep.subr.mxu0 0.0
      %2016 = vmatpush1.msra.mxu0 0.0
      %2017 = vmatprep.subr.mxu0 0.0
      %2018 = vmatpush1.msra.mxu0 0.0
      %2019 = vmatprep.subr.mxu0 0.0
      %2020 = vmatpush1.msra.mxu0 0.0
      %2021 = vmatprep.subr.mxu0 0.0
      %2022 = vmatpush1.msra.mxu0 0.0
      %2023 = vmatprep.subr.mxu0 0.0
      %2024 = vmatpush1.msra.mxu0 0.0
      %2025 = vmatprep.subr.mxu0 0.0
      %2026 = vmatpush1.msra.mxu0 0.0
      %2027 = vmatprep.subr.mxu0 0.0
      %2028 = vmatpush1.msra.mxu0 0.0
      %2029 = vmatprep.subr.mxu0 0.0
      %2030 = vmatpush1.msra.mxu0 0.0
      %2031 = vmatprep.subr.mxu0 0.0
      %2032 = vmatpush1.msra.mxu0 0.0
      %2033 = vmatprep.subr.mxu0 0.0
      %2034 = vmatpush1.msra.mxu0 0.0
      %2035 = vmatprep.subr.mxu0 0.0
      %2036 = vmatpush1.msra.mxu0 0.0
      %2037 = vmatprep.subr.mxu0 0.0
      %2038 = vmatpush1.msra.mxu0 0.0
      %2039 = vmatprep.subr.mxu0 0.0
      %2040 = vmatpush1.msra.mxu0 0.0
      %2041 = vmatprep.subr.mxu0 0.0
      %2042 = vmatpush1.msra.mxu0 %v2009
      %2043 = vmatprep.subr.mxu0 0.0
      %2044 = vmatpush2.msra.mxu0 0.0
      %2045 = vmatprep.subr.mxu0 0.0
      %2046 = vmatpush2.msra.mxu0 0.0
      %2047 = vmatprep.subr.mxu0 0.0
      %2048 = vmatpush2.msra.mxu0 0.0
      %2049 = vmatprep.subr.mxu0 0.0
      %2050 = vmatpush2.msra.mxu0 0.0
      %2051 = vmatprep.subr.mxu0 0.0
      %2052 = vmatpush2.msra.mxu0 0.0
      %2053 = vmatprep.subr.mxu0 0.0
      %2054 = vmatpush2.msra.mxu0 0.0
      %2055 = vmatprep.subr.mxu0 0.0
      %2056 = vmatpush2.msra.mxu0 0.0
      %2057 = vmatprep.subr.mxu0 0.0
      %2058 = vmatpush2.msra.mxu0 0.0
      %2059 = vmatprep.subr.mxu0 0.0
      %2060 = vmatpush2.msra.mxu0 0.0
      %2061 = vmatprep.subr.mxu0 0.0
      %2062 = vmatpush2.msra.mxu0 0.0
      %2063 = vmatprep.subr.mxu0 0.0
      %2064 = vmatpush2.msra.mxu0 0.0
      %2065 = vmatprep.subr.mxu0 0.0
      %2066 = vmatpush2.msra.mxu0 0.0
      %2067 = vmatprep.subr.mxu0 0.0
      %2068 = vmatpush2.msra.mxu0 0.0
      %2069 = vmatprep.subr.mxu0 0.0
      %2070 = vmatpush2.msra.mxu0 0.0
      %2071 = vmatprep.subr.mxu0 0.0
      %2072 = vmatpush2.msra.mxu0 0.0
      %2073 = vmatprep.subr.mxu0 0.0
      %2074 = vmatpush2.msra.mxu0 0.0
      %2075 = vmatprep.mubr.f32.mxu0 0.0
      %2076 = vmatmul.mubr.f32.gmra.mxu0 %v1886
      %v2077 = vpop.f32.mrf.mxu0
      %v2078 = vadd.f32 0.0, %v2077
      %v2079 = vpop.f32.mrf.mxu0
      %2080 = vmatprep.mubr.f32.mxu0 0.0
      %2081 = vmatmul.mubr.f32.gmra.mxu0 %v1889
      %v2082 = vpop.f32.mrf.mxu0
      %v2083 = vadd.f32 0.0, %v2082
      %v2084 = vpop.f32.mrf.mxu0
      %2085 = vmatprep.mubr.f32.mxu0 0.0
      %2086 = vmatmul.mubr.f32.gmra.mxu0 %v1892
      %v2087 = vpop.f32.mrf.mxu0
      %v2088 = vadd.f32 0.0, %v2087
      %v2089 = vpop.f32.mrf.mxu0
      %2090 = vmatprep.mubr.f32.mxu0 0.0
      %2091 = vmatmul.mubr.f32.gmra.mxu0 %v1895
      %v2092 = vpop.f32.mrf.mxu0
      %v2093 = vadd.f32 0.0, %v2092
      %v2094 = vpop.f32.mrf.mxu0
      %2095 = vmatprep.mubr.f32.mxu0 0.0
      %2096 = vmatmul.mubr.f32.gmra.mxu0 %v1898
      %v2097 = vpop.f32.mrf.mxu0
      %v2098 = vadd.f32 0.0, %v2097
      %v2099 = vpop.f32.mrf.mxu0
      %2100 = vmatprep.mubr.f32.mxu0 0.0
      %2101 = vmatmul.mubr.f32.gmra.mxu0 %v1901
      %v2102 = vpop.f32.mrf.mxu0
      %v2103 = vadd.f32 0.0, %v2102
      %v2104 = vpop.f32.mrf.mxu0
      %2105 = vmatprep.mubr.f32.mxu0 0.0
      %2106 = vmatmul.mubr.f32.gmra.mxu0 %v1904
      %v2107 = vpop.f32.mrf.mxu0
      %v2108 = vadd.f32 0.0, %v2107
      %v2109 = vpop.f32.mrf.mxu0
      %2110 = vmatprep.mubr.f32.mxu0 0.0
      %2111 = vmatmul.mubr.f32.gmra.mxu0 %v1907
      %v2112 = vpop.f32.mrf.mxu0
      %v2113 = vadd.f32 0.0, %v2112
      %v2114 = vpop.f32.mrf.mxu0
      %2115 = vmatprep.mubr.f32.mxu0 0.0
      %2116 = vmatmul.mubr.f32.gmra.mxu0 %v1910
      %v2117 = vpop.f32.mrf.mxu0
      %v2118 = vadd.f32 0.0, %v2117
      %v2119 = vpop.f32.mrf.mxu0
      %2120 = vmatprep.mubr.f32.mxu0 0.0
      %2121 = vmatmul.mubr.f32.gmra.mxu0 %v1913
      %v2122 = vpop.f32.mrf.mxu0
      %v2123 = vadd.f32 0.0, %v2122
      %v2124 = vpop.f32.mrf.mxu0
      %2125 = vmatprep.mubr.f32.mxu0 0.0
      %2126 = vmatmul.mubr.f32.gmra.mxu0 %v1916
      %v2127 = vpop.f32.mrf.mxu0
      %v2128 = vadd.f32 0.0, %v2127
      %v2129 = vpop.f32.mrf.mxu0
      %2130 = vmatprep.mubr.f32.mxu0 0.0
      %2131 = vmatmul.mubr.f32.gmra.mxu0 %v1919
      %v2132 = vpop.f32.mrf.mxu0
      %v2133 = vadd.f32 0.0, %v2132
      %v2134 = vpop.f32.mrf.mxu0
      %2135 = vmatprep.mubr.f32.mxu0 0.0
      %2136 = vmatmul.mubr.f32.gmra.mxu0 %v1922
      %v2137 = vpop.f32.mrf.mxu0
      %v2138 = vadd.f32 0.0, %v2137
      %v2139 = vpop.f32.mrf.mxu0
      %2140 = vmatprep.mubr.f32.mxu0 0.0
      %2141 = vmatmul.mubr.f32.gmra.mxu0 %v1925
      %v2142 = vpop.f32.mrf.mxu0
      %v2143 = vadd.f32 0.0, %v2142
      %v2144 = vpop.f32.mrf.mxu0
      %2145 = vmatprep.mubr.f32.mxu0 0.0
      %2146 = vmatmul.mubr.f32.gmra.mxu0 %v1928
      %v2147 = vpop.f32.mrf.mxu0
      %v2148 = vadd.f32 0.0, %v2147
      %v2149 = vpop.f32.mrf.mxu0
      %2150 = vmatprep.mubr.f32.mxu0 0.0
      %2151 = vmatmul.mubr.f32.gmra.mxu0 %v1931
      %v2152 = vpop.f32.mrf.mxu0
      %v2153 = vadd.f32 0.0, %v2152
      %v2154 = vpop.f32.mrf.mxu0
      %2155 = vmatprep.mubr.f32.mxu0 0.0
      %2156 = vmatmul.mubr.f32.gmra.mxu0 %v1934
      %v2157 = vpop.f32.mrf.mxu0
      %v2158 = vadd.f32 0.0, %v2157
      %v2159 = vpop.f32.mrf.mxu0
      %2160 = vmatprep.mubr.f32.mxu0 0.0
      %2161 = vmatmul.mubr.f32.gmra.mxu0 %v1937
      %v2162 = vpop.f32.mrf.mxu0
      %v2163 = vadd.f32 0.0, %v2162
      %v2164 = vpop.f32.mrf.mxu0
      %2165 = vmatprep.mubr.f32.mxu0 0.0
      %2166 = vmatmul.mubr.f32.gmra.mxu0 %v1940
      %v2167 = vpop.f32.mrf.mxu0
      %v2168 = vadd.f32 0.0, %v2167
      %v2169 = vpop.f32.mrf.mxu0
      %2170 = vmatprep.mubr.f32.mxu0 0.0
      %2171 = vmatmul.mubr.f32.gmra.mxu0 %v1943
      %v2172 = vpop.f32.mrf.mxu0
      %v2173 = vadd.f32 0.0, %v2172
      %v2174 = vpop.f32.mrf.mxu0
      %2175 = vmatprep.mubr.f32.mxu0 0.0
      %2176 = vmatmul.mubr.f32.gmra.mxu0 %v1946
      %v2177 = vpop.f32.mrf.mxu0
      %v2178 = vadd.f32 0.0, %v2177
      %v2179 = vpop.f32.mrf.mxu0
      %2180 = vmatprep.mubr.f32.mxu0 0.0
      %2181 = vmatmul.mubr.f32.gmra.mxu0 %v1949
      %v2182 = vpop.f32.mrf.mxu0
      %v2183 = vadd.f32 0.0, %v2182
      %v2184 = vpop.f32.mrf.mxu0
      %2185 = vmatprep.mubr.f32.mxu0 0.0
      %2186 = vmatmul.mubr.f32.gmra.mxu0 %v1952
      %v2187 = vpop.f32.mrf.mxu0
      %v2188 = vadd.f32 0.0, %v2187
      %v2189 = vpop.f32.mrf.mxu0
      %2190 = vmatprep.mubr.f32.mxu0 0.0
      %2191 = vmatmul.mubr.f32.gmra.mxu0 %v1955
      %v2192 = vpop.f32.mrf.mxu0
      %v2193 = vadd.f32 0.0, %v2192
      %v2194 = vpop.f32.mrf.mxu0
      %2195 = vmatprep.mubr.f32.mxu0 0.0
      %2196 = vmatmul.mubr.f32.gmra.mxu0 %v1958
      %v2197 = vpop.f32.mrf.mxu0
      %v2198 = vadd.f32 0.0, %v2197
      %v2199 = vpop.f32.mrf.mxu0
      %2200 = vmatprep.mubr.f32.mxu0 0.0
      %2201 = vmatmul.mubr.f32.gmra.mxu0 %v1961
      %v2202 = vpop.f32.mrf.mxu0
      %v2203 = vadd.f32 0.0, %v2202
      %v2204 = vpop.f32.mrf.mxu0
      %2205 = vmatprep.mubr.f32.mxu0 0.0
      %2206 = vmatmul.mubr.f32.gmra.mxu0 %v1964
      %v2207 = vpop.f32.mrf.mxu0
      %v2208 = vadd.f32 0.0, %v2207
      %v2209 = vpop.f32.mrf.mxu0
      %2210 = vmatprep.mubr.f32.mxu0 0.0
      %2211 = vmatmul.mubr.f32.gmra.mxu0 %v1967
      %v2212 = vpop.f32.mrf.mxu0
      %v2213 = vadd.f32 0.0, %v2212
      %v2214 = vpop.f32.mrf.mxu0
      %2215 = vmatprep.mubr.f32.mxu0 0.0
      %2216 = vmatmul.mubr.f32.gmra.mxu0 %v1970
      %v2217 = vpop.f32.mrf.mxu0
      %v2218 = vadd.f32 0.0, %v2217
      %v2219 = vpop.f32.mrf.mxu0
      %2220 = vmatprep.mubr.f32.mxu0 0.0
      %2221 = vmatmul.mubr.f32.gmra.mxu0 %v1973
      %v2222 = vpop.f32.mrf.mxu0
      %v2223 = vadd.f32 0.0, %v2222
      %v2224 = vpop.f32.mrf.mxu0
      %2225 = vmatprep.mubr.f32.mxu0 0.0
      %2226 = vmatmul.mubr.f32.gmra.mxu0 %v1976
      %v2227 = vpop.f32.mrf.mxu0
      %v2228 = vadd.f32 0.0, %v2227
      %v2229 = vpop.f32.mrf.mxu0
      %2230 = vmatprep.mubr.f32.mxu0 0.0
      %2231 = vmatmul.mubr.f32.gmra.mxu0 %v1979
      %v2232 = vpop.f32.mrf.mxu0
      %v2233 = vadd.f32 0.0, %v2232
      %v2234 = vpop.f32.mrf.mxu0
      %2235 = vmatprep.mubr.f32.mxu0 0.0
      %2236 = vmatmul.mubr.f32.gmra.mxu0 %v1982
      %v2237 = vpop.f32.mrf.mxu0
      %v2238 = vadd.f32 0.0, %v2237
      %v2239 = vpop.f32.mrf.mxu0
      %2240 = vmatprep.mubr.f32.mxu0 0.0
      %2241 = vmatmul.mubr.f32.gmra.mxu0 %v1985
      %v2242 = vpop.f32.mrf.mxu0
      %v2243 = vadd.f32 0.0, %v2242
      %v2244 = vpop.f32.mrf.mxu0
      %2245 = vmatprep.mubr.f32.mxu0 0.0
      %2246 = vmatmul.mubr.f32.gmra.mxu0 %v1988
      %v2247 = vpop.f32.mrf.mxu0
      %v2248 = vadd.f32 0.0, %v2247
      %v2249 = vpop.f32.mrf.mxu0
      %2250 = vmatprep.mubr.f32.mxu0 0.0
      %2251 = vmatmul.mubr.f32.gmra.mxu0 %v1991
      %v2252 = vpop.f32.mrf.mxu0
      %v2253 = vadd.f32 0.0, %v2252
      %v2254 = vpop.f32.mrf.mxu0
      %2255 = vmatprep.mubr.f32.mxu0 0.0
      %2256 = vmatmul.mubr.f32.gmra.mxu0 %v1994
      %v2257 = vpop.f32.mrf.mxu0
      %v2258 = vadd.f32 0.0, %v2257
      %v2259 = vpop.f32.mrf.mxu0
      %2260 = vmatprep.mubr.f32.mxu0 0.0
      %2261 = vmatmul.mubr.f32.gmra.mxu0 %v1997
      %v2262 = vpop.f32.mrf.mxu0
      %v2263 = vadd.f32 0.0, %v2262
      %v2264 = vpop.f32.mrf.mxu0
      %2265 = vmatprep.mubr.f32.mxu0 0.0
      %2266 = vmatmul.mubr.f32.gmra.mxu0 %v2000
      %v2267 = vpop.f32.mrf.mxu0
      %v2268 = vadd.f32 0.0, %v2267
      %v2269 = vpop.f32.mrf.mxu0
      %2270 = vmatprep.mubr.f32.mxu0 0.0
      %2271 = vmatmul.mubr.f32.gmra.mxu0 %v2003
      %v2272 = vpop.f32.mrf.mxu0
      %v2273 = vadd.f32 0.0, %v2272
      %v2274 = vpop.f32.mrf.mxu0
      %2275 = vmatprep.mubr.f32.mxu0 0.0
      %2276 = vmatmul.mubr.f32.gmra.mxu0 %v2006
      %v2277 = vpop.f32.mrf.mxu0
      %v2278 = vadd.f32 0.0, %v2277
      %v2279 = vpop.f32.mrf.mxu0
      %2280 = vdwg.mxu0
      %v2281 = vadd.f32 %v1801, %v2078
      %v2282 = vadd.f32 %v1802, %v2083
      %v2283 = vadd.f32 %v1803, %v2088
      %v2284 = vadd.f32 %v1804, %v2093
      %v2285 = vadd.f32 %v1805, %v2098
      %v2286 = vadd.f32 %v1806, %v2103
      %v2287 = vadd.f32 %v1807, %v2108
      %v2288 = vadd.f32 %v1808, %v2113
      %v2289 = vadd.f32 %v1809, %v2118
      %v2290 = vadd.f32 %v1810, %v2123
      %v2291 = vadd.f32 %v1811, %v2128
      %v2292 = vadd.f32 %v1812, %v2133
      %v2293 = vadd.f32 %v1813, %v2138
      %v2294 = vadd.f32 %v1814, %v2143
      %v2295 = vadd.f32 %v1815, %v2148
      %v2296 = vadd.f32 %v1816, %v2153
      %v2297 = vadd.f32 %v1817, %v2158
      %v2298 = vadd.f32 %v1818, %v2163
      %v2299 = vadd.f32 %v1819, %v2168
      %v2300 = vadd.f32 %v1820, %v2173
      %v2301 = vadd.f32 %v1821, %v2178
      %v2302 = vadd.f32 %v1822, %v2183
      %v2303 = vadd.f32 %v1823, %v2188
      %v2304 = vadd.f32 %v1824, %v2193
      %v2305 = vadd.f32 %v1825, %v2198
      %v2306 = vadd.f32 %v1826, %v2203
      %v2307 = vadd.f32 %v1827, %v2208
      %v2308 = vadd.f32 %v1828, %v2213
      %v2309 = vadd.f32 %v1829, %v2218
      %v2310 = vadd.f32 %v1830, %v2223
      %v2311 = vadd.f32 %v1831, %v2228
      %v2312 = vadd.f32 %v1832, %v2233
      %v2313 = vadd.f32 %v1833, %v2238
      %v2314 = vadd.f32 %v1834, %v2243
      %v2315 = vadd.f32 %v1835, %v2248
      %v2316 = vadd.f32 %v1836, %v2253
      %v2317 = vadd.f32 %v1837, %v2258
      %v2318 = vadd.f32 %v1838, %v2263
      %v2319 = vadd.f32 %v1839, %v2268
      %v2320 = vadd.f32 %v1840, %v2273
      %v2321 = vadd.f32 %v1841, %v2278
      %v2322 = vld [vmem:[#allocation2 + $0x13] sm:$0xff]
      %v2323 = vld [vmem:[#allocation2 + $0x1b] sm:$0xff]
      %v2324 = vld [vmem:[#allocation2 + $0x23] sm:$0xff]
      %v2325 = vld [vmem:[#allocation2 + $0x2b] sm:$0xff]
      %v2326 = vld [vmem:[#allocation2 + $0x33] sm:$0xff]
      %v2327 = vld [vmem:[#allocation2 + $0x3b] sm:$0xff]
      %v2328 = vld [vmem:[#allocation2 + $0x43] sm:$0xff]
      %v2329 = vld [vmem:[#allocation2 + $0x4b] sm:$0xff]
      %v2330 = vld [vmem:[#allocation2 + $0x53] sm:$0xff]
      %v2331 = vld [vmem:[#allocation2 + $0x5b] sm:$0xff]
      %v2332 = vld [vmem:[#allocation2 + $0x63] sm:$0xff]
      %v2333 = vld [vmem:[#allocation2 + $0x6b] sm:$0xff]
      %v2334 = vld [vmem:[#allocation2 + $0x73] sm:$0xff]
      %v2335 = vld [vmem:[#allocation2 + $0x7b] sm:$0xff]
      %v2336 = vld [vmem:[#allocation2 + $0x83] sm:$0xff]
      %v2337 = vld [vmem:[#allocation2 + $0x8b] sm:$0xff]
      %v2338 = vld [vmem:[#allocation2 + $0x93] sm:$0xff]
      %v2339 = vld [vmem:[#allocation2 + $0x9b] sm:$0xff]
      %v2340 = vld [vmem:[#allocation2 + $0xa3] sm:$0xff]
      %v2341 = vld [vmem:[#allocation2 + $0xab] sm:$0xff]
      %v2342 = vld [vmem:[#allocation2 + $0xb3] sm:$0xff]
      %v2343 = vld [vmem:[#allocation2 + $0xbb] sm:$0xff]
      %v2344 = vld [vmem:[#allocation2 + $0xc3] sm:$0xff]
      %v2345 = vld [vmem:[#allocation2 + $0xcb] sm:$0xff]
      %v2346 = vld [vmem:[#allocation2 + $0xd3] sm:$0xff]
      %v2347 = vld [vmem:[#allocation2 + $0xdb] sm:$0xff]
      %v2348 = vld [vmem:[#allocation2 + $0xe3] sm:$0xff]
      %v2349 = vld [vmem:[#allocation2 + $0xeb] sm:$0xff]
      %v2350 = vld [vmem:[#allocation2 + $0xf3] sm:$0xff]
      %v2351 = vld [vmem:[#allocation2 + $0xfb] sm:$0xff]
      %v2352 = vld [vmem:[#allocation2 + $0x103] sm:$0xff]
      %v2353 = vld [vmem:[#allocation2 + $0x10b] sm:$0xff]
      %v2354 = vld [vmem:[#allocation2 + $0x113] sm:$0xff]
      %v2355 = vld [vmem:[#allocation2 + $0x11b] sm:$0xff]
      %v2356 = vld [vmem:[#allocation2 + $0x123] sm:$0xff]
      %v2357 = vld [vmem:[#allocation2 + $0x12b] sm:$0xff]
      %v2358 = vld [vmem:[#allocation2 + $0x133] sm:$0xff]
      %v2359 = vld [vmem:[#allocation2 + $0x13b] sm:$0xff]
      %v2360 = vld [vmem:[#allocation2 + $0x143] sm:$0xff]
      %v2361 = vld [vmem:[#allocation2 + $0x14b] sm:$0xff]
      %v2362 = vld [vmem:[#allocation2 + $0x153] sm:$0xf]
      %s2363 = scalar_lea.vmem %s1, 16
      %v2364 = vld [vmem:[%s2363] sm:$0xf]
      %v2366 = vsel %vm306, %v2322, 0
      %v2369 = vsel %vm306, %v2323, 0
      %v2372 = vsel %vm306, %v2324, 0
      %v2375 = vsel %vm306, %v2325, 0
      %v2378 = vsel %vm306, %v2326, 0
      %v2381 = vsel %vm306, %v2327, 0
      %v2384 = vsel %vm306, %v2328, 0
      %v2387 = vsel %vm306, %v2329, 0
      %v2390 = vsel %vm306, %v2330, 0
      %v2393 = vsel %vm306, %v2331, 0
      %v2396 = vsel %vm306, %v2332, 0
      %v2399 = vsel %vm306, %v2333, 0
      %v2402 = vsel %vm306, %v2334, 0
      %v2405 = vsel %vm306, %v2335, 0
      %v2408 = vsel %vm306, %v2336, 0
      %v2411 = vsel %vm306, %v2337, 0
      %v2414 = vsel %vm306, %v2338, 0
      %v2417 = vsel %vm306, %v2339, 0
      %v2420 = vsel %vm306, %v2340, 0
      %v2423 = vsel %vm306, %v2341, 0
      %v2426 = vsel %vm306, %v2342, 0
      %v2429 = vsel %vm306, %v2343, 0
      %v2432 = vsel %vm306, %v2344, 0
      %v2435 = vsel %vm306, %v2345, 0
      %v2438 = vsel %vm306, %v2346, 0
      %v2441 = vsel %vm306, %v2347, 0
      %v2444 = vsel %vm306, %v2348, 0
      %v2447 = vsel %vm306, %v2349, 0
      %v2450 = vsel %vm306, %v2350, 0
      %v2453 = vsel %vm306, %v2351, 0
      %v2456 = vsel %vm306, %v2352, 0
      %v2459 = vsel %vm306, %v2353, 0
      %v2462 = vsel %vm306, %v2354, 0
      %v2465 = vsel %vm306, %v2355, 0
      %v2468 = vsel %vm306, %v2356, 0
      %v2471 = vsel %vm306, %v2357, 0
      %v2474 = vsel %vm306, %v2358, 0
      %v2477 = vsel %vm306, %v2359, 0
      %v2480 = vsel %vm306, %v2360, 0
      %v2483 = vsel %vm306, %v2361, 0
      %v2486 = vsel %vm306, %v2362, 0
      %v2489 = vsel %vm692, %v2364, 0
      %2491 = vmatprep.subr.mxu0 0.0
      %2492 = vmatpush1.msra.mxu0 0.0
      %2493 = vmatprep.subr.mxu0 0.0
      %2494 = vmatpush1.msra.mxu0 0.0
      %2495 = vmatprep.subr.mxu0 0.0
      %2496 = vmatpush1.msra.mxu0 0.0
      %2497 = vmatprep.subr.mxu0 0.0
      %2498 = vmatpush1.msra.mxu0 0.0
      %2499 = vmatprep.subr.mxu0 0.0
      %2500 = vmatpush1.msra.mxu0 0.0
      %2501 = vmatprep.subr.mxu0 0.0
      %2502 = vmatpush1.msra.mxu0 0.0
      %2503 = vmatprep.subr.mxu0 0.0
      %2504 = vmatpush1.msra.mxu0 0.0
      %2505 = vmatprep.subr.mxu0 0.0
      %2506 = vmatpush1.msra.mxu0 0.0
      %2507 = vmatprep.subr.mxu0 0.0
      %2508 = vmatpush1.msra.mxu0 0.0
      %2509 = vmatprep.subr.mxu0 0.0
      %2510 = vmatpush1.msra.mxu0 0.0
      %2511 = vmatprep.subr.mxu0 0.0
      %2512 = vmatpush1.msra.mxu0 0.0
      %2513 = vmatprep.subr.mxu0 0.0
      %2514 = vmatpush1.msra.mxu0 0.0
      %2515 = vmatprep.subr.mxu0 0.0
      %2516 = vmatpush1.msra.mxu0 0.0
      %2517 = vmatprep.subr.mxu0 0.0
      %2518 = vmatpush1.msra.mxu0 0.0
      %2519 = vmatprep.subr.mxu0 0.0
      %2520 = vmatpush1.msra.mxu0 0.0
      %2521 = vmatprep.subr.mxu0 0.0
      %2522 = vmatpush1.msra.mxu0 %v2489
      %2523 = vmatprep.subr.mxu0 0.0
      %2524 = vmatpush2.msra.mxu0 0.0
      %2525 = vmatprep.subr.mxu0 0.0
      %2526 = vmatpush2.msra.mxu0 0.0
      %2527 = vmatprep.subr.mxu0 0.0
      %2528 = vmatpush2.msra.mxu0 0.0
      %2529 = vmatprep.subr.mxu0 0.0
      %2530 = vmatpush2.msra.mxu0 0.0
      %2531 = vmatprep.subr.mxu0 0.0
      %2532 = vmatpush2.msra.mxu0 0.0
      %2533 = vmatprep.subr.mxu0 0.0
      %2534 = vmatpush2.msra.mxu0 0.0
      %2535 = vmatprep.subr.mxu0 0.0
      %2536 = vmatpush2.msra.mxu0 0.0
      %2537 = vmatprep.subr.mxu0 0.0
      %2538 = vmatpush2.msra.mxu0 0.0
      %2539 = vmatprep.subr.mxu0 0.0
      %2540 = vmatpush2.msra.mxu0 0.0
      %2541 = vmatprep.subr.mxu0 0.0
      %2542 = vmatpush2.msra.mxu0 0.0
      %2543 = vmatprep.subr.mxu0 0.0
      %2544 = vmatpush2.msra.mxu0 0.0
      %2545 = vmatprep.subr.mxu0 0.0
      %2546 = vmatpush2.msra.mxu0 0.0
      %2547 = vmatprep.subr.mxu0 0.0
      %2548 = vmatpush2.msra.mxu0 0.0
      %2549 = vmatprep.subr.mxu0 0.0
      %2550 = vmatpush2.msra.mxu0 0.0
      %2551 = vmatprep.subr.mxu0 0.0
      %2552 = vmatpush2.msra.mxu0 0.0
      %2553 = vmatprep.subr.mxu0 0.0
      %2554 = vmatpush2.msra.mxu0 0.0
      %2555 = vmatprep.mubr.f32.mxu0 0.0
      %2556 = vmatmul.mubr.f32.gmra.mxu0 %v2366
      %v2557 = vpop.f32.mrf.mxu0
      %v2558 = vadd.f32 0.0, %v2557
      %v2559 = vpop.f32.mrf.mxu0
      %2560 = vmatprep.mubr.f32.mxu0 0.0
      %2561 = vmatmul.mubr.f32.gmra.mxu0 %v2369
      %v2562 = vpop.f32.mrf.mxu0
      %v2563 = vadd.f32 0.0, %v2562
      %v2564 = vpop.f32.mrf.mxu0
      %2565 = vmatprep.mubr.f32.mxu0 0.0
      %2566 = vmatmul.mubr.f32.gmra.mxu0 %v2372
      %v2567 = vpop.f32.mrf.mxu0
      %v2568 = vadd.f32 0.0, %v2567
      %v2569 = vpop.f32.mrf.mxu0
      %2570 = vmatprep.mubr.f32.mxu0 0.0
      %2571 = vmatmul.mubr.f32.gmra.mxu0 %v2375
      %v2572 = vpop.f32.mrf.mxu0
      %v2573 = vadd.f32 0.0, %v2572
      %v2574 = vpop.f32.mrf.mxu0
      %2575 = vmatprep.mubr.f32.mxu0 0.0
      %2576 = vmatmul.mubr.f32.gmra.mxu0 %v2378
      %v2577 = vpop.f32.mrf.mxu0
      %v2578 = vadd.f32 0.0, %v2577
      %v2579 = vpop.f32.mrf.mxu0
      %2580 = vmatprep.mubr.f32.mxu0 0.0
      %2581 = vmatmul.mubr.f32.gmra.mxu0 %v2381
      %v2582 = vpop.f32.mrf.mxu0
      %v2583 = vadd.f32 0.0, %v2582
      %v2584 = vpop.f32.mrf.mxu0
      %2585 = vmatprep.mubr.f32.mxu0 0.0
      %2586 = vmatmul.mubr.f32.gmra.mxu0 %v2384
      %v2587 = vpop.f32.mrf.mxu0
      %v2588 = vadd.f32 0.0, %v2587
      %v2589 = vpop.f32.mrf.mxu0
      %2590 = vmatprep.mubr.f32.mxu0 0.0
      %2591 = vmatmul.mubr.f32.gmra.mxu0 %v2387
      %v2592 = vpop.f32.mrf.mxu0
      %v2593 = vadd.f32 0.0, %v2592
      %v2594 = vpop.f32.mrf.mxu0
      %2595 = vmatprep.mubr.f32.mxu0 0.0
      %2596 = vmatmul.mubr.f32.gmra.mxu0 %v2390
      %v2597 = vpop.f32.mrf.mxu0
      %v2598 = vadd.f32 0.0, %v2597
      %v2599 = vpop.f32.mrf.mxu0
      %2600 = vmatprep.mubr.f32.mxu0 0.0
      %2601 = vmatmul.mubr.f32.gmra.mxu0 %v2393
      %v2602 = vpop.f32.mrf.mxu0
      %v2603 = vadd.f32 0.0, %v2602
      %v2604 = vpop.f32.mrf.mxu0
      %2605 = vmatprep.mubr.f32.mxu0 0.0
      %2606 = vmatmul.mubr.f32.gmra.mxu0 %v2396
      %v2607 = vpop.f32.mrf.mxu0
      %v2608 = vadd.f32 0.0, %v2607
      %v2609 = vpop.f32.mrf.mxu0
      %2610 = vmatprep.mubr.f32.mxu0 0.0
      %2611 = vmatmul.mubr.f32.gmra.mxu0 %v2399
      %v2612 = vpop.f32.mrf.mxu0
      %v2613 = vadd.f32 0.0, %v2612
      %v2614 = vpop.f32.mrf.mxu0
      %2615 = vmatprep.mubr.f32.mxu0 0.0
      %2616 = vmatmul.mubr.f32.gmra.mxu0 %v2402
      %v2617 = vpop.f32.mrf.mxu0
      %v2618 = vadd.f32 0.0, %v2617
      %v2619 = vpop.f32.mrf.mxu0
      %2620 = vmatprep.mubr.f32.mxu0 0.0
      %2621 = vmatmul.mubr.f32.gmra.mxu0 %v2405
      %v2622 = vpop.f32.mrf.mxu0
      %v2623 = vadd.f32 0.0, %v2622
      %v2624 = vpop.f32.mrf.mxu0
      %2625 = vmatprep.mubr.f32.mxu0 0.0
      %2626 = vmatmul.mubr.f32.gmra.mxu0 %v2408
      %v2627 = vpop.f32.mrf.mxu0
      %v2628 = vadd.f32 0.0, %v2627
      %v2629 = vpop.f32.mrf.mxu0
      %2630 = vmatprep.mubr.f32.mxu0 0.0
      %2631 = vmatmul.mubr.f32.gmra.mxu0 %v2411
      %v2632 = vpop.f32.mrf.mxu0
      %v2633 = vadd.f32 0.0, %v2632
      %v2634 = vpop.f32.mrf.mxu0
      %2635 = vmatprep.mubr.f32.mxu0 0.0
      %2636 = vmatmul.mubr.f32.gmra.mxu0 %v2414
      %v2637 = vpop.f32.mrf.mxu0
      %v2638 = vadd.f32 0.0, %v2637
      %v2639 = vpop.f32.mrf.mxu0
      %2640 = vmatprep.mubr.f32.mxu0 0.0
      %2641 = vmatmul.mubr.f32.gmra.mxu0 %v2417
      %v2642 = vpop.f32.mrf.mxu0
      %v2643 = vadd.f32 0.0, %v2642
      %v2644 = vpop.f32.mrf.mxu0
      %2645 = vmatprep.mubr.f32.mxu0 0.0
      %2646 = vmatmul.mubr.f32.gmra.mxu0 %v2420
      %v2647 = vpop.f32.mrf.mxu0
      %v2648 = vadd.f32 0.0, %v2647
      %v2649 = vpop.f32.mrf.mxu0
      %2650 = vmatprep.mubr.f32.mxu0 0.0
      %2651 = vmatmul.mubr.f32.gmra.mxu0 %v2423
      %v2652 = vpop.f32.mrf.mxu0
      %v2653 = vadd.f32 0.0, %v2652
      %v2654 = vpop.f32.mrf.mxu0
      %2655 = vmatprep.mubr.f32.mxu0 0.0
      %2656 = vmatmul.mubr.f32.gmra.mxu0 %v2426
      %v2657 = vpop.f32.mrf.mxu0
      %v2658 = vadd.f32 0.0, %v2657
      %v2659 = vpop.f32.mrf.mxu0
      %2660 = vmatprep.mubr.f32.mxu0 0.0
      %2661 = vmatmul.mubr.f32.gmra.mxu0 %v2429
      %v2662 = vpop.f32.mrf.mxu0
      %v2663 = vadd.f32 0.0, %v2662
      %v2664 = vpop.f32.mrf.mxu0
      %2665 = vmatprep.mubr.f32.mxu0 0.0
      %2666 = vmatmul.mubr.f32.gmra.mxu0 %v2432
      %v2667 = vpop.f32.mrf.mxu0
      %v2668 = vadd.f32 0.0, %v2667
      %v2669 = vpop.f32.mrf.mxu0
      %2670 = vmatprep.mubr.f32.mxu0 0.0
      %2671 = vmatmul.mubr.f32.gmra.mxu0 %v2435
      %v2672 = vpop.f32.mrf.mxu0
      %v2673 = vadd.f32 0.0, %v2672
      %v2674 = vpop.f32.mrf.mxu0
      %2675 = vmatprep.mubr.f32.mxu0 0.0
      %2676 = vmatmul.mubr.f32.gmra.mxu0 %v2438
      %v2677 = vpop.f32.mrf.mxu0
      %v2678 = vadd.f32 0.0, %v2677
      %v2679 = vpop.f32.mrf.mxu0
      %2680 = vmatprep.mubr.f32.mxu0 0.0
      %2681 = vmatmul.mubr.f32.gmra.mxu0 %v2441
      %v2682 = vpop.f32.mrf.mxu0
      %v2683 = vadd.f32 0.0, %v2682
      %v2684 = vpop.f32.mrf.mxu0
      %2685 = vmatprep.mubr.f32.mxu0 0.0
      %2686 = vmatmul.mubr.f32.gmra.mxu0 %v2444
      %v2687 = vpop.f32.mrf.mxu0
      %v2688 = vadd.f32 0.0, %v2687
      %v2689 = vpop.f32.mrf.mxu0
      %2690 = vmatprep.mubr.f32.mxu0 0.0
      %2691 = vmatmul.mubr.f32.gmra.mxu0 %v2447
      %v2692 = vpop.f32.mrf.mxu0
      %v2693 = vadd.f32 0.0, %v2692
      %v2694 = vpop.f32.mrf.mxu0
      %2695 = vmatprep.mubr.f32.mxu0 0.0
      %2696 = vmatmul.mubr.f32.gmra.mxu0 %v2450
      %v2697 = vpop.f32.mrf.mxu0
      %v2698 = vadd.f32 0.0, %v2697
      %v2699 = vpop.f32.mrf.mxu0
      %2700 = vmatprep.mubr.f32.mxu0 0.0
      %2701 = vmatmul.mubr.f32.gmra.mxu0 %v2453
      %v2702 = vpop.f32.mrf.mxu0
      %v2703 = vadd.f32 0.0, %v2702
      %v2704 = vpop.f32.mrf.mxu0
      %2705 = vmatprep.mubr.f32.mxu0 0.0
      %2706 = vmatmul.mubr.f32.gmra.mxu0 %v2456
      %v2707 = vpop.f32.mrf.mxu0
      %v2708 = vadd.f32 0.0, %v2707
      %v2709 = vpop.f32.mrf.mxu0
      %2710 = vmatprep.mubr.f32.mxu0 0.0
      %2711 = vmatmul.mubr.f32.gmra.mxu0 %v2459
      %v2712 = vpop.f32.mrf.mxu0
      %v2713 = vadd.f32 0.0, %v2712
      %v2714 = vpop.f32.mrf.mxu0
      %2715 = vmatprep.mubr.f32.mxu0 0.0
      %2716 = vmatmul.mubr.f32.gmra.mxu0 %v2462
      %v2717 = vpop.f32.mrf.mxu0
      %v2718 = vadd.f32 0.0, %v2717
      %v2719 = vpop.f32.mrf.mxu0
      %2720 = vmatprep.mubr.f32.mxu0 0.0
      %2721 = vmatmul.mubr.f32.gmra.mxu0 %v2465
      %v2722 = vpop.f32.mrf.mxu0
      %v2723 = vadd.f32 0.0, %v2722
      %v2724 = vpop.f32.mrf.mxu0
      %2725 = vmatprep.mubr.f32.mxu0 0.0
      %2726 = vmatmul.mubr.f32.gmra.mxu0 %v2468
      %v2727 = vpop.f32.mrf.mxu0
      %v2728 = vadd.f32 0.0, %v2727
      %v2729 = vpop.f32.mrf.mxu0
      %2730 = vmatprep.mubr.f32.mxu0 0.0
      %2731 = vmatmul.mubr.f32.gmra.mxu0 %v2471
      %v2732 = vpop.f32.mrf.mxu0
      %v2733 = vadd.f32 0.0, %v2732
      %v2734 = vpop.f32.mrf.mxu0
      %2735 = vmatprep.mubr.f32.mxu0 0.0
      %2736 = vmatmul.mubr.f32.gmra.mxu0 %v2474
      %v2737 = vpop.f32.mrf.mxu0
      %v2738 = vadd.f32 0.0, %v2737
      %v2739 = vpop.f32.mrf.mxu0
      %2740 = vmatprep.mubr.f32.mxu0 0.0
      %2741 = vmatmul.mubr.f32.gmra.mxu0 %v2477
      %v2742 = vpop.f32.mrf.mxu0
      %v2743 = vadd.f32 0.0, %v2742
      %v2744 = vpop.f32.mrf.mxu0
      %2745 = vmatprep.mubr.f32.mxu0 0.0
      %2746 = vmatmul.mubr.f32.gmra.mxu0 %v2480
      %v2747 = vpop.f32.mrf.mxu0
      %v2748 = vadd.f32 0.0, %v2747
      %v2749 = vpop.f32.mrf.mxu0
      %2750 = vmatprep.mubr.f32.mxu0 0.0
      %2751 = vmatmul.mubr.f32.gmra.mxu0 %v2483
      %v2752 = vpop.f32.mrf.mxu0
      %v2753 = vadd.f32 0.0, %v2752
      %v2754 = vpop.f32.mrf.mxu0
      %2755 = vmatprep.mubr.f32.mxu0 0.0
      %2756 = vmatmul.mubr.f32.gmra.mxu0 %v2486
      %v2757 = vpop.f32.mrf.mxu0
      %v2758 = vadd.f32 0.0, %v2757
      %v2759 = vpop.f32.mrf.mxu0
      %2760 = vdwg.mxu0
      %v2761 = vadd.f32 %v2281, %v2558
      %v2762 = vadd.f32 %v2282, %v2563
      %v2763 = vadd.f32 %v2283, %v2568
      %v2764 = vadd.f32 %v2284, %v2573
      %v2765 = vadd.f32 %v2285, %v2578
      %v2766 = vadd.f32 %v2286, %v2583
      %v2767 = vadd.f32 %v2287, %v2588
      %v2768 = vadd.f32 %v2288, %v2593
      %v2769 = vadd.f32 %v2289, %v2598
      %v2770 = vadd.f32 %v2290, %v2603
      %v2771 = vadd.f32 %v2291, %v2608
      %v2772 = vadd.f32 %v2292, %v2613
      %v2773 = vadd.f32 %v2293, %v2618
      %v2774 = vadd.f32 %v2294, %v2623
      %v2775 = vadd.f32 %v2295, %v2628
      %v2776 = vadd.f32 %v2296, %v2633
      %v2777 = vadd.f32 %v2297, %v2638
      %v2778 = vadd.f32 %v2298, %v2643
      %v2779 = vadd.f32 %v2299, %v2648
      %v2780 = vadd.f32 %v2300, %v2653
      %v2781 = vadd.f32 %v2301, %v2658
      %v2782 = vadd.f32 %v2302, %v2663
      %v2783 = vadd.f32 %v2303, %v2668
      %v2784 = vadd.f32 %v2304, %v2673
      %v2785 = vadd.f32 %v2305, %v2678
      %v2786 = vadd.f32 %v2306, %v2683
      %v2787 = vadd.f32 %v2307, %v2688
      %v2788 = vadd.f32 %v2308, %v2693
      %v2789 = vadd.f32 %v2309, %v2698
      %v2790 = vadd.f32 %v2310, %v2703
      %v2791 = vadd.f32 %v2311, %v2708
      %v2792 = vadd.f32 %v2312, %v2713
      %v2793 = vadd.f32 %v2313, %v2718
      %v2794 = vadd.f32 %v2314, %v2723
      %v2795 = vadd.f32 %v2315, %v2728
      %v2796 = vadd.f32 %v2316, %v2733
      %v2797 = vadd.f32 %v2317, %v2738
      %v2798 = vadd.f32 %v2318, %v2743
      %v2799 = vadd.f32 %v2319, %v2748
      %v2800 = vadd.f32 %v2320, %v2753
      %v2801 = vadd.f32 %v2321, %v2758
      %v2802 = vld [vmem:[#allocation2 + $0x14] sm:$0xff]
      %v2803 = vld [vmem:[#allocation2 + $0x1c] sm:$0xff]
      %v2804 = vld [vmem:[#allocation2 + $0x24] sm:$0xff]
      %v2805 = vld [vmem:[#allocation2 + $0x2c] sm:$0xff]
      %v2806 = vld [vmem:[#allocation2 + $0x34] sm:$0xff]
      %v2807 = vld [vmem:[#allocation2 + $0x3c] sm:$0xff]
      %v2808 = vld [vmem:[#allocation2 + $0x44] sm:$0xff]
      %v2809 = vld [vmem:[#allocation2 + $0x4c] sm:$0xff]
      %v2810 = vld [vmem:[#allocation2 + $0x54] sm:$0xff]
      %v2811 = vld [vmem:[#allocation2 + $0x5c] sm:$0xff]
      %v2812 = vld [vmem:[#allocation2 + $0x64] sm:$0xff]
      %v2813 = vld [vmem:[#allocation2 + $0x6c] sm:$0xff]
      %v2814 = vld [vmem:[#allocation2 + $0x74] sm:$0xff]
      %v2815 = vld [vmem:[#allocation2 + $0x7c] sm:$0xff]
      %v2816 = vld [vmem:[#allocation2 + $0x84] sm:$0xff]
      %v2817 = vld [vmem:[#allocation2 + $0x8c] sm:$0xff]
      %v2818 = vld [vmem:[#allocation2 + $0x94] sm:$0xff]
      %v2819 = vld [vmem:[#allocation2 + $0x9c] sm:$0xff]
      %v2820 = vld [vmem:[#allocation2 + $0xa4] sm:$0xff]
      %v2821 = vld [vmem:[#allocation2 + $0xac] sm:$0xff]
      %v2822 = vld [vmem:[#allocation2 + $0xb4] sm:$0xff]
      %v2823 = vld [vmem:[#allocation2 + $0xbc] sm:$0xff]
      %v2824 = vld [vmem:[#allocation2 + $0xc4] sm:$0xff]
      %v2825 = vld [vmem:[#allocation2 + $0xcc] sm:$0xff]
      %v2826 = vld [vmem:[#allocation2 + $0xd4] sm:$0xff]
      %v2827 = vld [vmem:[#allocation2 + $0xdc] sm:$0xff]
      %v2828 = vld [vmem:[#allocation2 + $0xe4] sm:$0xff]
      %v2829 = vld [vmem:[#allocation2 + $0xec] sm:$0xff]
      %v2830 = vld [vmem:[#allocation2 + $0xf4] sm:$0xff]
      %v2831 = vld [vmem:[#allocation2 + $0xfc] sm:$0xff]
      %v2832 = vld [vmem:[#allocation2 + $0x104] sm:$0xff]
      %v2833 = vld [vmem:[#allocation2 + $0x10c] sm:$0xff]
      %v2834 = vld [vmem:[#allocation2 + $0x114] sm:$0xff]
      %v2835 = vld [vmem:[#allocation2 + $0x11c] sm:$0xff]
      %v2836 = vld [vmem:[#allocation2 + $0x124] sm:$0xff]
      %v2837 = vld [vmem:[#allocation2 + $0x12c] sm:$0xff]
      %v2838 = vld [vmem:[#allocation2 + $0x134] sm:$0xff]
      %v2839 = vld [vmem:[#allocation2 + $0x13c] sm:$0xff]
      %v2840 = vld [vmem:[#allocation2 + $0x144] sm:$0xff]
      %v2841 = vld [vmem:[#allocation2 + $0x14c] sm:$0xff]
      %v2842 = vld [vmem:[#allocation2 + $0x154] sm:$0xf]
      %s2843 = scalar_lea.vmem %s1, 20
      %v2844 = vld [vmem:[%s2843] sm:$0xf]
      %v2846 = vsel %vm306, %v2802, 0
      %v2849 = vsel %vm306, %v2803, 0
      %v2852 = vsel %vm306, %v2804, 0
      %v2855 = vsel %vm306, %v2805, 0
      %v2858 = vsel %vm306, %v2806, 0
      %v2861 = vsel %vm306, %v2807, 0
      %v2864 = vsel %vm306, %v2808, 0
      %v2867 = vsel %vm306, %v2809, 0
      %v2870 = vsel %vm306, %v2810, 0
      %v2873 = vsel %vm306, %v2811, 0
      %v2876 = vsel %vm306, %v2812, 0
      %v2879 = vsel %vm306, %v2813, 0
      %v2882 = vsel %vm306, %v2814, 0
      %v2885 = vsel %vm306, %v2815, 0
      %v2888 = vsel %vm306, %v2816, 0
      %v2891 = vsel %vm306, %v2817, 0
      %v2894 = vsel %vm306, %v2818, 0
      %v2897 = vsel %vm306, %v2819, 0
      %v2900 = vsel %vm306, %v2820, 0
      %v2903 = vsel %vm306, %v2821, 0
      %v2906 = vsel %vm306, %v2822, 0
      %v2909 = vsel %vm306, %v2823, 0
      %v2912 = vsel %vm306, %v2824, 0
      %v2915 = vsel %vm306, %v2825, 0
      %v2918 = vsel %vm306, %v2826, 0
      %v2921 = vsel %vm306, %v2827, 0
      %v2924 = vsel %vm306, %v2828, 0
      %v2927 = vsel %vm306, %v2829, 0
      %v2930 = vsel %vm306, %v2830, 0
      %v2933 = vsel %vm306, %v2831, 0
      %v2936 = vsel %vm306, %v2832, 0
      %v2939 = vsel %vm306, %v2833, 0
      %v2942 = vsel %vm306, %v2834, 0
      %v2945 = vsel %vm306, %v2835, 0
      %v2948 = vsel %vm306, %v2836, 0
      %v2951 = vsel %vm306, %v2837, 0
      %v2954 = vsel %vm306, %v2838, 0
      %v2957 = vsel %vm306, %v2839, 0
      %v2960 = vsel %vm306, %v2840, 0
      %v2963 = vsel %vm306, %v2841, 0
      %v2966 = vsel %vm306, %v2842, 0
      %v2969 = vsel %vm692, %v2844, 0
      %2971 = vmatprep.subr.mxu0 0.0
      %2972 = vmatpush1.msra.mxu0 0.0
      %2973 = vmatprep.subr.mxu0 0.0
      %2974 = vmatpush1.msra.mxu0 0.0
      %2975 = vmatprep.subr.mxu0 0.0
      %2976 = vmatpush1.msra.mxu0 0.0
      %2977 = vmatprep.subr.mxu0 0.0
      %2978 = vmatpush1.msra.mxu0 0.0
      %2979 = vmatprep.subr.mxu0 0.0
      %2980 = vmatpush1.msra.mxu0 0.0
      %2981 = vmatprep.subr.mxu0 0.0
      %2982 = vmatpush1.msra.mxu0 0.0
      %2983 = vmatprep.subr.mxu0 0.0
      %2984 = vmatpush1.msra.mxu0 0.0
      %2985 = vmatprep.subr.mxu0 0.0
      %2986 = vmatpush1.msra.mxu0 0.0
      %2987 = vmatprep.subr.mxu0 0.0
      %2988 = vmatpush1.msra.mxu0 0.0
      %2989 = vmatprep.subr.mxu0 0.0
      %2990 = vmatpush1.msra.mxu0 0.0
      %2991 = vmatprep.subr.mxu0 0.0
      %2992 = vmatpush1.msra.mxu0 0.0
      %2993 = vmatprep.subr.mxu0 0.0
      %2994 = vmatpush1.msra.mxu0 0.0
      %2995 = vmatprep.subr.mxu0 0.0
      %2996 = vmatpush1.msra.mxu0 0.0
      %2997 = vmatprep.subr.mxu0 0.0
      %2998 = vmatpush1.msra.mxu0 0.0
      %2999 = vmatprep.subr.mxu0 0.0
      %3000 = vmatpush1.msra.mxu0 0.0
      %3001 = vmatprep.subr.mxu0 0.0
      %3002 = vmatpush1.msra.mxu0 %v2969
      %3003 = vmatprep.subr.mxu0 0.0
      %3004 = vmatpush2.msra.mxu0 0.0
      %3005 = vmatprep.subr.mxu0 0.0
      %3006 = vmatpush2.msra.mxu0 0.0
      %3007 = vmatprep.subr.mxu0 0.0
      %3008 = vmatpush2.msra.mxu0 0.0
      %3009 = vmatprep.subr.mxu0 0.0
      %3010 = vmatpush2.msra.mxu0 0.0
      %3011 = vmatprep.subr.mxu0 0.0
      %3012 = vmatpush2.msra.mxu0 0.0
      %3013 = vmatprep.subr.mxu0 0.0
      %3014 = vmatpush2.msra.mxu0 0.0
      %3015 = vmatprep.subr.mxu0 0.0
      %3016 = vmatpush2.msra.mxu0 0.0
      %3017 = vmatprep.subr.mxu0 0.0
      %3018 = vmatpush2.msra.mxu0 0.0
      %3019 = vmatprep.subr.mxu0 0.0
      %3020 = vmatpush2.msra.mxu0 0.0
      %3021 = vmatprep.subr.mxu0 0.0
      %3022 = vmatpush2.msra.mxu0 0.0
      %3023 = vmatprep.subr.mxu0 0.0
      %3024 = vmatpush2.msra.mxu0 0.0
      %3025 = vmatprep.subr.mxu0 0.0
      %3026 = vmatpush2.msra.mxu0 0.0
      %3027 = vmatprep.subr.mxu0 0.0
      %3028 = vmatpush2.msra.mxu0 0.0
      %3029 = vmatprep.subr.mxu0 0.0
      %3030 = vmatpush2.msra.mxu0 0.0
      %3031 = vmatprep.subr.mxu0 0.0
      %3032 = vmatpush2.msra.mxu0 0.0
      %3033 = vmatprep.subr.mxu0 0.0
      %3034 = vmatpush2.msra.mxu0 0.0
      %3035 = vmatprep.mubr.f32.mxu0 0.0
      %3036 = vmatmul.mubr.f32.gmra.mxu0 %v2846
      %v3037 = vpop.f32.mrf.mxu0
      %v3038 = vadd.f32 0.0, %v3037
      %v3039 = vpop.f32.mrf.mxu0
      %3040 = vmatprep.mubr.f32.mxu0 0.0
      %3041 = vmatmul.mubr.f32.gmra.mxu0 %v2849
      %v3042 = vpop.f32.mrf.mxu0
      %v3043 = vadd.f32 0.0, %v3042
      %v3044 = vpop.f32.mrf.mxu0
      %3045 = vmatprep.mubr.f32.mxu0 0.0
      %3046 = vmatmul.mubr.f32.gmra.mxu0 %v2852
      %v3047 = vpop.f32.mrf.mxu0
      %v3048 = vadd.f32 0.0, %v3047
      %v3049 = vpop.f32.mrf.mxu0
      %3050 = vmatprep.mubr.f32.mxu0 0.0
      %3051 = vmatmul.mubr.f32.gmra.mxu0 %v2855
      %v3052 = vpop.f32.mrf.mxu0
      %v3053 = vadd.f32 0.0, %v3052
      %v3054 = vpop.f32.mrf.mxu0
      %3055 = vmatprep.mubr.f32.mxu0 0.0
      %3056 = vmatmul.mubr.f32.gmra.mxu0 %v2858
      %v3057 = vpop.f32.mrf.mxu0
      %v3058 = vadd.f32 0.0, %v3057
      %v3059 = vpop.f32.mrf.mxu0
      %3060 = vmatprep.mubr.f32.mxu0 0.0
      %3061 = vmatmul.mubr.f32.gmra.mxu0 %v2861
      %v3062 = vpop.f32.mrf.mxu0
      %v3063 = vadd.f32 0.0, %v3062
      %v3064 = vpop.f32.mrf.mxu0
      %3065 = vmatprep.mubr.f32.mxu0 0.0
      %3066 = vmatmul.mubr.f32.gmra.mxu0 %v2864
      %v3067 = vpop.f32.mrf.mxu0
      %v3068 = vadd.f32 0.0, %v3067
      %v3069 = vpop.f32.mrf.mxu0
      %3070 = vmatprep.mubr.f32.mxu0 0.0
      %3071 = vmatmul.mubr.f32.gmra.mxu0 %v2867
      %v3072 = vpop.f32.mrf.mxu0
      %v3073 = vadd.f32 0.0, %v3072
      %v3074 = vpop.f32.mrf.mxu0
      %3075 = vmatprep.mubr.f32.mxu0 0.0
      %3076 = vmatmul.mubr.f32.gmra.mxu0 %v2870
      %v3077 = vpop.f32.mrf.mxu0
      %v3078 = vadd.f32 0.0, %v3077
      %v3079 = vpop.f32.mrf.mxu0
      %3080 = vmatprep.mubr.f32.mxu0 0.0
      %3081 = vmatmul.mubr.f32.gmra.mxu0 %v2873
      %v3082 = vpop.f32.mrf.mxu0
      %v3083 = vadd.f32 0.0, %v3082
      %v3084 = vpop.f32.mrf.mxu0
      %3085 = vmatprep.mubr.f32.mxu0 0.0
      %3086 = vmatmul.mubr.f32.gmra.mxu0 %v2876
      %v3087 = vpop.f32.mrf.mxu0
      %v3088 = vadd.f32 0.0, %v3087
      %v3089 = vpop.f32.mrf.mxu0
      %3090 = vmatprep.mubr.f32.mxu0 0.0
      %3091 = vmatmul.mubr.f32.gmra.mxu0 %v2879
      %v3092 = vpop.f32.mrf.mxu0
      %v3093 = vadd.f32 0.0, %v3092
      %v3094 = vpop.f32.mrf.mxu0
      %3095 = vmatprep.mubr.f32.mxu0 0.0
      %3096 = vmatmul.mubr.f32.gmra.mxu0 %v2882
      %v3097 = vpop.f32.mrf.mxu0
      %v3098 = vadd.f32 0.0, %v3097
      %v3099 = vpop.f32.mrf.mxu0
      %3100 = vmatprep.mubr.f32.mxu0 0.0
      %3101 = vmatmul.mubr.f32.gmra.mxu0 %v2885
      %v3102 = vpop.f32.mrf.mxu0
      %v3103 = vadd.f32 0.0, %v3102
      %v3104 = vpop.f32.mrf.mxu0
      %3105 = vmatprep.mubr.f32.mxu0 0.0
      %3106 = vmatmul.mubr.f32.gmra.mxu0 %v2888
      %v3107 = vpop.f32.mrf.mxu0
      %v3108 = vadd.f32 0.0, %v3107
      %v3109 = vpop.f32.mrf.mxu0
      %3110 = vmatprep.mubr.f32.mxu0 0.0
      %3111 = vmatmul.mubr.f32.gmra.mxu0 %v2891
      %v3112 = vpop.f32.mrf.mxu0
      %v3113 = vadd.f32 0.0, %v3112
      %v3114 = vpop.f32.mrf.mxu0
      %3115 = vmatprep.mubr.f32.mxu0 0.0
      %3116 = vmatmul.mubr.f32.gmra.mxu0 %v2894
      %v3117 = vpop.f32.mrf.mxu0
      %v3118 = vadd.f32 0.0, %v3117
      %v3119 = vpop.f32.mrf.mxu0
      %3120 = vmatprep.mubr.f32.mxu0 0.0
      %3121 = vmatmul.mubr.f32.gmra.mxu0 %v2897
      %v3122 = vpop.f32.mrf.mxu0
      %v3123 = vadd.f32 0.0, %v3122
      %v3124 = vpop.f32.mrf.mxu0
      %3125 = vmatprep.mubr.f32.mxu0 0.0
      %3126 = vmatmul.mubr.f32.gmra.mxu0 %v2900
      %v3127 = vpop.f32.mrf.mxu0
      %v3128 = vadd.f32 0.0, %v3127
      %v3129 = vpop.f32.mrf.mxu0
      %3130 = vmatprep.mubr.f32.mxu0 0.0
      %3131 = vmatmul.mubr.f32.gmra.mxu0 %v2903
      %v3132 = vpop.f32.mrf.mxu0
      %v3133 = vadd.f32 0.0, %v3132
      %v3134 = vpop.f32.mrf.mxu0
      %3135 = vmatprep.mubr.f32.mxu0 0.0
      %3136 = vmatmul.mubr.f32.gmra.mxu0 %v2906
      %v3137 = vpop.f32.mrf.mxu0
      %v3138 = vadd.f32 0.0, %v3137
      %v3139 = vpop.f32.mrf.mxu0
      %3140 = vmatprep.mubr.f32.mxu0 0.0
      %3141 = vmatmul.mubr.f32.gmra.mxu0 %v2909
      %v3142 = vpop.f32.mrf.mxu0
      %v3143 = vadd.f32 0.0, %v3142
      %v3144 = vpop.f32.mrf.mxu0
      %3145 = vmatprep.mubr.f32.mxu0 0.0
      %3146 = vmatmul.mubr.f32.gmra.mxu0 %v2912
      %v3147 = vpop.f32.mrf.mxu0
      %v3148 = vadd.f32 0.0, %v3147
      %v3149 = vpop.f32.mrf.mxu0
      %3150 = vmatprep.mubr.f32.mxu0 0.0
      %3151 = vmatmul.mubr.f32.gmra.mxu0 %v2915
      %v3152 = vpop.f32.mrf.mxu0
      %v3153 = vadd.f32 0.0, %v3152
      %v3154 = vpop.f32.mrf.mxu0
      %3155 = vmatprep.mubr.f32.mxu0 0.0
      %3156 = vmatmul.mubr.f32.gmra.mxu0 %v2918
      %v3157 = vpop.f32.mrf.mxu0
      %v3158 = vadd.f32 0.0, %v3157
      %v3159 = vpop.f32.mrf.mxu0
      %3160 = vmatprep.mubr.f32.mxu0 0.0
      %3161 = vmatmul.mubr.f32.gmra.mxu0 %v2921
      %v3162 = vpop.f32.mrf.mxu0
      %v3163 = vadd.f32 0.0, %v3162
      %v3164 = vpop.f32.mrf.mxu0
      %3165 = vmatprep.mubr.f32.mxu0 0.0
      %3166 = vmatmul.mubr.f32.gmra.mxu0 %v2924
      %v3167 = vpop.f32.mrf.mxu0
      %v3168 = vadd.f32 0.0, %v3167
      %v3169 = vpop.f32.mrf.mxu0
      %3170 = vmatprep.mubr.f32.mxu0 0.0
      %3171 = vmatmul.mubr.f32.gmra.mxu0 %v2927
      %v3172 = vpop.f32.mrf.mxu0
      %v3173 = vadd.f32 0.0, %v3172
      %v3174 = vpop.f32.mrf.mxu0
      %3175 = vmatprep.mubr.f32.mxu0 0.0
      %3176 = vmatmul.mubr.f32.gmra.mxu0 %v2930
      %v3177 = vpop.f32.mrf.mxu0
      %v3178 = vadd.f32 0.0, %v3177
      %v3179 = vpop.f32.mrf.mxu0
      %3180 = vmatprep.mubr.f32.mxu0 0.0
      %3181 = vmatmul.mubr.f32.gmra.mxu0 %v2933
      %v3182 = vpop.f32.mrf.mxu0
      %v3183 = vadd.f32 0.0, %v3182
      %v3184 = vpop.f32.mrf.mxu0
      %3185 = vmatprep.mubr.f32.mxu0 0.0
      %3186 = vmatmul.mubr.f32.gmra.mxu0 %v2936
      %v3187 = vpop.f32.mrf.mxu0
      %v3188 = vadd.f32 0.0, %v3187
      %v3189 = vpop.f32.mrf.mxu0
      %3190 = vmatprep.mubr.f32.mxu0 0.0
      %3191 = vmatmul.mubr.f32.gmra.mxu0 %v2939
      %v3192 = vpop.f32.mrf.mxu0
      %v3193 = vadd.f32 0.0, %v3192
      %v3194 = vpop.f32.mrf.mxu0
      %3195 = vmatprep.mubr.f32.mxu0 0.0
      %3196 = vmatmul.mubr.f32.gmra.mxu0 %v2942
      %v3197 = vpop.f32.mrf.mxu0
      %v3198 = vadd.f32 0.0, %v3197
      %v3199 = vpop.f32.mrf.mxu0
      %3200 = vmatprep.mubr.f32.mxu0 0.0
      %3201 = vmatmul.mubr.f32.gmra.mxu0 %v2945
      %v3202 = vpop.f32.mrf.mxu0
      %v3203 = vadd.f32 0.0, %v3202
      %v3204 = vpop.f32.mrf.mxu0
      %3205 = vmatprep.mubr.f32.mxu0 0.0
      %3206 = vmatmul.mubr.f32.gmra.mxu0 %v2948
      %v3207 = vpop.f32.mrf.mxu0
      %v3208 = vadd.f32 0.0, %v3207
      %v3209 = vpop.f32.mrf.mxu0
      %3210 = vmatprep.mubr.f32.mxu0 0.0
      %3211 = vmatmul.mubr.f32.gmra.mxu0 %v2951
      %v3212 = vpop.f32.mrf.mxu0
      %v3213 = vadd.f32 0.0, %v3212
      %v3214 = vpop.f32.mrf.mxu0
      %3215 = vmatprep.mubr.f32.mxu0 0.0
      %3216 = vmatmul.mubr.f32.gmra.mxu0 %v2954
      %v3217 = vpop.f32.mrf.mxu0
      %v3218 = vadd.f32 0.0, %v3217
      %v3219 = vpop.f32.mrf.mxu0
      %3220 = vmatprep.mubr.f32.mxu0 0.0
      %3221 = vmatmul.mubr.f32.gmra.mxu0 %v2957
      %v3222 = vpop.f32.mrf.mxu0
      %v3223 = vadd.f32 0.0, %v3222
      %v3224 = vpop.f32.mrf.mxu0
      %3225 = vmatprep.mubr.f32.mxu0 0.0
      %3226 = vmatmul.mubr.f32.gmra.mxu0 %v2960
      %v3227 = vpop.f32.mrf.mxu0
      %v3228 = vadd.f32 0.0, %v3227
      %v3229 = vpop.f32.mrf.mxu0
      %3230 = vmatprep.mubr.f32.mxu0 0.0
      %3231 = vmatmul.mubr.f32.gmra.mxu0 %v2963
      %v3232 = vpop.f32.mrf.mxu0
      %v3233 = vadd.f32 0.0, %v3232
      %v3234 = vpop.f32.mrf.mxu0
      %3235 = vmatprep.mubr.f32.mxu0 0.0
      %3236 = vmatmul.mubr.f32.gmra.mxu0 %v2966
      %v3237 = vpop.f32.mrf.mxu0
      %v3238 = vadd.f32 0.0, %v3237
      %v3239 = vpop.f32.mrf.mxu0
      %3240 = vdwg.mxu0
      %v3241 = vadd.f32 %v2761, %v3038
      %v3242 = vadd.f32 %v2762, %v3043
      %v3243 = vadd.f32 %v2763, %v3048
      %v3244 = vadd.f32 %v2764, %v3053
      %v3245 = vadd.f32 %v2765, %v3058
      %v3246 = vadd.f32 %v2766, %v3063
      %v3247 = vadd.f32 %v2767, %v3068
      %v3248 = vadd.f32 %v2768, %v3073
      %v3249 = vadd.f32 %v2769, %v3078
      %v3250 = vadd.f32 %v2770, %v3083
      %v3251 = vadd.f32 %v2771, %v3088
      %v3252 = vadd.f32 %v2772, %v3093
      %v3253 = vadd.f32 %v2773, %v3098
      %v3254 = vadd.f32 %v2774, %v3103
      %v3255 = vadd.f32 %v2775, %v3108
      %v3256 = vadd.f32 %v2776, %v3113
      %v3257 = vadd.f32 %v2777, %v3118
      %v3258 = vadd.f32 %v2778, %v3123
      %v3259 = vadd.f32 %v2779, %v3128
      %v3260 = vadd.f32 %v2780, %v3133
      %v3261 = vadd.f32 %v2781, %v3138
      %v3262 = vadd.f32 %v2782, %v3143
      %v3263 = vadd.f32 %v2783, %v3148
      %v3264 = vadd.f32 %v2784, %v3153
      %v3265 = vadd.f32 %v2785, %v3158
      %v3266 = vadd.f32 %v2786, %v3163
      %v3267 = vadd.f32 %v2787, %v3168
      %v3268 = vadd.f32 %v2788, %v3173
      %v3269 = vadd.f32 %v2789, %v3178
      %v3270 = vadd.f32 %v2790, %v3183
      %v3271 = vadd.f32 %v2791, %v3188
      %v3272 = vadd.f32 %v2792, %v3193
      %v3273 = vadd.f32 %v2793, %v3198
      %v3274 = vadd.f32 %v2794, %v3203
      %v3275 = vadd.f32 %v2795, %v3208
      %v3276 = vadd.f32 %v2796, %v3213
      %v3277 = vadd.f32 %v2797, %v3218
      %v3278 = vadd.f32 %v2798, %v3223
      %v3279 = vadd.f32 %v2799, %v3228
      %v3280 = vadd.f32 %v2800, %v3233
      %v3281 = vadd.f32 %v2801, %v3238
      %v3282 = vld [vmem:[#allocation2 + $0x24] sm:$0xff]
      %v3283 = vld [vmem:[#allocation2 + $0x2c] sm:$0xff]
      %v3284 = vld [vmem:[#allocation2 + $0x34] sm:$0xff]
      %v3285 = vld [vmem:[#allocation2 + $0x3c] sm:$0xff]
      %v3286 = vld [vmem:[#allocation2 + $0x44] sm:$0xff]
      %v3287 = vld [vmem:[#allocation2 + $0x4c] sm:$0xff]
      %v3288 = vld [vmem:[#allocation2 + $0x54] sm:$0xff]
      %v3289 = vld [vmem:[#allocation2 + $0x5c] sm:$0xff]
      %v3290 = vld [vmem:[#allocation2 + $0x64] sm:$0xff]
      %v3291 = vld [vmem:[#allocation2 + $0x6c] sm:$0xff]
      %v3292 = vld [vmem:[#allocation2 + $0x74] sm:$0xff]
      %v3293 = vld [vmem:[#allocation2 + $0x7c] sm:$0xff]
      %v3294 = vld [vmem:[#allocation2 + $0x84] sm:$0xff]
      %v3295 = vld [vmem:[#allocation2 + $0x8c] sm:$0xff]
      %v3296 = vld [vmem:[#allocation2 + $0x94] sm:$0xff]
      %v3297 = vld [vmem:[#allocation2 + $0x9c] sm:$0xff]
      %v3298 = vld [vmem:[#allocation2 + $0xa4] sm:$0xff]
      %v3299 = vld [vmem:[#allocation2 + $0xac] sm:$0xff]
      %v3300 = vld [vmem:[#allocation2 + $0xb4] sm:$0xff]
      %v3301 = vld [vmem:[#allocation2 + $0xbc] sm:$0xff]
      %v3302 = vld [vmem:[#allocation2 + $0xc4] sm:$0xff]
      %v3303 = vld [vmem:[#allocation2 + $0xcc] sm:$0xff]
      %v3304 = vld [vmem:[#allocation2 + $0xd4] sm:$0xff]
      %v3305 = vld [vmem:[#allocation2 + $0xdc] sm:$0xff]
      %v3306 = vld [vmem:[#allocation2 + $0xe4] sm:$0xff]
      %v3307 = vld [vmem:[#allocation2 + $0xec] sm:$0xff]
      %v3308 = vld [vmem:[#allocation2 + $0xf4] sm:$0xff]
      %v3309 = vld [vmem:[#allocation2 + $0xfc] sm:$0xff]
      %v3310 = vld [vmem:[#allocation2 + $0x104] sm:$0xff]
      %v3311 = vld [vmem:[#allocation2 + $0x10c] sm:$0xff]
      %v3312 = vld [vmem:[#allocation2 + $0x114] sm:$0xff]
      %v3313 = vld [vmem:[#allocation2 + $0x11c] sm:$0xff]
      %v3314 = vld [vmem:[#allocation2 + $0x124] sm:$0xff]
      %v3315 = vld [vmem:[#allocation2 + $0x12c] sm:$0xff]
      %v3316 = vld [vmem:[#allocation2 + $0x134] sm:$0xff]
      %v3317 = vld [vmem:[#allocation2 + $0x13c] sm:$0xff]
      %v3318 = vld [vmem:[#allocation2 + $0x144] sm:$0xff]
      %v3319 = vld [vmem:[#allocation2 + $0x14c] sm:$0xff]
      %v3320 = vld [vmem:[#allocation2 + $0x154] sm:$0xff]
      %v3321 = vld [vmem:[#allocation2 + $0x15c] sm:$0xff]
      %v3322 = vld [vmem:[#allocation2 + $0x164] sm:$0xf]
      %s3323 = scalar_lea.vmem %s1, 24
      %v3324 = vld [vmem:[%s3323] sm:$0xf]
      %v3326 = vsel %vm306, %v3282, 0
      %v3329 = vsel %vm306, %v3283, 0
      %v3332 = vsel %vm306, %v3284, 0
      %v3335 = vsel %vm306, %v3285, 0
      %v3338 = vsel %vm306, %v3286, 0
      %v3341 = vsel %vm306, %v3287, 0
      %v3344 = vsel %vm306, %v3288, 0
      %v3347 = vsel %vm306, %v3289, 0
      %v3350 = vsel %vm306, %v3290, 0
      %v3353 = vsel %vm306, %v3291, 0
      %v3356 = vsel %vm306, %v3292, 0
      %v3359 = vsel %vm306, %v3293, 0
      %v3362 = vsel %vm306, %v3294, 0
      %v3365 = vsel %vm306, %v3295, 0
      %v3368 = vsel %vm306, %v3296, 0
      %v3371 = vsel %vm306, %v3297, 0
      %v3374 = vsel %vm306, %v3298, 0
      %v3377 = vsel %vm306, %v3299, 0
      %v3380 = vsel %vm306, %v3300, 0
      %v3383 = vsel %vm306, %v3301, 0
      %v3386 = vsel %vm306, %v3302, 0
      %v3389 = vsel %vm306, %v3303, 0
      %v3392 = vsel %vm306, %v3304, 0
      %v3395 = vsel %vm306, %v3305, 0
      %v3398 = vsel %vm306, %v3306, 0
      %v3401 = vsel %vm306, %v3307, 0
      %v3404 = vsel %vm306, %v3308, 0
      %v3407 = vsel %vm306, %v3309, 0
      %v3410 = vsel %vm306, %v3310, 0
      %v3413 = vsel %vm306, %v3311, 0
      %v3416 = vsel %vm306, %v3312, 0
      %v3419 = vsel %vm306, %v3313, 0
      %v3422 = vsel %vm306, %v3314, 0
      %v3425 = vsel %vm306, %v3315, 0
      %v3428 = vsel %vm306, %v3316, 0
      %v3431 = vsel %vm306, %v3317, 0
      %v3434 = vsel %vm306, %v3318, 0
      %v3437 = vsel %vm306, %v3319, 0
      %v3440 = vsel %vm306, %v3320, 0
      %v3443 = vsel %vm306, %v3321, 0
      %v3446 = vsel %vm306, %v3322, 0
      %v3449 = vsel %vm692, %v3324, 0
      %3451 = vmatprep.subr.mxu0 0.0
      %3452 = vmatpush1.msra.mxu0 0.0
      %3453 = vmatprep.subr.mxu0 0.0
      %3454 = vmatpush1.msra.mxu0 0.0
      %3455 = vmatprep.subr.mxu0 0.0
      %3456 = vmatpush1.msra.mxu0 0.0
      %3457 = vmatprep.subr.mxu0 0.0
      %3458 = vmatpush1.msra.mxu0 0.0
      %3459 = vmatprep.subr.mxu0 0.0
      %3460 = vmatpush1.msra.mxu0 0.0
      %3461 = vmatprep.subr.mxu0 0.0
      %3462 = vmatpush1.msra.mxu0 0.0
      %3463 = vmatprep.subr.mxu0 0.0
      %3464 = vmatpush1.msra.mxu0 0.0
      %3465 = vmatprep.subr.mxu0 0.0
      %3466 = vmatpush1.msra.mxu0 0.0
      %3467 = vmatprep.subr.mxu0 0.0
      %3468 = vmatpush1.msra.mxu0 0.0
      %3469 = vmatprep.subr.mxu0 0.0
      %3470 = vmatpush1.msra.mxu0 0.0
      %3471 = vmatprep.subr.mxu0 0.0
      %3472 = vmatpush1.msra.mxu0 0.0
      %3473 = vmatprep.subr.mxu0 0.0
      %3474 = vmatpush1.msra.mxu0 0.0
      %3475 = vmatprep.subr.mxu0 0.0
      %3476 = vmatpush1.msra.mxu0 0.0
      %3477 = vmatprep.subr.mxu0 0.0
      %3478 = vmatpush1.msra.mxu0 0.0
      %3479 = vmatprep.subr.mxu0 0.0
      %3480 = vmatpush1.msra.mxu0 0.0
      %3481 = vmatprep.subr.mxu0 0.0
      %3482 = vmatpush1.msra.mxu0 %v3449
      %3483 = vmatprep.subr.mxu0 0.0
      %3484 = vmatpush2.msra.mxu0 0.0
      %3485 = vmatprep.subr.mxu0 0.0
      %3486 = vmatpush2.msra.mxu0 0.0
      %3487 = vmatprep.subr.mxu0 0.0
      %3488 = vmatpush2.msra.mxu0 0.0
      %3489 = vmatprep.subr.mxu0 0.0
      %3490 = vmatpush2.msra.mxu0 0.0
      %3491 = vmatprep.subr.mxu0 0.0
      %3492 = vmatpush2.msra.mxu0 0.0
      %3493 = vmatprep.subr.mxu0 0.0
      %3494 = vmatpush2.msra.mxu0 0.0
      %3495 = vmatprep.subr.mxu0 0.0
      %3496 = vmatpush2.msra.mxu0 0.0
      %3497 = vmatprep.subr.mxu0 0.0
      %3498 = vmatpush2.msra.mxu0 0.0
      %3499 = vmatprep.subr.mxu0 0.0
      %3500 = vmatpush2.msra.mxu0 0.0
      %3501 = vmatprep.subr.mxu0 0.0
      %3502 = vmatpush2.msra.mxu0 0.0
      %3503 = vmatprep.subr.mxu0 0.0
      %3504 = vmatpush2.msra.mxu0 0.0
      %3505 = vmatprep.subr.mxu0 0.0
      %3506 = vmatpush2.msra.mxu0 0.0
      %3507 = vmatprep.subr.mxu0 0.0
      %3508 = vmatpush2.msra.mxu0 0.0
      %3509 = vmatprep.subr.mxu0 0.0
      %3510 = vmatpush2.msra.mxu0 0.0
      %3511 = vmatprep.subr.mxu0 0.0
      %3512 = vmatpush2.msra.mxu0 0.0
      %3513 = vmatprep.subr.mxu0 0.0
      %3514 = vmatpush2.msra.mxu0 0.0
      %3515 = vmatprep.mubr.f32.mxu0 0.0
      %3516 = vmatmul.mubr.f32.gmra.mxu0 %v3326
      %v3517 = vpop.f32.mrf.mxu0
      %v3518 = vadd.f32 0.0, %v3517
      %v3519 = vpop.f32.mrf.mxu0
      %3520 = vmatprep.mubr.f32.mxu0 0.0
      %3521 = vmatmul.mubr.f32.gmra.mxu0 %v3329
      %v3522 = vpop.f32.mrf.mxu0
      %v3523 = vadd.f32 0.0, %v3522
      %v3524 = vpop.f32.mrf.mxu0
      %3525 = vmatprep.mubr.f32.mxu0 0.0
      %3526 = vmatmul.mubr.f32.gmra.mxu0 %v3332
      %v3527 = vpop.f32.mrf.mxu0
      %v3528 = vadd.f32 0.0, %v3527
      %v3529 = vpop.f32.mrf.mxu0
      %3530 = vmatprep.mubr.f32.mxu0 0.0
      %3531 = vmatmul.mubr.f32.gmra.mxu0 %v3335
      %v3532 = vpop.f32.mrf.mxu0
      %v3533 = vadd.f32 0.0, %v3532
      %v3534 = vpop.f32.mrf.mxu0
      %3535 = vmatprep.mubr.f32.mxu0 0.0
      %3536 = vmatmul.mubr.f32.gmra.mxu0 %v3338
      %v3537 = vpop.f32.mrf.mxu0
      %v3538 = vadd.f32 0.0, %v3537
      %v3539 = vpop.f32.mrf.mxu0
      %3540 = vmatprep.mubr.f32.mxu0 0.0
      %3541 = vmatmul.mubr.f32.gmra.mxu0 %v3341
      %v3542 = vpop.f32.mrf.mxu0
      %v3543 = vadd.f32 0.0, %v3542
      %v3544 = vpop.f32.mrf.mxu0
      %3545 = vmatprep.mubr.f32.mxu0 0.0
      %3546 = vmatmul.mubr.f32.gmra.mxu0 %v3344
      %v3547 = vpop.f32.mrf.mxu0
      %v3548 = vadd.f32 0.0, %v3547
      %v3549 = vpop.f32.mrf.mxu0
      %3550 = vmatprep.mubr.f32.mxu0 0.0
      %3551 = vmatmul.mubr.f32.gmra.mxu0 %v3347
      %v3552 = vpop.f32.mrf.mxu0
      %v3553 = vadd.f32 0.0, %v3552
      %v3554 = vpop.f32.mrf.mxu0
      %3555 = vmatprep.mubr.f32.mxu0 0.0
      %3556 = vmatmul.mubr.f32.gmra.mxu0 %v3350
      %v3557 = vpop.f32.mrf.mxu0
      %v3558 = vadd.f32 0.0, %v3557
      %v3559 = vpop.f32.mrf.mxu0
      %3560 = vmatprep.mubr.f32.mxu0 0.0
      %3561 = vmatmul.mubr.f32.gmra.mxu0 %v3353
      %v3562 = vpop.f32.mrf.mxu0
      %v3563 = vadd.f32 0.0, %v3562
      %v3564 = vpop.f32.mrf.mxu0
      %3565 = vmatprep.mubr.f32.mxu0 0.0
      %3566 = vmatmul.mubr.f32.gmra.mxu0 %v3356
      %v3567 = vpop.f32.mrf.mxu0
      %v3568 = vadd.f32 0.0, %v3567
      %v3569 = vpop.f32.mrf.mxu0
      %3570 = vmatprep.mubr.f32.mxu0 0.0
      %3571 = vmatmul.mubr.f32.gmra.mxu0 %v3359
      %v3572 = vpop.f32.mrf.mxu0
      %v3573 = vadd.f32 0.0, %v3572
      %v3574 = vpop.f32.mrf.mxu0
      %3575 = vmatprep.mubr.f32.mxu0 0.0
      %3576 = vmatmul.mubr.f32.gmra.mxu0 %v3362
      %v3577 = vpop.f32.mrf.mxu0
      %v3578 = vadd.f32 0.0, %v3577
      %v3579 = vpop.f32.mrf.mxu0
      %3580 = vmatprep.mubr.f32.mxu0 0.0
      %3581 = vmatmul.mubr.f32.gmra.mxu0 %v3365
      %v3582 = vpop.f32.mrf.mxu0
      %v3583 = vadd.f32 0.0, %v3582
      %v3584 = vpop.f32.mrf.mxu0
      %3585 = vmatprep.mubr.f32.mxu0 0.0
      %3586 = vmatmul.mubr.f32.gmra.mxu0 %v3368
      %v3587 = vpop.f32.mrf.mxu0
      %v3588 = vadd.f32 0.0, %v3587
      %v3589 = vpop.f32.mrf.mxu0
      %3590 = vmatprep.mubr.f32.mxu0 0.0
      %3591 = vmatmul.mubr.f32.gmra.mxu0 %v3371
      %v3592 = vpop.f32.mrf.mxu0
      %v3593 = vadd.f32 0.0, %v3592
      %v3594 = vpop.f32.mrf.mxu0
      %3595 = vmatprep.mubr.f32.mxu0 0.0
      %3596 = vmatmul.mubr.f32.gmra.mxu0 %v3374
      %v3597 = vpop.f32.mrf.mxu0
      %v3598 = vadd.f32 0.0, %v3597
      %v3599 = vpop.f32.mrf.mxu0
      %3600 = vmatprep.mubr.f32.mxu0 0.0
      %3601 = vmatmul.mubr.f32.gmra.mxu0 %v3377
      %v3602 = vpop.f32.mrf.mxu0
      %v3603 = vadd.f32 0.0, %v3602
      %v3604 = vpop.f32.mrf.mxu0
      %3605 = vmatprep.mubr.f32.mxu0 0.0
      %3606 = vmatmul.mubr.f32.gmra.mxu0 %v3380
      %v3607 = vpop.f32.mrf.mxu0
      %v3608 = vadd.f32 0.0, %v3607
      %v3609 = vpop.f32.mrf.mxu0
      %3610 = vmatprep.mubr.f32.mxu0 0.0
      %3611 = vmatmul.mubr.f32.gmra.mxu0 %v3383
      %v3612 = vpop.f32.mrf.mxu0
      %v3613 = vadd.f32 0.0, %v3612
      %v3614 = vpop.f32.mrf.mxu0
      %3615 = vmatprep.mubr.f32.mxu0 0.0
      %3616 = vmatmul.mubr.f32.gmra.mxu0 %v3386
      %v3617 = vpop.f32.mrf.mxu0
      %v3618 = vadd.f32 0.0, %v3617
      %v3619 = vpop.f32.mrf.mxu0
      %3620 = vmatprep.mubr.f32.mxu0 0.0
      %3621 = vmatmul.mubr.f32.gmra.mxu0 %v3389
      %v3622 = vpop.f32.mrf.mxu0
      %v3623 = vadd.f32 0.0, %v3622
      %v3624 = vpop.f32.mrf.mxu0
      %3625 = vmatprep.mubr.f32.mxu0 0.0
      %3626 = vmatmul.mubr.f32.gmra.mxu0 %v3392
      %v3627 = vpop.f32.mrf.mxu0
      %v3628 = vadd.f32 0.0, %v3627
      %v3629 = vpop.f32.mrf.mxu0
      %3630 = vmatprep.mubr.f32.mxu0 0.0
      %3631 = vmatmul.mubr.f32.gmra.mxu0 %v3395
      %v3632 = vpop.f32.mrf.mxu0
      %v3633 = vadd.f32 0.0, %v3632
      %v3634 = vpop.f32.mrf.mxu0
      %3635 = vmatprep.mubr.f32.mxu0 0.0
      %3636 = vmatmul.mubr.f32.gmra.mxu0 %v3398
      %v3637 = vpop.f32.mrf.mxu0
      %v3638 = vadd.f32 0.0, %v3637
      %v3639 = vpop.f32.mrf.mxu0
      %3640 = vmatprep.mubr.f32.mxu0 0.0
      %3641 = vmatmul.mubr.f32.gmra.mxu0 %v3401
      %v3642 = vpop.f32.mrf.mxu0
      %v3643 = vadd.f32 0.0, %v3642
      %v3644 = vpop.f32.mrf.mxu0
      %3645 = vmatprep.mubr.f32.mxu0 0.0
      %3646 = vmatmul.mubr.f32.gmra.mxu0 %v3404
      %v3647 = vpop.f32.mrf.mxu0
      %v3648 = vadd.f32 0.0, %v3647
      %v3649 = vpop.f32.mrf.mxu0
      %3650 = vmatprep.mubr.f32.mxu0 0.0
      %3651 = vmatmul.mubr.f32.gmra.mxu0 %v3407
      %v3652 = vpop.f32.mrf.mxu0
      %v3653 = vadd.f32 0.0, %v3652
      %v3654 = vpop.f32.mrf.mxu0
      %3655 = vmatprep.mubr.f32.mxu0 0.0
      %3656 = vmatmul.mubr.f32.gmra.mxu0 %v3410
      %v3657 = vpop.f32.mrf.mxu0
      %v3658 = vadd.f32 0.0, %v3657
      %v3659 = vpop.f32.mrf.mxu0
      %3660 = vmatprep.mubr.f32.mxu0 0.0
      %3661 = vmatmul.mubr.f32.gmra.mxu0 %v3413
      %v3662 = vpop.f32.mrf.mxu0
      %v3663 = vadd.f32 0.0, %v3662
      %v3664 = vpop.f32.mrf.mxu0
      %3665 = vmatprep.mubr.f32.mxu0 0.0
      %3666 = vmatmul.mubr.f32.gmra.mxu0 %v3416
      %v3667 = vpop.f32.mrf.mxu0
      %v3668 = vadd.f32 0.0, %v3667
      %v3669 = vpop.f32.mrf.mxu0
      %3670 = vmatprep.mubr.f32.mxu0 0.0
      %3671 = vmatmul.mubr.f32.gmra.mxu0 %v3419
      %v3672 = vpop.f32.mrf.mxu0
      %v3673 = vadd.f32 0.0, %v3672
      %v3674 = vpop.f32.mrf.mxu0
      %3675 = vmatprep.mubr.f32.mxu0 0.0
      %3676 = vmatmul.mubr.f32.gmra.mxu0 %v3422
      %v3677 = vpop.f32.mrf.mxu0
      %v3678 = vadd.f32 0.0, %v3677
      %v3679 = vpop.f32.mrf.mxu0
      %3680 = vmatprep.mubr.f32.mxu0 0.0
      %3681 = vmatmul.mubr.f32.gmra.mxu0 %v3425
      %v3682 = vpop.f32.mrf.mxu0
      %v3683 = vadd.f32 0.0, %v3682
      %v3684 = vpop.f32.mrf.mxu0
      %3685 = vmatprep.mubr.f32.mxu0 0.0
      %3686 = vmatmul.mubr.f32.gmra.mxu0 %v3428
      %v3687 = vpop.f32.mrf.mxu0
      %v3688 = vadd.f32 0.0, %v3687
      %v3689 = vpop.f32.mrf.mxu0
      %3690 = vmatprep.mubr.f32.mxu0 0.0
      %3691 = vmatmul.mubr.f32.gmra.mxu0 %v3431
      %v3692 = vpop.f32.mrf.mxu0
      %v3693 = vadd.f32 0.0, %v3692
      %v3694 = vpop.f32.mrf.mxu0
      %3695 = vmatprep.mubr.f32.mxu0 0.0
      %3696 = vmatmul.mubr.f32.gmra.mxu0 %v3434
      %v3697 = vpop.f32.mrf.mxu0
      %v3698 = vadd.f32 0.0, %v3697
      %v3699 = vpop.f32.mrf.mxu0
      %3700 = vmatprep.mubr.f32.mxu0 0.0
      %3701 = vmatmul.mubr.f32.gmra.mxu0 %v3437
      %v3702 = vpop.f32.mrf.mxu0
      %v3703 = vadd.f32 0.0, %v3702
      %v3704 = vpop.f32.mrf.mxu0
      %3705 = vmatprep.mubr.f32.mxu0 0.0
      %3706 = vmatmul.mubr.f32.gmra.mxu0 %v3440
      %v3707 = vpop.f32.mrf.mxu0
      %v3708 = vadd.f32 0.0, %v3707
      %v3709 = vpop.f32.mrf.mxu0
      %3710 = vmatprep.mubr.f32.mxu0 0.0
      %3711 = vmatmul.mubr.f32.gmra.mxu0 %v3443
      %v3712 = vpop.f32.mrf.mxu0
      %v3713 = vadd.f32 0.0, %v3712
      %v3714 = vpop.f32.mrf.mxu0
      %3715 = vmatprep.mubr.f32.mxu0 0.0
      %3716 = vmatmul.mubr.f32.gmra.mxu0 %v3446
      %v3717 = vpop.f32.mrf.mxu0
      %v3718 = vadd.f32 0.0, %v3717
      %v3719 = vpop.f32.mrf.mxu0
      %3720 = vdwg.mxu0
      %v3721 = vadd.f32 %v3241, %v3518
      %v3722 = vadd.f32 %v3242, %v3523
      %v3723 = vadd.f32 %v3243, %v3528
      %v3724 = vadd.f32 %v3244, %v3533
      %v3725 = vadd.f32 %v3245, %v3538
      %v3726 = vadd.f32 %v3246, %v3543
      %v3727 = vadd.f32 %v3247, %v3548
      %v3728 = vadd.f32 %v3248, %v3553
      %v3729 = vadd.f32 %v3249, %v3558
      %v3730 = vadd.f32 %v3250, %v3563
      %v3731 = vadd.f32 %v3251, %v3568
      %v3732 = vadd.f32 %v3252, %v3573
      %v3733 = vadd.f32 %v3253, %v3578
      %v3734 = vadd.f32 %v3254, %v3583
      %v3735 = vadd.f32 %v3255, %v3588
      %v3736 = vadd.f32 %v3256, %v3593
      %v3737 = vadd.f32 %v3257, %v3598
      %v3738 = vadd.f32 %v3258, %v3603
      %v3739 = vadd.f32 %v3259, %v3608
      %v3740 = vadd.f32 %v3260, %v3613
      %v3741 = vadd.f32 %v3261, %v3618
      %v3742 = vadd.f32 %v3262, %v3623
      %v3743 = vadd.f32 %v3263, %v3628
      %v3744 = vadd.f32 %v3264, %v3633
      %v3745 = vadd.f32 %v3265, %v3638
      %v3746 = vadd.f32 %v3266, %v3643
      %v3747 = vadd.f32 %v3267, %v3648
      %v3748 = vadd.f32 %v3268, %v3653
      %v3749 = vadd.f32 %v3269, %v3658
      %v3750 = vadd.f32 %v3270, %v3663
      %v3751 = vadd.f32 %v3271, %v3668
      %v3752 = vadd.f32 %v3272, %v3673
      %v3753 = vadd.f32 %v3273, %v3678
      %v3754 = vadd.f32 %v3274, %v3683
      %v3755 = vadd.f32 %v3275, %v3688
      %v3756 = vadd.f32 %v3276, %v3693
      %v3757 = vadd.f32 %v3277, %v3698
      %v3758 = vadd.f32 %v3278, %v3703
      %v3759 = vadd.f32 %v3279, %v3708
      %v3760 = vadd.f32 %v3280, %v3713
      %v3761 = vadd.f32 %v3281, %v3718
      %v3762 = vld [vmem:[#allocation2 + $0x25] sm:$0xff]
      %v3763 = vld [vmem:[#allocation2 + $0x2d] sm:$0xff]
      %v3764 = vld [vmem:[#allocation2 + $0x35] sm:$0xff]
      %v3765 = vld [vmem:[#allocation2 + $0x3d] sm:$0xff]
      %v3766 = vld [vmem:[#allocation2 + $0x45] sm:$0xff]
      %v3767 = vld [vmem:[#allocation2 + $0x4d] sm:$0xff]
      %v3768 = vld [vmem:[#allocation2 + $0x55] sm:$0xff]
      %v3769 = vld [vmem:[#allocation2 + $0x5d] sm:$0xff]
      %v3770 = vld [vmem:[#allocation2 + $0x65] sm:$0xff]
      %v3771 = vld [vmem:[#allocation2 + $0x6d] sm:$0xff]
      %v3772 = vld [vmem:[#allocation2 + $0x75] sm:$0xff]
      %v3773 = vld [vmem:[#allocation2 + $0x7d] sm:$0xff]
      %v3774 = vld [vmem:[#allocation2 + $0x85] sm:$0xff]
      %v3775 = vld [vmem:[#allocation2 + $0x8d] sm:$0xff]
      %v3776 = vld [vmem:[#allocation2 + $0x95] sm:$0xff]
      %v3777 = vld [vmem:[#allocation2 + $0x9d] sm:$0xff]
      %v3778 = vld [vmem:[#allocation2 + $0xa5] sm:$0xff]
      %v3779 = vld [vmem:[#allocation2 + $0xad] sm:$0xff]
      %v3780 = vld [vmem:[#allocation2 + $0xb5] sm:$0xff]
      %v3781 = vld [vmem:[#allocation2 + $0xbd] sm:$0xff]
      %v3782 = vld [vmem:[#allocation2 + $0xc5] sm:$0xff]
      %v3783 = vld [vmem:[#allocation2 + $0xcd] sm:$0xff]
      %v3784 = vld [vmem:[#allocation2 + $0xd5] sm:$0xff]
      %v3785 = vld [vmem:[#allocation2 + $0xdd] sm:$0xff]
      %v3786 = vld [vmem:[#allocation2 + $0xe5] sm:$0xff]
      %v3787 = vld [vmem:[#allocation2 + $0xed] sm:$0xff]
      %v3788 = vld [vmem:[#allocation2 + $0xf5] sm:$0xff]
      %v3789 = vld [vmem:[#allocation2 + $0xfd] sm:$0xff]
      %v3790 = vld [vmem:[#allocation2 + $0x105] sm:$0xff]
      %v3791 = vld [vmem:[#allocation2 + $0x10d] sm:$0xff]
      %v3792 = vld [vmem:[#allocation2 + $0x115] sm:$0xff]
      %v3793 = vld [vmem:[#allocation2 + $0x11d] sm:$0xff]
      %v3794 = vld [vmem:[#allocation2 + $0x125] sm:$0xff]
      %v3795 = vld [vmem:[#allocation2 + $0x12d] sm:$0xff]
      %v3796 = vld [vmem:[#allocation2 + $0x135] sm:$0xff]
      %v3797 = vld [vmem:[#allocation2 + $0x13d] sm:$0xff]
      %v3798 = vld [vmem:[#allocation2 + $0x145] sm:$0xff]
      %v3799 = vld [vmem:[#allocation2 + $0x14d] sm:$0xff]
      %v3800 = vld [vmem:[#allocation2 + $0x155] sm:$0xff]
      %v3801 = vld [vmem:[#allocation2 + $0x15d] sm:$0xff]
      %v3802 = vld [vmem:[#allocation2 + $0x165] sm:$0xf]
      %s3803 = scalar_lea.vmem %s1, 28
      %v3804 = vld [vmem:[%s3803] sm:$0xf]
      %v3806 = vsel %vm306, %v3762, 0
      %v3809 = vsel %vm306, %v3763, 0
      %v3812 = vsel %vm306, %v3764, 0
      %v3815 = vsel %vm306, %v3765, 0
      %v3818 = vsel %vm306, %v3766, 0
      %v3821 = vsel %vm306, %v3767, 0
      %v3824 = vsel %vm306, %v3768, 0
      %v3827 = vsel %vm306, %v3769, 0
      %v3830 = vsel %vm306, %v3770, 0
      %v3833 = vsel %vm306, %v3771, 0
      %v3836 = vsel %vm306, %v3772, 0
      %v3839 = vsel %vm306, %v3773, 0
      %v3842 = vsel %vm306, %v3774, 0
      %v3845 = vsel %vm306, %v3775, 0
      %v3848 = vsel %vm306, %v3776, 0
      %v3851 = vsel %vm306, %v3777, 0
      %v3854 = vsel %vm306, %v3778, 0
      %v3857 = vsel %vm306, %v3779, 0
      %v3860 = vsel %vm306, %v3780, 0
      %v3863 = vsel %vm306, %v3781, 0
      %v3866 = vsel %vm306, %v3782, 0
      %v3869 = vsel %vm306, %v3783, 0
      %v3872 = vsel %vm306, %v3784, 0
      %v3875 = vsel %vm306, %v3785, 0
      %v3878 = vsel %vm306, %v3786, 0
      %v3881 = vsel %vm306, %v3787, 0
      %v3884 = vsel %vm306, %v3788, 0
      %v3887 = vsel %vm306, %v3789, 0
      %v3890 = vsel %vm306, %v3790, 0
      %v3893 = vsel %vm306, %v3791, 0
      %v3896 = vsel %vm306, %v3792, 0
      %v3899 = vsel %vm306, %v3793, 0
      %v3902 = vsel %vm306, %v3794, 0
      %v3905 = vsel %vm306, %v3795, 0
      %v3908 = vsel %vm306, %v3796, 0
      %v3911 = vsel %vm306, %v3797, 0
      %v3914 = vsel %vm306, %v3798, 0
      %v3917 = vsel %vm306, %v3799, 0
      %v3920 = vsel %vm306, %v3800, 0
      %v3923 = vsel %vm306, %v3801, 0
      %v3926 = vsel %vm306, %v3802, 0
      %v3929 = vsel %vm692, %v3804, 0
      %3931 = vmatprep.subr.mxu0 0.0
      %3932 = vmatpush1.msra.mxu0 0.0
      %3933 = vmatprep.subr.mxu0 0.0
      %3934 = vmatpush1.msra.mxu0 0.0
      %3935 = vmatprep.subr.mxu0 0.0
      %3936 = vmatpush1.msra.mxu0 0.0
      %3937 = vmatprep.subr.mxu0 0.0
      %3938 = vmatpush1.msra.mxu0 0.0
      %3939 = vmatprep.subr.mxu0 0.0
      %3940 = vmatpush1.msra.mxu0 0.0
      %3941 = vmatprep.subr.mxu0 0.0
      %3942 = vmatpush1.msra.mxu0 0.0
      %3943 = vmatprep.subr.mxu0 0.0
      %3944 = vmatpush1.msra.mxu0 0.0
      %3945 = vmatprep.subr.mxu0 0.0
      %3946 = vmatpush1.msra.mxu0 0.0
      %3947 = vmatprep.subr.mxu0 0.0
      %3948 = vmatpush1.msra.mxu0 0.0
      %3949 = vmatprep.subr.mxu0 0.0
      %3950 = vmatpush1.msra.mxu0 0.0
      %3951 = vmatprep.subr.mxu0 0.0
      %3952 = vmatpush1.msra.mxu0 0.0
      %3953 = vmatprep.subr.mxu0 0.0
      %3954 = vmatpush1.msra.mxu0 0.0
      %3955 = vmatprep.subr.mxu0 0.0
      %3956 = vmatpush1.msra.mxu0 0.0
      %3957 = vmatprep.subr.mxu0 0.0
      %3958 = vmatpush1.msra.mxu0 0.0
      %3959 = vmatprep.subr.mxu0 0.0
      %3960 = vmatpush1.msra.mxu0 0.0
      %3961 = vmatprep.subr.mxu0 0.0
      %3962 = vmatpush1.msra.mxu0 %v3929
      %3963 = vmatprep.subr.mxu0 0.0
      %3964 = vmatpush2.msra.mxu0 0.0
      %3965 = vmatprep.subr.mxu0 0.0
      %3966 = vmatpush2.msra.mxu0 0.0
      %3967 = vmatprep.subr.mxu0 0.0
      %3968 = vmatpush2.msra.mxu0 0.0
      %3969 = vmatprep.subr.mxu0 0.0
      %3970 = vmatpush2.msra.mxu0 0.0
      %3971 = vmatprep.subr.mxu0 0.0
      %3972 = vmatpush2.msra.mxu0 0.0
      %3973 = vmatprep.subr.mxu0 0.0
      %3974 = vmatpush2.msra.mxu0 0.0
      %3975 = vmatprep.subr.mxu0 0.0
      %3976 = vmatpush2.msra.mxu0 0.0
      %3977 = vmatprep.subr.mxu0 0.0
      %3978 = vmatpush2.msra.mxu0 0.0
      %3979 = vmatprep.subr.mxu0 0.0
      %3980 = vmatpush2.msra.mxu0 0.0
      %3981 = vmatprep.subr.mxu0 0.0
      %3982 = vmatpush2.msra.mxu0 0.0
      %3983 = vmatprep.subr.mxu0 0.0
      %3984 = vmatpush2.msra.mxu0 0.0
      %3985 = vmatprep.subr.mxu0 0.0
      %3986 = vmatpush2.msra.mxu0 0.0
      %3987 = vmatprep.subr.mxu0 0.0
      %3988 = vmatpush2.msra.mxu0 0.0
      %3989 = vmatprep.subr.mxu0 0.0
      %3990 = vmatpush2.msra.mxu0 0.0
      %3991 = vmatprep.subr.mxu0 0.0
      %3992 = vmatpush2.msra.mxu0 0.0
      %3993 = vmatprep.subr.mxu0 0.0
      %3994 = vmatpush2.msra.mxu0 0.0
      %3995 = vmatprep.mubr.f32.mxu0 0.0
      %3996 = vmatmul.mubr.f32.gmra.mxu0 %v3806
      %v3997 = vpop.f32.mrf.mxu0
      %v3998 = vadd.f32 0.0, %v3997
      %v3999 = vpop.f32.mrf.mxu0
      %4000 = vmatprep.mubr.f32.mxu0 0.0
      %4001 = vmatmul.mubr.f32.gmra.mxu0 %v3809
      %v4002 = vpop.f32.mrf.mxu0
      %v4003 = vadd.f32 0.0, %v4002
      %v4004 = vpop.f32.mrf.mxu0
      %4005 = vmatprep.mubr.f32.mxu0 0.0
      %4006 = vmatmul.mubr.f32.gmra.mxu0 %v3812
      %v4007 = vpop.f32.mrf.mxu0
      %v4008 = vadd.f32 0.0, %v4007
      %v4009 = vpop.f32.mrf.mxu0
      %4010 = vmatprep.mubr.f32.mxu0 0.0
      %4011 = vmatmul.mubr.f32.gmra.mxu0 %v3815
      %v4012 = vpop.f32.mrf.mxu0
      %v4013 = vadd.f32 0.0, %v4012
      %v4014 = vpop.f32.mrf.mxu0
      %4015 = vmatprep.mubr.f32.mxu0 0.0
      %4016 = vmatmul.mubr.f32.gmra.mxu0 %v3818
      %v4017 = vpop.f32.mrf.mxu0
      %v4018 = vadd.f32 0.0, %v4017
      %v4019 = vpop.f32.mrf.mxu0
      %4020 = vmatprep.mubr.f32.mxu0 0.0
      %4021 = vmatmul.mubr.f32.gmra.mxu0 %v3821
      %v4022 = vpop.f32.mrf.mxu0
      %v4023 = vadd.f32 0.0, %v4022
      %v4024 = vpop.f32.mrf.mxu0
      %4025 = vmatprep.mubr.f32.mxu0 0.0
      %4026 = vmatmul.mubr.f32.gmra.mxu0 %v3824
      %v4027 = vpop.f32.mrf.mxu0
      %v4028 = vadd.f32 0.0, %v4027
      %v4029 = vpop.f32.mrf.mxu0
      %4030 = vmatprep.mubr.f32.mxu0 0.0
      %4031 = vmatmul.mubr.f32.gmra.mxu0 %v3827
      %v4032 = vpop.f32.mrf.mxu0
      %v4033 = vadd.f32 0.0, %v4032
      %v4034 = vpop.f32.mrf.mxu0
      %4035 = vmatprep.mubr.f32.mxu0 0.0
      %4036 = vmatmul.mubr.f32.gmra.mxu0 %v3830
      %v4037 = vpop.f32.mrf.mxu0
      %v4038 = vadd.f32 0.0, %v4037
      %v4039 = vpop.f32.mrf.mxu0
      %4040 = vmatprep.mubr.f32.mxu0 0.0
      %4041 = vmatmul.mubr.f32.gmra.mxu0 %v3833
      %v4042 = vpop.f32.mrf.mxu0
      %v4043 = vadd.f32 0.0, %v4042
      %v4044 = vpop.f32.mrf.mxu0
      %4045 = vmatprep.mubr.f32.mxu0 0.0
      %4046 = vmatmul.mubr.f32.gmra.mxu0 %v3836
      %v4047 = vpop.f32.mrf.mxu0
      %v4048 = vadd.f32 0.0, %v4047
      %v4049 = vpop.f32.mrf.mxu0
      %4050 = vmatprep.mubr.f32.mxu0 0.0
      %4051 = vmatmul.mubr.f32.gmra.mxu0 %v3839
      %v4052 = vpop.f32.mrf.mxu0
      %v4053 = vadd.f32 0.0, %v4052
      %v4054 = vpop.f32.mrf.mxu0
      %4055 = vmatprep.mubr.f32.mxu0 0.0
      %4056 = vmatmul.mubr.f32.gmra.mxu0 %v3842
      %v4057 = vpop.f32.mrf.mxu0
      %v4058 = vadd.f32 0.0, %v4057
      %v4059 = vpop.f32.mrf.mxu0
      %4060 = vmatprep.mubr.f32.mxu0 0.0
      %4061 = vmatmul.mubr.f32.gmra.mxu0 %v3845
      %v4062 = vpop.f32.mrf.mxu0
      %v4063 = vadd.f32 0.0, %v4062
      %v4064 = vpop.f32.mrf.mxu0
      %4065 = vmatprep.mubr.f32.mxu0 0.0
      %4066 = vmatmul.mubr.f32.gmra.mxu0 %v3848
      %v4067 = vpop.f32.mrf.mxu0
      %v4068 = vadd.f32 0.0, %v4067
      %v4069 = vpop.f32.mrf.mxu0
      %4070 = vmatprep.mubr.f32.mxu0 0.0
      %4071 = vmatmul.mubr.f32.gmra.mxu0 %v3851
      %v4072 = vpop.f32.mrf.mxu0
      %v4073 = vadd.f32 0.0, %v4072
      %v4074 = vpop.f32.mrf.mxu0
      %4075 = vmatprep.mubr.f32.mxu0 0.0
      %4076 = vmatmul.mubr.f32.gmra.mxu0 %v3854
      %v4077 = vpop.f32.mrf.mxu0
      %v4078 = vadd.f32 0.0, %v4077
      %v4079 = vpop.f32.mrf.mxu0
      %4080 = vmatprep.mubr.f32.mxu0 0.0
      %4081 = vmatmul.mubr.f32.gmra.mxu0 %v3857
      %v4082 = vpop.f32.mrf.mxu0
      %v4083 = vadd.f32 0.0, %v4082
      %v4084 = vpop.f32.mrf.mxu0
      %4085 = vmatprep.mubr.f32.mxu0 0.0
      %4086 = vmatmul.mubr.f32.gmra.mxu0 %v3860
      %v4087 = vpop.f32.mrf.mxu0
      %v4088 = vadd.f32 0.0, %v4087
      %v4089 = vpop.f32.mrf.mxu0
      %4090 = vmatprep.mubr.f32.mxu0 0.0
      %4091 = vmatmul.mubr.f32.gmra.mxu0 %v3863
      %v4092 = vpop.f32.mrf.mxu0
      %v4093 = vadd.f32 0.0, %v4092
      %v4094 = vpop.f32.mrf.mxu0
      %4095 = vmatprep.mubr.f32.mxu0 0.0
      %4096 = vmatmul.mubr.f32.gmra.mxu0 %v3866
      %v4097 = vpop.f32.mrf.mxu0
      %v4098 = vadd.f32 0.0, %v4097
      %v4099 = vpop.f32.mrf.mxu0
      %4100 = vmatprep.mubr.f32.mxu0 0.0
      %4101 = vmatmul.mubr.f32.gmra.mxu0 %v3869
      %v4102 = vpop.f32.mrf.mxu0
      %v4103 = vadd.f32 0.0, %v4102
      %v4104 = vpop.f32.mrf.mxu0
      %4105 = vmatprep.mubr.f32.mxu0 0.0
      %4106 = vmatmul.mubr.f32.gmra.mxu0 %v3872
      %v4107 = vpop.f32.mrf.mxu0
      %v4108 = vadd.f32 0.0, %v4107
      %v4109 = vpop.f32.mrf.mxu0
      %4110 = vmatprep.mubr.f32.mxu0 0.0
      %4111 = vmatmul.mubr.f32.gmra.mxu0 %v3875
      %v4112 = vpop.f32.mrf.mxu0
      %v4113 = vadd.f32 0.0, %v4112
      %v4114 = vpop.f32.mrf.mxu0
      %4115 = vmatprep.mubr.f32.mxu0 0.0
      %4116 = vmatmul.mubr.f32.gmra.mxu0 %v3878
      %v4117 = vpop.f32.mrf.mxu0
      %v4118 = vadd.f32 0.0, %v4117
      %v4119 = vpop.f32.mrf.mxu0
      %4120 = vmatprep.mubr.f32.mxu0 0.0
      %4121 = vmatmul.mubr.f32.gmra.mxu0 %v3881
      %v4122 = vpop.f32.mrf.mxu0
      %v4123 = vadd.f32 0.0, %v4122
      %v4124 = vpop.f32.mrf.mxu0
      %4125 = vmatprep.mubr.f32.mxu0 0.0
      %4126 = vmatmul.mubr.f32.gmra.mxu0 %v3884
      %v4127 = vpop.f32.mrf.mxu0
      %v4128 = vadd.f32 0.0, %v4127
      %v4129 = vpop.f32.mrf.mxu0
      %4130 = vmatprep.mubr.f32.mxu0 0.0
      %4131 = vmatmul.mubr.f32.gmra.mxu0 %v3887
      %v4132 = vpop.f32.mrf.mxu0
      %v4133 = vadd.f32 0.0, %v4132
      %v4134 = vpop.f32.mrf.mxu0
      %4135 = vmatprep.mubr.f32.mxu0 0.0
      %4136 = vmatmul.mubr.f32.gmra.mxu0 %v3890
      %v4137 = vpop.f32.mrf.mxu0
      %v4138 = vadd.f32 0.0, %v4137
      %v4139 = vpop.f32.mrf.mxu0
      %4140 = vmatprep.mubr.f32.mxu0 0.0
      %4141 = vmatmul.mubr.f32.gmra.mxu0 %v3893
      %v4142 = vpop.f32.mrf.mxu0
      %v4143 = vadd.f32 0.0, %v4142
      %v4144 = vpop.f32.mrf.mxu0
      %4145 = vmatprep.mubr.f32.mxu0 0.0
      %4146 = vmatmul.mubr.f32.gmra.mxu0 %v3896
      %v4147 = vpop.f32.mrf.mxu0
      %v4148 = vadd.f32 0.0, %v4147
      %v4149 = vpop.f32.mrf.mxu0
      %4150 = vmatprep.mubr.f32.mxu0 0.0
      %4151 = vmatmul.mubr.f32.gmra.mxu0 %v3899
      %v4152 = vpop.f32.mrf.mxu0
      %v4153 = vadd.f32 0.0, %v4152
      %v4154 = vpop.f32.mrf.mxu0
      %4155 = vmatprep.mubr.f32.mxu0 0.0
      %4156 = vmatmul.mubr.f32.gmra.mxu0 %v3902
      %v4157 = vpop.f32.mrf.mxu0
      %v4158 = vadd.f32 0.0, %v4157
      %v4159 = vpop.f32.mrf.mxu0
      %4160 = vmatprep.mubr.f32.mxu0 0.0
      %4161 = vmatmul.mubr.f32.gmra.mxu0 %v3905
      %v4162 = vpop.f32.mrf.mxu0
      %v4163 = vadd.f32 0.0, %v4162
      %v4164 = vpop.f32.mrf.mxu0
      %4165 = vmatprep.mubr.f32.mxu0 0.0
      %4166 = vmatmul.mubr.f32.gmra.mxu0 %v3908
      %v4167 = vpop.f32.mrf.mxu0
      %v4168 = vadd.f32 0.0, %v4167
      %v4169 = vpop.f32.mrf.mxu0
      %4170 = vmatprep.mubr.f32.mxu0 0.0
      %4171 = vmatmul.mubr.f32.gmra.mxu0 %v3911
      %v4172 = vpop.f32.mrf.mxu0
      %v4173 = vadd.f32 0.0, %v4172
      %v4174 = vpop.f32.mrf.mxu0
      %4175 = vmatprep.mubr.f32.mxu0 0.0
      %4176 = vmatmul.mubr.f32.gmra.mxu0 %v3914
      %v4177 = vpop.f32.mrf.mxu0
      %v4178 = vadd.f32 0.0, %v4177
      %v4179 = vpop.f32.mrf.mxu0
      %4180 = vmatprep.mubr.f32.mxu0 0.0
      %4181 = vmatmul.mubr.f32.gmra.mxu0 %v3917
      %v4182 = vpop.f32.mrf.mxu0
      %v4183 = vadd.f32 0.0, %v4182
      %v4184 = vpop.f32.mrf.mxu0
      %4185 = vmatprep.mubr.f32.mxu0 0.0
      %4186 = vmatmul.mubr.f32.gmra.mxu0 %v3920
      %v4187 = vpop.f32.mrf.mxu0
      %v4188 = vadd.f32 0.0, %v4187
      %v4189 = vpop.f32.mrf.mxu0
      %4190 = vmatprep.mubr.f32.mxu0 0.0
      %4191 = vmatmul.mubr.f32.gmra.mxu0 %v3923
      %v4192 = vpop.f32.mrf.mxu0
      %v4193 = vadd.f32 0.0, %v4192
      %v4194 = vpop.f32.mrf.mxu0
      %4195 = vmatprep.mubr.f32.mxu0 0.0
      %4196 = vmatmul.mubr.f32.gmra.mxu0 %v3926
      %v4197 = vpop.f32.mrf.mxu0
      %v4198 = vadd.f32 0.0, %v4197
      %v4199 = vpop.f32.mrf.mxu0
      %4200 = vdwg.mxu0
      %v4201 = vadd.f32 %v3721, %v3998
      %v4202 = vadd.f32 %v3722, %v4003
      %v4203 = vadd.f32 %v3723, %v4008
      %v4204 = vadd.f32 %v3724, %v4013
      %v4205 = vadd.f32 %v3725, %v4018
      %v4206 = vadd.f32 %v3726, %v4023
      %v4207 = vadd.f32 %v3727, %v4028
      %v4208 = vadd.f32 %v3728, %v4033
      %v4209 = vadd.f32 %v3729, %v4038
      %v4210 = vadd.f32 %v3730, %v4043
      %v4211 = vadd.f32 %v3731, %v4048
      %v4212 = vadd.f32 %v3732, %v4053
      %v4213 = vadd.f32 %v3733, %v4058
      %v4214 = vadd.f32 %v3734, %v4063
      %v4215 = vadd.f32 %v3735, %v4068
      %v4216 = vadd.f32 %v3736, %v4073
      %v4217 = vadd.f32 %v3737, %v4078
      %v4218 = vadd.f32 %v3738, %v4083
      %v4219 = vadd.f32 %v3739, %v4088
      %v4220 = vadd.f32 %v3740, %v4093
      %v4221 = vadd.f32 %v3741, %v4098
      %v4222 = vadd.f32 %v3742, %v4103
      %v4223 = vadd.f32 %v3743, %v4108
      %v4224 = vadd.f32 %v3744, %v4113
      %v4225 = vadd.f32 %v3745, %v4118
      %v4226 = vadd.f32 %v3746, %v4123
      %v4227 = vadd.f32 %v3747, %v4128
      %v4228 = vadd.f32 %v3748, %v4133
      %v4229 = vadd.f32 %v3749, %v4138
      %v4230 = vadd.f32 %v3750, %v4143
      %v4231 = vadd.f32 %v3751, %v4148
      %v4232 = vadd.f32 %v3752, %v4153
      %v4233 = vadd.f32 %v3753, %v4158
      %v4234 = vadd.f32 %v3754, %v4163
      %v4235 = vadd.f32 %v3755, %v4168
      %v4236 = vadd.f32 %v3756, %v4173
      %v4237 = vadd.f32 %v3757, %v4178
      %v4238 = vadd.f32 %v3758, %v4183
      %v4239 = vadd.f32 %v3759, %v4188
      %v4240 = vadd.f32 %v3760, %v4193
      %v4241 = vadd.f32 %v3761, %v4198
      %v4242 = vld [vmem:[#allocation2 + $0x26] sm:$0xff]
      %v4243 = vld [vmem:[#allocation2 + $0x2e] sm:$0xff]
      %v4244 = vld [vmem:[#allocation2 + $0x36] sm:$0xff]
      %v4245 = vld [vmem:[#allocation2 + $0x3e] sm:$0xff]
      %v4246 = vld [vmem:[#allocation2 + $0x46] sm:$0xff]
      %v4247 = vld [vmem:[#allocation2 + $0x4e] sm:$0xff]
      %v4248 = vld [vmem:[#allocation2 + $0x56] sm:$0xff]
      %v4249 = vld [vmem:[#allocation2 + $0x5e] sm:$0xff]
      %v4250 = vld [vmem:[#allocation2 + $0x66] sm:$0xff]
      %v4251 = vld [vmem:[#allocation2 + $0x6e] sm:$0xff]
      %v4252 = vld [vmem:[#allocation2 + $0x76] sm:$0xff]
      %v4253 = vld [vmem:[#allocation2 + $0x7e] sm:$0xff]
      %v4254 = vld [vmem:[#allocation2 + $0x86] sm:$0xff]
      %v4255 = vld [vmem:[#allocation2 + $0x8e] sm:$0xff]
      %v4256 = vld [vmem:[#allocation2 + $0x96] sm:$0xff]
      %v4257 = vld [vmem:[#allocation2 + $0x9e] sm:$0xff]
      %v4258 = vld [vmem:[#allocation2 + $0xa6] sm:$0xff]
      %v4259 = vld [vmem:[#allocation2 + $0xae] sm:$0xff]
      %v4260 = vld [vmem:[#allocation2 + $0xb6] sm:$0xff]
      %v4261 = vld [vmem:[#allocation2 + $0xbe] sm:$0xff]
      %v4262 = vld [vmem:[#allocation2 + $0xc6] sm:$0xff]
      %v4263 = vld [vmem:[#allocation2 + $0xce] sm:$0xff]
      %v4264 = vld [vmem:[#allocation2 + $0xd6] sm:$0xff]
      %v4265 = vld [vmem:[#allocation2 + $0xde] sm:$0xff]
      %v4266 = vld [vmem:[#allocation2 + $0xe6] sm:$0xff]
      %v4267 = vld [vmem:[#allocation2 + $0xee] sm:$0xff]
      %v4268 = vld [vmem:[#allocation2 + $0xf6] sm:$0xff]
      %v4269 = vld [vmem:[#allocation2 + $0xfe] sm:$0xff]
      %v4270 = vld [vmem:[#allocation2 + $0x106] sm:$0xff]
      %v4271 = vld [vmem:[#allocation2 + $0x10e] sm:$0xff]
      %v4272 = vld [vmem:[#allocation2 + $0x116] sm:$0xff]
      %v4273 = vld [vmem:[#allocation2 + $0x11e] sm:$0xff]
      %v4274 = vld [vmem:[#allocation2 + $0x126] sm:$0xff]
      %v4275 = vld [vmem:[#allocation2 + $0x12e] sm:$0xff]
      %v4276 = vld [vmem:[#allocation2 + $0x136] sm:$0xff]
      %v4277 = vld [vmem:[#allocation2 + $0x13e] sm:$0xff]
      %v4278 = vld [vmem:[#allocation2 + $0x146] sm:$0xff]
      %v4279 = vld [vmem:[#allocation2 + $0x14e] sm:$0xff]
      %v4280 = vld [vmem:[#allocation2 + $0x156] sm:$0xff]
      %v4281 = vld [vmem:[#allocation2 + $0x15e] sm:$0xff]
      %v4282 = vld [vmem:[#allocation2 + $0x166] sm:$0xf]
      %s4283 = scalar_lea.vmem %s1, 32
      %v4284 = vld [vmem:[%s4283] sm:$0xf]
      %v4286 = vsel %vm306, %v4242, 0
      %v4289 = vsel %vm306, %v4243, 0
      %v4292 = vsel %vm306, %v4244, 0
      %v4295 = vsel %vm306, %v4245, 0
      %v4298 = vsel %vm306, %v4246, 0
      %v4301 = vsel %vm306, %v4247, 0
      %v4304 = vsel %vm306, %v4248, 0
      %v4307 = vsel %vm306, %v4249, 0
      %v4310 = vsel %vm306, %v4250, 0
      %v4313 = vsel %vm306, %v4251, 0
      %v4316 = vsel %vm306, %v4252, 0
      %v4319 = vsel %vm306, %v4253, 0
      %v4322 = vsel %vm306, %v4254, 0
      %v4325 = vsel %vm306, %v4255, 0
      %v4328 = vsel %vm306, %v4256, 0
      %v4331 = vsel %vm306, %v4257, 0
      %v4334 = vsel %vm306, %v4258, 0
      %v4337 = vsel %vm306, %v4259, 0
      %v4340 = vsel %vm306, %v4260, 0
      %v4343 = vsel %vm306, %v4261, 0
      %v4346 = vsel %vm306, %v4262, 0
      %v4349 = vsel %vm306, %v4263, 0
      %v4352 = vsel %vm306, %v4264, 0
      %v4355 = vsel %vm306, %v4265, 0
      %v4358 = vsel %vm306, %v4266, 0
      %v4361 = vsel %vm306, %v4267, 0
      %v4364 = vsel %vm306, %v4268, 0
      %v4367 = vsel %vm306, %v4269, 0
      %v4370 = vsel %vm306, %v4270, 0
      %v4373 = vsel %vm306, %v4271, 0
      %v4376 = vsel %vm306, %v4272, 0
      %v4379 = vsel %vm306, %v4273, 0
      %v4382 = vsel %vm306, %v4274, 0
      %v4385 = vsel %vm306, %v4275, 0
      %v4388 = vsel %vm306, %v4276, 0
      %v4391 = vsel %vm306, %v4277, 0
      %v4394 = vsel %vm306, %v4278, 0
      %v4397 = vsel %vm306, %v4279, 0
      %v4400 = vsel %vm306, %v4280, 0
      %v4403 = vsel %vm306, %v4281, 0
      %v4406 = vsel %vm306, %v4282, 0
      %v4409 = vsel %vm692, %v4284, 0
      %4411 = vmatprep.subr.mxu0 0.0
      %4412 = vmatpush1.msra.mxu0 0.0
      %4413 = vmatprep.subr.mxu0 0.0
      %4414 = vmatpush1.msra.mxu0 0.0
      %4415 = vmatprep.subr.mxu0 0.0
      %4416 = vmatpush1.msra.mxu0 0.0
      %4417 = vmatprep.subr.mxu0 0.0
      %4418 = vmatpush1.msra.mxu0 0.0
      %4419 = vmatprep.subr.mxu0 0.0
      %4420 = vmatpush1.msra.mxu0 0.0
      %4421 = vmatprep.subr.mxu0 0.0
      %4422 = vmatpush1.msra.mxu0 0.0
      %4423 = vmatprep.subr.mxu0 0.0
      %4424 = vmatpush1.msra.mxu0 0.0
      %4425 = vmatprep.subr.mxu0 0.0
      %4426 = vmatpush1.msra.mxu0 0.0
      %4427 = vmatprep.subr.mxu0 0.0
      %4428 = vmatpush1.msra.mxu0 0.0
      %4429 = vmatprep.subr.mxu0 0.0
      %4430 = vmatpush1.msra.mxu0 0.0
      %4431 = vmatprep.subr.mxu0 0.0
      %4432 = vmatpush1.msra.mxu0 0.0
      %4433 = vmatprep.subr.mxu0 0.0
      %4434 = vmatpush1.msra.mxu0 0.0
      %4435 = vmatprep.subr.mxu0 0.0
      %4436 = vmatpush1.msra.mxu0 0.0
      %4437 = vmatprep.subr.mxu0 0.0
      %4438 = vmatpush1.msra.mxu0 0.0
      %4439 = vmatprep.subr.mxu0 0.0
      %4440 = vmatpush1.msra.mxu0 0.0
      %4441 = vmatprep.subr.mxu0 0.0
      %4442 = vmatpush1.msra.mxu0 %v4409
      %4443 = vmatprep.subr.mxu0 0.0
      %4444 = vmatpush2.msra.mxu0 0.0
      %4445 = vmatprep.subr.mxu0 0.0
      %4446 = vmatpush2.msra.mxu0 0.0
      %4447 = vmatprep.subr.mxu0 0.0
      %4448 = vmatpush2.msra.mxu0 0.0
      %4449 = vmatprep.subr.mxu0 0.0
      %4450 = vmatpush2.msra.mxu0 0.0
      %4451 = vmatprep.subr.mxu0 0.0
      %4452 = vmatpush2.msra.mxu0 0.0
      %4453 = vmatprep.subr.mxu0 0.0
      %4454 = vmatpush2.msra.mxu0 0.0
      %4455 = vmatprep.subr.mxu0 0.0
      %4456 = vmatpush2.msra.mxu0 0.0
      %4457 = vmatprep.subr.mxu0 0.0
      %4458 = vmatpush2.msra.mxu0 0.0
      %4459 = vmatprep.subr.mxu0 0.0
      %4460 = vmatpush2.msra.mxu0 0.0
      %4461 = vmatprep.subr.mxu0 0.0
      %4462 = vmatpush2.msra.mxu0 0.0
      %4463 = vmatprep.subr.mxu0 0.0
      %4464 = vmatpush2.msra.mxu0 0.0
      %4465 = vmatprep.subr.mxu0 0.0
      %4466 = vmatpush2.msra.mxu0 0.0
      %4467 = vmatprep.subr.mxu0 0.0
      %4468 = vmatpush2.msra.mxu0 0.0
      %4469 = vmatprep.subr.mxu0 0.0
      %4470 = vmatpush2.msra.mxu0 0.0
      %4471 = vmatprep.subr.mxu0 0.0
      %4472 = vmatpush2.msra.mxu0 0.0
      %4473 = vmatprep.subr.mxu0 0.0
      %4474 = vmatpush2.msra.mxu0 0.0
      %4475 = vmatprep.mubr.f32.mxu0 0.0
      %4476 = vmatmul.mubr.f32.gmra.mxu0 %v4286
      %v4477 = vpop.f32.mrf.mxu0
      %v4478 = vadd.f32 0.0, %v4477
      %v4479 = vpop.f32.mrf.mxu0
      %4480 = vmatprep.mubr.f32.mxu0 0.0
      %4481 = vmatmul.mubr.f32.gmra.mxu0 %v4289
      %v4482 = vpop.f32.mrf.mxu0
      %v4483 = vadd.f32 0.0, %v4482
      %v4484 = vpop.f32.mrf.mxu0
      %4485 = vmatprep.mubr.f32.mxu0 0.0
      %4486 = vmatmul.mubr.f32.gmra.mxu0 %v4292
      %v4487 = vpop.f32.mrf.mxu0
      %v4488 = vadd.f32 0.0, %v4487
      %v4489 = vpop.f32.mrf.mxu0
      %4490 = vmatprep.mubr.f32.mxu0 0.0
      %4491 = vmatmul.mubr.f32.gmra.mxu0 %v4295
      %v4492 = vpop.f32.mrf.mxu0
      %v4493 = vadd.f32 0.0, %v4492
      %v4494 = vpop.f32.mrf.mxu0
      %4495 = vmatprep.mubr.f32.mxu0 0.0
      %4496 = vmatmul.mubr.f32.gmra.mxu0 %v4298
      %v4497 = vpop.f32.mrf.mxu0
      %v4498 = vadd.f32 0.0, %v4497
      %v4499 = vpop.f32.mrf.mxu0
      %4500 = vmatprep.mubr.f32.mxu0 0.0
      %4501 = vmatmul.mubr.f32.gmra.mxu0 %v4301
      %v4502 = vpop.f32.mrf.mxu0
      %v4503 = vadd.f32 0.0, %v4502
      %v4504 = vpop.f32.mrf.mxu0
      %4505 = vmatprep.mubr.f32.mxu0 0.0
      %4506 = vmatmul.mubr.f32.gmra.mxu0 %v4304
      %v4507 = vpop.f32.mrf.mxu0
      %v4508 = vadd.f32 0.0, %v4507
      %v4509 = vpop.f32.mrf.mxu0
      %4510 = vmatprep.mubr.f32.mxu0 0.0
      %4511 = vmatmul.mubr.f32.gmra.mxu0 %v4307
      %v4512 = vpop.f32.mrf.mxu0
      %v4513 = vadd.f32 0.0, %v4512
      %v4514 = vpop.f32.mrf.mxu0
      %4515 = vmatprep.mubr.f32.mxu0 0.0
      %4516 = vmatmul.mubr.f32.gmra.mxu0 %v4310
      %v4517 = vpop.f32.mrf.mxu0
      %v4518 = vadd.f32 0.0, %v4517
      %v4519 = vpop.f32.mrf.mxu0
      %4520 = vmatprep.mubr.f32.mxu0 0.0
      %4521 = vmatmul.mubr.f32.gmra.mxu0 %v4313
      %v4522 = vpop.f32.mrf.mxu0
      %v4523 = vadd.f32 0.0, %v4522
      %v4524 = vpop.f32.mrf.mxu0
      %4525 = vmatprep.mubr.f32.mxu0 0.0
      %4526 = vmatmul.mubr.f32.gmra.mxu0 %v4316
      %v4527 = vpop.f32.mrf.mxu0
      %v4528 = vadd.f32 0.0, %v4527
      %v4529 = vpop.f32.mrf.mxu0
      %4530 = vmatprep.mubr.f32.mxu0 0.0
      %4531 = vmatmul.mubr.f32.gmra.mxu0 %v4319
      %v4532 = vpop.f32.mrf.mxu0
      %v4533 = vadd.f32 0.0, %v4532
      %v4534 = vpop.f32.mrf.mxu0
      %4535 = vmatprep.mubr.f32.mxu0 0.0
      %4536 = vmatmul.mubr.f32.gmra.mxu0 %v4322
      %v4537 = vpop.f32.mrf.mxu0
      %v4538 = vadd.f32 0.0, %v4537
      %v4539 = vpop.f32.mrf.mxu0
      %4540 = vmatprep.mubr.f32.mxu0 0.0
      %4541 = vmatmul.mubr.f32.gmra.mxu0 %v4325
      %v4542 = vpop.f32.mrf.mxu0
      %v4543 = vadd.f32 0.0, %v4542
      %v4544 = vpop.f32.mrf.mxu0
      %4545 = vmatprep.mubr.f32.mxu0 0.0
      %4546 = vmatmul.mubr.f32.gmra.mxu0 %v4328
      %v4547 = vpop.f32.mrf.mxu0
      %v4548 = vadd.f32 0.0, %v4547
      %v4549 = vpop.f32.mrf.mxu0
      %4550 = vmatprep.mubr.f32.mxu0 0.0
      %4551 = vmatmul.mubr.f32.gmra.mxu0 %v4331
      %v4552 = vpop.f32.mrf.mxu0
      %v4553 = vadd.f32 0.0, %v4552
      %v4554 = vpop.f32.mrf.mxu0
      %4555 = vmatprep.mubr.f32.mxu0 0.0
      %4556 = vmatmul.mubr.f32.gmra.mxu0 %v4334
      %v4557 = vpop.f32.mrf.mxu0
      %v4558 = vadd.f32 0.0, %v4557
      %v4559 = vpop.f32.mrf.mxu0
      %4560 = vmatprep.mubr.f32.mxu0 0.0
      %4561 = vmatmul.mubr.f32.gmra.mxu0 %v4337
      %v4562 = vpop.f32.mrf.mxu0
      %v4563 = vadd.f32 0.0, %v4562
      %v4564 = vpop.f32.mrf.mxu0
      %4565 = vmatprep.mubr.f32.mxu0 0.0
      %4566 = vmatmul.mubr.f32.gmra.mxu0 %v4340
      %v4567 = vpop.f32.mrf.mxu0
      %v4568 = vadd.f32 0.0, %v4567
      %v4569 = vpop.f32.mrf.mxu0
      %4570 = vmatprep.mubr.f32.mxu0 0.0
      %4571 = vmatmul.mubr.f32.gmra.mxu0 %v4343
      %v4572 = vpop.f32.mrf.mxu0
      %v4573 = vadd.f32 0.0, %v4572
      %v4574 = vpop.f32.mrf.mxu0
      %4575 = vmatprep.mubr.f32.mxu0 0.0
      %4576 = vmatmul.mubr.f32.gmra.mxu0 %v4346
      %v4577 = vpop.f32.mrf.mxu0
      %v4578 = vadd.f32 0.0, %v4577
      %v4579 = vpop.f32.mrf.mxu0
      %4580 = vmatprep.mubr.f32.mxu0 0.0
      %4581 = vmatmul.mubr.f32.gmra.mxu0 %v4349
      %v4582 = vpop.f32.mrf.mxu0
      %v4583 = vadd.f32 0.0, %v4582
      %v4584 = vpop.f32.mrf.mxu0
      %4585 = vmatprep.mubr.f32.mxu0 0.0
      %4586 = vmatmul.mubr.f32.gmra.mxu0 %v4352
      %v4587 = vpop.f32.mrf.mxu0
      %v4588 = vadd.f32 0.0, %v4587
      %v4589 = vpop.f32.mrf.mxu0
      %4590 = vmatprep.mubr.f32.mxu0 0.0
      %4591 = vmatmul.mubr.f32.gmra.mxu0 %v4355
      %v4592 = vpop.f32.mrf.mxu0
      %v4593 = vadd.f32 0.0, %v4592
      %v4594 = vpop.f32.mrf.mxu0
      %4595 = vmatprep.mubr.f32.mxu0 0.0
      %4596 = vmatmul.mubr.f32.gmra.mxu0 %v4358
      %v4597 = vpop.f32.mrf.mxu0
      %v4598 = vadd.f32 0.0, %v4597
      %v4599 = vpop.f32.mrf.mxu0
      %4600 = vmatprep.mubr.f32.mxu0 0.0
      %4601 = vmatmul.mubr.f32.gmra.mxu0 %v4361
      %v4602 = vpop.f32.mrf.mxu0
      %v4603 = vadd.f32 0.0, %v4602
      %v4604 = vpop.f32.mrf.mxu0
      %4605 = vmatprep.mubr.f32.mxu0 0.0
      %4606 = vmatmul.mubr.f32.gmra.mxu0 %v4364
      %v4607 = vpop.f32.mrf.mxu0
      %v4608 = vadd.f32 0.0, %v4607
      %v4609 = vpop.f32.mrf.mxu0
      %4610 = vmatprep.mubr.f32.mxu0 0.0
      %4611 = vmatmul.mubr.f32.gmra.mxu0 %v4367
      %v4612 = vpop.f32.mrf.mxu0
      %v4613 = vadd.f32 0.0, %v4612
      %v4614 = vpop.f32.mrf.mxu0
      %4615 = vmatprep.mubr.f32.mxu0 0.0
      %4616 = vmatmul.mubr.f32.gmra.mxu0 %v4370
      %v4617 = vpop.f32.mrf.mxu0
      %v4618 = vadd.f32 0.0, %v4617
      %v4619 = vpop.f32.mrf.mxu0
      %4620 = vmatprep.mubr.f32.mxu0 0.0
      %4621 = vmatmul.mubr.f32.gmra.mxu0 %v4373
      %v4622 = vpop.f32.mrf.mxu0
      %v4623 = vadd.f32 0.0, %v4622
      %v4624 = vpop.f32.mrf.mxu0
      %4625 = vmatprep.mubr.f32.mxu0 0.0
      %4626 = vmatmul.mubr.f32.gmra.mxu0 %v4376
      %v4627 = vpop.f32.mrf.mxu0
      %v4628 = vadd.f32 0.0, %v4627
      %v4629 = vpop.f32.mrf.mxu0
      %4630 = vmatprep.mubr.f32.mxu0 0.0
      %4631 = vmatmul.mubr.f32.gmra.mxu0 %v4379
      %v4632 = vpop.f32.mrf.mxu0
      %v4633 = vadd.f32 0.0, %v4632
      %v4634 = vpop.f32.mrf.mxu0
      %4635 = vmatprep.mubr.f32.mxu0 0.0
      %4636 = vmatmul.mubr.f32.gmra.mxu0 %v4382
      %v4637 = vpop.f32.mrf.mxu0
      %v4638 = vadd.f32 0.0, %v4637
      %v4639 = vpop.f32.mrf.mxu0
      %4640 = vmatprep.mubr.f32.mxu0 0.0
      %4641 = vmatmul.mubr.f32.gmra.mxu0 %v4385
      %v4642 = vpop.f32.mrf.mxu0
      %v4643 = vadd.f32 0.0, %v4642
      %v4644 = vpop.f32.mrf.mxu0
      %4645 = vmatprep.mubr.f32.mxu0 0.0
      %4646 = vmatmul.mubr.f32.gmra.mxu0 %v4388
      %v4647 = vpop.f32.mrf.mxu0
      %v4648 = vadd.f32 0.0, %v4647
      %v4649 = vpop.f32.mrf.mxu0
      %4650 = vmatprep.mubr.f32.mxu0 0.0
      %4651 = vmatmul.mubr.f32.gmra.mxu0 %v4391
      %v4652 = vpop.f32.mrf.mxu0
      %v4653 = vadd.f32 0.0, %v4652
      %v4654 = vpop.f32.mrf.mxu0
      %4655 = vmatprep.mubr.f32.mxu0 0.0
      %4656 = vmatmul.mubr.f32.gmra.mxu0 %v4394
      %v4657 = vpop.f32.mrf.mxu0
      %v4658 = vadd.f32 0.0, %v4657
      %v4659 = vpop.f32.mrf.mxu0
      %4660 = vmatprep.mubr.f32.mxu0 0.0
      %4661 = vmatmul.mubr.f32.gmra.mxu0 %v4397
      %v4662 = vpop.f32.mrf.mxu0
      %v4663 = vadd.f32 0.0, %v4662
      %v4664 = vpop.f32.mrf.mxu0
      %4665 = vmatprep.mubr.f32.mxu0 0.0
      %4666 = vmatmul.mubr.f32.gmra.mxu0 %v4400
      %v4667 = vpop.f32.mrf.mxu0
      %v4668 = vadd.f32 0.0, %v4667
      %v4669 = vpop.f32.mrf.mxu0
      %4670 = vmatprep.mubr.f32.mxu0 0.0
      %4671 = vmatmul.mubr.f32.gmra.mxu0 %v4403
      %v4672 = vpop.f32.mrf.mxu0
      %v4673 = vadd.f32 0.0, %v4672
      %v4674 = vpop.f32.mrf.mxu0
      %4675 = vmatprep.mubr.f32.mxu0 0.0
      %4676 = vmatmul.mubr.f32.gmra.mxu0 %v4406
      %v4677 = vpop.f32.mrf.mxu0
      %v4678 = vadd.f32 0.0, %v4677
      %v4679 = vpop.f32.mrf.mxu0
      %4680 = vdwg.mxu0
      %v4681 = vadd.f32 %v4201, %v4478
      %v4682 = vadd.f32 %v4202, %v4483
      %v4683 = vadd.f32 %v4203, %v4488
      %v4684 = vadd.f32 %v4204, %v4493
      %v4685 = vadd.f32 %v4205, %v4498
      %v4686 = vadd.f32 %v4206, %v4503
      %v4687 = vadd.f32 %v4207, %v4508
      %v4688 = vadd.f32 %v4208, %v4513
      %v4689 = vadd.f32 %v4209, %v4518
      %v4690 = vadd.f32 %v4210, %v4523
      %v4691 = vadd.f32 %v4211, %v4528
      %v4692 = vadd.f32 %v4212, %v4533
      %v4693 = vadd.f32 %v4213, %v4538
      %v4694 = vadd.f32 %v4214, %v4543
      %v4695 = vadd.f32 %v4215, %v4548
      %v4696 = vadd.f32 %v4216, %v4553
      %v4697 = vadd.f32 %v4217, %v4558
      %v4698 = vadd.f32 %v4218, %v4563
      %v4699 = vadd.f32 %v4219, %v4568
      %v4700 = vadd.f32 %v4220, %v4573
      %v4701 = vadd.f32 %v4221, %v4578
      %v4702 = vadd.f32 %v4222, %v4583
      %v4703 = vadd.f32 %v4223, %v4588
      %v4704 = vadd.f32 %v4224, %v4593
      %v4705 = vadd.f32 %v4225, %v4598
      %v4706 = vadd.f32 %v4226, %v4603
      %v4707 = vadd.f32 %v4227, %v4608
      %v4708 = vadd.f32 %v4228, %v4613
      %v4709 = vadd.f32 %v4229, %v4618
      %v4710 = vadd.f32 %v4230, %v4623
      %v4711 = vadd.f32 %v4231, %v4628
      %v4712 = vadd.f32 %v4232, %v4633
      %v4713 = vadd.f32 %v4233, %v4638
      %v4714 = vadd.f32 %v4234, %v4643
      %v4715 = vadd.f32 %v4235, %v4648
      %v4716 = vadd.f32 %v4236, %v4653
      %v4717 = vadd.f32 %v4237, %v4658
      %v4718 = vadd.f32 %v4238, %v4663
      %v4719 = vadd.f32 %v4239, %v4668
      %v4720 = vadd.f32 %v4240, %v4673
      %v4721 = vadd.f32 %v4241, %v4678
      %v4722 = vld [vmem:[%s2] sm:$0x1]
      %v4724 = vlaneseq
      %v4725 = vshrl.u32 %v4724, 7
      %v4726 = vsub.s32 0, %v4725
      %v4727 = vrot.slane %v4722, %v4726
      %v4729 = vmul.f32 %v4681, %v4727
      %v4730 = vmul.f32 %v4682, %v4727
      %v4731 = vmul.f32 %v4683, %v4727
      %v4732 = vmul.f32 %v4684, %v4727
      %v4733 = vmul.f32 %v4685, %v4727
      %v4734 = vmul.f32 %v4686, %v4727
      %v4735 = vmul.f32 %v4687, %v4727
      %v4736 = vmul.f32 %v4688, %v4727
      %v4737 = vmul.f32 %v4689, %v4727
      %v4738 = vmul.f32 %v4690, %v4727
      %v4739 = vmul.f32 %v4691, %v4727
      %v4740 = vmul.f32 %v4692, %v4727
      %v4741 = vmul.f32 %v4693, %v4727
      %v4742 = vmul.f32 %v4694, %v4727
      %v4743 = vmul.f32 %v4695, %v4727
      %v4744 = vmul.f32 %v4696, %v4727
      %v4745 = vmul.f32 %v4697, %v4727
      %v4746 = vmul.f32 %v4698, %v4727
      %v4747 = vmul.f32 %v4699, %v4727
      %v4748 = vmul.f32 %v4700, %v4727
      %v4749 = vmul.f32 %v4701, %v4727
      %v4750 = vmul.f32 %v4702, %v4727
      %v4751 = vmul.f32 %v4703, %v4727
      %v4752 = vmul.f32 %v4704, %v4727
      %v4753 = vmul.f32 %v4705, %v4727
      %v4754 = vmul.f32 %v4706, %v4727
      %v4755 = vmul.f32 %v4707, %v4727
      %v4756 = vmul.f32 %v4708, %v4727
      %v4757 = vmul.f32 %v4709, %v4727
      %v4758 = vmul.f32 %v4710, %v4727
      %v4759 = vmul.f32 %v4711, %v4727
      %v4760 = vmul.f32 %v4712, %v4727
      %v4761 = vmul.f32 %v4713, %v4727
      %v4762 = vmul.f32 %v4714, %v4727
      %v4763 = vmul.f32 %v4715, %v4727
      %v4764 = vmul.f32 %v4716, %v4727
      %v4765 = vmul.f32 %v4717, %v4727
      %v4766 = vmul.f32 %v4718, %v4727
      %v4767 = vmul.f32 %v4719, %v4727
      %v4768 = vmul.f32 %v4720, %v4727
      %v4769 = vmul.f32 %v4721, %v4727
      %v4770 = vld [vmem:[%s3] sm:$0x1]
      %v4772 = vlaneseq
      %v4773 = vshrl.u32 %v4772, 7
      %v4774 = vsub.s32 0, %v4773
      %v4775 = vrot.slane %v4770, %v4774
      %v4777 = vadd.f32 %v4729, %v4775
      %v4778 = vadd.f32 %v4730, %v4775
      %v4779 = vadd.f32 %v4731, %v4775
      %v4780 = vadd.f32 %v4732, %v4775
      %v4781 = vadd.f32 %v4733, %v4775
      %v4782 = vadd.f32 %v4734, %v4775
      %v4783 = vadd.f32 %v4735, %v4775
      %v4784 = vadd.f32 %v4736, %v4775
      %v4785 = vadd.f32 %v4737, %v4775
      %v4786 = vadd.f32 %v4738, %v4775
      %v4787 = vadd.f32 %v4739, %v4775
      %v4788 = vadd.f32 %v4740, %v4775
      %v4789 = vadd.f32 %v4741, %v4775
      %v4790 = vadd.f32 %v4742, %v4775
      %v4791 = vadd.f32 %v4743, %v4775
      %v4792 = vadd.f32 %v4744, %v4775
      %v4793 = vadd.f32 %v4745, %v4775
      %v4794 = vadd.f32 %v4746, %v4775
      %v4795 = vadd.f32 %v4747, %v4775
      %v4796 = vadd.f32 %v4748, %v4775
      %v4797 = vadd.f32 %v4749, %v4775
      %v4798 = vadd.f32 %v4750, %v4775
      %v4799 = vadd.f32 %v4751, %v4775
      %v4800 = vadd.f32 %v4752, %v4775
      %v4801 = vadd.f32 %v4753, %v4775
      %v4802 = vadd.f32 %v4754, %v4775
      %v4803 = vadd.f32 %v4755, %v4775
      %v4804 = vadd.f32 %v4756, %v4775
      %v4805 = vadd.f32 %v4757, %v4775
      %v4806 = vadd.f32 %v4758, %v4775
      %v4807 = vadd.f32 %v4759, %v4775
      %v4808 = vadd.f32 %v4760, %v4775
      %v4809 = vadd.f32 %v4761, %v4775
      %v4810 = vadd.f32 %v4762, %v4775
      %v4811 = vadd.f32 %v4763, %v4775
      %v4812 = vadd.f32 %v4764, %v4775
      %v4813 = vadd.f32 %v4765, %v4775
      %v4814 = vadd.f32 %v4766, %v4775
      %v4815 = vadd.f32 %v4767, %v4775
      %v4816 = vadd.f32 %v4768, %v4775
      %v4817 = vadd.f32 %v4769, %v4775
      %v4818 = vmax.f32 %v4777, 0.0
      %v4819 = vmax.f32 %v4778, 0.0
      %v4820 = vmax.f32 %v4779, 0.0
      %v4821 = vmax.f32 %v4780, 0.0
      %v4822 = vmax.f32 %v4781, 0.0
      %v4823 = vmax.f32 %v4782, 0.0
      %v4824 = vmax.f32 %v4783, 0.0
      %v4825 = vmax.f32 %v4784, 0.0
      %v4826 = vmax.f32 %v4785, 0.0
      %v4827 = vmax.f32 %v4786, 0.0
      %v4828 = vmax.f32 %v4787, 0.0
      %v4829 = vmax.f32 %v4788, 0.0
      %v4830 = vmax.f32 %v4789, 0.0
      %v4831 = vmax.f32 %v4790, 0.0
      %v4832 = vmax.f32 %v4791, 0.0
      %v4833 = vmax.f32 %v4792, 0.0
      %v4834 = vmax.f32 %v4793, 0.0
      %v4835 = vmax.f32 %v4794, 0.0
      %v4836 = vmax.f32 %v4795, 0.0
      %v4837 = vmax.f32 %v4796, 0.0
      %v4838 = vmax.f32 %v4797, 0.0
      %v4839 = vmax.f32 %v4798, 0.0
      %v4840 = vmax.f32 %v4799, 0.0
      %v4841 = vmax.f32 %v4800, 0.0
      %v4842 = vmax.f32 %v4801, 0.0
      %v4843 = vmax.f32 %v4802, 0.0
      %v4844 = vmax.f32 %v4803, 0.0
      %v4845 = vmax.f32 %v4804, 0.0
      %v4846 = vmax.f32 %v4805, 0.0
      %v4847 = vmax.f32 %v4806, 0.0
      %v4848 = vmax.f32 %v4807, 0.0
      %v4849 = vmax.f32 %v4808, 0.0
      %v4850 = vmax.f32 %v4809, 0.0
      %v4851 = vmax.f32 %v4810, 0.0
      %v4852 = vmax.f32 %v4811, 0.0
      %v4853 = vmax.f32 %v4812, 0.0
      %v4854 = vmax.f32 %v4813, 0.0
      %v4855 = vmax.f32 %v4814, 0.0
      %v4856 = vmax.f32 %v4815, 0.0
      %v4857 = vmax.f32 %v4816, 0.0
      %v4858 = vmax.f32 %v4817, 0.0
      %v4859 = vsel %vm443, 1, 0
      %v4860 = vsel %vm444, 1, 0
      %v4861 = vsel %vm445, 1, 0
      %v4862 = vsel %vm446, 1, 0
      %v4863 = vsel %vm447, 1, 0
      %v4864 = vsel %vm448, 1, 0
      %v4865 = vsel %vm449, 1, 0
      %v4866 = vsel %vm450, 1, 0
      %v4867 = vsel %vm451, 1, 0
      %v4868 = vsel %vm452, 1, 0
      %v4869 = vsel %vm453, 1, 0
      %v4870 = vsel %vm454, 1, 0
      %v4871 = vsel %vm455, 1, 0
      %v4872 = vsel %vm456, 1, 0
      %v4873 = vsel %vm457, 1, 0
      %v4874 = vsel %vm458, 1, 0
      %v4875 = vsel %vm459, 1, 0
      %v4876 = vsel %vm460, 1, 0
      %v4877 = vsel %vm461, 1, 0
      %v4878 = vsel %vm462, 1, 0
      %v4879 = vsel %vm463, 1, 0
      %v4880 = vsel %vm464, 1, 0
      %v4881 = vsel %vm465, 1, 0
      %v4882 = vsel %vm466, 1, 0
      %v4883 = vsel %vm467, 1, 0
      %v4884 = vsel %vm468, 1, 0
      %v4885 = vsel %vm469, 1, 0
      %v4886 = vsel %vm470, 1, 0
      %v4887 = vsel %vm471, 1, 0
      %v4888 = vsel %vm472, 1, 0
      %v4889 = vsel %vm473, 1, 0
      %v4890 = vsel %vm474, 1, 0
      %v4891 = vsel %vm475, 1, 0
      %v4892 = vsel %vm476, 1, 0
      %v4893 = vsel %vm477, 1, 0
      %v4894 = vsel %vm478, 1, 0
      %v4895 = vsel %vm479, 1, 0
      %v4896 = vsel %vm480, 1, 0
      %v4897 = vsel %vm481, 1, 0
      %v4898 = vsel %vm482, 1, 0
      %v4899 = vsel %vm483, 1, 0
      %4900 = vset.pattern.permute.xlu0 0
      %4901 = vperm.xlu0 %4900, %v4859
      %v4902 = vpop.permute.xlu0 %4901
      %4903 = vset.pattern.permute.xlu0 0
      %4904 = vperm.xlu0 %4903, %v4860
      %v4905 = vpop.permute.xlu0 %4904
      %4906 = vset.pattern.permute.xlu0 0
      %4907 = vperm.xlu0 %4906, %v4861
      %v4908 = vpop.permute.xlu0 %4907
      %4909 = vset.pattern.permute.xlu0 0
      %4910 = vperm.xlu0 %4909, %v4862
      %v4911 = vpop.permute.xlu0 %4910
      %4912 = vset.pattern.permute.xlu0 0
      %4913 = vperm.xlu0 %4912, %v4863
      %v4914 = vpop.permute.xlu0 %4913
      %4915 = vset.pattern.permute.xlu0 0
      %4916 = vperm.xlu0 %4915, %v4864
      %v4917 = vpop.permute.xlu0 %4916
      %4918 = vset.pattern.permute.xlu0 0
      %4919 = vperm.xlu0 %4918, %v4865
      %v4920 = vpop.permute.xlu0 %4919
      %4921 = vset.pattern.permute.xlu0 0
      %4922 = vperm.xlu0 %4921, %v4866
      %v4923 = vpop.permute.xlu0 %4922
      %4924 = vset.pattern.permute.xlu0 0
      %4925 = vperm.xlu0 %4924, %v4867
      %v4926 = vpop.permute.xlu0 %4925
      %4927 = vset.pattern.permute.xlu0 0
      %4928 = vperm.xlu0 %4927, %v4868
      %v4929 = vpop.permute.xlu0 %4928
      %4930 = vset.pattern.permute.xlu0 0
      %4931 = vperm.xlu0 %4930, %v4869
      %v4932 = vpop.permute.xlu0 %4931
      %4933 = vset.pattern.permute.xlu0 0
      %4934 = vperm.xlu0 %4933, %v4870
      %v4935 = vpop.permute.xlu0 %4934
      %4936 = vset.pattern.permute.xlu0 0
      %4937 = vperm.xlu0 %4936, %v4871
      %v4938 = vpop.permute.xlu0 %4937
      %4939 = vset.pattern.permute.xlu0 0
      %4940 = vperm.xlu0 %4939, %v4872
      %v4941 = vpop.permute.xlu0 %4940
      %4942 = vset.pattern.permute.xlu0 0
      %4943 = vperm.xlu0 %4942, %v4873
      %v4944 = vpop.permute.xlu0 %4943
      %4945 = vset.pattern.permute.xlu0 0
      %4946 = vperm.xlu0 %4945, %v4874
      %v4947 = vpop.permute.xlu0 %4946
      %4948 = vset.pattern.permute.xlu0 0
      %4949 = vperm.xlu0 %4948, %v4875
      %v4950 = vpop.permute.xlu0 %4949
      %4951 = vset.pattern.permute.xlu0 0
      %4952 = vperm.xlu0 %4951, %v4876
      %v4953 = vpop.permute.xlu0 %4952
      %4954 = vset.pattern.permute.xlu0 0
      %4955 = vperm.xlu0 %4954, %v4877
      %v4956 = vpop.permute.xlu0 %4955
      %4957 = vset.pattern.permute.xlu0 0
      %4958 = vperm.xlu0 %4957, %v4878
      %v4959 = vpop.permute.xlu0 %4958
      %4960 = vset.pattern.permute.xlu0 0
      %4961 = vperm.xlu0 %4960, %v4879
      %v4962 = vpop.permute.xlu0 %4961
      %4963 = vset.pattern.permute.xlu0 0
      %4964 = vperm.xlu0 %4963, %v4880
      %v4965 = vpop.permute.xlu0 %4964
      %4966 = vset.pattern.permute.xlu0 0
      %4967 = vperm.xlu0 %4966, %v4881
      %v4968 = vpop.permute.xlu0 %4967
      %4969 = vset.pattern.permute.xlu0 0
      %4970 = vperm.xlu0 %4969, %v4882
      %v4971 = vpop.permute.xlu0 %4970
      %4972 = vset.pattern.permute.xlu0 0
      %4973 = vperm.xlu0 %4972, %v4883
      %v4974 = vpop.permute.xlu0 %4973
      %4975 = vset.pattern.permute.xlu0 0
      %4976 = vperm.xlu0 %4975, %v4884
      %v4977 = vpop.permute.xlu0 %4976
      %4978 = vset.pattern.permute.xlu0 0
      %4979 = vperm.xlu0 %4978, %v4885
      %v4980 = vpop.permute.xlu0 %4979
      %4981 = vset.pattern.permute.xlu0 0
      %4982 = vperm.xlu0 %4981, %v4886
      %v4983 = vpop.permute.xlu0 %4982
      %4984 = vset.pattern.permute.xlu0 0
      %4985 = vperm.xlu0 %4984, %v4887
      %v4986 = vpop.permute.xlu0 %4985
      %4987 = vset.pattern.permute.xlu0 0
      %4988 = vperm.xlu0 %4987, %v4888
      %v4989 = vpop.permute.xlu0 %4988
      %4990 = vset.pattern.permute.xlu0 0
      %4991 = vperm.xlu0 %4990, %v4889
      %v4992 = vpop.permute.xlu0 %4991
      %4993 = vset.pattern.permute.xlu0 0
      %4994 = vperm.xlu0 %4993, %v4890
      %v4995 = vpop.permute.xlu0 %4994
      %4996 = vset.pattern.permute.xlu0 0
      %4997 = vperm.xlu0 %4996, %v4891
      %v4998 = vpop.permute.xlu0 %4997
      %4999 = vset.pattern.permute.xlu0 0
      %5000 = vperm.xlu0 %4999, %v4892
      %v5001 = vpop.permute.xlu0 %5000
      %5002 = vset.pattern.permute.xlu0 0
      %5003 = vperm.xlu0 %5002, %v4893
      %v5004 = vpop.permute.xlu0 %5003
      %5005 = vset.pattern.permute.xlu0 0
      %5006 = vperm.xlu0 %5005, %v4894
      %v5007 = vpop.permute.xlu0 %5006
      %5008 = vset.pattern.permute.xlu0 0
      %5009 = vperm.xlu0 %5008, %v4895
      %v5010 = vpop.permute.xlu0 %5009
      %5011 = vset.pattern.permute.xlu0 0
      %5012 = vperm.xlu0 %5011, %v4896
      %v5013 = vpop.permute.xlu0 %5012
      %5014 = vset.pattern.permute.xlu0 0
      %5015 = vperm.xlu0 %5014, %v4897
      %v5016 = vpop.permute.xlu0 %5015
      %5017 = vset.pattern.permute.xlu0 0
      %5018 = vperm.xlu0 %5017, %v4898
      %v5019 = vpop.permute.xlu0 %5018
      %5020 = vset.pattern.permute.xlu0 0
      %5021 = vperm.xlu0 %5020, %v4899
      %v5022 = vpop.permute.xlu0 %5021
      %vm5023 = vcmp.eq.s32.totalorder %v4902, 1
      %vm5024 = vcmp.eq.s32.totalorder %v4905, 1
      %vm5025 = vcmp.eq.s32.totalorder %v4908, 1
      %vm5026 = vcmp.eq.s32.totalorder %v4911, 1
      %vm5027 = vcmp.eq.s32.totalorder %v4914, 1
      %vm5028 = vcmp.eq.s32.totalorder %v4917, 1
      %vm5029 = vcmp.eq.s32.totalorder %v4920, 1
      %vm5030 = vcmp.eq.s32.totalorder %v4923, 1
      %vm5031 = vcmp.eq.s32.totalorder %v4926, 1
      %vm5032 = vcmp.eq.s32.totalorder %v4929, 1
      %vm5033 = vcmp.eq.s32.totalorder %v4932, 1
      %vm5034 = vcmp.eq.s32.totalorder %v4935, 1
      %vm5035 = vcmp.eq.s32.totalorder %v4938, 1
      %vm5036 = vcmp.eq.s32.totalorder %v4941, 1
      %vm5037 = vcmp.eq.s32.totalorder %v4944, 1
      %vm5038 = vcmp.eq.s32.totalorder %v4947, 1
      %vm5039 = vcmp.eq.s32.totalorder %v4950, 1
      %vm5040 = vcmp.eq.s32.totalorder %v4953, 1
      %vm5041 = vcmp.eq.s32.totalorder %v4956, 1
      %vm5042 = vcmp.eq.s32.totalorder %v4959, 1
      %vm5043 = vcmp.eq.s32.totalorder %v4962, 1
      %vm5044 = vcmp.eq.s32.totalorder %v4965, 1
      %vm5045 = vcmp.eq.s32.totalorder %v4968, 1
      %vm5046 = vcmp.eq.s32.totalorder %v4971, 1
      %vm5047 = vcmp.eq.s32.totalorder %v4974, 1
      %vm5048 = vcmp.eq.s32.totalorder %v4977, 1
      %vm5049 = vcmp.eq.s32.totalorder %v4980, 1
      %vm5050 = vcmp.eq.s32.totalorder %v4983, 1
      %vm5051 = vcmp.eq.s32.totalorder %v4986, 1
      %vm5052 = vcmp.eq.s32.totalorder %v4989, 1
      %vm5053 = vcmp.eq.s32.totalorder %v4992, 1
      %vm5054 = vcmp.eq.s32.totalorder %v4995, 1
      %vm5055 = vcmp.eq.s32.totalorder %v4998, 1
      %vm5056 = vcmp.eq.s32.totalorder %v5001, 1
      %vm5057 = vcmp.eq.s32.totalorder %v5004, 1
      %vm5058 = vcmp.eq.s32.totalorder %v5007, 1
      %vm5059 = vcmp.eq.s32.totalorder %v5010, 1
      %vm5060 = vcmp.eq.s32.totalorder %v5013, 1
      %vm5061 = vcmp.eq.s32.totalorder %v5016, 1
      %vm5062 = vcmp.eq.s32.totalorder %v5019, 1
      %vm5063 = vcmp.eq.s32.totalorder %v5022, 1
      %v5064 = vsel %vm5023, %v4818, 0.0
      %v5065 = vsel %vm5024, %v4819, 0.0
      %v5066 = vsel %vm5025, %v4820, 0.0
      %v5067 = vsel %vm5026, %v4821, 0.0
      %v5068 = vsel %vm5027, %v4822, 0.0
      %v5069 = vsel %vm5028, %v4823, 0.0
      %v5070 = vsel %vm5029, %v4824, 0.0
      %v5071 = vsel %vm5030, %v4825, 0.0
      %v5072 = vsel %vm5031, %v4826, 0.0
      %v5073 = vsel %vm5032, %v4827, 0.0
      %v5074 = vsel %vm5033, %v4828, 0.0
      %v5075 = vsel %vm5034, %v4829, 0.0
      %v5076 = vsel %vm5035, %v4830, 0.0
      %v5077 = vsel %vm5036, %v4831, 0.0
      %v5078 = vsel %vm5037, %v4832, 0.0
      %v5079 = vsel %vm5038, %v4833, 0.0
      %v5080 = vsel %vm5039, %v4834, 0.0
      %v5081 = vsel %vm5040, %v4835, 0.0
      %v5082 = vsel %vm5041, %v4836, 0.0
      %v5083 = vsel %vm5042, %v4837, 0.0
      %v5084 = vsel %vm5043, %v4838, 0.0
      %v5085 = vsel %vm5044, %v4839, 0.0
      %v5086 = vsel %vm5045, %v4840, 0.0
      %v5087 = vsel %vm5046, %v4841, 0.0
      %v5088 = vsel %vm5047, %v4842, 0.0
      %v5089 = vsel %vm5048, %v4843, 0.0
      %v5090 = vsel %vm5049, %v4844, 0.0
      %v5091 = vsel %vm5050, %v4845, 0.0
      %v5092 = vsel %vm5051, %v4846, 0.0
      %v5093 = vsel %vm5052, %v4847, 0.0
      %v5094 = vsel %vm5053, %v4848, 0.0
      %v5095 = vsel %vm5054, %v4849, 0.0
      %v5096 = vsel %vm5055, %v4850, 0.0
      %v5097 = vsel %vm5056, %v4851, 0.0
      %v5098 = vsel %vm5057, %v4852, 0.0
      %v5099 = vsel %vm5058, %v4853, 0.0
      %v5100 = vsel %vm5059, %v4854, 0.0
      %v5101 = vsel %vm5060, %v4855, 0.0
      %v5102 = vsel %vm5061, %v4856, 0.0
      %v5103 = vsel %vm5062, %v4857, 0.0
      %v5104 = vsel %vm5063, %v4858, 0.0
      %vm5105 = vcmask 64512
      %5106 = vst.msk [vmem:[#allocation3] sm:$0xff] %vm5105, 0.0
      %5107 = vst.msk [vmem:[#allocation3 + $0x8] sm:$0xff] %vm5105, 0.0
      %vm5108 = vcmask 59392
      %5109 = vst.msk [vmem:[#allocation3 + $0x10] sm:$0x7] %vm5108, 0.0
      %5110 = vst.msk [vmem:[#allocation3 + $0x13] sm:$0xff] %vm5105, %v5064
      %5111 = vst.msk [vmem:[#allocation3 + $0x1b] sm:$0xff] %vm5105, %v5065
      %5112 = vst.msk [vmem:[#allocation3 + $0x23] sm:$0xff] %vm5105, %v5066
      %5113 = vst.msk [vmem:[#allocation3 + $0x2b] sm:$0xff] %vm5105, %v5067
      %5114 = vst.msk [vmem:[#allocation3 + $0x33] sm:$0xff] %vm5105, %v5068
      %5115 = vst.msk [vmem:[#allocation3 + $0x3b] sm:$0xff] %vm5105, %v5069
      %5116 = vst.msk [vmem:[#allocation3 + $0x43] sm:$0xff] %vm5105, %v5070
      %5117 = vst.msk [vmem:[#allocation3 + $0x4b] sm:$0xff] %vm5105, %v5071
      %5118 = vst.msk [vmem:[#allocation3 + $0x53] sm:$0xff] %vm5105, %v5072
      %5119 = vst.msk [vmem:[#allocation3 + $0x5b] sm:$0xff] %vm5105, %v5073
      %5120 = vst.msk [vmem:[#allocation3 + $0x63] sm:$0xff] %vm5105, %v5074
      %5121 = vst.msk [vmem:[#allocation3 + $0x6b] sm:$0xff] %vm5105, %v5075
      %5122 = vst.msk [vmem:[#allocation3 + $0x73] sm:$0xff] %vm5105, %v5076
      %5123 = vst.msk [vmem:[#allocation3 + $0x7b] sm:$0xff] %vm5105, %v5077
      %5124 = vst.msk [vmem:[#allocation3 + $0x83] sm:$0xff] %vm5105, %v5078
      %5125 = vst.msk [vmem:[#allocation3 + $0x8b] sm:$0xff] %vm5105, %v5079
      %5126 = vst.msk [vmem:[#allocation3 + $0x93] sm:$0xff] %vm5105, %v5080
      %5127 = vst.msk [vmem:[#allocation3 + $0x9b] sm:$0xff] %vm5105, %v5081
      %5128 = vst.msk [vmem:[#allocation3 + $0xa3] sm:$0xff] %vm5105, %v5082
      %5129 = vst.msk [vmem:[#allocation3 + $0xab] sm:$0xff] %vm5105, %v5083
      %5130 = vst.msk [vmem:[#allocation3 + $0xb3] sm:$0xff] %vm5105, %v5084
      %5131 = vst.msk [vmem:[#allocation3 + $0xbb] sm:$0xff] %vm5105, %v5085
      %5132 = vst.msk [vmem:[#allocation3 + $0xc3] sm:$0xff] %vm5105, %v5086
      %5133 = vst.msk [vmem:[#allocation3 + $0xcb] sm:$0xff] %vm5105, %v5087
      %5134 = vst.msk [vmem:[#allocation3 + $0xd3] sm:$0xff] %vm5105, %v5088
      %5135 = vst.msk [vmem:[#allocation3 + $0xdb] sm:$0xff] %vm5105, %v5089
      %5136 = vst.msk [vmem:[#allocation3 + $0xe3] sm:$0xff] %vm5105, %v5090
      %5137 = vst.msk [vmem:[#allocation3 + $0xeb] sm:$0xff] %vm5105, %v5091
      %5138 = vst.msk [vmem:[#allocation3 + $0xf3] sm:$0xff] %vm5105, %v5092
      %5139 = vst.msk [vmem:[#allocation3 + $0xfb] sm:$0xff] %vm5105, %v5093
      %5140 = vst.msk [vmem:[#allocation3 + $0x103] sm:$0xff] %vm5105, %v5094
      %5141 = vst.msk [vmem:[#allocation3 + $0x10b] sm:$0xff] %vm5105, %v5095
      %5142 = vst.msk [vmem:[#allocation3 + $0x113] sm:$0xff] %vm5105, %v5096
      %5143 = vst.msk [vmem:[#allocation3 + $0x11b] sm:$0xff] %vm5105, %v5097
      %5144 = vst.msk [vmem:[#allocation3 + $0x123] sm:$0xff] %vm5105, %v5098
      %5145 = vst.msk [vmem:[#allocation3 + $0x12b] sm:$0xff] %vm5105, %v5099
      %5146 = vst.msk [vmem:[#allocation3 + $0x133] sm:$0xff] %vm5105, %v5100
      %5147 = vst.msk [vmem:[#allocation3 + $0x13b] sm:$0xff] %vm5105, %v5101
      %5148 = vst.msk [vmem:[#allocation3 + $0x143] sm:$0xff] %vm5105, %v5102
      %5149 = vst.msk [vmem:[#allocation3 + $0x14b] sm:$0xff] %vm5105, %v5103
      %vm5150 = vcmask 60416
      %5151 = vst.msk [vmem:[#allocation3 + $0x153] sm:$0xf] %vm5150, %v5104
      %5152 = vst.msk [vmem:[#allocation3 + $0x157] sm:$0xff] %vm5105, 0.0
      %5153 = vst.msk [vmem:[#allocation3 + $0x15f] sm:$0xff] %vm5105, 0.0
      %5154 = vst.msk [vmem:[#allocation3 + $0x167] sm:$0x7] %vm5108, 0.0
      %v5155 = vld [vmem:[#allocation3] sm:$0xff]
      %v5156 = vld [vmem:[#allocation3 + $0x8] sm:$0xff]
      %v5157 = vld [vmem:[#allocation3 + $0x10] sm:$0xff]
      %v5158 = vld [vmem:[#allocation3 + $0x18] sm:$0xff]
      %v5159 = vld [vmem:[#allocation3 + $0x20] sm:$0xff]
      %v5160 = vld [vmem:[#allocation3 + $0x28] sm:$0xff]
      %v5161 = vld [vmem:[#allocation3 + $0x30] sm:$0xff]
      %v5162 = vld [vmem:[#allocation3 + $0x38] sm:$0xff]
      %v5163 = vld [vmem:[#allocation3 + $0x40] sm:$0xff]
      %v5164 = vld [vmem:[#allocation3 + $0x48] sm:$0xff]
      %v5165 = vld [vmem:[#allocation3 + $0x50] sm:$0xff]
      %v5166 = vld [vmem:[#allocation3 + $0x58] sm:$0xff]
      %v5167 = vld [vmem:[#allocation3 + $0x60] sm:$0xff]
      %v5168 = vld [vmem:[#allocation3 + $0x68] sm:$0xff]
      %v5169 = vld [vmem:[#allocation3 + $0x70] sm:$0xff]
      %v5170 = vld [vmem:[#allocation3 + $0x78] sm:$0xff]
      %v5171 = vld [vmem:[#allocation3 + $0x80] sm:$0xff]
      %v5172 = vld [vmem:[#allocation3 + $0x88] sm:$0xff]
      %v5173 = vld [vmem:[#allocation3 + $0x90] sm:$0xff]
      %v5174 = vld [vmem:[#allocation3 + $0x98] sm:$0xff]
      %v5175 = vld [vmem:[#allocation3 + $0xa0] sm:$0xff]
      %v5176 = vld [vmem:[#allocation3 + $0xa8] sm:$0xff]
      %v5177 = vld [vmem:[#allocation3 + $0xb0] sm:$0xff]
      %v5178 = vld [vmem:[#allocation3 + $0xb8] sm:$0xff]
      %v5179 = vld [vmem:[#allocation3 + $0xc0] sm:$0xff]
      %v5180 = vld [vmem:[#allocation3 + $0xc8] sm:$0xff]
      %v5181 = vld [vmem:[#allocation3 + $0xd0] sm:$0xff]
      %v5182 = vld [vmem:[#allocation3 + $0xd8] sm:$0xff]
      %v5183 = vld [vmem:[#allocation3 + $0xe0] sm:$0xff]
      %v5184 = vld [vmem:[#allocation3 + $0xe8] sm:$0xff]
      %v5185 = vld [vmem:[#allocation3 + $0xf0] sm:$0xff]
      %v5186 = vld [vmem:[#allocation3 + $0xf8] sm:$0xff]
      %v5187 = vld [vmem:[#allocation3 + $0x100] sm:$0xff]
      %v5188 = vld [vmem:[#allocation3 + $0x108] sm:$0xff]
      %v5189 = vld [vmem:[#allocation3 + $0x110] sm:$0xff]
      %v5190 = vld [vmem:[#allocation3 + $0x118] sm:$0xff]
      %v5191 = vld [vmem:[#allocation3 + $0x120] sm:$0xff]
      %v5192 = vld [vmem:[#allocation3 + $0x128] sm:$0xff]
      %v5193 = vld [vmem:[#allocation3 + $0x130] sm:$0xff]
      %v5194 = vld [vmem:[#allocation3 + $0x138] sm:$0xff]
      %v5195 = vld [vmem:[#allocation3 + $0x140] sm:$0xf]
      %v5196 = vld [vmem:[%s4] sm:$0xff]
      %v5197 = vld [vmem:[#allocation3 + $0x1] sm:$0xff]
      %v5198 = vld [vmem:[#allocation3 + $0x9] sm:$0xff]
      %v5199 = vld [vmem:[#allocation3 + $0x11] sm:$0xff]
      %v5200 = vld [vmem:[#allocation3 + $0x19] sm:$0xff]
      %v5201 = vld [vmem:[#allocation3 + $0x21] sm:$0xff]
      %v5202 = vld [vmem:[#allocation3 + $0x29] sm:$0xff]
      %v5203 = vld [vmem:[#allocation3 + $0x31] sm:$0xff]
      %v5204 = vld [vmem:[#allocation3 + $0x39] sm:$0xff]
      %v5205 = vld [vmem:[#allocation3 + $0x41] sm:$0xff]
      %v5206 = vld [vmem:[#allocation3 + $0x49] sm:$0xff]
      %v5207 = vld [vmem:[#allocation3 + $0x51] sm:$0xff]
      %v5208 = vld [vmem:[#allocation3 + $0x59] sm:$0xff]
      %v5209 = vld [vmem:[#allocation3 + $0x61] sm:$0xff]
      %v5210 = vld [vmem:[#allocation3 + $0x69] sm:$0xff]
      %v5211 = vld [vmem:[#allocation3 + $0x71] sm:$0xff]
      %v5212 = vld [vmem:[#allocation3 + $0x79] sm:$0xff]
      %v5213 = vld [vmem:[#allocation3 + $0x81] sm:$0xff]
      %v5214 = vld [vmem:[#allocation3 + $0x89] sm:$0xff]
      %v5215 = vld [vmem:[#allocation3 + $0x91] sm:$0xff]
      %v5216 = vld [vmem:[#allocation3 + $0x99] sm:$0xff]
      %v5217 = vld [vmem:[#allocation3 + $0xa1] sm:$0xff]
      %v5218 = vld [vmem:[#allocation3 + $0xa9] sm:$0xff]
      %v5219 = vld [vmem:[#allocation3 + $0xb1] sm:$0xff]
      %v5220 = vld [vmem:[#allocation3 + $0xb9] sm:$0xff]
      %v5221 = vld [vmem:[#allocation3 + $0xc1] sm:$0xff]
      %v5222 = vld [vmem:[#allocation3 + $0xc9] sm:$0xff]
      %v5223 = vld [vmem:[#allocation3 + $0xd1] sm:$0xff]
      %v5224 = vld [vmem:[#allocation3 + $0xd9] sm:$0xff]
      %v5225 = vld [vmem:[#allocation3 + $0xe1] sm:$0xff]
      %v5226 = vld [vmem:[#allocation3 + $0xe9] sm:$0xff]
      %v5227 = vld [vmem:[#allocation3 + $0xf1] sm:$0xff]
      %v5228 = vld [vmem:[#allocation3 + $0xf9] sm:$0xff]
      %v5229 = vld [vmem:[#allocation3 + $0x101] sm:$0xff]
      %v5230 = vld [vmem:[#allocation3 + $0x109] sm:$0xff]
      %v5231 = vld [vmem:[#allocation3 + $0x111] sm:$0xff]
      %v5232 = vld [vmem:[#allocation3 + $0x119] sm:$0xff]
      %v5233 = vld [vmem:[#allocation3 + $0x121] sm:$0xff]
      %v5234 = vld [vmem:[#allocation3 + $0x129] sm:$0xff]
      %v5235 = vld [vmem:[#allocation3 + $0x131] sm:$0xff]
      %v5236 = vld [vmem:[#allocation3 + $0x139] sm:$0xff]
      %v5237 = vld [vmem:[#allocation3 + $0x141] sm:$0xf]
      %s5238 = scalar_lea.vmem %s4, 8
      %v5239 = vld [vmem:[%s5238] sm:$0xff]
      %v5241 = vsel %vm5105, %v5197, 0
      %v5244 = vsel %vm5105, %v5198, 0
      %v5247 = vsel %vm5105, %v5199, 0
      %v5250 = vsel %vm5105, %v5200, 0
      %v5253 = vsel %vm5105, %v5201, 0
      %v5256 = vsel %vm5105, %v5202, 0
      %v5259 = vsel %vm5105, %v5203, 0
      %v5262 = vsel %vm5105, %v5204, 0
      %v5265 = vsel %vm5105, %v5205, 0
      %v5268 = vsel %vm5105, %v5206, 0
      %v5271 = vsel %vm5105, %v5207, 0
      %v5274 = vsel %vm5105, %v5208, 0
      %v5277 = vsel %vm5105, %v5209, 0
      %v5280 = vsel %vm5105, %v5210, 0
      %v5283 = vsel %vm5105, %v5211, 0
      %v5286 = vsel %vm5105, %v5212, 0
      %v5289 = vsel %vm5105, %v5213, 0
      %v5292 = vsel %vm5105, %v5214, 0
      %v5295 = vsel %vm5105, %v5215, 0
      %v5298 = vsel %vm5105, %v5216, 0
      %v5301 = vsel %vm5105, %v5217, 0
      %v5304 = vsel %vm5105, %v5218, 0
      %v5307 = vsel %vm5105, %v5219, 0
      %v5310 = vsel %vm5105, %v5220, 0
      %v5313 = vsel %vm5105, %v5221, 0
      %v5316 = vsel %vm5105, %v5222, 0
      %v5319 = vsel %vm5105, %v5223, 0
      %v5322 = vsel %vm5105, %v5224, 0
      %v5325 = vsel %vm5105, %v5225, 0
      %v5328 = vsel %vm5105, %v5226, 0
      %v5331 = vsel %vm5105, %v5227, 0
      %v5334 = vsel %vm5105, %v5228, 0
      %v5337 = vsel %vm5105, %v5229, 0
      %v5340 = vsel %vm5105, %v5230, 0
      %v5343 = vsel %vm5105, %v5231, 0
      %v5346 = vsel %vm5105, %v5232, 0
      %v5349 = vsel %vm5105, %v5233, 0
      %v5352 = vsel %vm5105, %v5234, 0
      %v5355 = vsel %vm5105, %v5235, 0
      %v5358 = vsel %vm5105, %v5236, 0
      %v5361 = vsel %vm5105, %v5237, 0
      %5363 = vmatprep.subr.mxu0 0.0
      %5364 = vmatpush1.msra.mxu0 0.0
      %5365 = vmatprep.subr.mxu0 0.0
      %5366 = vmatpush1.msra.mxu0 0.0
      %5367 = vmatprep.subr.mxu0 0.0
      %5368 = vmatpush1.msra.mxu0 0.0
      %5369 = vmatprep.subr.mxu0 0.0
      %5370 = vmatpush1.msra.mxu0 0.0
      %5371 = vmatprep.subr.mxu0 0.0
      %5372 = vmatpush1.msra.mxu0 0.0
      %5373 = vmatprep.subr.mxu0 0.0
      %5374 = vmatpush1.msra.mxu0 0.0
      %5375 = vmatprep.subr.mxu0 0.0
      %5376 = vmatpush1.msra.mxu0 0.0
      %5377 = vmatprep.subr.mxu0 0.0
      %5378 = vmatpush1.msra.mxu0 0.0
      %5379 = vmatprep.subr.mxu0 0.0
      %5380 = vmatpush1.msra.mxu0 0.0
      %5381 = vmatprep.subr.mxu0 0.0
      %5382 = vmatpush1.msra.mxu0 0.0
      %5383 = vmatprep.subr.mxu0 0.0
      %5384 = vmatpush1.msra.mxu0 0.0
      %5385 = vmatprep.subr.mxu0 0.0
      %5386 = vmatpush1.msra.mxu0 0.0
      %5387 = vmatprep.subr.mxu0 0.0
      %5388 = vmatpush1.msra.mxu0 0.0
      %5389 = vmatprep.subr.mxu0 0.0
      %5390 = vmatpush1.msra.mxu0 0.0
      %5391 = vmatprep.subr.mxu0 0.0
      %5392 = vmatpush1.msra.mxu0 0.0
      %5393 = vmatprep.subr.mxu0 0.0
      %5394 = vmatpush1.msra.mxu0 %v5239
      %5395 = vmatprep.subr.mxu0 0.0
      %5396 = vmatpush2.msra.mxu0 0.0
      %5397 = vmatprep.subr.mxu0 0.0
      %5398 = vmatpush2.msra.mxu0 0.0
      %5399 = vmatprep.subr.mxu0 0.0
      %5400 = vmatpush2.msra.mxu0 0.0
      %5401 = vmatprep.subr.mxu0 0.0
      %5402 = vmatpush2.msra.mxu0 0.0
      %5403 = vmatprep.subr.mxu0 0.0
      %5404 = vmatpush2.msra.mxu0 0.0
      %5405 = vmatprep.subr.mxu0 0.0
      %5406 = vmatpush2.msra.mxu0 0.0
      %5407 = vmatprep.subr.mxu0 0.0
      %5408 = vmatpush2.msra.mxu0 0.0
      %5409 = vmatprep.subr.mxu0 0.0
      %5410 = vmatpush2.msra.mxu0 0.0
      %5411 = vmatprep.subr.mxu0 0.0
      %5412 = vmatpush2.msra.mxu0 0.0
      %5413 = vmatprep.subr.mxu0 0.0
      %5414 = vmatpush2.msra.mxu0 0.0
      %5415 = vmatprep.subr.mxu0 0.0
      %5416 = vmatpush2.msra.mxu0 0.0
      %5417 = vmatprep.subr.mxu0 0.0
      %5418 = vmatpush2.msra.mxu0 0.0
      %5419 = vmatprep.subr.mxu0 0.0
      %5420 = vmatpush2.msra.mxu0 0.0
      %5421 = vmatprep.subr.mxu0 0.0
      %5422 = vmatpush2.msra.mxu0 0.0
      %5423 = vmatprep.subr.mxu0 0.0
      %5424 = vmatpush2.msra.mxu0 0.0
      %5425 = vmatprep.subr.mxu0 0.0
      %5426 = vmatpush2.msra.mxu0 0.0
      %5427 = vmatprep.mubr.f32.mxu0 0.0
      %5428 = vmatmul.mubr.f32.gmra.mxu0 %v5241
      %v5429 = vpop.f32.mrf.mxu0
      %v5430 = vadd.f32 0.0, %v5429
      %v5431 = vpop.f32.mrf.mxu0
      %5432 = vmatprep.mubr.f32.mxu0 0.0
      %5433 = vmatmul.mubr.f32.gmra.mxu0 %v5244
      %v5434 = vpop.f32.mrf.mxu0
      %v5435 = vadd.f32 0.0, %v5434
      %v5436 = vpop.f32.mrf.mxu0
      %5437 = vmatprep.mubr.f32.mxu0 0.0
      %5438 = vmatmul.mubr.f32.gmra.mxu0 %v5247
      %v5439 = vpop.f32.mrf.mxu0
      %v5440 = vadd.f32 0.0, %v5439
      %v5441 = vpop.f32.mrf.mxu0
      %5442 = vmatprep.mubr.f32.mxu0 0.0
      %5443 = vmatmul.mubr.f32.gmra.mxu0 %v5250
      %v5444 = vpop.f32.mrf.mxu0
      %v5445 = vadd.f32 0.0, %v5444
      %v5446 = vpop.f32.mrf.mxu0
      %5447 = vmatprep.mubr.f32.mxu0 0.0
      %5448 = vmatmul.mubr.f32.gmra.mxu0 %v5253
      %v5449 = vpop.f32.mrf.mxu0
      %v5450 = vadd.f32 0.0, %v5449
      %v5451 = vpop.f32.mrf.mxu0
      %5452 = vmatprep.mubr.f32.mxu0 0.0
      %5453 = vmatmul.mubr.f32.gmra.mxu0 %v5256
      %v5454 = vpop.f32.mrf.mxu0
      %v5455 = vadd.f32 0.0, %v5454
      %v5456 = vpop.f32.mrf.mxu0
      %5457 = vmatprep.mubr.f32.mxu0 0.0
      %5458 = vmatmul.mubr.f32.gmra.mxu0 %v5259
      %v5459 = vpop.f32.mrf.mxu0
      %v5460 = vadd.f32 0.0, %v5459
      %v5461 = vpop.f32.mrf.mxu0
      %5462 = vmatprep.mubr.f32.mxu0 0.0
      %5463 = vmatmul.mubr.f32.gmra.mxu0 %v5262
      %v5464 = vpop.f32.mrf.mxu0
      %v5465 = vadd.f32 0.0, %v5464
      %v5466 = vpop.f32.mrf.mxu0
      %5467 = vmatprep.mubr.f32.mxu0 0.0
      %5468 = vmatmul.mubr.f32.gmra.mxu0 %v5265
      %v5469 = vpop.f32.mrf.mxu0
      %v5470 = vadd.f32 0.0, %v5469
      %v5471 = vpop.f32.mrf.mxu0
      %5472 = vmatprep.mubr.f32.mxu0 0.0
      %5473 = vmatmul.mubr.f32.gmra.mxu0 %v5268
      %v5474 = vpop.f32.mrf.mxu0
      %v5475 = vadd.f32 0.0, %v5474
      %v5476 = vpop.f32.mrf.mxu0
      %5477 = vmatprep.mubr.f32.mxu0 0.0
      %5478 = vmatmul.mubr.f32.gmra.mxu0 %v5271
      %v5479 = vpop.f32.mrf.mxu0
      %v5480 = vadd.f32 0.0, %v5479
      %v5481 = vpop.f32.mrf.mxu0
      %5482 = vmatprep.mubr.f32.mxu0 0.0
      %5483 = vmatmul.mubr.f32.gmra.mxu0 %v5274
      %v5484 = vpop.f32.mrf.mxu0
      %v5485 = vadd.f32 0.0, %v5484
      %v5486 = vpop.f32.mrf.mxu0
      %5487 = vmatprep.mubr.f32.mxu0 0.0
      %5488 = vmatmul.mubr.f32.gmra.mxu0 %v5277
      %v5489 = vpop.f32.mrf.mxu0
      %v5490 = vadd.f32 0.0, %v5489
      %v5491 = vpop.f32.mrf.mxu0
      %5492 = vmatprep.mubr.f32.mxu0 0.0
      %5493 = vmatmul.mubr.f32.gmra.mxu0 %v5280
      %v5494 = vpop.f32.mrf.mxu0
      %v5495 = vadd.f32 0.0, %v5494
      %v5496 = vpop.f32.mrf.mxu0
      %5497 = vmatprep.mubr.f32.mxu0 0.0
      %5498 = vmatmul.mubr.f32.gmra.mxu0 %v5283
      %v5499 = vpop.f32.mrf.mxu0
      %v5500 = vadd.f32 0.0, %v5499
      %v5501 = vpop.f32.mrf.mxu0
      %5502 = vmatprep.mubr.f32.mxu0 0.0
      %5503 = vmatmul.mubr.f32.gmra.mxu0 %v5286
      %v5504 = vpop.f32.mrf.mxu0
      %v5505 = vadd.f32 0.0, %v5504
      %v5506 = vpop.f32.mrf.mxu0
      %5507 = vmatprep.mubr.f32.mxu0 0.0
      %5508 = vmatmul.mubr.f32.gmra.mxu0 %v5289
      %v5509 = vpop.f32.mrf.mxu0
      %v5510 = vadd.f32 0.0, %v5509
      %v5511 = vpop.f32.mrf.mxu0
      %5512 = vmatprep.mubr.f32.mxu0 0.0
      %5513 = vmatmul.mubr.f32.gmra.mxu0 %v5292
      %v5514 = vpop.f32.mrf.mxu0
      %v5515 = vadd.f32 0.0, %v5514
      %v5516 = vpop.f32.mrf.mxu0
      %5517 = vmatprep.mubr.f32.mxu0 0.0
      %5518 = vmatmul.mubr.f32.gmra.mxu0 %v5295
      %v5519 = vpop.f32.mrf.mxu0
      %v5520 = vadd.f32 0.0, %v5519
      %v5521 = vpop.f32.mrf.mxu0
      %5522 = vmatprep.mubr.f32.mxu0 0.0
      %5523 = vmatmul.mubr.f32.gmra.mxu0 %v5298
      %v5524 = vpop.f32.mrf.mxu0
      %v5525 = vadd.f32 0.0, %v5524
      %v5526 = vpop.f32.mrf.mxu0
      %5527 = vmatprep.mubr.f32.mxu0 0.0
      %5528 = vmatmul.mubr.f32.gmra.mxu0 %v5301
      %v5529 = vpop.f32.mrf.mxu0
      %v5530 = vadd.f32 0.0, %v5529
      %v5531 = vpop.f32.mrf.mxu0
      %5532 = vmatprep.mubr.f32.mxu0 0.0
      %5533 = vmatmul.mubr.f32.gmra.mxu0 %v5304
      %v5534 = vpop.f32.mrf.mxu0
      %v5535 = vadd.f32 0.0, %v5534
      %v5536 = vpop.f32.mrf.mxu0
      %5537 = vmatprep.mubr.f32.mxu0 0.0
      %5538 = vmatmul.mubr.f32.gmra.mxu0 %v5307
      %v5539 = vpop.f32.mrf.mxu0
      %v5540 = vadd.f32 0.0, %v5539
      %v5541 = vpop.f32.mrf.mxu0
      %5542 = vmatprep.mubr.f32.mxu0 0.0
      %5543 = vmatmul.mubr.f32.gmra.mxu0 %v5310
      %v5544 = vpop.f32.mrf.mxu0
      %v5545 = vadd.f32 0.0, %v5544
      %v5546 = vpop.f32.mrf.mxu0
      %5547 = vmatprep.mubr.f32.mxu0 0.0
      %5548 = vmatmul.mubr.f32.gmra.mxu0 %v5313
      %v5549 = vpop.f32.mrf.mxu0
      %v5550 = vadd.f32 0.0, %v5549
      %v5551 = vpop.f32.mrf.mxu0
      %5552 = vmatprep.mubr.f32.mxu0 0.0
      %5553 = vmatmul.mubr.f32.gmra.mxu0 %v5316
      %v5554 = vpop.f32.mrf.mxu0
      %v5555 = vadd.f32 0.0, %v5554
      %v5556 = vpop.f32.mrf.mxu0
      %5557 = vmatprep.mubr.f32.mxu0 0.0
      %5558 = vmatmul.mubr.f32.gmra.mxu0 %v5319
      %v5559 = vpop.f32.mrf.mxu0
      %v5560 = vadd.f32 0.0, %v5559
      %v5561 = vpop.f32.mrf.mxu0
      %5562 = vmatprep.mubr.f32.mxu0 0.0
      %5563 = vmatmul.mubr.f32.gmra.mxu0 %v5322
      %v5564 = vpop.f32.mrf.mxu0
      %v5565 = vadd.f32 0.0, %v5564
      %v5566 = vpop.f32.mrf.mxu0
      %5567 = vmatprep.mubr.f32.mxu0 0.0
      %5568 = vmatmul.mubr.f32.gmra.mxu0 %v5325
      %v5569 = vpop.f32.mrf.mxu0
      %v5570 = vadd.f32 0.0, %v5569
      %v5571 = vpop.f32.mrf.mxu0
      %5572 = vmatprep.mubr.f32.mxu0 0.0
      %5573 = vmatmul.mubr.f32.gmra.mxu0 %v5328
      %v5574 = vpop.f32.mrf.mxu0
      %v5575 = vadd.f32 0.0, %v5574
      %v5576 = vpop.f32.mrf.mxu0
      %5577 = vmatprep.mubr.f32.mxu0 0.0
      %5578 = vmatmul.mubr.f32.gmra.mxu0 %v5331
      %v5579 = vpop.f32.mrf.mxu0
      %v5580 = vadd.f32 0.0, %v5579
      %v5581 = vpop.f32.mrf.mxu0
      %5582 = vmatprep.mubr.f32.mxu0 0.0
      %5583 = vmatmul.mubr.f32.gmra.mxu0 %v5334
      %v5584 = vpop.f32.mrf.mxu0
      %v5585 = vadd.f32 0.0, %v5584
      %v5586 = vpop.f32.mrf.mxu0
      %5587 = vmatprep.mubr.f32.mxu0 0.0
      %5588 = vmatmul.mubr.f32.gmra.mxu0 %v5337
      %v5589 = vpop.f32.mrf.mxu0
      %v5590 = vadd.f32 0.0, %v5589
      %v5591 = vpop.f32.mrf.mxu0
      %5592 = vmatprep.mubr.f32.mxu0 0.0
      %5593 = vmatmul.mubr.f32.gmra.mxu0 %v5340
      %v5594 = vpop.f32.mrf.mxu0
      %v5595 = vadd.f32 0.0, %v5594
      %v5596 = vpop.f32.mrf.mxu0
      %5597 = vmatprep.mubr.f32.mxu0 0.0
      %5598 = vmatmul.mubr.f32.gmra.mxu0 %v5343
      %v5599 = vpop.f32.mrf.mxu0
      %v5600 = vadd.f32 0.0, %v5599
      %v5601 = vpop.f32.mrf.mxu0
      %5602 = vmatprep.mubr.f32.mxu0 0.0
      %5603 = vmatmul.mubr.f32.gmra.mxu0 %v5346
      %v5604 = vpop.f32.mrf.mxu0
      %v5605 = vadd.f32 0.0, %v5604
      %v5606 = vpop.f32.mrf.mxu0
      %5607 = vmatprep.mubr.f32.mxu0 0.0
      %5608 = vmatmul.mubr.f32.gmra.mxu0 %v5349
      %v5609 = vpop.f32.mrf.mxu0
      %v5610 = vpop.f32.mrf.mxu0
      %5611 = vmatprep.mubr.f32.mxu0 0.0
      %5612 = vmatmul.mubr.f32.gmra.mxu0 %v5352
      %v5613 = vpop.f32.mrf.mxu0
      %v5614 = vpop.f32.mrf.mxu0
      %5615 = vmatprep.mubr.f32.mxu0 0.0
      %5616 = vmatmul.mubr.f32.gmra.mxu0 %v5355
      %v5617 = vpop.f32.mrf.mxu0
      %v5618 = vpop.f32.mrf.mxu0
      %5619 = vmatprep.mubr.f32.mxu0 0.0
      %5620 = vmatmul.mubr.f32.gmra.mxu0 %v5358
      %v5621 = vpop.f32.mrf.mxu0
      %v5622 = vpop.f32.mrf.mxu0
      %5623 = vmatprep.mubr.f32.mxu0 0.0
      %5624 = vmatmul.mubr.f32.gmra.mxu0 %v5361
      %v5625 = vpop.f32.mrf.mxu0
      %v5626 = vpop.f32.mrf.mxu0
      %5627 = vdwg.mxu0
      %v5629 = vsel %vm5105, %v5155, 0
      %v5632 = vsel %vm5105, %v5156, 0
      %v5635 = vsel %vm5105, %v5157, 0
      %v5638 = vsel %vm5105, %v5158, 0
      %v5641 = vsel %vm5105, %v5159, 0
      %v5644 = vsel %vm5105, %v5160, 0
      %v5647 = vsel %vm5105, %v5161, 0
      %v5650 = vsel %vm5105, %v5162, 0
      %v5653 = vsel %vm5105, %v5163, 0
      %v5656 = vsel %vm5105, %v5164, 0
      %v5659 = vsel %vm5105, %v5165, 0
      %v5662 = vsel %vm5105, %v5166, 0
      %v5665 = vsel %vm5105, %v5167, 0
      %v5668 = vsel %vm5105, %v5168, 0
      %v5671 = vsel %vm5105, %v5169, 0
      %v5674 = vsel %vm5105, %v5170, 0
      %v5677 = vsel %vm5105, %v5171, 0
      %v5680 = vsel %vm5105, %v5172, 0
      %v5683 = vsel %vm5105, %v5173, 0
      %v5686 = vsel %vm5105, %v5174, 0
      %v5689 = vsel %vm5105, %v5175, 0
      %v5692 = vsel %vm5105, %v5176, 0
      %v5695 = vsel %vm5105, %v5177, 0
      %v5698 = vsel %vm5105, %v5178, 0
      %v5701 = vsel %vm5105, %v5179, 0
      %v5704 = vsel %vm5105, %v5180, 0
      %v5707 = vsel %vm5105, %v5181, 0
      %v5710 = vsel %vm5105, %v5182, 0
      %v5713 = vsel %vm5105, %v5183, 0
      %v5716 = vsel %vm5105, %v5184, 0
      %v5719 = vsel %vm5105, %v5185, 0
      %v5722 = vsel %vm5105, %v5186, 0
      %v5725 = vsel %vm5105, %v5187, 0
      %v5728 = vsel %vm5105, %v5188, 0
      %v5731 = vsel %vm5105, %v5189, 0
      %v5734 = vsel %vm5105, %v5190, 0
      %v5737 = vsel %vm5105, %v5191, 0
      %v5740 = vsel %vm5105, %v5192, 0
      %v5743 = vsel %vm5105, %v5193, 0
      %v5746 = vsel %vm5105, %v5194, 0
      %v5749 = vsel %vm5105, %v5195, 0
      %5751 = vmatprep.subr.mxu0 0.0
      %5752 = vmatpush1.msra.mxu0 0.0
      %5753 = vmatprep.subr.mxu0 0.0
      %5754 = vmatpush1.msra.mxu0 0.0
      %5755 = vmatprep.subr.mxu0 0.0
      %5756 = vmatpush1.msra.mxu0 0.0
      %5757 = vmatprep.subr.mxu0 0.0
      %5758 = vmatpush1.msra.mxu0 0.0
      %5759 = vmatprep.subr.mxu0 0.0
      %5760 = vmatpush1.msra.mxu0 0.0
      %5761 = vmatprep.subr.mxu0 0.0
      %5762 = vmatpush1.msra.mxu0 0.0
      %5763 = vmatprep.subr.mxu0 0.0
      %5764 = vmatpush1.msra.mxu0 0.0
      %5765 = vmatprep.subr.mxu0 0.0
      %5766 = vmatpush1.msra.mxu0 0.0
      %5767 = vmatprep.subr.mxu0 0.0
      %5768 = vmatpush1.msra.mxu0 0.0
      %5769 = vmatprep.subr.mxu0 0.0
      %5770 = vmatpush1.msra.mxu0 0.0
      %5771 = vmatprep.subr.mxu0 0.0
      %5772 = vmatpush1.msra.mxu0 0.0
      %5773 = vmatprep.subr.mxu0 0.0
      %5774 = vmatpush1.msra.mxu0 0.0
      %5775 = vmatprep.subr.mxu0 0.0
      %5776 = vmatpush1.msra.mxu0 0.0
      %5777 = vmatprep.subr.mxu0 0.0
      %5778 = vmatpush1.msra.mxu0 0.0
      %5779 = vmatprep.subr.mxu0 0.0
      %5780 = vmatpush1.msra.mxu0 0.0
      %5781 = vmatprep.subr.mxu0 0.0
      %5782 = vmatpush1.msra.mxu0 %v5196
      %5783 = vmatprep.subr.mxu0 0.0
      %5784 = vmatpush2.msra.mxu0 0.0
      %5785 = vmatprep.subr.mxu0 0.0
      %5786 = vmatpush2.msra.mxu0 0.0
      %5787 = vmatprep.subr.mxu0 0.0
      %5788 = vmatpush2.msra.mxu0 0.0
      %5789 = vmatprep.subr.mxu0 0.0
      %5790 = vmatpush2.msra.mxu0 0.0
      %5791 = vmatprep.subr.mxu0 0.0
      %5792 = vmatpush2.msra.mxu0 0.0
      %5793 = vmatprep.subr.mxu0 0.0
      %5794 = vmatpush2.msra.mxu0 0.0
      %5795 = vmatprep.subr.mxu0 0.0
      %5796 = vmatpush2.msra.mxu0 0.0
      %5797 = vmatprep.subr.mxu0 0.0
      %5798 = vmatpush2.msra.mxu0 0.0
      %5799 = vmatprep.subr.mxu0 0.0
      %5800 = vmatpush2.msra.mxu0 0.0
      %5801 = vmatprep.subr.mxu0 0.0
      %5802 = vmatpush2.msra.mxu0 0.0
      %5803 = vmatprep.subr.mxu0 0.0
      %5804 = vmatpush2.msra.mxu0 0.0
      %5805 = vmatprep.subr.mxu0 0.0
      %5806 = vmatpush2.msra.mxu0 0.0
      %5807 = vmatprep.subr.mxu0 0.0
      %5808 = vmatpush2.msra.mxu0 0.0
      %5809 = vmatprep.subr.mxu0 0.0
      %5810 = vmatpush2.msra.mxu0 0.0
      %5811 = vmatprep.subr.mxu0 0.0
      %5812 = vmatpush2.msra.mxu0 0.0
      %5813 = vmatprep.subr.mxu0 0.0
      %5814 = vmatpush2.msra.mxu0 0.0
      %5815 = vmatprep.mubr.f32.mxu0 0.0
      %5816 = vmatmul.mubr.f32.gmra.mxu0 %v5629
      %v5817 = vpop.f32.mrf.mxu0
      %v5818 = vadd.f32 %v5430, %v5817
      %v5819 = vpop.f32.mrf.mxu0
      %5820 = vmatprep.mubr.f32.mxu0 0.0
      %5821 = vmatmul.mubr.f32.gmra.mxu0 %v5632
      %v5822 = vpop.f32.mrf.mxu0
      %v5823 = vadd.f32 %v5435, %v5822
      %v5824 = vpop.f32.mrf.mxu0
      %5825 = vmatprep.mubr.f32.mxu0 0.0
      %5826 = vmatmul.mubr.f32.gmra.mxu0 %v5635
      %v5827 = vpop.f32.mrf.mxu0
      %v5828 = vadd.f32 %v5440, %v5827
      %v5829 = vpop.f32.mrf.mxu0
      %5830 = vmatprep.mubr.f32.mxu0 0.0
      %5831 = vmatmul.mubr.f32.gmra.mxu0 %v5638
      %v5832 = vpop.f32.mrf.mxu0
      %v5833 = vadd.f32 %v5445, %v5832
      %v5834 = vpop.f32.mrf.mxu0
      %5835 = vmatprep.mubr.f32.mxu0 0.0
      %5836 = vmatmul.mubr.f32.gmra.mxu0 %v5641
      %v5837 = vpop.f32.mrf.mxu0
      %v5838 = vadd.f32 %v5450, %v5837
      %v5839 = vpop.f32.mrf.mxu0
      %5840 = vmatprep.mubr.f32.mxu0 0.0
      %5841 = vmatmul.mubr.f32.gmra.mxu0 %v5644
      %v5842 = vpop.f32.mrf.mxu0
      %v5843 = vadd.f32 %v5455, %v5842
      %v5844 = vpop.f32.mrf.mxu0
      %5845 = vmatprep.mubr.f32.mxu0 0.0
      %5846 = vmatmul.mubr.f32.gmra.mxu0 %v5647
      %v5847 = vpop.f32.mrf.mxu0
      %v5848 = vadd.f32 %v5460, %v5847
      %v5849 = vpop.f32.mrf.mxu0
      %5850 = vmatprep.mubr.f32.mxu0 0.0
      %5851 = vmatmul.mubr.f32.gmra.mxu0 %v5650
      %v5852 = vpop.f32.mrf.mxu0
      %v5853 = vadd.f32 %v5465, %v5852
      %v5854 = vpop.f32.mrf.mxu0
      %5855 = vmatprep.mubr.f32.mxu0 0.0
      %5856 = vmatmul.mubr.f32.gmra.mxu0 %v5653
      %v5857 = vpop.f32.mrf.mxu0
      %v5858 = vadd.f32 %v5470, %v5857
      %v5859 = vpop.f32.mrf.mxu0
      %5860 = vmatprep.mubr.f32.mxu0 0.0
      %5861 = vmatmul.mubr.f32.gmra.mxu0 %v5656
      %v5862 = vpop.f32.mrf.mxu0
      %v5863 = vadd.f32 %v5475, %v5862
      %v5864 = vpop.f32.mrf.mxu0
      %5865 = vmatprep.mubr.f32.mxu0 0.0
      %5866 = vmatmul.mubr.f32.gmra.mxu0 %v5659
      %v5867 = vpop.f32.mrf.mxu0
      %v5868 = vadd.f32 %v5480, %v5867
      %v5869 = vpop.f32.mrf.mxu0
      %5870 = vmatprep.mubr.f32.mxu0 0.0
      %5871 = vmatmul.mubr.f32.gmra.mxu0 %v5662
      %v5872 = vpop.f32.mrf.mxu0
      %v5873 = vadd.f32 %v5485, %v5872
      %v5874 = vpop.f32.mrf.mxu0
      %5875 = vmatprep.mubr.f32.mxu0 0.0
      %5876 = vmatmul.mubr.f32.gmra.mxu0 %v5665
      %v5877 = vpop.f32.mrf.mxu0
      %v5878 = vadd.f32 %v5490, %v5877
      %v5879 = vpop.f32.mrf.mxu0
      %5880 = vmatprep.mubr.f32.mxu0 0.0
      %5881 = vmatmul.mubr.f32.gmra.mxu0 %v5668
      %v5882 = vpop.f32.mrf.mxu0
      %v5883 = vadd.f32 %v5495, %v5882
      %v5884 = vpop.f32.mrf.mxu0
      %5885 = vmatprep.mubr.f32.mxu0 0.0
      %5886 = vmatmul.mubr.f32.gmra.mxu0 %v5671
      %v5887 = vpop.f32.mrf.mxu0
      %v5888 = vadd.f32 %v5500, %v5887
      %v5889 = vpop.f32.mrf.mxu0
      %5890 = vmatprep.mubr.f32.mxu0 0.0
      %5891 = vmatmul.mubr.f32.gmra.mxu0 %v5674
      %v5892 = vpop.f32.mrf.mxu0
      %v5893 = vadd.f32 %v5505, %v5892
      %v5894 = vpop.f32.mrf.mxu0
      %5895 = vmatprep.mubr.f32.mxu0 0.0
      %5896 = vmatmul.mubr.f32.gmra.mxu0 %v5677
      %v5897 = vpop.f32.mrf.mxu0
      %v5898 = vadd.f32 %v5510, %v5897
      %v5899 = vpop.f32.mrf.mxu0
      %5900 = vmatprep.mubr.f32.mxu0 0.0
      %5901 = vmatmul.mubr.f32.gmra.mxu0 %v5680
      %v5902 = vpop.f32.mrf.mxu0
      %v5903 = vadd.f32 %v5515, %v5902
      %v5904 = vpop.f32.mrf.mxu0
      %5905 = vmatprep.mubr.f32.mxu0 0.0
      %5906 = vmatmul.mubr.f32.gmra.mxu0 %v5683
      %v5907 = vpop.f32.mrf.mxu0
      %v5908 = vadd.f32 %v5520, %v5907
      %v5909 = vpop.f32.mrf.mxu0
      %5910 = vmatprep.mubr.f32.mxu0 0.0
      %5911 = vmatmul.mubr.f32.gmra.mxu0 %v5686
      %v5912 = vpop.f32.mrf.mxu0
      %v5913 = vadd.f32 %v5525, %v5912
      %v5914 = vpop.f32.mrf.mxu0
      %5915 = vmatprep.mubr.f32.mxu0 0.0
      %5916 = vmatmul.mubr.f32.gmra.mxu0 %v5689
      %v5917 = vpop.f32.mrf.mxu0
      %v5918 = vadd.f32 %v5530, %v5917
      %v5919 = vpop.f32.mrf.mxu0
      %5920 = vmatprep.mubr.f32.mxu0 0.0
      %5921 = vmatmul.mubr.f32.gmra.mxu0 %v5692
      %v5922 = vpop.f32.mrf.mxu0
      %v5923 = vadd.f32 %v5535, %v5922
      %v5924 = vpop.f32.mrf.mxu0
      %5925 = vmatprep.mubr.f32.mxu0 0.0
      %5926 = vmatmul.mubr.f32.gmra.mxu0 %v5695
      %v5927 = vpop.f32.mrf.mxu0
      %v5928 = vadd.f32 %v5540, %v5927
      %v5929 = vpop.f32.mrf.mxu0
      %5930 = vmatprep.mubr.f32.mxu0 0.0
      %5931 = vmatmul.mubr.f32.gmra.mxu0 %v5698
      %v5932 = vpop.f32.mrf.mxu0
      %v5933 = vadd.f32 %v5545, %v5932
      %v5934 = vpop.f32.mrf.mxu0
      %5935 = vmatprep.mubr.f32.mxu0 0.0
      %5936 = vmatmul.mubr.f32.gmra.mxu0 %v5701
      %v5937 = vpop.f32.mrf.mxu0
      %v5938 = vadd.f32 %v5550, %v5937
      %v5939 = vpop.f32.mrf.mxu0
      %5940 = vmatprep.mubr.f32.mxu0 0.0
      %5941 = vmatmul.mubr.f32.gmra.mxu0 %v5704
      %v5942 = vpop.f32.mrf.mxu0
      %v5943 = vadd.f32 %v5555, %v5942
      %v5944 = vpop.f32.mrf.mxu0
      %5945 = vmatprep.mubr.f32.mxu0 0.0
      %5946 = vmatmul.mubr.f32.gmra.mxu0 %v5707
      %v5947 = vpop.f32.mrf.mxu0
      %v5948 = vadd.f32 %v5560, %v5947
      %v5949 = vpop.f32.mrf.mxu0
      %5950 = vmatprep.mubr.f32.mxu0 0.0
      %5951 = vmatmul.mubr.f32.gmra.mxu0 %v5710
      %v5952 = vpop.f32.mrf.mxu0
      %v5953 = vadd.f32 %v5565, %v5952
      %v5954 = vpop.f32.mrf.mxu0
      %5955 = vmatprep.mubr.f32.mxu0 0.0
      %5956 = vmatmul.mubr.f32.gmra.mxu0 %v5713
      %v5957 = vpop.f32.mrf.mxu0
      %v5958 = vadd.f32 %v5570, %v5957
      %v5959 = vpop.f32.mrf.mxu0
      %5960 = vmatprep.mubr.f32.mxu0 0.0
      %5961 = vmatmul.mubr.f32.gmra.mxu0 %v5716
      %v5962 = vpop.f32.mrf.mxu0
      %v5963 = vadd.f32 %v5575, %v5962
      %v5964 = vpop.f32.mrf.mxu0
      %5965 = vmatprep.mubr.f32.mxu0 0.0
      %5966 = vmatmul.mubr.f32.gmra.mxu0 %v5719
      %v5967 = vpop.f32.mrf.mxu0
      %v5968 = vadd.f32 %v5580, %v5967
      %v5969 = vpop.f32.mrf.mxu0
      %5970 = vmatprep.mubr.f32.mxu0 0.0
      %5971 = vmatmul.mubr.f32.gmra.mxu0 %v5722
      %v5972 = vpop.f32.mrf.mxu0
      %v5973 = vadd.f32 %v5585, %v5972
      %v5974 = vpop.f32.mrf.mxu0
      %5975 = vmatprep.mubr.f32.mxu0 0.0
      %5976 = vmatmul.mubr.f32.gmra.mxu0 %v5725
      %v5977 = vpop.f32.mrf.mxu0
      %v5978 = vadd.f32 %v5590, %v5977
      %v5979 = vpop.f32.mrf.mxu0
      %5980 = vmatprep.mubr.f32.mxu0 0.0
      %5981 = vmatmul.mubr.f32.gmra.mxu0 %v5728
      %v5982 = vpop.f32.mrf.mxu0
      %v5983 = vadd.f32 %v5595, %v5982
      %v5984 = vpop.f32.mrf.mxu0
      %5985 = vmatprep.mubr.f32.mxu0 0.0
      %5986 = vmatmul.mubr.f32.gmra.mxu0 %v5731
      %v5987 = vpop.f32.mrf.mxu0
      %v5988 = vadd.f32 %v5600, %v5987
      %v5989 = vpop.f32.mrf.mxu0
      %5990 = vmatprep.mubr.f32.mxu0 0.0
      %5991 = vmatmul.mubr.f32.gmra.mxu0 %v5734
      %v5992 = vpop.f32.mrf.mxu0
      %v5993 = vadd.f32 %v5605, %v5992
      %v5994 = vpop.f32.mrf.mxu0
      %5995 = vmatprep.mubr.f32.mxu0 0.0
      %5996 = vmatmul.mubr.f32.gmra.mxu0 %v5737
      %v5997 = vpop.f32.mrf.mxu0
      %v5998 = vpop.f32.mrf.mxu0
      %5999 = vmatprep.mubr.f32.mxu0 0.0
      %6000 = vmatmul.mubr.f32.gmra.mxu0 %v5740
      %v6001 = vpop.f32.mrf.mxu0
      %v6002 = vpop.f32.mrf.mxu0
      %6003 = vmatprep.mubr.f32.mxu0 0.0
      %6004 = vmatmul.mubr.f32.gmra.mxu0 %v5743
      %v6005 = vpop.f32.mrf.mxu0
      %v6006 = vpop.f32.mrf.mxu0
      %6007 = vmatprep.mubr.f32.mxu0 0.0
      %6008 = vmatmul.mubr.f32.gmra.mxu0 %v5746
      %v6009 = vpop.f32.mrf.mxu0
      %v6010 = vpop.f32.mrf.mxu0
      %6011 = vmatprep.mubr.f32.mxu0 0.0
      %6012 = vmatmul.mubr.f32.gmra.mxu0 %v5749
      %v6013 = vpop.f32.mrf.mxu0
      %v6014 = vpop.f32.mrf.mxu0
      %6015 = vdwg.mxu0
      %v6016 = vld [vmem:[#allocation3 + $0x2] sm:$0xff]
      %v6017 = vld [vmem:[#allocation3 + $0xa] sm:$0xff]
      %v6018 = vld [vmem:[#allocation3 + $0x12] sm:$0xff]
      %v6019 = vld [vmem:[#allocation3 + $0x1a] sm:$0xff]
      %v6020 = vld [vmem:[#allocation3 + $0x22] sm:$0xff]
      %v6021 = vld [vmem:[#allocation3 + $0x2a] sm:$0xff]
      %v6022 = vld [vmem:[#allocation3 + $0x32] sm:$0xff]
      %v6023 = vld [vmem:[#allocation3 + $0x3a] sm:$0xff]
      %v6024 = vld [vmem:[#allocation3 + $0x42] sm:$0xff]
      %v6025 = vld [vmem:[#allocation3 + $0x4a] sm:$0xff]
      %v6026 = vld [vmem:[#allocation3 + $0x52] sm:$0xff]
      %v6027 = vld [vmem:[#allocation3 + $0x5a] sm:$0xff]
      %v6028 = vld [vmem:[#allocation3 + $0x62] sm:$0xff]
      %v6029 = vld [vmem:[#allocation3 + $0x6a] sm:$0xff]
      %v6030 = vld [vmem:[#allocation3 + $0x72] sm:$0xff]
      %v6031 = vld [vmem:[#allocation3 + $0x7a] sm:$0xff]
      %v6032 = vld [vmem:[#allocation3 + $0x82] sm:$0xff]
      %v6033 = vld [vmem:[#allocation3 + $0x8a] sm:$0xff]
      %v6034 = vld [vmem:[#allocation3 + $0x92] sm:$0xff]
      %v6035 = vld [vmem:[#allocation3 + $0x9a] sm:$0xff]
      %v6036 = vld [vmem:[#allocation3 + $0xa2] sm:$0xff]
      %v6037 = vld [vmem:[#allocation3 + $0xaa] sm:$0xff]
      %v6038 = vld [vmem:[#allocation3 + $0xb2] sm:$0xff]
      %v6039 = vld [vmem:[#allocation3 + $0xba] sm:$0xff]
      %v6040 = vld [vmem:[#allocation3 + $0xc2] sm:$0xff]
      %v6041 = vld [vmem:[#allocation3 + $0xca] sm:$0xff]
      %v6042 = vld [vmem:[#allocation3 + $0xd2] sm:$0xff]
      %v6043 = vld [vmem:[#allocation3 + $0xda] sm:$0xff]
      %v6044 = vld [vmem:[#allocation3 + $0xe2] sm:$0xff]
      %v6045 = vld [vmem:[#allocation3 + $0xea] sm:$0xff]
      %v6046 = vld [vmem:[#allocation3 + $0xf2] sm:$0xff]
      %v6047 = vld [vmem:[#allocation3 + $0xfa] sm:$0xff]
      %v6048 = vld [vmem:[#allocation3 + $0x102] sm:$0xff]
      %v6049 = vld [vmem:[#allocation3 + $0x10a] sm:$0xff]
      %v6050 = vld [vmem:[#allocation3 + $0x112] sm:$0xff]
      %v6051 = vld [vmem:[#allocation3 + $0x11a] sm:$0xff]
      %v6052 = vld [vmem:[#allocation3 + $0x122] sm:$0xff]
      %v6053 = vld [vmem:[#allocation3 + $0x12a] sm:$0xff]
      %v6054 = vld [vmem:[#allocation3 + $0x132] sm:$0xff]
      %v6055 = vld [vmem:[#allocation3 + $0x13a] sm:$0xff]
      %v6056 = vld [vmem:[#allocation3 + $0x142] sm:$0xf]
      %s6057 = scalar_lea.vmem %s4, 16
      %v6058 = vld [vmem:[%s6057] sm:$0xff]
      %v6060 = vsel %vm5105, %v6016, 0
      %v6063 = vsel %vm5105, %v6017, 0
      %v6066 = vsel %vm5105, %v6018, 0
      %v6069 = vsel %vm5105, %v6019, 0
      %v6072 = vsel %vm5105, %v6020, 0
      %v6075 = vsel %vm5105, %v6021, 0
      %v6078 = vsel %vm5105, %v6022, 0
      %v6081 = vsel %vm5105, %v6023, 0
      %v6084 = vsel %vm5105, %v6024, 0
      %v6087 = vsel %vm5105, %v6025, 0
      %v6090 = vsel %vm5105, %v6026, 0
      %v6093 = vsel %vm5105, %v6027, 0
      %v6096 = vsel %vm5105, %v6028, 0
      %v6099 = vsel %vm5105, %v6029, 0
      %v6102 = vsel %vm5105, %v6030, 0
      %v6105 = vsel %vm5105, %v6031, 0
      %v6108 = vsel %vm5105, %v6032, 0
      %v6111 = vsel %vm5105, %v6033, 0
      %v6114 = vsel %vm5105, %v6034, 0
      %v6117 = vsel %vm5105, %v6035, 0
      %v6120 = vsel %vm5105, %v6036, 0
      %v6123 = vsel %vm5105, %v6037, 0
      %v6126 = vsel %vm5105, %v6038, 0
      %v6129 = vsel %vm5105, %v6039, 0
      %v6132 = vsel %vm5105, %v6040, 0
      %v6135 = vsel %vm5105, %v6041, 0
      %v6138 = vsel %vm5105, %v6042, 0
      %v6141 = vsel %vm5105, %v6043, 0
      %v6144 = vsel %vm5105, %v6044, 0
      %v6147 = vsel %vm5105, %v6045, 0
      %v6150 = vsel %vm5105, %v6046, 0
      %v6153 = vsel %vm5105, %v6047, 0
      %v6156 = vsel %vm5105, %v6048, 0
      %v6159 = vsel %vm5105, %v6049, 0
      %v6162 = vsel %vm5105, %v6050, 0
      %v6165 = vsel %vm5105, %v6051, 0
      %v6168 = vsel %vm5105, %v6052, 0
      %v6171 = vsel %vm5105, %v6053, 0
      %v6174 = vsel %vm5105, %v6054, 0
      %v6177 = vsel %vm5105, %v6055, 0
      %v6180 = vsel %vm5105, %v6056, 0
      %6182 = vmatprep.subr.mxu0 0.0
      %6183 = vmatpush1.msra.mxu0 0.0
      %6184 = vmatprep.subr.mxu0 0.0
      %6185 = vmatpush1.msra.mxu0 0.0
      %6186 = vmatprep.subr.mxu0 0.0
      %6187 = vmatpush1.msra.mxu0 0.0
      %6188 = vmatprep.subr.mxu0 0.0
      %6189 = vmatpush1.msra.mxu0 0.0
      %6190 = vmatprep.subr.mxu0 0.0
      %6191 = vmatpush1.msra.mxu0 0.0
      %6192 = vmatprep.subr.mxu0 0.0
      %6193 = vmatpush1.msra.mxu0 0.0
      %6194 = vmatprep.subr.mxu0 0.0
      %6195 = vmatpush1.msra.mxu0 0.0
      %6196 = vmatprep.subr.mxu0 0.0
      %6197 = vmatpush1.msra.mxu0 0.0
      %6198 = vmatprep.subr.mxu0 0.0
      %6199 = vmatpush1.msra.mxu0 0.0
      %6200 = vmatprep.subr.mxu0 0.0
      %6201 = vmatpush1.msra.mxu0 0.0
      %6202 = vmatprep.subr.mxu0 0.0
      %6203 = vmatpush1.msra.mxu0 0.0
      %6204 = vmatprep.subr.mxu0 0.0
      %6205 = vmatpush1.msra.mxu0 0.0
      %6206 = vmatprep.subr.mxu0 0.0
      %6207 = vmatpush1.msra.mxu0 0.0
      %6208 = vmatprep.subr.mxu0 0.0
      %6209 = vmatpush1.msra.mxu0 0.0
      %6210 = vmatprep.subr.mxu0 0.0
      %6211 = vmatpush1.msra.mxu0 0.0
      %6212 = vmatprep.subr.mxu0 0.0
      %6213 = vmatpush1.msra.mxu0 %v6058
      %6214 = vmatprep.subr.mxu0 0.0
      %6215 = vmatpush2.msra.mxu0 0.0
      %6216 = vmatprep.subr.mxu0 0.0
      %6217 = vmatpush2.msra.mxu0 0.0
      %6218 = vmatprep.subr.mxu0 0.0
      %6219 = vmatpush2.msra.mxu0 0.0
      %6220 = vmatprep.subr.mxu0 0.0
      %6221 = vmatpush2.msra.mxu0 0.0
      %6222 = vmatprep.subr.mxu0 0.0
      %6223 = vmatpush2.msra.mxu0 0.0
      %6224 = vmatprep.subr.mxu0 0.0
      %6225 = vmatpush2.msra.mxu0 0.0
      %6226 = vmatprep.subr.mxu0 0.0
      %6227 = vmatpush2.msra.mxu0 0.0
      %6228 = vmatprep.subr.mxu0 0.0
      %6229 = vmatpush2.msra.mxu0 0.0
      %6230 = vmatprep.subr.mxu0 0.0
      %6231 = vmatpush2.msra.mxu0 0.0
      %6232 = vmatprep.subr.mxu0 0.0
      %6233 = vmatpush2.msra.mxu0 0.0
      %6234 = vmatprep.subr.mxu0 0.0
      %6235 = vmatpush2.msra.mxu0 0.0
      %6236 = vmatprep.subr.mxu0 0.0
      %6237 = vmatpush2.msra.mxu0 0.0
      %6238 = vmatprep.subr.mxu0 0.0
      %6239 = vmatpush2.msra.mxu0 0.0
      %6240 = vmatprep.subr.mxu0 0.0
      %6241 = vmatpush2.msra.mxu0 0.0
      %6242 = vmatprep.subr.mxu0 0.0
      %6243 = vmatpush2.msra.mxu0 0.0
      %6244 = vmatprep.subr.mxu0 0.0
      %6245 = vmatpush2.msra.mxu0 0.0
      %6246 = vmatprep.mubr.f32.mxu0 0.0
      %6247 = vmatmul.mubr.f32.gmra.mxu0 %v6060
      %v6248 = vpop.f32.mrf.mxu0
      %v6249 = vadd.f32 0.0, %v6248
      %v6250 = vpop.f32.mrf.mxu0
      %6251 = vmatprep.mubr.f32.mxu0 0.0
      %6252 = vmatmul.mubr.f32.gmra.mxu0 %v6063
      %v6253 = vpop.f32.mrf.mxu0
      %v6254 = vadd.f32 0.0, %v6253
      %v6255 = vpop.f32.mrf.mxu0
      %6256 = vmatprep.mubr.f32.mxu0 0.0
      %6257 = vmatmul.mubr.f32.gmra.mxu0 %v6066
      %v6258 = vpop.f32.mrf.mxu0
      %v6259 = vadd.f32 0.0, %v6258
      %v6260 = vpop.f32.mrf.mxu0
      %6261 = vmatprep.mubr.f32.mxu0 0.0
      %6262 = vmatmul.mubr.f32.gmra.mxu0 %v6069
      %v6263 = vpop.f32.mrf.mxu0
      %v6264 = vadd.f32 0.0, %v6263
      %v6265 = vpop.f32.mrf.mxu0
      %6266 = vmatprep.mubr.f32.mxu0 0.0
      %6267 = vmatmul.mubr.f32.gmra.mxu0 %v6072
      %v6268 = vpop.f32.mrf.mxu0
      %v6269 = vadd.f32 0.0, %v6268
      %v6270 = vpop.f32.mrf.mxu0
      %6271 = vmatprep.mubr.f32.mxu0 0.0
      %6272 = vmatmul.mubr.f32.gmra.mxu0 %v6075
      %v6273 = vpop.f32.mrf.mxu0
      %v6274 = vadd.f32 0.0, %v6273
      %v6275 = vpop.f32.mrf.mxu0
      %6276 = vmatprep.mubr.f32.mxu0 0.0
      %6277 = vmatmul.mubr.f32.gmra.mxu0 %v6078
      %v6278 = vpop.f32.mrf.mxu0
      %v6279 = vadd.f32 0.0, %v6278
      %v6280 = vpop.f32.mrf.mxu0
      %6281 = vmatprep.mubr.f32.mxu0 0.0
      %6282 = vmatmul.mubr.f32.gmra.mxu0 %v6081
      %v6283 = vpop.f32.mrf.mxu0
      %v6284 = vadd.f32 0.0, %v6283
      %v6285 = vpop.f32.mrf.mxu0
      %6286 = vmatprep.mubr.f32.mxu0 0.0
      %6287 = vmatmul.mubr.f32.gmra.mxu0 %v6084
      %v6288 = vpop.f32.mrf.mxu0
      %v6289 = vadd.f32 0.0, %v6288
      %v6290 = vpop.f32.mrf.mxu0
      %6291 = vmatprep.mubr.f32.mxu0 0.0
      %6292 = vmatmul.mubr.f32.gmra.mxu0 %v6087
      %v6293 = vpop.f32.mrf.mxu0
      %v6294 = vadd.f32 0.0, %v6293
      %v6295 = vpop.f32.mrf.mxu0
      %6296 = vmatprep.mubr.f32.mxu0 0.0
      %6297 = vmatmul.mubr.f32.gmra.mxu0 %v6090
      %v6298 = vpop.f32.mrf.mxu0
      %v6299 = vadd.f32 0.0, %v6298
      %v6300 = vpop.f32.mrf.mxu0
      %6301 = vmatprep.mubr.f32.mxu0 0.0
      %6302 = vmatmul.mubr.f32.gmra.mxu0 %v6093
      %v6303 = vpop.f32.mrf.mxu0
      %v6304 = vadd.f32 0.0, %v6303
      %v6305 = vpop.f32.mrf.mxu0
      %6306 = vmatprep.mubr.f32.mxu0 0.0
      %6307 = vmatmul.mubr.f32.gmra.mxu0 %v6096
      %v6308 = vpop.f32.mrf.mxu0
      %v6309 = vadd.f32 0.0, %v6308
      %v6310 = vpop.f32.mrf.mxu0
      %6311 = vmatprep.mubr.f32.mxu0 0.0
      %6312 = vmatmul.mubr.f32.gmra.mxu0 %v6099
      %v6313 = vpop.f32.mrf.mxu0
      %v6314 = vadd.f32 0.0, %v6313
      %v6315 = vpop.f32.mrf.mxu0
      %6316 = vmatprep.mubr.f32.mxu0 0.0
      %6317 = vmatmul.mubr.f32.gmra.mxu0 %v6102
      %v6318 = vpop.f32.mrf.mxu0
      %v6319 = vadd.f32 0.0, %v6318
      %v6320 = vpop.f32.mrf.mxu0
      %6321 = vmatprep.mubr.f32.mxu0 0.0
      %6322 = vmatmul.mubr.f32.gmra.mxu0 %v6105
      %v6323 = vpop.f32.mrf.mxu0
      %v6324 = vadd.f32 0.0, %v6323
      %v6325 = vpop.f32.mrf.mxu0
      %6326 = vmatprep.mubr.f32.mxu0 0.0
      %6327 = vmatmul.mubr.f32.gmra.mxu0 %v6108
      %v6328 = vpop.f32.mrf.mxu0
      %v6329 = vadd.f32 0.0, %v6328
      %v6330 = vpop.f32.mrf.mxu0
      %6331 = vmatprep.mubr.f32.mxu0 0.0
      %6332 = vmatmul.mubr.f32.gmra.mxu0 %v6111
      %v6333 = vpop.f32.mrf.mxu0
      %v6334 = vadd.f32 0.0, %v6333
      %v6335 = vpop.f32.mrf.mxu0
      %6336 = vmatprep.mubr.f32.mxu0 0.0
      %6337 = vmatmul.mubr.f32.gmra.mxu0 %v6114
      %v6338 = vpop.f32.mrf.mxu0
      %v6339 = vadd.f32 0.0, %v6338
      %v6340 = vpop.f32.mrf.mxu0
      %6341 = vmatprep.mubr.f32.mxu0 0.0
      %6342 = vmatmul.mubr.f32.gmra.mxu0 %v6117
      %v6343 = vpop.f32.mrf.mxu0
      %v6344 = vadd.f32 0.0, %v6343
      %v6345 = vpop.f32.mrf.mxu0
      %6346 = vmatprep.mubr.f32.mxu0 0.0
      %6347 = vmatmul.mubr.f32.gmra.mxu0 %v6120
      %v6348 = vpop.f32.mrf.mxu0
      %v6349 = vadd.f32 0.0, %v6348
      %v6350 = vpop.f32.mrf.mxu0
      %6351 = vmatprep.mubr.f32.mxu0 0.0
      %6352 = vmatmul.mubr.f32.gmra.mxu0 %v6123
      %v6353 = vpop.f32.mrf.mxu0
      %v6354 = vadd.f32 0.0, %v6353
      %v6355 = vpop.f32.mrf.mxu0
      %6356 = vmatprep.mubr.f32.mxu0 0.0
      %6357 = vmatmul.mubr.f32.gmra.mxu0 %v6126
      %v6358 = vpop.f32.mrf.mxu0
      %v6359 = vadd.f32 0.0, %v6358
      %v6360 = vpop.f32.mrf.mxu0
      %6361 = vmatprep.mubr.f32.mxu0 0.0
      %6362 = vmatmul.mubr.f32.gmra.mxu0 %v6129
      %v6363 = vpop.f32.mrf.mxu0
      %v6364 = vadd.f32 0.0, %v6363
      %v6365 = vpop.f32.mrf.mxu0
      %6366 = vmatprep.mubr.f32.mxu0 0.0
      %6367 = vmatmul.mubr.f32.gmra.mxu0 %v6132
      %v6368 = vpop.f32.mrf.mxu0
      %v6369 = vadd.f32 0.0, %v6368
      %v6370 = vpop.f32.mrf.mxu0
      %6371 = vmatprep.mubr.f32.mxu0 0.0
      %6372 = vmatmul.mubr.f32.gmra.mxu0 %v6135
      %v6373 = vpop.f32.mrf.mxu0
      %v6374 = vadd.f32 0.0, %v6373
      %v6375 = vpop.f32.mrf.mxu0
      %6376 = vmatprep.mubr.f32.mxu0 0.0
      %6377 = vmatmul.mubr.f32.gmra.mxu0 %v6138
      %v6378 = vpop.f32.mrf.mxu0
      %v6379 = vadd.f32 0.0, %v6378
      %v6380 = vpop.f32.mrf.mxu0
      %6381 = vmatprep.mubr.f32.mxu0 0.0
      %6382 = vmatmul.mubr.f32.gmra.mxu0 %v6141
      %v6383 = vpop.f32.mrf.mxu0
      %v6384 = vadd.f32 0.0, %v6383
      %v6385 = vpop.f32.mrf.mxu0
      %6386 = vmatprep.mubr.f32.mxu0 0.0
      %6387 = vmatmul.mubr.f32.gmra.mxu0 %v6144
      %v6388 = vpop.f32.mrf.mxu0
      %v6389 = vadd.f32 0.0, %v6388
      %v6390 = vpop.f32.mrf.mxu0
      %6391 = vmatprep.mubr.f32.mxu0 0.0
      %6392 = vmatmul.mubr.f32.gmra.mxu0 %v6147
      %v6393 = vpop.f32.mrf.mxu0
      %v6394 = vadd.f32 0.0, %v6393
      %v6395 = vpop.f32.mrf.mxu0
      %6396 = vmatprep.mubr.f32.mxu0 0.0
      %6397 = vmatmul.mubr.f32.gmra.mxu0 %v6150
      %v6398 = vpop.f32.mrf.mxu0
      %v6399 = vadd.f32 0.0, %v6398
      %v6400 = vpop.f32.mrf.mxu0
      %6401 = vmatprep.mubr.f32.mxu0 0.0
      %6402 = vmatmul.mubr.f32.gmra.mxu0 %v6153
      %v6403 = vpop.f32.mrf.mxu0
      %v6404 = vadd.f32 0.0, %v6403
      %v6405 = vpop.f32.mrf.mxu0
      %6406 = vmatprep.mubr.f32.mxu0 0.0
      %6407 = vmatmul.mubr.f32.gmra.mxu0 %v6156
      %v6408 = vpop.f32.mrf.mxu0
      %v6409 = vadd.f32 0.0, %v6408
      %v6410 = vpop.f32.mrf.mxu0
      %6411 = vmatprep.mubr.f32.mxu0 0.0
      %6412 = vmatmul.mubr.f32.gmra.mxu0 %v6159
      %v6413 = vpop.f32.mrf.mxu0
      %v6414 = vadd.f32 0.0, %v6413
      %v6415 = vpop.f32.mrf.mxu0
      %6416 = vmatprep.mubr.f32.mxu0 0.0
      %6417 = vmatmul.mubr.f32.gmra.mxu0 %v6162
      %v6418 = vpop.f32.mrf.mxu0
      %v6419 = vadd.f32 0.0, %v6418
      %v6420 = vpop.f32.mrf.mxu0
      %6421 = vmatprep.mubr.f32.mxu0 0.0
      %6422 = vmatmul.mubr.f32.gmra.mxu0 %v6165
      %v6423 = vpop.f32.mrf.mxu0
      %v6424 = vadd.f32 0.0, %v6423
      %v6425 = vpop.f32.mrf.mxu0
      %6426 = vmatprep.mubr.f32.mxu0 0.0
      %6427 = vmatmul.mubr.f32.gmra.mxu0 %v6168
      %v6428 = vpop.f32.mrf.mxu0
      %v6429 = vpop.f32.mrf.mxu0
      %6430 = vmatprep.mubr.f32.mxu0 0.0
      %6431 = vmatmul.mubr.f32.gmra.mxu0 %v6171
      %v6432 = vpop.f32.mrf.mxu0
      %v6433 = vpop.f32.mrf.mxu0
      %6434 = vmatprep.mubr.f32.mxu0 0.0
      %6435 = vmatmul.mubr.f32.gmra.mxu0 %v6174
      %v6436 = vpop.f32.mrf.mxu0
      %v6437 = vpop.f32.mrf.mxu0
      %6438 = vmatprep.mubr.f32.mxu0 0.0
      %6439 = vmatmul.mubr.f32.gmra.mxu0 %v6177
      %v6440 = vpop.f32.mrf.mxu0
      %v6441 = vpop.f32.mrf.mxu0
      %6442 = vmatprep.mubr.f32.mxu0 0.0
      %6443 = vmatmul.mubr.f32.gmra.mxu0 %v6180
      %v6444 = vpop.f32.mrf.mxu0
      %v6445 = vpop.f32.mrf.mxu0
      %6446 = vdwg.mxu0
      %v6447 = vadd.f32 %v5818, %v6249
      %v6448 = vadd.f32 %v5823, %v6254
      %v6449 = vadd.f32 %v5828, %v6259
      %v6450 = vadd.f32 %v5833, %v6264
      %v6451 = vadd.f32 %v5838, %v6269
      %v6452 = vadd.f32 %v5843, %v6274
      %v6453 = vadd.f32 %v5848, %v6279
      %v6454 = vadd.f32 %v5853, %v6284
      %v6455 = vadd.f32 %v5858, %v6289
      %v6456 = vadd.f32 %v5863, %v6294
      %v6457 = vadd.f32 %v5868, %v6299
      %v6458 = vadd.f32 %v5873, %v6304
      %v6459 = vadd.f32 %v5878, %v6309
      %v6460 = vadd.f32 %v5883, %v6314
      %v6461 = vadd.f32 %v5888, %v6319
      %v6462 = vadd.f32 %v5893, %v6324
      %v6463 = vadd.f32 %v5898, %v6329
      %v6464 = vadd.f32 %v5903, %v6334
      %v6465 = vadd.f32 %v5908, %v6339
      %v6466 = vadd.f32 %v5913, %v6344
      %v6467 = vadd.f32 %v5918, %v6349
      %v6468 = vadd.f32 %v5923, %v6354
      %v6469 = vadd.f32 %v5928, %v6359
      %v6470 = vadd.f32 %v5933, %v6364
      %v6471 = vadd.f32 %v5938, %v6369
      %v6472 = vadd.f32 %v5943, %v6374
      %v6473 = vadd.f32 %v5948, %v6379
      %v6474 = vadd.f32 %v5953, %v6384
      %v6475 = vadd.f32 %v5958, %v6389
      %v6476 = vadd.f32 %v5963, %v6394
      %v6477 = vadd.f32 %v5968, %v6399
      %v6478 = vadd.f32 %v5973, %v6404
      %v6479 = vadd.f32 %v5978, %v6409
      %v6480 = vadd.f32 %v5983, %v6414
      %v6481 = vadd.f32 %v5988, %v6419
      %v6482 = vadd.f32 %v5993, %v6424
      %v6483 = vld [vmem:[#allocation3 + $0x12] sm:$0xff]
      %v6484 = vld [vmem:[#allocation3 + $0x1a] sm:$0xff]
      %v6485 = vld [vmem:[#allocation3 + $0x22] sm:$0xff]
      %v6486 = vld [vmem:[#allocation3 + $0x2a] sm:$0xff]
      %v6487 = vld [vmem:[#allocation3 + $0x32] sm:$0xff]
      %v6488 = vld [vmem:[#allocation3 + $0x3a] sm:$0xff]
      %v6489 = vld [vmem:[#allocation3 + $0x42] sm:$0xff]
      %v6490 = vld [vmem:[#allocation3 + $0x4a] sm:$0xff]
      %v6491 = vld [vmem:[#allocation3 + $0x52] sm:$0xff]
      %v6492 = vld [vmem:[#allocation3 + $0x5a] sm:$0xff]
      %v6493 = vld [vmem:[#allocation3 + $0x62] sm:$0xff]
      %v6494 = vld [vmem:[#allocation3 + $0x6a] sm:$0xff]
      %v6495 = vld [vmem:[#allocation3 + $0x72] sm:$0xff]
      %v6496 = vld [vmem:[#allocation3 + $0x7a] sm:$0xff]
      %v6497 = vld [vmem:[#allocation3 + $0x82] sm:$0xff]
      %v6498 = vld [vmem:[#allocation3 + $0x8a] sm:$0xff]
      %v6499 = vld [vmem:[#allocation3 + $0x92] sm:$0xff]
      %v6500 = vld [vmem:[#allocation3 + $0x9a] sm:$0xff]
      %v6501 = vld [vmem:[#allocation3 + $0xa2] sm:$0xff]
      %v6502 = vld [vmem:[#allocation3 + $0xaa] sm:$0xff]
      %v6503 = vld [vmem:[#allocation3 + $0xb2] sm:$0xff]
      %v6504 = vld [vmem:[#allocation3 + $0xba] sm:$0xff]
      %v6505 = vld [vmem:[#allocation3 + $0xc2] sm:$0xff]
      %v6506 = vld [vmem:[#allocation3 + $0xca] sm:$0xff]
      %v6507 = vld [vmem:[#allocation3 + $0xd2] sm:$0xff]
      %v6508 = vld [vmem:[#allocation3 + $0xda] sm:$0xff]
      %v6509 = vld [vmem:[#allocation3 + $0xe2] sm:$0xff]
      %v6510 = vld [vmem:[#allocation3 + $0xea] sm:$0xff]
      %v6511 = vld [vmem:[#allocation3 + $0xf2] sm:$0xff]
      %v6512 = vld [vmem:[#allocation3 + $0xfa] sm:$0xff]
      %v6513 = vld [vmem:[#allocation3 + $0x102] sm:$0xff]
      %v6514 = vld [vmem:[#allocation3 + $0x10a] sm:$0xff]
      %v6515 = vld [vmem:[#allocation3 + $0x112] sm:$0xff]
      %v6516 = vld [vmem:[#allocation3 + $0x11a] sm:$0xff]
      %v6517 = vld [vmem:[#allocation3 + $0x122] sm:$0xff]
      %v6518 = vld [vmem:[#allocation3 + $0x12a] sm:$0xff]
      %v6519 = vld [vmem:[#allocation3 + $0x132] sm:$0xff]
      %v6520 = vld [vmem:[#allocation3 + $0x13a] sm:$0xff]
      %v6521 = vld [vmem:[#allocation3 + $0x142] sm:$0xff]
      %v6522 = vld [vmem:[#allocation3 + $0x14a] sm:$0xff]
      %v6523 = vld [vmem:[#allocation3 + $0x152] sm:$0xf]
      %s6524 = scalar_lea.vmem %s4, 24
      %v6525 = vld [vmem:[%s6524] sm:$0xff]
      %v6527 = vsel %vm5105, %v6483, 0
      %v6530 = vsel %vm5105, %v6484, 0
      %v6533 = vsel %vm5105, %v6485, 0
      %v6536 = vsel %vm5105, %v6486, 0
      %v6539 = vsel %vm5105, %v6487, 0
      %v6542 = vsel %vm5105, %v6488, 0
      %v6545 = vsel %vm5105, %v6489, 0
      %v6548 = vsel %vm5105, %v6490, 0
      %v6551 = vsel %vm5105, %v6491, 0
      %v6554 = vsel %vm5105, %v6492, 0
      %v6557 = vsel %vm5105, %v6493, 0
      %v6560 = vsel %vm5105, %v6494, 0
      %v6563 = vsel %vm5105, %v6495, 0
      %v6566 = vsel %vm5105, %v6496, 0
      %v6569 = vsel %vm5105, %v6497, 0
      %v6572 = vsel %vm5105, %v6498, 0
      %v6575 = vsel %vm5105, %v6499, 0
      %v6578 = vsel %vm5105, %v6500, 0
      %v6581 = vsel %vm5105, %v6501, 0
      %v6584 = vsel %vm5105, %v6502, 0
      %v6587 = vsel %vm5105, %v6503, 0
      %v6590 = vsel %vm5105, %v6504, 0
      %v6593 = vsel %vm5105, %v6505, 0
      %v6596 = vsel %vm5105, %v6506, 0
      %v6599 = vsel %vm5105, %v6507, 0
      %v6602 = vsel %vm5105, %v6508, 0
      %v6605 = vsel %vm5105, %v6509, 0
      %v6608 = vsel %vm5105, %v6510, 0
      %v6611 = vsel %vm5105, %v6511, 0
      %v6614 = vsel %vm5105, %v6512, 0
      %v6617 = vsel %vm5105, %v6513, 0
      %v6620 = vsel %vm5105, %v6514, 0
      %v6623 = vsel %vm5105, %v6515, 0
      %v6626 = vsel %vm5105, %v6516, 0
      %v6629 = vsel %vm5105, %v6517, 0
      %v6632 = vsel %vm5105, %v6518, 0
      %v6635 = vsel %vm5105, %v6519, 0
      %v6638 = vsel %vm5105, %v6520, 0
      %v6641 = vsel %vm5105, %v6521, 0
      %v6644 = vsel %vm5105, %v6522, 0
      %v6647 = vsel %vm5105, %v6523, 0
      %6649 = vmatprep.subr.mxu0 0.0
      %6650 = vmatpush1.msra.mxu0 0.0
      %6651 = vmatprep.subr.mxu0 0.0
      %6652 = vmatpush1.msra.mxu0 0.0
      %6653 = vmatprep.subr.mxu0 0.0
      %6654 = vmatpush1.msra.mxu0 0.0
      %6655 = vmatprep.subr.mxu0 0.0
      %6656 = vmatpush1.msra.mxu0 0.0
      %6657 = vmatprep.subr.mxu0 0.0
      %6658 = vmatpush1.msra.mxu0 0.0
      %6659 = vmatprep.subr.mxu0 0.0
      %6660 = vmatpush1.msra.mxu0 0.0
      %6661 = vmatprep.subr.mxu0 0.0
      %6662 = vmatpush1.msra.mxu0 0.0
      %6663 = vmatprep.subr.mxu0 0.0
      %6664 = vmatpush1.msra.mxu0 0.0
      %6665 = vmatprep.subr.mxu0 0.0
      %6666 = vmatpush1.msra.mxu0 0.0
      %6667 = vmatprep.subr.mxu0 0.0
      %6668 = vmatpush1.msra.mxu0 0.0
      %6669 = vmatprep.subr.mxu0 0.0
      %6670 = vmatpush1.msra.mxu0 0.0
      %6671 = vmatprep.subr.mxu0 0.0
      %6672 = vmatpush1.msra.mxu0 0.0
      %6673 = vmatprep.subr.mxu0 0.0
      %6674 = vmatpush1.msra.mxu0 0.0
      %6675 = vmatprep.subr.mxu0 0.0
      %6676 = vmatpush1.msra.mxu0 0.0
      %6677 = vmatprep.subr.mxu0 0.0
      %6678 = vmatpush1.msra.mxu0 0.0
      %6679 = vmatprep.subr.mxu0 0.0
      %6680 = vmatpush1.msra.mxu0 %v6525
      %6681 = vmatprep.subr.mxu0 0.0
      %6682 = vmatpush2.msra.mxu0 0.0
      %6683 = vmatprep.subr.mxu0 0.0
      %6684 = vmatpush2.msra.mxu0 0.0
      %6685 = vmatprep.subr.mxu0 0.0
      %6686 = vmatpush2.msra.mxu0 0.0
      %6687 = vmatprep.subr.mxu0 0.0
      %6688 = vmatpush2.msra.mxu0 0.0
      %6689 = vmatprep.subr.mxu0 0.0
      %6690 = vmatpush2.msra.mxu0 0.0
      %6691 = vmatprep.subr.mxu0 0.0
      %6692 = vmatpush2.msra.mxu0 0.0
      %6693 = vmatprep.subr.mxu0 0.0
      %6694 = vmatpush2.msra.mxu0 0.0
      %6695 = vmatprep.subr.mxu0 0.0
      %6696 = vmatpush2.msra.mxu0 0.0
      %6697 = vmatprep.subr.mxu0 0.0
      %6698 = vmatpush2.msra.mxu0 0.0
      %6699 = vmatprep.subr.mxu0 0.0
      %6700 = vmatpush2.msra.mxu0 0.0
      %6701 = vmatprep.subr.mxu0 0.0
      %6702 = vmatpush2.msra.mxu0 0.0
      %6703 = vmatprep.subr.mxu0 0.0
      %6704 = vmatpush2.msra.mxu0 0.0
      %6705 = vmatprep.subr.mxu0 0.0
      %6706 = vmatpush2.msra.mxu0 0.0
      %6707 = vmatprep.subr.mxu0 0.0
      %6708 = vmatpush2.msra.mxu0 0.0
      %6709 = vmatprep.subr.mxu0 0.0
      %6710 = vmatpush2.msra.mxu0 0.0
      %6711 = vmatprep.subr.mxu0 0.0
      %6712 = vmatpush2.msra.mxu0 0.0
      %6713 = vmatprep.mubr.f32.mxu0 0.0
      %6714 = vmatmul.mubr.f32.gmra.mxu0 %v6527
      %v6715 = vpop.f32.mrf.mxu0
      %v6716 = vadd.f32 0.0, %v6715
      %v6717 = vpop.f32.mrf.mxu0
      %6718 = vmatprep.mubr.f32.mxu0 0.0
      %6719 = vmatmul.mubr.f32.gmra.mxu0 %v6530
      %v6720 = vpop.f32.mrf.mxu0
      %v6721 = vadd.f32 0.0, %v6720
      %v6722 = vpop.f32.mrf.mxu0
      %6723 = vmatprep.mubr.f32.mxu0 0.0
      %6724 = vmatmul.mubr.f32.gmra.mxu0 %v6533
      %v6725 = vpop.f32.mrf.mxu0
      %v6726 = vadd.f32 0.0, %v6725
      %v6727 = vpop.f32.mrf.mxu0
      %6728 = vmatprep.mubr.f32.mxu0 0.0
      %6729 = vmatmul.mubr.f32.gmra.mxu0 %v6536
      %v6730 = vpop.f32.mrf.mxu0
      %v6731 = vadd.f32 0.0, %v6730
      %v6732 = vpop.f32.mrf.mxu0
      %6733 = vmatprep.mubr.f32.mxu0 0.0
      %6734 = vmatmul.mubr.f32.gmra.mxu0 %v6539
      %v6735 = vpop.f32.mrf.mxu0
      %v6736 = vadd.f32 0.0, %v6735
      %v6737 = vpop.f32.mrf.mxu0
      %6738 = vmatprep.mubr.f32.mxu0 0.0
      %6739 = vmatmul.mubr.f32.gmra.mxu0 %v6542
      %v6740 = vpop.f32.mrf.mxu0
      %v6741 = vadd.f32 0.0, %v6740
      %v6742 = vpop.f32.mrf.mxu0
      %6743 = vmatprep.mubr.f32.mxu0 0.0
      %6744 = vmatmul.mubr.f32.gmra.mxu0 %v6545
      %v6745 = vpop.f32.mrf.mxu0
      %v6746 = vadd.f32 0.0, %v6745
      %v6747 = vpop.f32.mrf.mxu0
      %6748 = vmatprep.mubr.f32.mxu0 0.0
      %6749 = vmatmul.mubr.f32.gmra.mxu0 %v6548
      %v6750 = vpop.f32.mrf.mxu0
      %v6751 = vadd.f32 0.0, %v6750
      %v6752 = vpop.f32.mrf.mxu0
      %6753 = vmatprep.mubr.f32.mxu0 0.0
      %6754 = vmatmul.mubr.f32.gmra.mxu0 %v6551
      %v6755 = vpop.f32.mrf.mxu0
      %v6756 = vadd.f32 0.0, %v6755
      %v6757 = vpop.f32.mrf.mxu0
      %6758 = vmatprep.mubr.f32.mxu0 0.0
      %6759 = vmatmul.mubr.f32.gmra.mxu0 %v6554
      %v6760 = vpop.f32.mrf.mxu0
      %v6761 = vadd.f32 0.0, %v6760
      %v6762 = vpop.f32.mrf.mxu0
      %6763 = vmatprep.mubr.f32.mxu0 0.0
      %6764 = vmatmul.mubr.f32.gmra.mxu0 %v6557
      %v6765 = vpop.f32.mrf.mxu0
      %v6766 = vadd.f32 0.0, %v6765
      %v6767 = vpop.f32.mrf.mxu0
      %6768 = vmatprep.mubr.f32.mxu0 0.0
      %6769 = vmatmul.mubr.f32.gmra.mxu0 %v6560
      %v6770 = vpop.f32.mrf.mxu0
      %v6771 = vadd.f32 0.0, %v6770
      %v6772 = vpop.f32.mrf.mxu0
      %6773 = vmatprep.mubr.f32.mxu0 0.0
      %6774 = vmatmul.mubr.f32.gmra.mxu0 %v6563
      %v6775 = vpop.f32.mrf.mxu0
      %v6776 = vadd.f32 0.0, %v6775
      %v6777 = vpop.f32.mrf.mxu0
      %6778 = vmatprep.mubr.f32.mxu0 0.0
      %6779 = vmatmul.mubr.f32.gmra.mxu0 %v6566
      %v6780 = vpop.f32.mrf.mxu0
      %v6781 = vadd.f32 0.0, %v6780
      %v6782 = vpop.f32.mrf.mxu0
      %6783 = vmatprep.mubr.f32.mxu0 0.0
      %6784 = vmatmul.mubr.f32.gmra.mxu0 %v6569
      %v6785 = vpop.f32.mrf.mxu0
      %v6786 = vadd.f32 0.0, %v6785
      %v6787 = vpop.f32.mrf.mxu0
      %6788 = vmatprep.mubr.f32.mxu0 0.0
      %6789 = vmatmul.mubr.f32.gmra.mxu0 %v6572
      %v6790 = vpop.f32.mrf.mxu0
      %v6791 = vadd.f32 0.0, %v6790
      %v6792 = vpop.f32.mrf.mxu0
      %6793 = vmatprep.mubr.f32.mxu0 0.0
      %6794 = vmatmul.mubr.f32.gmra.mxu0 %v6575
      %v6795 = vpop.f32.mrf.mxu0
      %v6796 = vadd.f32 0.0, %v6795
      %v6797 = vpop.f32.mrf.mxu0
      %6798 = vmatprep.mubr.f32.mxu0 0.0
      %6799 = vmatmul.mubr.f32.gmra.mxu0 %v6578
      %v6800 = vpop.f32.mrf.mxu0
      %v6801 = vadd.f32 0.0, %v6800
      %v6802 = vpop.f32.mrf.mxu0
      %6803 = vmatprep.mubr.f32.mxu0 0.0
      %6804 = vmatmul.mubr.f32.gmra.mxu0 %v6581
      %v6805 = vpop.f32.mrf.mxu0
      %v6806 = vadd.f32 0.0, %v6805
      %v6807 = vpop.f32.mrf.mxu0
      %6808 = vmatprep.mubr.f32.mxu0 0.0
      %6809 = vmatmul.mubr.f32.gmra.mxu0 %v6584
      %v6810 = vpop.f32.mrf.mxu0
      %v6811 = vadd.f32 0.0, %v6810
      %v6812 = vpop.f32.mrf.mxu0
      %6813 = vmatprep.mubr.f32.mxu0 0.0
      %6814 = vmatmul.mubr.f32.gmra.mxu0 %v6587
      %v6815 = vpop.f32.mrf.mxu0
      %v6816 = vadd.f32 0.0, %v6815
      %v6817 = vpop.f32.mrf.mxu0
      %6818 = vmatprep.mubr.f32.mxu0 0.0
      %6819 = vmatmul.mubr.f32.gmra.mxu0 %v6590
      %v6820 = vpop.f32.mrf.mxu0
      %v6821 = vadd.f32 0.0, %v6820
      %v6822 = vpop.f32.mrf.mxu0
      %6823 = vmatprep.mubr.f32.mxu0 0.0
      %6824 = vmatmul.mubr.f32.gmra.mxu0 %v6593
      %v6825 = vpop.f32.mrf.mxu0
      %v6826 = vadd.f32 0.0, %v6825
      %v6827 = vpop.f32.mrf.mxu0
      %6828 = vmatprep.mubr.f32.mxu0 0.0
      %6829 = vmatmul.mubr.f32.gmra.mxu0 %v6596
      %v6830 = vpop.f32.mrf.mxu0
      %v6831 = vadd.f32 0.0, %v6830
      %v6832 = vpop.f32.mrf.mxu0
      %6833 = vmatprep.mubr.f32.mxu0 0.0
      %6834 = vmatmul.mubr.f32.gmra.mxu0 %v6599
      %v6835 = vpop.f32.mrf.mxu0
      %v6836 = vadd.f32 0.0, %v6835
      %v6837 = vpop.f32.mrf.mxu0
      %6838 = vmatprep.mubr.f32.mxu0 0.0
      %6839 = vmatmul.mubr.f32.gmra.mxu0 %v6602
      %v6840 = vpop.f32.mrf.mxu0
      %v6841 = vadd.f32 0.0, %v6840
      %v6842 = vpop.f32.mrf.mxu0
      %6843 = vmatprep.mubr.f32.mxu0 0.0
      %6844 = vmatmul.mubr.f32.gmra.mxu0 %v6605
      %v6845 = vpop.f32.mrf.mxu0
      %v6846 = vadd.f32 0.0, %v6845
      %v6847 = vpop.f32.mrf.mxu0
      %6848 = vmatprep.mubr.f32.mxu0 0.0
      %6849 = vmatmul.mubr.f32.gmra.mxu0 %v6608
      %v6850 = vpop.f32.mrf.mxu0
      %v6851 = vadd.f32 0.0, %v6850
      %v6852 = vpop.f32.mrf.mxu0
      %6853 = vmatprep.mubr.f32.mxu0 0.0
      %6854 = vmatmul.mubr.f32.gmra.mxu0 %v6611
      %v6855 = vpop.f32.mrf.mxu0
      %v6856 = vadd.f32 0.0, %v6855
      %v6857 = vpop.f32.mrf.mxu0
      %6858 = vmatprep.mubr.f32.mxu0 0.0
      %6859 = vmatmul.mubr.f32.gmra.mxu0 %v6614
      %v6860 = vpop.f32.mrf.mxu0
      %v6861 = vadd.f32 0.0, %v6860
      %v6862 = vpop.f32.mrf.mxu0
      %6863 = vmatprep.mubr.f32.mxu0 0.0
      %6864 = vmatmul.mubr.f32.gmra.mxu0 %v6617
      %v6865 = vpop.f32.mrf.mxu0
      %v6866 = vadd.f32 0.0, %v6865
      %v6867 = vpop.f32.mrf.mxu0
      %6868 = vmatprep.mubr.f32.mxu0 0.0
      %6869 = vmatmul.mubr.f32.gmra.mxu0 %v6620
      %v6870 = vpop.f32.mrf.mxu0
      %v6871 = vadd.f32 0.0, %v6870
      %v6872 = vpop.f32.mrf.mxu0
      %6873 = vmatprep.mubr.f32.mxu0 0.0
      %6874 = vmatmul.mubr.f32.gmra.mxu0 %v6623
      %v6875 = vpop.f32.mrf.mxu0
      %v6876 = vadd.f32 0.0, %v6875
      %v6877 = vpop.f32.mrf.mxu0
      %6878 = vmatprep.mubr.f32.mxu0 0.0
      %6879 = vmatmul.mubr.f32.gmra.mxu0 %v6626
      %v6880 = vpop.f32.mrf.mxu0
      %v6881 = vadd.f32 0.0, %v6880
      %v6882 = vpop.f32.mrf.mxu0
      %6883 = vmatprep.mubr.f32.mxu0 0.0
      %6884 = vmatmul.mubr.f32.gmra.mxu0 %v6629
      %v6885 = vpop.f32.mrf.mxu0
      %v6886 = vadd.f32 0.0, %v6885
      %v6887 = vpop.f32.mrf.mxu0
      %6888 = vmatprep.mubr.f32.mxu0 0.0
      %6889 = vmatmul.mubr.f32.gmra.mxu0 %v6632
      %v6890 = vpop.f32.mrf.mxu0
      %v6891 = vadd.f32 0.0, %v6890
      %v6892 = vpop.f32.mrf.mxu0
      %6893 = vmatprep.mubr.f32.mxu0 0.0
      %6894 = vmatmul.mubr.f32.gmra.mxu0 %v6635
      %v6895 = vpop.f32.mrf.mxu0
      %v6896 = vpop.f32.mrf.mxu0
      %6897 = vmatprep.mubr.f32.mxu0 0.0
      %6898 = vmatmul.mubr.f32.gmra.mxu0 %v6638
      %v6899 = vpop.f32.mrf.mxu0
      %v6900 = vpop.f32.mrf.mxu0
      %6901 = vmatprep.mubr.f32.mxu0 0.0
      %6902 = vmatmul.mubr.f32.gmra.mxu0 %v6641
      %v6903 = vpop.f32.mrf.mxu0
      %v6904 = vpop.f32.mrf.mxu0
      %6905 = vmatprep.mubr.f32.mxu0 0.0
      %6906 = vmatmul.mubr.f32.gmra.mxu0 %v6644
      %v6907 = vpop.f32.mrf.mxu0
      %v6908 = vpop.f32.mrf.mxu0
      %6909 = vmatprep.mubr.f32.mxu0 0.0
      %6910 = vmatmul.mubr.f32.gmra.mxu0 %v6647
      %v6911 = vpop.f32.mrf.mxu0
      %v6912 = vpop.f32.mrf.mxu0
      %6913 = vdwg.mxu0
      %v6914 = vadd.f32 %v6447, %v6716
      %v6915 = vadd.f32 %v6448, %v6721
      %v6916 = vadd.f32 %v6449, %v6726
      %v6917 = vadd.f32 %v6450, %v6731
      %v6918 = vadd.f32 %v6451, %v6736
      %v6919 = vadd.f32 %v6452, %v6741
      %v6920 = vadd.f32 %v6453, %v6746
      %v6921 = vadd.f32 %v6454, %v6751
      %v6922 = vadd.f32 %v6455, %v6756
      %v6923 = vadd.f32 %v6456, %v6761
      %v6924 = vadd.f32 %v6457, %v6766
      %v6925 = vadd.f32 %v6458, %v6771
      %v6926 = vadd.f32 %v6459, %v6776
      %v6927 = vadd.f32 %v6460, %v6781
      %v6928 = vadd.f32 %v6461, %v6786
      %v6929 = vadd.f32 %v6462, %v6791
      %v6930 = vadd.f32 %v6463, %v6796
      %v6931 = vadd.f32 %v6464, %v6801
      %v6932 = vadd.f32 %v6465, %v6806
      %v6933 = vadd.f32 %v6466, %v6811
      %v6934 = vadd.f32 %v6467, %v6816
      %v6935 = vadd.f32 %v6468, %v6821
      %v6936 = vadd.f32 %v6469, %v6826
      %v6937 = vadd.f32 %v6470, %v6831
      %v6938 = vadd.f32 %v6471, %v6836
      %v6939 = vadd.f32 %v6472, %v6841
      %v6940 = vadd.f32 %v6473, %v6846
      %v6941 = vadd.f32 %v6474, %v6851
      %v6942 = vadd.f32 %v6475, %v6856
      %v6943 = vadd.f32 %v6476, %v6861
      %v6944 = vadd.f32 %v6477, %v6866
      %v6945 = vadd.f32 %v6478, %v6871
      %v6946 = vadd.f32 %v6479, %v6876
      %v6947 = vadd.f32 %v6480, %v6881
      %v6948 = vadd.f32 %v6481, %v6886
      %v6949 = vadd.f32 %v6482, %v6891
      %v6950 = vld [vmem:[#allocation3 + $0x13] sm:$0xff]
      %v6951 = vld [vmem:[#allocation3 + $0x1b] sm:$0xff]
      %v6952 = vld [vmem:[#allocation3 + $0x23] sm:$0xff]
      %v6953 = vld [vmem:[#allocation3 + $0x2b] sm:$0xff]
      %v6954 = vld [vmem:[#allocation3 + $0x33] sm:$0xff]
      %v6955 = vld [vmem:[#allocation3 + $0x3b] sm:$0xff]
      %v6956 = vld [vmem:[#allocation3 + $0x43] sm:$0xff]
      %v6957 = vld [vmem:[#allocation3 + $0x4b] sm:$0xff]
      %v6958 = vld [vmem:[#allocation3 + $0x53] sm:$0xff]
      %v6959 = vld [vmem:[#allocation3 + $0x5b] sm:$0xff]
      %v6960 = vld [vmem:[#allocation3 + $0x63] sm:$0xff]
      %v6961 = vld [vmem:[#allocation3 + $0x6b] sm:$0xff]
      %v6962 = vld [vmem:[#allocation3 + $0x73] sm:$0xff]
      %v6963 = vld [vmem:[#allocation3 + $0x7b] sm:$0xff]
      %v6964 = vld [vmem:[#allocation3 + $0x83] sm:$0xff]
      %v6965 = vld [vmem:[#allocation3 + $0x8b] sm:$0xff]
      %v6966 = vld [vmem:[#allocation3 + $0x93] sm:$0xff]
      %v6967 = vld [vmem:[#allocation3 + $0x9b] sm:$0xff]
      %v6968 = vld [vmem:[#allocation3 + $0xa3] sm:$0xff]
      %v6969 = vld [vmem:[#allocation3 + $0xab] sm:$0xff]
      %v6970 = vld [vmem:[#allocation3 + $0xb3] sm:$0xff]
      %v6971 = vld [vmem:[#allocation3 + $0xbb] sm:$0xff]
      %v6972 = vld [vmem:[#allocation3 + $0xc3] sm:$0xff]
      %v6973 = vld [vmem:[#allocation3 + $0xcb] sm:$0xff]
      %v6974 = vld [vmem:[#allocation3 + $0xd3] sm:$0xff]
      %v6975 = vld [vmem:[#allocation3 + $0xdb] sm:$0xff]
      %v6976 = vld [vmem:[#allocation3 + $0xe3] sm:$0xff]
      %v6977 = vld [vmem:[#allocation3 + $0xeb] sm:$0xff]
      %v6978 = vld [vmem:[#allocation3 + $0xf3] sm:$0xff]
      %v6979 = vld [vmem:[#allocation3 + $0xfb] sm:$0xff]
      %v6980 = vld [vmem:[#allocation3 + $0x103] sm:$0xff]
      %v6981 = vld [vmem:[#allocation3 + $0x10b] sm:$0xff]
      %v6982 = vld [vmem:[#allocation3 + $0x113] sm:$0xff]
      %v6983 = vld [vmem:[#allocation3 + $0x11b] sm:$0xff]
      %v6984 = vld [vmem:[#allocation3 + $0x123] sm:$0xff]
      %v6985 = vld [vmem:[#allocation3 + $0x12b] sm:$0xff]
      %v6986 = vld [vmem:[#allocation3 + $0x133] sm:$0xff]
      %v6987 = vld [vmem:[#allocation3 + $0x13b] sm:$0xff]
      %v6988 = vld [vmem:[#allocation3 + $0x143] sm:$0xff]
      %v6989 = vld [vmem:[#allocation3 + $0x14b] sm:$0xff]
      %v6990 = vld [vmem:[#allocation3 + $0x153] sm:$0xf]
      %s6991 = scalar_lea.vmem %s4, 32
      %v6992 = vld [vmem:[%s6991] sm:$0xff]
      %v6994 = vsel %vm5105, %v6950, 0
      %v6997 = vsel %vm5105, %v6951, 0
      %v7000 = vsel %vm5105, %v6952, 0
      %v7003 = vsel %vm5105, %v6953, 0
      %v7006 = vsel %vm5105, %v6954, 0
      %v7009 = vsel %vm5105, %v6955, 0
      %v7012 = vsel %vm5105, %v6956, 0
      %v7015 = vsel %vm5105, %v6957, 0
      %v7018 = vsel %vm5105, %v6958, 0
      %v7021 = vsel %vm5105, %v6959, 0
      %v7024 = vsel %vm5105, %v6960, 0
      %v7027 = vsel %vm5105, %v6961, 0
      %v7030 = vsel %vm5105, %v6962, 0
      %v7033 = vsel %vm5105, %v6963, 0
      %v7036 = vsel %vm5105, %v6964, 0
      %v7039 = vsel %vm5105, %v6965, 0
      %v7042 = vsel %vm5105, %v6966, 0
      %v7045 = vsel %vm5105, %v6967, 0
      %v7048 = vsel %vm5105, %v6968, 0
      %v7051 = vsel %vm5105, %v6969, 0
      %v7054 = vsel %vm5105, %v6970, 0
      %v7057 = vsel %vm5105, %v6971, 0
      %v7060 = vsel %vm5105, %v6972, 0
      %v7063 = vsel %vm5105, %v6973, 0
      %v7066 = vsel %vm5105, %v6974, 0
      %v7069 = vsel %vm5105, %v6975, 0
      %v7072 = vsel %vm5105, %v6976, 0
      %v7075 = vsel %vm5105, %v6977, 0
      %v7078 = vsel %vm5105, %v6978, 0
      %v7081 = vsel %vm5105, %v6979, 0
      %v7084 = vsel %vm5105, %v6980, 0
      %v7087 = vsel %vm5105, %v6981, 0
      %v7090 = vsel %vm5105, %v6982, 0
      %v7093 = vsel %vm5105, %v6983, 0
      %v7096 = vsel %vm5105, %v6984, 0
      %v7099 = vsel %vm5105, %v6985, 0
      %v7102 = vsel %vm5105, %v6986, 0
      %v7105 = vsel %vm5105, %v6987, 0
      %v7108 = vsel %vm5105, %v6988, 0
      %v7111 = vsel %vm5105, %v6989, 0
      %v7114 = vsel %vm5105, %v6990, 0
      %7116 = vmatprep.subr.mxu0 0.0
      %7117 = vmatpush1.msra.mxu0 0.0
      %7118 = vmatprep.subr.mxu0 0.0
      %7119 = vmatpush1.msra.mxu0 0.0
      %7120 = vmatprep.subr.mxu0 0.0
      %7121 = vmatpush1.msra.mxu0 0.0
      %7122 = vmatprep.subr.mxu0 0.0
      %7123 = vmatpush1.msra.mxu0 0.0
      %7124 = vmatprep.subr.mxu0 0.0
      %7125 = vmatpush1.msra.mxu0 0.0
      %7126 = vmatprep.subr.mxu0 0.0
      %7127 = vmatpush1.msra.mxu0 0.0
      %7128 = vmatprep.subr.mxu0 0.0
      %7129 = vmatpush1.msra.mxu0 0.0
      %7130 = vmatprep.subr.mxu0 0.0
      %7131 = vmatpush1.msra.mxu0 0.0
      %7132 = vmatprep.subr.mxu0 0.0
      %7133 = vmatpush1.msra.mxu0 0.0
      %7134 = vmatprep.subr.mxu0 0.0
      %7135 = vmatpush1.msra.mxu0 0.0
      %7136 = vmatprep.subr.mxu0 0.0
      %7137 = vmatpush1.msra.mxu0 0.0
      %7138 = vmatprep.subr.mxu0 0.0
      %7139 = vmatpush1.msra.mxu0 0.0
      %7140 = vmatprep.subr.mxu0 0.0
      %7141 = vmatpush1.msra.mxu0 0.0
      %7142 = vmatprep.subr.mxu0 0.0
      %7143 = vmatpush1.msra.mxu0 0.0
      %7144 = vmatprep.subr.mxu0 0.0
      %7145 = vmatpush1.msra.mxu0 0.0
      %7146 = vmatprep.subr.mxu0 0.0
      %7147 = vmatpush1.msra.mxu0 %v6992
      %7148 = vmatprep.subr.mxu0 0.0
      %7149 = vmatpush2.msra.mxu0 0.0
      %7150 = vmatprep.subr.mxu0 0.0
      %7151 = vmatpush2.msra.mxu0 0.0
      %7152 = vmatprep.subr.mxu0 0.0
      %7153 = vmatpush2.msra.mxu0 0.0
      %7154 = vmatprep.subr.mxu0 0.0
      %7155 = vmatpush2.msra.mxu0 0.0
      %7156 = vmatprep.subr.mxu0 0.0
      %7157 = vmatpush2.msra.mxu0 0.0
      %7158 = vmatprep.subr.mxu0 0.0
      %7159 = vmatpush2.msra.mxu0 0.0
      %7160 = vmatprep.subr.mxu0 0.0
      %7161 = vmatpush2.msra.mxu0 0.0
      %7162 = vmatprep.subr.mxu0 0.0
      %7163 = vmatpush2.msra.mxu0 0.0
      %7164 = vmatprep.subr.mxu0 0.0
      %7165 = vmatpush2.msra.mxu0 0.0
      %7166 = vmatprep.subr.mxu0 0.0
      %7167 = vmatpush2.msra.mxu0 0.0
      %7168 = vmatprep.subr.mxu0 0.0
      %7169 = vmatpush2.msra.mxu0 0.0
      %7170 = vmatprep.subr.mxu0 0.0
      %7171 = vmatpush2.msra.mxu0 0.0
      %7172 = vmatprep.subr.mxu0 0.0
      %7173 = vmatpush2.msra.mxu0 0.0
      %7174 = vmatprep.subr.mxu0 0.0
      %7175 = vmatpush2.msra.mxu0 0.0
      %7176 = vmatprep.subr.mxu0 0.0
      %7177 = vmatpush2.msra.mxu0 0.0
      %7178 = vmatprep.subr.mxu0 0.0
      %7179 = vmatpush2.msra.mxu0 0.0
      %7180 = vmatprep.mubr.f32.mxu0 0.0
      %7181 = vmatmul.mubr.f32.gmra.mxu0 %v6994
      %v7182 = vpop.f32.mrf.mxu0
      %v7183 = vadd.f32 0.0, %v7182
      %v7184 = vpop.f32.mrf.mxu0
      %7185 = vmatprep.mubr.f32.mxu0 0.0
      %7186 = vmatmul.mubr.f32.gmra.mxu0 %v6997
      %v7187 = vpop.f32.mrf.mxu0
      %v7188 = vadd.f32 0.0, %v7187
      %v7189 = vpop.f32.mrf.mxu0
      %7190 = vmatprep.mubr.f32.mxu0 0.0
      %7191 = vmatmul.mubr.f32.gmra.mxu0 %v7000
      %v7192 = vpop.f32.mrf.mxu0
      %v7193 = vadd.f32 0.0, %v7192
      %v7194 = vpop.f32.mrf.mxu0
      %7195 = vmatprep.mubr.f32.mxu0 0.0
      %7196 = vmatmul.mubr.f32.gmra.mxu0 %v7003
      %v7197 = vpop.f32.mrf.mxu0
      %v7198 = vadd.f32 0.0, %v7197
      %v7199 = vpop.f32.mrf.mxu0
      %7200 = vmatprep.mubr.f32.mxu0 0.0
      %7201 = vmatmul.mubr.f32.gmra.mxu0 %v7006
      %v7202 = vpop.f32.mrf.mxu0
      %v7203 = vadd.f32 0.0, %v7202
      %v7204 = vpop.f32.mrf.mxu0
      %7205 = vmatprep.mubr.f32.mxu0 0.0
      %7206 = vmatmul.mubr.f32.gmra.mxu0 %v7009
      %v7207 = vpop.f32.mrf.mxu0
      %v7208 = vadd.f32 0.0, %v7207
      %v7209 = vpop.f32.mrf.mxu0
      %7210 = vmatprep.mubr.f32.mxu0 0.0
      %7211 = vmatmul.mubr.f32.gmra.mxu0 %v7012
      %v7212 = vpop.f32.mrf.mxu0
      %v7213 = vadd.f32 0.0, %v7212
      %v7214 = vpop.f32.mrf.mxu0
      %7215 = vmatprep.mubr.f32.mxu0 0.0
      %7216 = vmatmul.mubr.f32.gmra.mxu0 %v7015
      %v7217 = vpop.f32.mrf.mxu0
      %v7218 = vadd.f32 0.0, %v7217
      %v7219 = vpop.f32.mrf.mxu0
      %7220 = vmatprep.mubr.f32.mxu0 0.0
      %7221 = vmatmul.mubr.f32.gmra.mxu0 %v7018
      %v7222 = vpop.f32.mrf.mxu0
      %v7223 = vadd.f32 0.0, %v7222
      %v7224 = vpop.f32.mrf.mxu0
      %7225 = vmatprep.mubr.f32.mxu0 0.0
      %7226 = vmatmul.mubr.f32.gmra.mxu0 %v7021
      %v7227 = vpop.f32.mrf.mxu0
      %v7228 = vadd.f32 0.0, %v7227
      %v7229 = vpop.f32.mrf.mxu0
      %7230 = vmatprep.mubr.f32.mxu0 0.0
      %7231 = vmatmul.mubr.f32.gmra.mxu0 %v7024
      %v7232 = vpop.f32.mrf.mxu0
      %v7233 = vadd.f32 0.0, %v7232
      %v7234 = vpop.f32.mrf.mxu0
      %7235 = vmatprep.mubr.f32.mxu0 0.0
      %7236 = vmatmul.mubr.f32.gmra.mxu0 %v7027
      %v7237 = vpop.f32.mrf.mxu0
      %v7238 = vadd.f32 0.0, %v7237
      %v7239 = vpop.f32.mrf.mxu0
      %7240 = vmatprep.mubr.f32.mxu0 0.0
      %7241 = vmatmul.mubr.f32.gmra.mxu0 %v7030
      %v7242 = vpop.f32.mrf.mxu0
      %v7243 = vadd.f32 0.0, %v7242
      %v7244 = vpop.f32.mrf.mxu0
      %7245 = vmatprep.mubr.f32.mxu0 0.0
      %7246 = vmatmul.mubr.f32.gmra.mxu0 %v7033
      %v7247 = vpop.f32.mrf.mxu0
      %v7248 = vadd.f32 0.0, %v7247
      %v7249 = vpop.f32.mrf.mxu0
      %7250 = vmatprep.mubr.f32.mxu0 0.0
      %7251 = vmatmul.mubr.f32.gmra.mxu0 %v7036
      %v7252 = vpop.f32.mrf.mxu0
      %v7253 = vadd.f32 0.0, %v7252
      %v7254 = vpop.f32.mrf.mxu0
      %7255 = vmatprep.mubr.f32.mxu0 0.0
      %7256 = vmatmul.mubr.f32.gmra.mxu0 %v7039
      %v7257 = vpop.f32.mrf.mxu0
      %v7258 = vadd.f32 0.0, %v7257
      %v7259 = vpop.f32.mrf.mxu0
      %7260 = vmatprep.mubr.f32.mxu0 0.0
      %7261 = vmatmul.mubr.f32.gmra.mxu0 %v7042
      %v7262 = vpop.f32.mrf.mxu0
      %v7263 = vadd.f32 0.0, %v7262
      %v7264 = vpop.f32.mrf.mxu0
      %7265 = vmatprep.mubr.f32.mxu0 0.0
      %7266 = vmatmul.mubr.f32.gmra.mxu0 %v7045
      %v7267 = vpop.f32.mrf.mxu0
      %v7268 = vadd.f32 0.0, %v7267
      %v7269 = vpop.f32.mrf.mxu0
      %7270 = vmatprep.mubr.f32.mxu0 0.0
      %7271 = vmatmul.mubr.f32.gmra.mxu0 %v7048
      %v7272 = vpop.f32.mrf.mxu0
      %v7273 = vadd.f32 0.0, %v7272
      %v7274 = vpop.f32.mrf.mxu0
      %7275 = vmatprep.mubr.f32.mxu0 0.0
      %7276 = vmatmul.mubr.f32.gmra.mxu0 %v7051
      %v7277 = vpop.f32.mrf.mxu0
      %v7278 = vadd.f32 0.0, %v7277
      %v7279 = vpop.f32.mrf.mxu0
      %7280 = vmatprep.mubr.f32.mxu0 0.0
      %7281 = vmatmul.mubr.f32.gmra.mxu0 %v7054
      %v7282 = vpop.f32.mrf.mxu0
      %v7283 = vadd.f32 0.0, %v7282
      %v7284 = vpop.f32.mrf.mxu0
      %7285 = vmatprep.mubr.f32.mxu0 0.0
      %7286 = vmatmul.mubr.f32.gmra.mxu0 %v7057
      %v7287 = vpop.f32.mrf.mxu0
      %v7288 = vadd.f32 0.0, %v7287
      %v7289 = vpop.f32.mrf.mxu0
      %7290 = vmatprep.mubr.f32.mxu0 0.0
      %7291 = vmatmul.mubr.f32.gmra.mxu0 %v7060
      %v7292 = vpop.f32.mrf.mxu0
      %v7293 = vadd.f32 0.0, %v7292
      %v7294 = vpop.f32.mrf.mxu0
      %7295 = vmatprep.mubr.f32.mxu0 0.0
      %7296 = vmatmul.mubr.f32.gmra.mxu0 %v7063
      %v7297 = vpop.f32.mrf.mxu0
      %v7298 = vadd.f32 0.0, %v7297
      %v7299 = vpop.f32.mrf.mxu0
      %7300 = vmatprep.mubr.f32.mxu0 0.0
      %7301 = vmatmul.mubr.f32.gmra.mxu0 %v7066
      %v7302 = vpop.f32.mrf.mxu0
      %v7303 = vadd.f32 0.0, %v7302
      %v7304 = vpop.f32.mrf.mxu0
      %7305 = vmatprep.mubr.f32.mxu0 0.0
      %7306 = vmatmul.mubr.f32.gmra.mxu0 %v7069
      %v7307 = vpop.f32.mrf.mxu0
      %v7308 = vadd.f32 0.0, %v7307
      %v7309 = vpop.f32.mrf.mxu0
      %7310 = vmatprep.mubr.f32.mxu0 0.0
      %7311 = vmatmul.mubr.f32.gmra.mxu0 %v7072
      %v7312 = vpop.f32.mrf.mxu0
      %v7313 = vadd.f32 0.0, %v7312
      %v7314 = vpop.f32.mrf.mxu0
      %7315 = vmatprep.mubr.f32.mxu0 0.0
      %7316 = vmatmul.mubr.f32.gmra.mxu0 %v7075
      %v7317 = vpop.f32.mrf.mxu0
      %v7318 = vadd.f32 0.0, %v7317
      %v7319 = vpop.f32.mrf.mxu0
      %7320 = vmatprep.mubr.f32.mxu0 0.0
      %7321 = vmatmul.mubr.f32.gmra.mxu0 %v7078
      %v7322 = vpop.f32.mrf.mxu0
      %v7323 = vadd.f32 0.0, %v7322
      %v7324 = vpop.f32.mrf.mxu0
      %7325 = vmatprep.mubr.f32.mxu0 0.0
      %7326 = vmatmul.mubr.f32.gmra.mxu0 %v7081
      %v7327 = vpop.f32.mrf.mxu0
      %v7328 = vadd.f32 0.0, %v7327
      %v7329 = vpop.f32.mrf.mxu0
      %7330 = vmatprep.mubr.f32.mxu0 0.0
      %7331 = vmatmul.mubr.f32.gmra.mxu0 %v7084
      %v7332 = vpop.f32.mrf.mxu0
      %v7333 = vadd.f32 0.0, %v7332
      %v7334 = vpop.f32.mrf.mxu0
      %7335 = vmatprep.mubr.f32.mxu0 0.0
      %7336 = vmatmul.mubr.f32.gmra.mxu0 %v7087
      %v7337 = vpop.f32.mrf.mxu0
      %v7338 = vadd.f32 0.0, %v7337
      %v7339 = vpop.f32.mrf.mxu0
      %7340 = vmatprep.mubr.f32.mxu0 0.0
      %7341 = vmatmul.mubr.f32.gmra.mxu0 %v7090
      %v7342 = vpop.f32.mrf.mxu0
      %v7343 = vadd.f32 0.0, %v7342
      %v7344 = vpop.f32.mrf.mxu0
      %7345 = vmatprep.mubr.f32.mxu0 0.0
      %7346 = vmatmul.mubr.f32.gmra.mxu0 %v7093
      %v7347 = vpop.f32.mrf.mxu0
      %v7348 = vadd.f32 0.0, %v7347
      %v7349 = vpop.f32.mrf.mxu0
      %7350 = vmatprep.mubr.f32.mxu0 0.0
      %7351 = vmatmul.mubr.f32.gmra.mxu0 %v7096
      %v7352 = vpop.f32.mrf.mxu0
      %v7353 = vadd.f32 0.0, %v7352
      %v7354 = vpop.f32.mrf.mxu0
      %7355 = vmatprep.mubr.f32.mxu0 0.0
      %7356 = vmatmul.mubr.f32.gmra.mxu0 %v7099
      %v7357 = vpop.f32.mrf.mxu0
      %v7358 = vadd.f32 0.0, %v7357
      %v7359 = vpop.f32.mrf.mxu0
      %7360 = vmatprep.mubr.f32.mxu0 0.0
      %7361 = vmatmul.mubr.f32.gmra.mxu0 %v7102
      %v7362 = vpop.f32.mrf.mxu0
      %v7363 = vpop.f32.mrf.mxu0
      %7364 = vmatprep.mubr.f32.mxu0 0.0
      %7365 = vmatmul.mubr.f32.gmra.mxu0 %v7105
      %v7366 = vpop.f32.mrf.mxu0
      %v7367 = vpop.f32.mrf.mxu0
      %7368 = vmatprep.mubr.f32.mxu0 0.0
      %7369 = vmatmul.mubr.f32.gmra.mxu0 %v7108
      %v7370 = vpop.f32.mrf.mxu0
      %v7371 = vpop.f32.mrf.mxu0
      %7372 = vmatprep.mubr.f32.mxu0 0.0
      %7373 = vmatmul.mubr.f32.gmra.mxu0 %v7111
      %v7374 = vpop.f32.mrf.mxu0
      %v7375 = vpop.f32.mrf.mxu0
      %7376 = vmatprep.mubr.f32.mxu0 0.0
      %7377 = vmatmul.mubr.f32.gmra.mxu0 %v7114
      %v7378 = vpop.f32.mrf.mxu0
      %v7379 = vpop.f32.mrf.mxu0
      %7380 = vdwg.mxu0
      %v7381 = vadd.f32 %v6914, %v7183
      %v7382 = vadd.f32 %v6915, %v7188
      %v7383 = vadd.f32 %v6916, %v7193
      %v7384 = vadd.f32 %v6917, %v7198
      %v7385 = vadd.f32 %v6918, %v7203
      %v7386 = vadd.f32 %v6919, %v7208
      %v7387 = vadd.f32 %v6920, %v7213
      %v7388 = vadd.f32 %v6921, %v7218
      %v7389 = vadd.f32 %v6922, %v7223
      %v7390 = vadd.f32 %v6923, %v7228
      %v7391 = vadd.f32 %v6924, %v7233
      %v7392 = vadd.f32 %v6925, %v7238
      %v7393 = vadd.f32 %v6926, %v7243
      %v7394 = vadd.f32 %v6927, %v7248
      %v7395 = vadd.f32 %v6928, %v7253
      %v7396 = vadd.f32 %v6929, %v7258
      %v7397 = vadd.f32 %v6930, %v7263
      %v7398 = vadd.f32 %v6931, %v7268
      %v7399 = vadd.f32 %v6932, %v7273
      %v7400 = vadd.f32 %v6933, %v7278
      %v7401 = vadd.f32 %v6934, %v7283
      %v7402 = vadd.f32 %v6935, %v7288
      %v7403 = vadd.f32 %v6936, %v7293
      %v7404 = vadd.f32 %v6937, %v7298
      %v7405 = vadd.f32 %v6938, %v7303
      %v7406 = vadd.f32 %v6939, %v7308
      %v7407 = vadd.f32 %v6940, %v7313
      %v7408 = vadd.f32 %v6941, %v7318
      %v7409 = vadd.f32 %v6942, %v7323
      %v7410 = vadd.f32 %v6943, %v7328
      %v7411 = vadd.f32 %v6944, %v7333
      %v7412 = vadd.f32 %v6945, %v7338
      %v7413 = vadd.f32 %v6946, %v7343
      %v7414 = vadd.f32 %v6947, %v7348
      %v7415 = vadd.f32 %v6948, %v7353
      %v7416 = vadd.f32 %v6949, %v7358
      %v7417 = vld [vmem:[#allocation3 + $0x14] sm:$0xff]
      %v7418 = vld [vmem:[#allocation3 + $0x1c] sm:$0xff]
      %v7419 = vld [vmem:[#allocation3 + $0x24] sm:$0xff]
      %v7420 = vld [vmem:[#allocation3 + $0x2c] sm:$0xff]
      %v7421 = vld [vmem:[#allocation3 + $0x34] sm:$0xff]
      %v7422 = vld [vmem:[#allocation3 + $0x3c] sm:$0xff]
      %v7423 = vld [vmem:[#allocation3 + $0x44] sm:$0xff]
      %v7424 = vld [vmem:[#allocation3 + $0x4c] sm:$0xff]
      %v7425 = vld [vmem:[#allocation3 + $0x54] sm:$0xff]
      %v7426 = vld [vmem:[#allocation3 + $0x5c] sm:$0xff]
      %v7427 = vld [vmem:[#allocation3 + $0x64] sm:$0xff]
      %v7428 = vld [vmem:[#allocation3 + $0x6c] sm:$0xff]
      %v7429 = vld [vmem:[#allocation3 + $0x74] sm:$0xff]
      %v7430 = vld [vmem:[#allocation3 + $0x7c] sm:$0xff]
      %v7431 = vld [vmem:[#allocation3 + $0x84] sm:$0xff]
      %v7432 = vld [vmem:[#allocation3 + $0x8c] sm:$0xff]
      %v7433 = vld [vmem:[#allocation3 + $0x94] sm:$0xff]
      %v7434 = vld [vmem:[#allocation3 + $0x9c] sm:$0xff]
      %v7435 = vld [vmem:[#allocation3 + $0xa4] sm:$0xff]
      %v7436 = vld [vmem:[#allocation3 + $0xac] sm:$0xff]
      %v7437 = vld [vmem:[#allocation3 + $0xb4] sm:$0xff]
      %v7438 = vld [vmem:[#allocation3 + $0xbc] sm:$0xff]
      %v7439 = vld [vmem:[#allocation3 + $0xc4] sm:$0xff]
      %v7440 = vld [vmem:[#allocation3 + $0xcc] sm:$0xff]
      %v7441 = vld [vmem:[#allocation3 + $0xd4] sm:$0xff]
      %v7442 = vld [vmem:[#allocation3 + $0xdc] sm:$0xff]
      %v7443 = vld [vmem:[#allocation3 + $0xe4] sm:$0xff]
      %v7444 = vld [vmem:[#allocation3 + $0xec] sm:$0xff]
      %v7445 = vld [vmem:[#allocation3 + $0xf4] sm:$0xff]
      %v7446 = vld [vmem:[#allocation3 + $0xfc] sm:$0xff]
      %v7447 = vld [vmem:[#allocation3 + $0x104] sm:$0xff]
      %v7448 = vld [vmem:[#allocation3 + $0x10c] sm:$0xff]
      %v7449 = vld [vmem:[#allocation3 + $0x114] sm:$0xff]
      %v7450 = vld [vmem:[#allocation3 + $0x11c] sm:$0xff]
      %v7451 = vld [vmem:[#allocation3 + $0x124] sm:$0xff]
      %v7452 = vld [vmem:[#allocation3 + $0x12c] sm:$0xff]
      %v7453 = vld [vmem:[#allocation3 + $0x134] sm:$0xff]
      %v7454 = vld [vmem:[#allocation3 + $0x13c] sm:$0xff]
      %v7455 = vld [vmem:[#allocation3 + $0x144] sm:$0xff]
      %v7456 = vld [vmem:[#allocation3 + $0x14c] sm:$0xff]
      %v7457 = vld [vmem:[#allocation3 + $0x154] sm:$0xf]
      %s7458 = scalar_lea.vmem %s4, 40
      %v7459 = vld [vmem:[%s7458] sm:$0xff]
      %v7461 = vsel %vm5105, %v7417, 0
      %v7464 = vsel %vm5105, %v7418, 0
      %v7467 = vsel %vm5105, %v7419, 0
      %v7470 = vsel %vm5105, %v7420, 0
      %v7473 = vsel %vm5105, %v7421, 0
      %v7476 = vsel %vm5105, %v7422, 0
      %v7479 = vsel %vm5105, %v7423, 0
      %v7482 = vsel %vm5105, %v7424, 0
      %v7485 = vsel %vm5105, %v7425, 0
      %v7488 = vsel %vm5105, %v7426, 0
      %v7491 = vsel %vm5105, %v7427, 0
      %v7494 = vsel %vm5105, %v7428, 0
      %v7497 = vsel %vm5105, %v7429, 0
      %v7500 = vsel %vm5105, %v7430, 0
      %v7503 = vsel %vm5105, %v7431, 0
      %v7506 = vsel %vm5105, %v7432, 0
      %v7509 = vsel %vm5105, %v7433, 0
      %v7512 = vsel %vm5105, %v7434, 0
      %v7515 = vsel %vm5105, %v7435, 0
      %v7518 = vsel %vm5105, %v7436, 0
      %v7521 = vsel %vm5105, %v7437, 0
      %v7524 = vsel %vm5105, %v7438, 0
      %v7527 = vsel %vm5105, %v7439, 0
      %v7530 = vsel %vm5105, %v7440, 0
      %v7533 = vsel %vm5105, %v7441, 0
      %v7536 = vsel %vm5105, %v7442, 0
      %v7539 = vsel %vm5105, %v7443, 0
      %v7542 = vsel %vm5105, %v7444, 0
      %v7545 = vsel %vm5105, %v7445, 0
      %v7548 = vsel %vm5105, %v7446, 0
      %v7551 = vsel %vm5105, %v7447, 0
      %v7554 = vsel %vm5105, %v7448, 0
      %v7557 = vsel %vm5105, %v7449, 0
      %v7560 = vsel %vm5105, %v7450, 0
      %v7563 = vsel %vm5105, %v7451, 0
      %v7566 = vsel %vm5105, %v7452, 0
      %v7569 = vsel %vm5105, %v7453, 0
      %v7572 = vsel %vm5105, %v7454, 0
      %v7575 = vsel %vm5105, %v7455, 0
      %v7578 = vsel %vm5105, %v7456, 0
      %v7581 = vsel %vm5105, %v7457, 0
      %7583 = vmatprep.subr.mxu0 0.0
      %7584 = vmatpush1.msra.mxu0 0.0
      %7585 = vmatprep.subr.mxu0 0.0
      %7586 = vmatpush1.msra.mxu0 0.0
      %7587 = vmatprep.subr.mxu0 0.0
      %7588 = vmatpush1.msra.mxu0 0.0
      %7589 = vmatprep.subr.mxu0 0.0
      %7590 = vmatpush1.msra.mxu0 0.0
      %7591 = vmatprep.subr.mxu0 0.0
      %7592 = vmatpush1.msra.mxu0 0.0
      %7593 = vmatprep.subr.mxu0 0.0
      %7594 = vmatpush1.msra.mxu0 0.0
      %7595 = vmatprep.subr.mxu0 0.0
      %7596 = vmatpush1.msra.mxu0 0.0
      %7597 = vmatprep.subr.mxu0 0.0
      %7598 = vmatpush1.msra.mxu0 0.0
      %7599 = vmatprep.subr.mxu0 0.0
      %7600 = vmatpush1.msra.mxu0 0.0
      %7601 = vmatprep.subr.mxu0 0.0
      %7602 = vmatpush1.msra.mxu0 0.0
      %7603 = vmatprep.subr.mxu0 0.0
      %7604 = vmatpush1.msra.mxu0 0.0
      %7605 = vmatprep.subr.mxu0 0.0
      %7606 = vmatpush1.msra.mxu0 0.0
      %7607 = vmatprep.subr.mxu0 0.0
      %7608 = vmatpush1.msra.mxu0 0.0
      %7609 = vmatprep.subr.mxu0 0.0
      %7610 = vmatpush1.msra.mxu0 0.0
      %7611 = vmatprep.subr.mxu0 0.0
      %7612 = vmatpush1.msra.mxu0 0.0
      %7613 = vmatprep.subr.mxu0 0.0
      %7614 = vmatpush1.msra.mxu0 %v7459
      %7615 = vmatprep.subr.mxu0 0.0
      %7616 = vmatpush2.msra.mxu0 0.0
      %7617 = vmatprep.subr.mxu0 0.0
      %7618 = vmatpush2.msra.mxu0 0.0
      %7619 = vmatprep.subr.mxu0 0.0
      %7620 = vmatpush2.msra.mxu0 0.0
      %7621 = vmatprep.subr.mxu0 0.0
      %7622 = vmatpush2.msra.mxu0 0.0
      %7623 = vmatprep.subr.mxu0 0.0
      %7624 = vmatpush2.msra.mxu0 0.0
      %7625 = vmatprep.subr.mxu0 0.0
      %7626 = vmatpush2.msra.mxu0 0.0
      %7627 = vmatprep.subr.mxu0 0.0
      %7628 = vmatpush2.msra.mxu0 0.0
      %7629 = vmatprep.subr.mxu0 0.0
      %7630 = vmatpush2.msra.mxu0 0.0
      %7631 = vmatprep.subr.mxu0 0.0
      %7632 = vmatpush2.msra.mxu0 0.0
      %7633 = vmatprep.subr.mxu0 0.0
      %7634 = vmatpush2.msra.mxu0 0.0
      %7635 = vmatprep.subr.mxu0 0.0
      %7636 = vmatpush2.msra.mxu0 0.0
      %7637 = vmatprep.subr.mxu0 0.0
      %7638 = vmatpush2.msra.mxu0 0.0
      %7639 = vmatprep.subr.mxu0 0.0
      %7640 = vmatpush2.msra.mxu0 0.0
      %7641 = vmatprep.subr.mxu0 0.0
      %7642 = vmatpush2.msra.mxu0 0.0
      %7643 = vmatprep.subr.mxu0 0.0
      %7644 = vmatpush2.msra.mxu0 0.0
      %7645 = vmatprep.subr.mxu0 0.0
      %7646 = vmatpush2.msra.mxu0 0.0
      %7647 = vmatprep.mubr.f32.mxu0 0.0
      %7648 = vmatmul.mubr.f32.gmra.mxu0 %v7461
      %v7649 = vpop.f32.mrf.mxu0
      %v7650 = vadd.f32 0.0, %v7649
      %v7651 = vpop.f32.mrf.mxu0
      %7652 = vmatprep.mubr.f32.mxu0 0.0
      %7653 = vmatmul.mubr.f32.gmra.mxu0 %v7464
      %v7654 = vpop.f32.mrf.mxu0
      %v7655 = vadd.f32 0.0, %v7654
      %v7656 = vpop.f32.mrf.mxu0
      %7657 = vmatprep.mubr.f32.mxu0 0.0
      %7658 = vmatmul.mubr.f32.gmra.mxu0 %v7467
      %v7659 = vpop.f32.mrf.mxu0
      %v7660 = vadd.f32 0.0, %v7659
      %v7661 = vpop.f32.mrf.mxu0
      %7662 = vmatprep.mubr.f32.mxu0 0.0
      %7663 = vmatmul.mubr.f32.gmra.mxu0 %v7470
      %v7664 = vpop.f32.mrf.mxu0
      %v7665 = vadd.f32 0.0, %v7664
      %v7666 = vpop.f32.mrf.mxu0
      %7667 = vmatprep.mubr.f32.mxu0 0.0
      %7668 = vmatmul.mubr.f32.gmra.mxu0 %v7473
      %v7669 = vpop.f32.mrf.mxu0
      %v7670 = vadd.f32 0.0, %v7669
      %v7671 = vpop.f32.mrf.mxu0
      %7672 = vmatprep.mubr.f32.mxu0 0.0
      %7673 = vmatmul.mubr.f32.gmra.mxu0 %v7476
      %v7674 = vpop.f32.mrf.mxu0
      %v7675 = vadd.f32 0.0, %v7674
      %v7676 = vpop.f32.mrf.mxu0
      %7677 = vmatprep.mubr.f32.mxu0 0.0
      %7678 = vmatmul.mubr.f32.gmra.mxu0 %v7479
      %v7679 = vpop.f32.mrf.mxu0
      %v7680 = vadd.f32 0.0, %v7679
      %v7681 = vpop.f32.mrf.mxu0
      %7682 = vmatprep.mubr.f32.mxu0 0.0
      %7683 = vmatmul.mubr.f32.gmra.mxu0 %v7482
      %v7684 = vpop.f32.mrf.mxu0
      %v7685 = vadd.f32 0.0, %v7684
      %v7686 = vpop.f32.mrf.mxu0
      %7687 = vmatprep.mubr.f32.mxu0 0.0
      %7688 = vmatmul.mubr.f32.gmra.mxu0 %v7485
      %v7689 = vpop.f32.mrf.mxu0
      %v7690 = vadd.f32 0.0, %v7689
      %v7691 = vpop.f32.mrf.mxu0
      %7692 = vmatprep.mubr.f32.mxu0 0.0
      %7693 = vmatmul.mubr.f32.gmra.mxu0 %v7488
      %v7694 = vpop.f32.mrf.mxu0
      %v7695 = vadd.f32 0.0, %v7694
      %v7696 = vpop.f32.mrf.mxu0
      %7697 = vmatprep.mubr.f32.mxu0 0.0
      %7698 = vmatmul.mubr.f32.gmra.mxu0 %v7491
      %v7699 = vpop.f32.mrf.mxu0
      %v7700 = vadd.f32 0.0, %v7699
      %v7701 = vpop.f32.mrf.mxu0
      %7702 = vmatprep.mubr.f32.mxu0 0.0
      %7703 = vmatmul.mubr.f32.gmra.mxu0 %v7494
      %v7704 = vpop.f32.mrf.mxu0
      %v7705 = vadd.f32 0.0, %v7704
      %v7706 = vpop.f32.mrf.mxu0
      %7707 = vmatprep.mubr.f32.mxu0 0.0
      %7708 = vmatmul.mubr.f32.gmra.mxu0 %v7497
      %v7709 = vpop.f32.mrf.mxu0
      %v7710 = vadd.f32 0.0, %v7709
      %v7711 = vpop.f32.mrf.mxu0
      %7712 = vmatprep.mubr.f32.mxu0 0.0
      %7713 = vmatmul.mubr.f32.gmra.mxu0 %v7500
      %v7714 = vpop.f32.mrf.mxu0
      %v7715 = vadd.f32 0.0, %v7714
      %v7716 = vpop.f32.mrf.mxu0
      %7717 = vmatprep.mubr.f32.mxu0 0.0
      %7718 = vmatmul.mubr.f32.gmra.mxu0 %v7503
      %v7719 = vpop.f32.mrf.mxu0
      %v7720 = vadd.f32 0.0, %v7719
      %v7721 = vpop.f32.mrf.mxu0
      %7722 = vmatprep.mubr.f32.mxu0 0.0
      %7723 = vmatmul.mubr.f32.gmra.mxu0 %v7506
      %v7724 = vpop.f32.mrf.mxu0
      %v7725 = vadd.f32 0.0, %v7724
      %v7726 = vpop.f32.mrf.mxu0
      %7727 = vmatprep.mubr.f32.mxu0 0.0
      %7728 = vmatmul.mubr.f32.gmra.mxu0 %v7509
      %v7729 = vpop.f32.mrf.mxu0
      %v7730 = vadd.f32 0.0, %v7729
      %v7731 = vpop.f32.mrf.mxu0
      %7732 = vmatprep.mubr.f32.mxu0 0.0
      %7733 = vmatmul.mubr.f32.gmra.mxu0 %v7512
      %v7734 = vpop.f32.mrf.mxu0
      %v7735 = vadd.f32 0.0, %v7734
      %v7736 = vpop.f32.mrf.mxu0
      %7737 = vmatprep.mubr.f32.mxu0 0.0
      %7738 = vmatmul.mubr.f32.gmra.mxu0 %v7515
      %v7739 = vpop.f32.mrf.mxu0
      %v7740 = vadd.f32 0.0, %v7739
      %v7741 = vpop.f32.mrf.mxu0
      %7742 = vmatprep.mubr.f32.mxu0 0.0
      %7743 = vmatmul.mubr.f32.gmra.mxu0 %v7518
      %v7744 = vpop.f32.mrf.mxu0
      %v7745 = vadd.f32 0.0, %v7744
      %v7746 = vpop.f32.mrf.mxu0
      %7747 = vmatprep.mubr.f32.mxu0 0.0
      %7748 = vmatmul.mubr.f32.gmra.mxu0 %v7521
      %v7749 = vpop.f32.mrf.mxu0
      %v7750 = vadd.f32 0.0, %v7749
      %v7751 = vpop.f32.mrf.mxu0
      %7752 = vmatprep.mubr.f32.mxu0 0.0
      %7753 = vmatmul.mubr.f32.gmra.mxu0 %v7524
      %v7754 = vpop.f32.mrf.mxu0
      %v7755 = vadd.f32 0.0, %v7754
      %v7756 = vpop.f32.mrf.mxu0
      %7757 = vmatprep.mubr.f32.mxu0 0.0
      %7758 = vmatmul.mubr.f32.gmra.mxu0 %v7527
      %v7759 = vpop.f32.mrf.mxu0
      %v7760 = vadd.f32 0.0, %v7759
      %v7761 = vpop.f32.mrf.mxu0
      %7762 = vmatprep.mubr.f32.mxu0 0.0
      %7763 = vmatmul.mubr.f32.gmra.mxu0 %v7530
      %v7764 = vpop.f32.mrf.mxu0
      %v7765 = vadd.f32 0.0, %v7764
      %v7766 = vpop.f32.mrf.mxu0
      %7767 = vmatprep.mubr.f32.mxu0 0.0
      %7768 = vmatmul.mubr.f32.gmra.mxu0 %v7533
      %v7769 = vpop.f32.mrf.mxu0
      %v7770 = vadd.f32 0.0, %v7769
      %v7771 = vpop.f32.mrf.mxu0
      %7772 = vmatprep.mubr.f32.mxu0 0.0
      %7773 = vmatmul.mubr.f32.gmra.mxu0 %v7536
      %v7774 = vpop.f32.mrf.mxu0
      %v7775 = vadd.f32 0.0, %v7774
      %v7776 = vpop.f32.mrf.mxu0
      %7777 = vmatprep.mubr.f32.mxu0 0.0
      %7778 = vmatmul.mubr.f32.gmra.mxu0 %v7539
      %v7779 = vpop.f32.mrf.mxu0
      %v7780 = vadd.f32 0.0, %v7779
      %v7781 = vpop.f32.mrf.mxu0
      %7782 = vmatprep.mubr.f32.mxu0 0.0
      %7783 = vmatmul.mubr.f32.gmra.mxu0 %v7542
      %v7784 = vpop.f32.mrf.mxu0
      %v7785 = vadd.f32 0.0, %v7784
      %v7786 = vpop.f32.mrf.mxu0
      %7787 = vmatprep.mubr.f32.mxu0 0.0
      %7788 = vmatmul.mubr.f32.gmra.mxu0 %v7545
      %v7789 = vpop.f32.mrf.mxu0
      %v7790 = vadd.f32 0.0, %v7789
      %v7791 = vpop.f32.mrf.mxu0
      %7792 = vmatprep.mubr.f32.mxu0 0.0
      %7793 = vmatmul.mubr.f32.gmra.mxu0 %v7548
      %v7794 = vpop.f32.mrf.mxu0
      %v7795 = vadd.f32 0.0, %v7794
      %v7796 = vpop.f32.mrf.mxu0
      %7797 = vmatprep.mubr.f32.mxu0 0.0
      %7798 = vmatmul.mubr.f32.gmra.mxu0 %v7551
      %v7799 = vpop.f32.mrf.mxu0
      %v7800 = vadd.f32 0.0, %v7799
      %v7801 = vpop.f32.mrf.mxu0
      %7802 = vmatprep.mubr.f32.mxu0 0.0
      %7803 = vmatmul.mubr.f32.gmra.mxu0 %v7554
      %v7804 = vpop.f32.mrf.mxu0
      %v7805 = vadd.f32 0.0, %v7804
      %v7806 = vpop.f32.mrf.mxu0
      %7807 = vmatprep.mubr.f32.mxu0 0.0
      %7808 = vmatmul.mubr.f32.gmra.mxu0 %v7557
      %v7809 = vpop.f32.mrf.mxu0
      %v7810 = vadd.f32 0.0, %v7809
      %v7811 = vpop.f32.mrf.mxu0
      %7812 = vmatprep.mubr.f32.mxu0 0.0
      %7813 = vmatmul.mubr.f32.gmra.mxu0 %v7560
      %v7814 = vpop.f32.mrf.mxu0
      %v7815 = vadd.f32 0.0, %v7814
      %v7816 = vpop.f32.mrf.mxu0
      %7817 = vmatprep.mubr.f32.mxu0 0.0
      %7818 = vmatmul.mubr.f32.gmra.mxu0 %v7563
      %v7819 = vpop.f32.mrf.mxu0
      %v7820 = vadd.f32 0.0, %v7819
      %v7821 = vpop.f32.mrf.mxu0
      %7822 = vmatprep.mubr.f32.mxu0 0.0
      %7823 = vmatmul.mubr.f32.gmra.mxu0 %v7566
      %v7824 = vpop.f32.mrf.mxu0
      %v7825 = vadd.f32 0.0, %v7824
      %v7826 = vpop.f32.mrf.mxu0
      %7827 = vmatprep.mubr.f32.mxu0 0.0
      %7828 = vmatmul.mubr.f32.gmra.mxu0 %v7569
      %v7829 = vpop.f32.mrf.mxu0
      %v7830 = vpop.f32.mrf.mxu0
      %7831 = vmatprep.mubr.f32.mxu0 0.0
      %7832 = vmatmul.mubr.f32.gmra.mxu0 %v7572
      %v7833 = vpop.f32.mrf.mxu0
      %v7834 = vpop.f32.mrf.mxu0
      %7835 = vmatprep.mubr.f32.mxu0 0.0
      %7836 = vmatmul.mubr.f32.gmra.mxu0 %v7575
      %v7837 = vpop.f32.mrf.mxu0
      %v7838 = vpop.f32.mrf.mxu0
      %7839 = vmatprep.mubr.f32.mxu0 0.0
      %7840 = vmatmul.mubr.f32.gmra.mxu0 %v7578
      %v7841 = vpop.f32.mrf.mxu0
      %v7842 = vpop.f32.mrf.mxu0
      %7843 = vmatprep.mubr.f32.mxu0 0.0
      %7844 = vmatmul.mubr.f32.gmra.mxu0 %v7581
      %v7845 = vpop.f32.mrf.mxu0
      %v7846 = vpop.f32.mrf.mxu0
      %7847 = vdwg.mxu0
      %v7848 = vadd.f32 %v7381, %v7650
      %v7849 = vadd.f32 %v7382, %v7655
      %v7850 = vadd.f32 %v7383, %v7660
      %v7851 = vadd.f32 %v7384, %v7665
      %v7852 = vadd.f32 %v7385, %v7670
      %v7853 = vadd.f32 %v7386, %v7675
      %v7854 = vadd.f32 %v7387, %v7680
      %v7855 = vadd.f32 %v7388, %v7685
      %v7856 = vadd.f32 %v7389, %v7690
      %v7857 = vadd.f32 %v7390, %v7695
      %v7858 = vadd.f32 %v7391, %v7700
      %v7859 = vadd.f32 %v7392, %v7705
      %v7860 = vadd.f32 %v7393, %v7710
      %v7861 = vadd.f32 %v7394, %v7715
      %v7862 = vadd.f32 %v7395, %v7720
      %v7863 = vadd.f32 %v7396, %v7725
      %v7864 = vadd.f32 %v7397, %v7730
      %v7865 = vadd.f32 %v7398, %v7735
      %v7866 = vadd.f32 %v7399, %v7740
      %v7867 = vadd.f32 %v7400, %v7745
      %v7868 = vadd.f32 %v7401, %v7750
      %v7869 = vadd.f32 %v7402, %v7755
      %v7870 = vadd.f32 %v7403, %v7760
      %v7871 = vadd.f32 %v7404, %v7765
      %v7872 = vadd.f32 %v7405, %v7770
      %v7873 = vadd.f32 %v7406, %v7775
      %v7874 = vadd.f32 %v7407, %v7780
      %v7875 = vadd.f32 %v7408, %v7785
      %v7876 = vadd.f32 %v7409, %v7790
      %v7877 = vadd.f32 %v7410, %v7795
      %v7878 = vadd.f32 %v7411, %v7800
      %v7879 = vadd.f32 %v7412, %v7805
      %v7880 = vadd.f32 %v7413, %v7810
      %v7881 = vadd.f32 %v7414, %v7815
      %v7882 = vadd.f32 %v7415, %v7820
      %v7883 = vadd.f32 %v7416, %v7825
      %v7884 = vld [vmem:[#allocation3 + $0x24] sm:$0xff]
      %v7885 = vld [vmem:[#allocation3 + $0x2c] sm:$0xff]
      %v7886 = vld [vmem:[#allocation3 + $0x34] sm:$0xff]
      %v7887 = vld [vmem:[#allocation3 + $0x3c] sm:$0xff]
      %v7888 = vld [vmem:[#allocation3 + $0x44] sm:$0xff]
      %v7889 = vld [vmem:[#allocation3 + $0x4c] sm:$0xff]
      %v7890 = vld [vmem:[#allocation3 + $0x54] sm:$0xff]
      %v7891 = vld [vmem:[#allocation3 + $0x5c] sm:$0xff]
      %v7892 = vld [vmem:[#allocation3 + $0x64] sm:$0xff]
      %v7893 = vld [vmem:[#allocation3 + $0x6c] sm:$0xff]
      %v7894 = vld [vmem:[#allocation3 + $0x74] sm:$0xff]
      %v7895 = vld [vmem:[#allocation3 + $0x7c] sm:$0xff]
      %v7896 = vld [vmem:[#allocation3 + $0x84] sm:$0xff]
      %v7897 = vld [vmem:[#allocation3 + $0x8c] sm:$0xff]
      %v7898 = vld [vmem:[#allocation3 + $0x94] sm:$0xff]
      %v7899 = vld [vmem:[#allocation3 + $0x9c] sm:$0xff]
      %v7900 = vld [vmem:[#allocation3 + $0xa4] sm:$0xff]
      %v7901 = vld [vmem:[#allocation3 + $0xac] sm:$0xff]
      %v7902 = vld [vmem:[#allocation3 + $0xb4] sm:$0xff]
      %v7903 = vld [vmem:[#allocation3 + $0xbc] sm:$0xff]
      %v7904 = vld [vmem:[#allocation3 + $0xc4] sm:$0xff]
      %v7905 = vld [vmem:[#allocation3 + $0xcc] sm:$0xff]
      %v7906 = vld [vmem:[#allocation3 + $0xd4] sm:$0xff]
      %v7907 = vld [vmem:[#allocation3 + $0xdc] sm:$0xff]
      %v7908 = vld [vmem:[#allocation3 + $0xe4] sm:$0xff]
      %v7909 = vld [vmem:[#allocation3 + $0xec] sm:$0xff]
      %v7910 = vld [vmem:[#allocation3 + $0xf4] sm:$0xff]
      %v7911 = vld [vmem:[#allocation3 + $0xfc] sm:$0xff]
      %v7912 = vld [vmem:[#allocation3 + $0x104] sm:$0xff]
      %v7913 = vld [vmem:[#allocation3 + $0x10c] sm:$0xff]
      %v7914 = vld [vmem:[#allocation3 + $0x114] sm:$0xff]
      %v7915 = vld [vmem:[#allocation3 + $0x11c] sm:$0xff]
      %v7916 = vld [vmem:[#allocation3 + $0x124] sm:$0xff]
      %v7917 = vld [vmem:[#allocation3 + $0x12c] sm:$0xff]
      %v7918 = vld [vmem:[#allocation3 + $0x134] sm:$0xff]
      %v7919 = vld [vmem:[#allocation3 + $0x13c] sm:$0xff]
      %v7920 = vld [vmem:[#allocation3 + $0x144] sm:$0xff]
      %v7921 = vld [vmem:[#allocation3 + $0x14c] sm:$0xff]
      %v7922 = vld [vmem:[#allocation3 + $0x154] sm:$0xff]
      %v7923 = vld [vmem:[#allocation3 + $0x15c] sm:$0xff]
      %v7924 = vld [vmem:[#allocation3 + $0x164] sm:$0xf]
      %s7925 = scalar_lea.vmem %s4, 48
      %v7926 = vld [vmem:[%s7925] sm:$0xff]
      %v7928 = vsel %vm5105, %v7884, 0
      %v7931 = vsel %vm5105, %v7885, 0
      %v7934 = vsel %vm5105, %v7886, 0
      %v7937 = vsel %vm5105, %v7887, 0
      %v7940 = vsel %vm5105, %v7888, 0
      %v7943 = vsel %vm5105, %v7889, 0
      %v7946 = vsel %vm5105, %v7890, 0
      %v7949 = vsel %vm5105, %v7891, 0
      %v7952 = vsel %vm5105, %v7892, 0
      %v7955 = vsel %vm5105, %v7893, 0
      %v7958 = vsel %vm5105, %v7894, 0
      %v7961 = vsel %vm5105, %v7895, 0
      %v7964 = vsel %vm5105, %v7896, 0
      %v7967 = vsel %vm5105, %v7897, 0
      %v7970 = vsel %vm5105, %v7898, 0
      %v7973 = vsel %vm5105, %v7899, 0
      %v7976 = vsel %vm5105, %v7900, 0
      %v7979 = vsel %vm5105, %v7901, 0
      %v7982 = vsel %vm5105, %v7902, 0
      %v7985 = vsel %vm5105, %v7903, 0
      %v7988 = vsel %vm5105, %v7904, 0
      %v7991 = vsel %vm5105, %v7905, 0
      %v7994 = vsel %vm5105, %v7906, 0
      %v7997 = vsel %vm5105, %v7907, 0
      %v8000 = vsel %vm5105, %v7908, 0
      %v8003 = vsel %vm5105, %v7909, 0
      %v8006 = vsel %vm5105, %v7910, 0
      %v8009 = vsel %vm5105, %v7911, 0
      %v8012 = vsel %vm5105, %v7912, 0
      %v8015 = vsel %vm5105, %v7913, 0
      %v8018 = vsel %vm5105, %v7914, 0
      %v8021 = vsel %vm5105, %v7915, 0
      %v8024 = vsel %vm5105, %v7916, 0
      %v8027 = vsel %vm5105, %v7917, 0
      %v8030 = vsel %vm5105, %v7918, 0
      %v8033 = vsel %vm5105, %v7919, 0
      %v8036 = vsel %vm5105, %v7920, 0
      %v8039 = vsel %vm5105, %v7921, 0
      %v8042 = vsel %vm5105, %v7922, 0
      %v8045 = vsel %vm5105, %v7923, 0
      %v8048 = vsel %vm5105, %v7924, 0
      %8050 = vmatprep.subr.mxu0 0.0
      %8051 = vmatpush1.msra.mxu0 0.0
      %8052 = vmatprep.subr.mxu0 0.0
      %8053 = vmatpush1.msra.mxu0 0.0
      %8054 = vmatprep.subr.mxu0 0.0
      %8055 = vmatpush1.msra.mxu0 0.0
      %8056 = vmatprep.subr.mxu0 0.0
      %8057 = vmatpush1.msra.mxu0 0.0
      %8058 = vmatprep.subr.mxu0 0.0
      %8059 = vmatpush1.msra.mxu0 0.0
      %8060 = vmatprep.subr.mxu0 0.0
      %8061 = vmatpush1.msra.mxu0 0.0
      %8062 = vmatprep.subr.mxu0 0.0
      %8063 = vmatpush1.msra.mxu0 0.0
      %8064 = vmatprep.subr.mxu0 0.0
      %8065 = vmatpush1.msra.mxu0 0.0
      %8066 = vmatprep.subr.mxu0 0.0
      %8067 = vmatpush1.msra.mxu0 0.0
      %8068 = vmatprep.subr.mxu0 0.0
      %8069 = vmatpush1.msra.mxu0 0.0
      %8070 = vmatprep.subr.mxu0 0.0
      %8071 = vmatpush1.msra.mxu0 0.0
      %8072 = vmatprep.subr.mxu0 0.0
      %8073 = vmatpush1.msra.mxu0 0.0
      %8074 = vmatprep.subr.mxu0 0.0
      %8075 = vmatpush1.msra.mxu0 0.0
      %8076 = vmatprep.subr.mxu0 0.0
      %8077 = vmatpush1.msra.mxu0 0.0
      %8078 = vmatprep.subr.mxu0 0.0
      %8079 = vmatpush1.msra.mxu0 0.0
      %8080 = vmatprep.subr.mxu0 0.0
      %8081 = vmatpush1.msra.mxu0 %v7926
      %8082 = vmatprep.subr.mxu0 0.0
      %8083 = vmatpush2.msra.mxu0 0.0
      %8084 = vmatprep.subr.mxu0 0.0
      %8085 = vmatpush2.msra.mxu0 0.0
      %8086 = vmatprep.subr.mxu0 0.0
      %8087 = vmatpush2.msra.mxu0 0.0
      %8088 = vmatprep.subr.mxu0 0.0
      %8089 = vmatpush2.msra.mxu0 0.0
      %8090 = vmatprep.subr.mxu0 0.0
      %8091 = vmatpush2.msra.mxu0 0.0
      %8092 = vmatprep.subr.mxu0 0.0
      %8093 = vmatpush2.msra.mxu0 0.0
      %8094 = vmatprep.subr.mxu0 0.0
      %8095 = vmatpush2.msra.mxu0 0.0
      %8096 = vmatprep.subr.mxu0 0.0
      %8097 = vmatpush2.msra.mxu0 0.0
      %8098 = vmatprep.subr.mxu0 0.0
      %8099 = vmatpush2.msra.mxu0 0.0
      %8100 = vmatprep.subr.mxu0 0.0
      %8101 = vmatpush2.msra.mxu0 0.0
      %8102 = vmatprep.subr.mxu0 0.0
      %8103 = vmatpush2.msra.mxu0 0.0
      %8104 = vmatprep.subr.mxu0 0.0
      %8105 = vmatpush2.msra.mxu0 0.0
      %8106 = vmatprep.subr.mxu0 0.0
      %8107 = vmatpush2.msra.mxu0 0.0
      %8108 = vmatprep.subr.mxu0 0.0
      %8109 = vmatpush2.msra.mxu0 0.0
      %8110 = vmatprep.subr.mxu0 0.0
      %8111 = vmatpush2.msra.mxu0 0.0
      %8112 = vmatprep.subr.mxu0 0.0
      %8113 = vmatpush2.msra.mxu0 0.0
      %8114 = vmatprep.mubr.f32.mxu0 0.0
      %8115 = vmatmul.mubr.f32.gmra.mxu0 %v7928
      %v8116 = vpop.f32.mrf.mxu0
      %v8117 = vadd.f32 0.0, %v8116
      %v8118 = vpop.f32.mrf.mxu0
      %8119 = vmatprep.mubr.f32.mxu0 0.0
      %8120 = vmatmul.mubr.f32.gmra.mxu0 %v7931
      %v8121 = vpop.f32.mrf.mxu0
      %v8122 = vadd.f32 0.0, %v8121
      %v8123 = vpop.f32.mrf.mxu0
      %8124 = vmatprep.mubr.f32.mxu0 0.0
      %8125 = vmatmul.mubr.f32.gmra.mxu0 %v7934
      %v8126 = vpop.f32.mrf.mxu0
      %v8127 = vadd.f32 0.0, %v8126
      %v8128 = vpop.f32.mrf.mxu0
      %8129 = vmatprep.mubr.f32.mxu0 0.0
      %8130 = vmatmul.mubr.f32.gmra.mxu0 %v7937
      %v8131 = vpop.f32.mrf.mxu0
      %v8132 = vadd.f32 0.0, %v8131
      %v8133 = vpop.f32.mrf.mxu0
      %8134 = vmatprep.mubr.f32.mxu0 0.0
      %8135 = vmatmul.mubr.f32.gmra.mxu0 %v7940
      %v8136 = vpop.f32.mrf.mxu0
      %v8137 = vadd.f32 0.0, %v8136
      %v8138 = vpop.f32.mrf.mxu0
      %8139 = vmatprep.mubr.f32.mxu0 0.0
      %8140 = vmatmul.mubr.f32.gmra.mxu0 %v7943
      %v8141 = vpop.f32.mrf.mxu0
      %v8142 = vadd.f32 0.0, %v8141
      %v8143 = vpop.f32.mrf.mxu0
      %8144 = vmatprep.mubr.f32.mxu0 0.0
      %8145 = vmatmul.mubr.f32.gmra.mxu0 %v7946
      %v8146 = vpop.f32.mrf.mxu0
      %v8147 = vadd.f32 0.0, %v8146
      %v8148 = vpop.f32.mrf.mxu0
      %8149 = vmatprep.mubr.f32.mxu0 0.0
      %8150 = vmatmul.mubr.f32.gmra.mxu0 %v7949
      %v8151 = vpop.f32.mrf.mxu0
      %v8152 = vadd.f32 0.0, %v8151
      %v8153 = vpop.f32.mrf.mxu0
      %8154 = vmatprep.mubr.f32.mxu0 0.0
      %8155 = vmatmul.mubr.f32.gmra.mxu0 %v7952
      %v8156 = vpop.f32.mrf.mxu0
      %v8157 = vadd.f32 0.0, %v8156
      %v8158 = vpop.f32.mrf.mxu0
      %8159 = vmatprep.mubr.f32.mxu0 0.0
      %8160 = vmatmul.mubr.f32.gmra.mxu0 %v7955
      %v8161 = vpop.f32.mrf.mxu0
      %v8162 = vadd.f32 0.0, %v8161
      %v8163 = vpop.f32.mrf.mxu0
      %8164 = vmatprep.mubr.f32.mxu0 0.0
      %8165 = vmatmul.mubr.f32.gmra.mxu0 %v7958
      %v8166 = vpop.f32.mrf.mxu0
      %v8167 = vadd.f32 0.0, %v8166
      %v8168 = vpop.f32.mrf.mxu0
      %8169 = vmatprep.mubr.f32.mxu0 0.0
      %8170 = vmatmul.mubr.f32.gmra.mxu0 %v7961
      %v8171 = vpop.f32.mrf.mxu0
      %v8172 = vadd.f32 0.0, %v8171
      %v8173 = vpop.f32.mrf.mxu0
      %8174 = vmatprep.mubr.f32.mxu0 0.0
      %8175 = vmatmul.mubr.f32.gmra.mxu0 %v7964
      %v8176 = vpop.f32.mrf.mxu0
      %v8177 = vadd.f32 0.0, %v8176
      %v8178 = vpop.f32.mrf.mxu0
      %8179 = vmatprep.mubr.f32.mxu0 0.0
      %8180 = vmatmul.mubr.f32.gmra.mxu0 %v7967
      %v8181 = vpop.f32.mrf.mxu0
      %v8182 = vadd.f32 0.0, %v8181
      %v8183 = vpop.f32.mrf.mxu0
      %8184 = vmatprep.mubr.f32.mxu0 0.0
      %8185 = vmatmul.mubr.f32.gmra.mxu0 %v7970
      %v8186 = vpop.f32.mrf.mxu0
      %v8187 = vadd.f32 0.0, %v8186
      %v8188 = vpop.f32.mrf.mxu0
      %8189 = vmatprep.mubr.f32.mxu0 0.0
      %8190 = vmatmul.mubr.f32.gmra.mxu0 %v7973
      %v8191 = vpop.f32.mrf.mxu0
      %v8192 = vadd.f32 0.0, %v8191
      %v8193 = vpop.f32.mrf.mxu0
      %8194 = vmatprep.mubr.f32.mxu0 0.0
      %8195 = vmatmul.mubr.f32.gmra.mxu0 %v7976
      %v8196 = vpop.f32.mrf.mxu0
      %v8197 = vadd.f32 0.0, %v8196
      %v8198 = vpop.f32.mrf.mxu0
      %8199 = vmatprep.mubr.f32.mxu0 0.0
      %8200 = vmatmul.mubr.f32.gmra.mxu0 %v7979
      %v8201 = vpop.f32.mrf.mxu0
      %v8202 = vadd.f32 0.0, %v8201
      %v8203 = vpop.f32.mrf.mxu0
      %8204 = vmatprep.mubr.f32.mxu0 0.0
      %8205 = vmatmul.mubr.f32.gmra.mxu0 %v7982
      %v8206 = vpop.f32.mrf.mxu0
      %v8207 = vadd.f32 0.0, %v8206
      %v8208 = vpop.f32.mrf.mxu0
      %8209 = vmatprep.mubr.f32.mxu0 0.0
      %8210 = vmatmul.mubr.f32.gmra.mxu0 %v7985
      %v8211 = vpop.f32.mrf.mxu0
      %v8212 = vadd.f32 0.0, %v8211
      %v8213 = vpop.f32.mrf.mxu0
      %8214 = vmatprep.mubr.f32.mxu0 0.0
      %8215 = vmatmul.mubr.f32.gmra.mxu0 %v7988
      %v8216 = vpop.f32.mrf.mxu0
      %v8217 = vadd.f32 0.0, %v8216
      %v8218 = vpop.f32.mrf.mxu0
      %8219 = vmatprep.mubr.f32.mxu0 0.0
      %8220 = vmatmul.mubr.f32.gmra.mxu0 %v7991
      %v8221 = vpop.f32.mrf.mxu0
      %v8222 = vadd.f32 0.0, %v8221
      %v8223 = vpop.f32.mrf.mxu0
      %8224 = vmatprep.mubr.f32.mxu0 0.0
      %8225 = vmatmul.mubr.f32.gmra.mxu0 %v7994
      %v8226 = vpop.f32.mrf.mxu0
      %v8227 = vadd.f32 0.0, %v8226
      %v8228 = vpop.f32.mrf.mxu0
      %8229 = vmatprep.mubr.f32.mxu0 0.0
      %8230 = vmatmul.mubr.f32.gmra.mxu0 %v7997
      %v8231 = vpop.f32.mrf.mxu0
      %v8232 = vadd.f32 0.0, %v8231
      %v8233 = vpop.f32.mrf.mxu0
      %8234 = vmatprep.mubr.f32.mxu0 0.0
      %8235 = vmatmul.mubr.f32.gmra.mxu0 %v8000
      %v8236 = vpop.f32.mrf.mxu0
      %v8237 = vadd.f32 0.0, %v8236
      %v8238 = vpop.f32.mrf.mxu0
      %8239 = vmatprep.mubr.f32.mxu0 0.0
      %8240 = vmatmul.mubr.f32.gmra.mxu0 %v8003
      %v8241 = vpop.f32.mrf.mxu0
      %v8242 = vadd.f32 0.0, %v8241
      %v8243 = vpop.f32.mrf.mxu0
      %8244 = vmatprep.mubr.f32.mxu0 0.0
      %8245 = vmatmul.mubr.f32.gmra.mxu0 %v8006
      %v8246 = vpop.f32.mrf.mxu0
      %v8247 = vadd.f32 0.0, %v8246
      %v8248 = vpop.f32.mrf.mxu0
      %8249 = vmatprep.mubr.f32.mxu0 0.0
      %8250 = vmatmul.mubr.f32.gmra.mxu0 %v8009
      %v8251 = vpop.f32.mrf.mxu0
      %v8252 = vadd.f32 0.0, %v8251
      %v8253 = vpop.f32.mrf.mxu0
      %8254 = vmatprep.mubr.f32.mxu0 0.0
      %8255 = vmatmul.mubr.f32.gmra.mxu0 %v8012
      %v8256 = vpop.f32.mrf.mxu0
      %v8257 = vadd.f32 0.0, %v8256
      %v8258 = vpop.f32.mrf.mxu0
      %8259 = vmatprep.mubr.f32.mxu0 0.0
      %8260 = vmatmul.mubr.f32.gmra.mxu0 %v8015
      %v8261 = vpop.f32.mrf.mxu0
      %v8262 = vadd.f32 0.0, %v8261
      %v8263 = vpop.f32.mrf.mxu0
      %8264 = vmatprep.mubr.f32.mxu0 0.0
      %8265 = vmatmul.mubr.f32.gmra.mxu0 %v8018
      %v8266 = vpop.f32.mrf.mxu0
      %v8267 = vadd.f32 0.0, %v8266
      %v8268 = vpop.f32.mrf.mxu0
      %8269 = vmatprep.mubr.f32.mxu0 0.0
      %8270 = vmatmul.mubr.f32.gmra.mxu0 %v8021
      %v8271 = vpop.f32.mrf.mxu0
      %v8272 = vadd.f32 0.0, %v8271
      %v8273 = vpop.f32.mrf.mxu0
      %8274 = vmatprep.mubr.f32.mxu0 0.0
      %8275 = vmatmul.mubr.f32.gmra.mxu0 %v8024
      %v8276 = vpop.f32.mrf.mxu0
      %v8277 = vadd.f32 0.0, %v8276
      %v8278 = vpop.f32.mrf.mxu0
      %8279 = vmatprep.mubr.f32.mxu0 0.0
      %8280 = vmatmul.mubr.f32.gmra.mxu0 %v8027
      %v8281 = vpop.f32.mrf.mxu0
      %v8282 = vadd.f32 0.0, %v8281
      %v8283 = vpop.f32.mrf.mxu0
      %8284 = vmatprep.mubr.f32.mxu0 0.0
      %8285 = vmatmul.mubr.f32.gmra.mxu0 %v8030
      %v8286 = vpop.f32.mrf.mxu0
      %v8287 = vadd.f32 0.0, %v8286
      %v8288 = vpop.f32.mrf.mxu0
      %8289 = vmatprep.mubr.f32.mxu0 0.0
      %8290 = vmatmul.mubr.f32.gmra.mxu0 %v8033
      %v8291 = vpop.f32.mrf.mxu0
      %v8292 = vadd.f32 0.0, %v8291
      %v8293 = vpop.f32.mrf.mxu0
      %8294 = vmatprep.mubr.f32.mxu0 0.0
      %8295 = vmatmul.mubr.f32.gmra.mxu0 %v8036
      %v8296 = vpop.f32.mrf.mxu0
      %v8297 = vpop.f32.mrf.mxu0
      %8298 = vmatprep.mubr.f32.mxu0 0.0
      %8299 = vmatmul.mubr.f32.gmra.mxu0 %v8039
      %v8300 = vpop.f32.mrf.mxu0
      %v8301 = vpop.f32.mrf.mxu0
      %8302 = vmatprep.mubr.f32.mxu0 0.0
      %8303 = vmatmul.mubr.f32.gmra.mxu0 %v8042
      %v8304 = vpop.f32.mrf.mxu0
      %v8305 = vpop.f32.mrf.mxu0
      %8306 = vmatprep.mubr.f32.mxu0 0.0
      %8307 = vmatmul.mubr.f32.gmra.mxu0 %v8045
      %v8308 = vpop.f32.mrf.mxu0
      %v8309 = vpop.f32.mrf.mxu0
      %8310 = vmatprep.mubr.f32.mxu0 0.0
      %8311 = vmatmul.mubr.f32.gmra.mxu0 %v8048
      %v8312 = vpop.f32.mrf.mxu0
      %v8313 = vpop.f32.mrf.mxu0
      %8314 = vdwg.mxu0
      %v8315 = vadd.f32 %v7848, %v8117
      %v8316 = vadd.f32 %v7849, %v8122
      %v8317 = vadd.f32 %v7850, %v8127
      %v8318 = vadd.f32 %v7851, %v8132
      %v8319 = vadd.f32 %v7852, %v8137
      %v8320 = vadd.f32 %v7853, %v8142
      %v8321 = vadd.f32 %v7854, %v8147
      %v8322 = vadd.f32 %v7855, %v8152
      %v8323 = vadd.f32 %v7856, %v8157
      %v8324 = vadd.f32 %v7857, %v8162
      %v8325 = vadd.f32 %v7858, %v8167
      %v8326 = vadd.f32 %v7859, %v8172
      %v8327 = vadd.f32 %v7860, %v8177
      %v8328 = vadd.f32 %v7861, %v8182
      %v8329 = vadd.f32 %v7862, %v8187
      %v8330 = vadd.f32 %v7863, %v8192
      %v8331 = vadd.f32 %v7864, %v8197
      %v8332 = vadd.f32 %v7865, %v8202
      %v8333 = vadd.f32 %v7866, %v8207
      %v8334 = vadd.f32 %v7867, %v8212
      %v8335 = vadd.f32 %v7868, %v8217
      %v8336 = vadd.f32 %v7869, %v8222
      %v8337 = vadd.f32 %v7870, %v8227
      %v8338 = vadd.f32 %v7871, %v8232
      %v8339 = vadd.f32 %v7872, %v8237
      %v8340 = vadd.f32 %v7873, %v8242
      %v8341 = vadd.f32 %v7874, %v8247
      %v8342 = vadd.f32 %v7875, %v8252
      %v8343 = vadd.f32 %v7876, %v8257
      %v8344 = vadd.f32 %v7877, %v8262
      %v8345 = vadd.f32 %v7878, %v8267
      %v8346 = vadd.f32 %v7879, %v8272
      %v8347 = vadd.f32 %v7880, %v8277
      %v8348 = vadd.f32 %v7881, %v8282
      %v8349 = vadd.f32 %v7882, %v8287
      %v8350 = vadd.f32 %v7883, %v8292
      %v8351 = vld [vmem:[#allocation3 + $0x25] sm:$0xff]
      %v8352 = vld [vmem:[#allocation3 + $0x2d] sm:$0xff]
      %v8353 = vld [vmem:[#allocation3 + $0x35] sm:$0xff]
      %v8354 = vld [vmem:[#allocation3 + $0x3d] sm:$0xff]
      %v8355 = vld [vmem:[#allocation3 + $0x45] sm:$0xff]
      %v8356 = vld [vmem:[#allocation3 + $0x4d] sm:$0xff]
      %v8357 = vld [vmem:[#allocation3 + $0x55] sm:$0xff]
      %v8358 = vld [vmem:[#allocation3 + $0x5d] sm:$0xff]
      %v8359 = vld [vmem:[#allocation3 + $0x65] sm:$0xff]
      %v8360 = vld [vmem:[#allocation3 + $0x6d] sm:$0xff]
      %v8361 = vld [vmem:[#allocation3 + $0x75] sm:$0xff]
      %v8362 = vld [vmem:[#allocation3 + $0x7d] sm:$0xff]
      %v8363 = vld [vmem:[#allocation3 + $0x85] sm:$0xff]
      %v8364 = vld [vmem:[#allocation3 + $0x8d] sm:$0xff]
      %v8365 = vld [vmem:[#allocation3 + $0x95] sm:$0xff]
      %v8366 = vld [vmem:[#allocation3 + $0x9d] sm:$0xff]
      %v8367 = vld [vmem:[#allocation3 + $0xa5] sm:$0xff]
      %v8368 = vld [vmem:[#allocation3 + $0xad] sm:$0xff]
      %v8369 = vld [vmem:[#allocation3 + $0xb5] sm:$0xff]
      %v8370 = vld [vmem:[#allocation3 + $0xbd] sm:$0xff]
      %v8371 = vld [vmem:[#allocation3 + $0xc5] sm:$0xff]
      %v8372 = vld [vmem:[#allocation3 + $0xcd] sm:$0xff]
      %v8373 = vld [vmem:[#allocation3 + $0xd5] sm:$0xff]
      %v8374 = vld [vmem:[#allocation3 + $0xdd] sm:$0xff]
      %v8375 = vld [vmem:[#allocation3 + $0xe5] sm:$0xff]
      %v8376 = vld [vmem:[#allocation3 + $0xed] sm:$0xff]
      %v8377 = vld [vmem:[#allocation3 + $0xf5] sm:$0xff]
      %v8378 = vld [vmem:[#allocation3 + $0xfd] sm:$0xff]
      %v8379 = vld [vmem:[#allocation3 + $0x105] sm:$0xff]
      %v8380 = vld [vmem:[#allocation3 + $0x10d] sm:$0xff]
      %v8381 = vld [vmem:[#allocation3 + $0x115] sm:$0xff]
      %v8382 = vld [vmem:[#allocation3 + $0x11d] sm:$0xff]
      %v8383 = vld [vmem:[#allocation3 + $0x125] sm:$0xff]
      %v8384 = vld [vmem:[#allocation3 + $0x12d] sm:$0xff]
      %v8385 = vld [vmem:[#allocation3 + $0x135] sm:$0xff]
      %v8386 = vld [vmem:[#allocation3 + $0x13d] sm:$0xff]
      %v8387 = vld [vmem:[#allocation3 + $0x145] sm:$0xff]
      %v8388 = vld [vmem:[#allocation3 + $0x14d] sm:$0xff]
      %v8389 = vld [vmem:[#allocation3 + $0x155] sm:$0xff]
      %v8390 = vld [vmem:[#allocation3 + $0x15d] sm:$0xff]
      %v8391 = vld [vmem:[#allocation3 + $0x165] sm:$0xf]
      %s8392 = scalar_lea.vmem %s4, 56
      %v8393 = vld [vmem:[%s8392] sm:$0xff]
      %v8395 = vsel %vm5105, %v8351, 0
      %v8398 = vsel %vm5105, %v8352, 0
      %v8401 = vsel %vm5105, %v8353, 0
      %v8404 = vsel %vm5105, %v8354, 0
      %v8407 = vsel %vm5105, %v8355, 0
      %v8410 = vsel %vm5105, %v8356, 0
      %v8413 = vsel %vm5105, %v8357, 0
      %v8416 = vsel %vm5105, %v8358, 0
      %v8419 = vsel %vm5105, %v8359, 0
      %v8422 = vsel %vm5105, %v8360, 0
      %v8425 = vsel %vm5105, %v8361, 0
      %v8428 = vsel %vm5105, %v8362, 0
      %v8431 = vsel %vm5105, %v8363, 0
      %v8434 = vsel %vm5105, %v8364, 0
      %v8437 = vsel %vm5105, %v8365, 0
      %v8440 = vsel %vm5105, %v8366, 0
      %v8443 = vsel %vm5105, %v8367, 0
      %v8446 = vsel %vm5105, %v8368, 0
      %v8449 = vsel %vm5105, %v8369, 0
      %v8452 = vsel %vm5105, %v8370, 0
      %v8455 = vsel %vm5105, %v8371, 0
      %v8458 = vsel %vm5105, %v8372, 0
      %v8461 = vsel %vm5105, %v8373, 0
      %v8464 = vsel %vm5105, %v8374, 0
      %v8467 = vsel %vm5105, %v8375, 0
      %v8470 = vsel %vm5105, %v8376, 0
      %v8473 = vsel %vm5105, %v8377, 0
      %v8476 = vsel %vm5105, %v8378, 0
      %v8479 = vsel %vm5105, %v8379, 0
      %v8482 = vsel %vm5105, %v8380, 0
      %v8485 = vsel %vm5105, %v8381, 0
      %v8488 = vsel %vm5105, %v8382, 0
      %v8491 = vsel %vm5105, %v8383, 0
      %v8494 = vsel %vm5105, %v8384, 0
      %v8497 = vsel %vm5105, %v8385, 0
      %v8500 = vsel %vm5105, %v8386, 0
      %v8503 = vsel %vm5105, %v8387, 0
      %v8506 = vsel %vm5105, %v8388, 0
      %v8509 = vsel %vm5105, %v8389, 0
      %v8512 = vsel %vm5105, %v8390, 0
      %v8515 = vsel %vm5105, %v8391, 0
      %8517 = vmatprep.subr.mxu0 0.0
      %8518 = vmatpush1.msra.mxu0 0.0
      %8519 = vmatprep.subr.mxu0 0.0
      %8520 = vmatpush1.msra.mxu0 0.0
      %8521 = vmatprep.subr.mxu0 0.0
      %8522 = vmatpush1.msra.mxu0 0.0
      %8523 = vmatprep.subr.mxu0 0.0
      %8524 = vmatpush1.msra.mxu0 0.0
      %8525 = vmatprep.subr.mxu0 0.0
      %8526 = vmatpush1.msra.mxu0 0.0
      %8527 = vmatprep.subr.mxu0 0.0
      %8528 = vmatpush1.msra.mxu0 0.0
      %8529 = vmatprep.subr.mxu0 0.0
      %8530 = vmatpush1.msra.mxu0 0.0
      %8531 = vmatprep.subr.mxu0 0.0
      %8532 = vmatpush1.msra.mxu0 0.0
      %8533 = vmatprep.subr.mxu0 0.0
      %8534 = vmatpush1.msra.mxu0 0.0
      %8535 = vmatprep.subr.mxu0 0.0
      %8536 = vmatpush1.msra.mxu0 0.0
      %8537 = vmatprep.subr.mxu0 0.0
      %8538 = vmatpush1.msra.mxu0 0.0
      %8539 = vmatprep.subr.mxu0 0.0
      %8540 = vmatpush1.msra.mxu0 0.0
      %8541 = vmatprep.subr.mxu0 0.0
      %8542 = vmatpush1.msra.mxu0 0.0
      %8543 = vmatprep.subr.mxu0 0.0
      %8544 = vmatpush1.msra.mxu0 0.0
      %8545 = vmatprep.subr.mxu0 0.0
      %8546 = vmatpush1.msra.mxu0 0.0
      %8547 = vmatprep.subr.mxu0 0.0
      %8548 = vmatpush1.msra.mxu0 %v8393
      %8549 = vmatprep.subr.mxu0 0.0
      %8550 = vmatpush2.msra.mxu0 0.0
      %8551 = vmatprep.subr.mxu0 0.0
      %8552 = vmatpush2.msra.mxu0 0.0
      %8553 = vmatprep.subr.mxu0 0.0
      %8554 = vmatpush2.msra.mxu0 0.0
      %8555 = vmatprep.subr.mxu0 0.0
      %8556 = vmatpush2.msra.mxu0 0.0
      %8557 = vmatprep.subr.mxu0 0.0
      %8558 = vmatpush2.msra.mxu0 0.0
      %8559 = vmatprep.subr.mxu0 0.0
      %8560 = vmatpush2.msra.mxu0 0.0
      %8561 = vmatprep.subr.mxu0 0.0
      %8562 = vmatpush2.msra.mxu0 0.0
      %8563 = vmatprep.subr.mxu0 0.0
      %8564 = vmatpush2.msra.mxu0 0.0
      %8565 = vmatprep.subr.mxu0 0.0
      %8566 = vmatpush2.msra.mxu0 0.0
      %8567 = vmatprep.subr.mxu0 0.0
      %8568 = vmatpush2.msra.mxu0 0.0
      %8569 = vmatprep.subr.mxu0 0.0
      %8570 = vmatpush2.msra.mxu0 0.0
      %8571 = vmatprep.subr.mxu0 0.0
      %8572 = vmatpush2.msra.mxu0 0.0
      %8573 = vmatprep.subr.mxu0 0.0
      %8574 = vmatpush2.msra.mxu0 0.0
      %8575 = vmatprep.subr.mxu0 0.0
      %8576 = vmatpush2.msra.mxu0 0.0
      %8577 = vmatprep.subr.mxu0 0.0
      %8578 = vmatpush2.msra.mxu0 0.0
      %8579 = vmatprep.subr.mxu0 0.0
      %8580 = vmatpush2.msra.mxu0 0.0
      %8581 = vmatprep.mubr.f32.mxu0 0.0
      %8582 = vmatmul.mubr.f32.gmra.mxu0 %v8395
      %v8583 = vpop.f32.mrf.mxu0
      %v8584 = vadd.f32 0.0, %v8583
      %v8585 = vpop.f32.mrf.mxu0
      %8586 = vmatprep.mubr.f32.mxu0 0.0
      %8587 = vmatmul.mubr.f32.gmra.mxu0 %v8398
      %v8588 = vpop.f32.mrf.mxu0
      %v8589 = vadd.f32 0.0, %v8588
      %v8590 = vpop.f32.mrf.mxu0
      %8591 = vmatprep.mubr.f32.mxu0 0.0
      %8592 = vmatmul.mubr.f32.gmra.mxu0 %v8401
      %v8593 = vpop.f32.mrf.mxu0
      %v8594 = vadd.f32 0.0, %v8593
      %v8595 = vpop.f32.mrf.mxu0
      %8596 = vmatprep.mubr.f32.mxu0 0.0
      %8597 = vmatmul.mubr.f32.gmra.mxu0 %v8404
      %v8598 = vpop.f32.mrf.mxu0
      %v8599 = vadd.f32 0.0, %v8598
      %v8600 = vpop.f32.mrf.mxu0
      %8601 = vmatprep.mubr.f32.mxu0 0.0
      %8602 = vmatmul.mubr.f32.gmra.mxu0 %v8407
      %v8603 = vpop.f32.mrf.mxu0
      %v8604 = vadd.f32 0.0, %v8603
      %v8605 = vpop.f32.mrf.mxu0
      %8606 = vmatprep.mubr.f32.mxu0 0.0
      %8607 = vmatmul.mubr.f32.gmra.mxu0 %v8410
      %v8608 = vpop.f32.mrf.mxu0
      %v8609 = vadd.f32 0.0, %v8608
      %v8610 = vpop.f32.mrf.mxu0
      %8611 = vmatprep.mubr.f32.mxu0 0.0
      %8612 = vmatmul.mubr.f32.gmra.mxu0 %v8413
      %v8613 = vpop.f32.mrf.mxu0
      %v8614 = vadd.f32 0.0, %v8613
      %v8615 = vpop.f32.mrf.mxu0
      %8616 = vmatprep.mubr.f32.mxu0 0.0
      %8617 = vmatmul.mubr.f32.gmra.mxu0 %v8416
      %v8618 = vpop.f32.mrf.mxu0
      %v8619 = vadd.f32 0.0, %v8618
      %v8620 = vpop.f32.mrf.mxu0
      %8621 = vmatprep.mubr.f32.mxu0 0.0
      %8622 = vmatmul.mubr.f32.gmra.mxu0 %v8419
      %v8623 = vpop.f32.mrf.mxu0
      %v8624 = vadd.f32 0.0, %v8623
      %v8625 = vpop.f32.mrf.mxu0
      %8626 = vmatprep.mubr.f32.mxu0 0.0
      %8627 = vmatmul.mubr.f32.gmra.mxu0 %v8422
      %v8628 = vpop.f32.mrf.mxu0
      %v8629 = vadd.f32 0.0, %v8628
      %v8630 = vpop.f32.mrf.mxu0
      %8631 = vmatprep.mubr.f32.mxu0 0.0
      %8632 = vmatmul.mubr.f32.gmra.mxu0 %v8425
      %v8633 = vpop.f32.mrf.mxu0
      %v8634 = vadd.f32 0.0, %v8633
      %v8635 = vpop.f32.mrf.mxu0
      %8636 = vmatprep.mubr.f32.mxu0 0.0
      %8637 = vmatmul.mubr.f32.gmra.mxu0 %v8428
      %v8638 = vpop.f32.mrf.mxu0
      %v8639 = vadd.f32 0.0, %v8638
      %v8640 = vpop.f32.mrf.mxu0
      %8641 = vmatprep.mubr.f32.mxu0 0.0
      %8642 = vmatmul.mubr.f32.gmra.mxu0 %v8431
      %v8643 = vpop.f32.mrf.mxu0
      %v8644 = vadd.f32 0.0, %v8643
      %v8645 = vpop.f32.mrf.mxu0
      %8646 = vmatprep.mubr.f32.mxu0 0.0
      %8647 = vmatmul.mubr.f32.gmra.mxu0 %v8434
      %v8648 = vpop.f32.mrf.mxu0
      %v8649 = vadd.f32 0.0, %v8648
      %v8650 = vpop.f32.mrf.mxu0
      %8651 = vmatprep.mubr.f32.mxu0 0.0
      %8652 = vmatmul.mubr.f32.gmra.mxu0 %v8437
      %v8653 = vpop.f32.mrf.mxu0
      %v8654 = vadd.f32 0.0, %v8653
      %v8655 = vpop.f32.mrf.mxu0
      %8656 = vmatprep.mubr.f32.mxu0 0.0
      %8657 = vmatmul.mubr.f32.gmra.mxu0 %v8440
      %v8658 = vpop.f32.mrf.mxu0
      %v8659 = vadd.f32 0.0, %v8658
      %v8660 = vpop.f32.mrf.mxu0
      %8661 = vmatprep.mubr.f32.mxu0 0.0
      %8662 = vmatmul.mubr.f32.gmra.mxu0 %v8443
      %v8663 = vpop.f32.mrf.mxu0
      %v8664 = vadd.f32 0.0, %v8663
      %v8665 = vpop.f32.mrf.mxu0
      %8666 = vmatprep.mubr.f32.mxu0 0.0
      %8667 = vmatmul.mubr.f32.gmra.mxu0 %v8446
      %v8668 = vpop.f32.mrf.mxu0
      %v8669 = vadd.f32 0.0, %v8668
      %v8670 = vpop.f32.mrf.mxu0
      %8671 = vmatprep.mubr.f32.mxu0 0.0
      %8672 = vmatmul.mubr.f32.gmra.mxu0 %v8449
      %v8673 = vpop.f32.mrf.mxu0
      %v8674 = vadd.f32 0.0, %v8673
      %v8675 = vpop.f32.mrf.mxu0
      %8676 = vmatprep.mubr.f32.mxu0 0.0
      %8677 = vmatmul.mubr.f32.gmra.mxu0 %v8452
      %v8678 = vpop.f32.mrf.mxu0
      %v8679 = vadd.f32 0.0, %v8678
      %v8680 = vpop.f32.mrf.mxu0
      %8681 = vmatprep.mubr.f32.mxu0 0.0
      %8682 = vmatmul.mubr.f32.gmra.mxu0 %v8455
      %v8683 = vpop.f32.mrf.mxu0
      %v8684 = vadd.f32 0.0, %v8683
      %v8685 = vpop.f32.mrf.mxu0
      %8686 = vmatprep.mubr.f32.mxu0 0.0
      %8687 = vmatmul.mubr.f32.gmra.mxu0 %v8458
      %v8688 = vpop.f32.mrf.mxu0
      %v8689 = vadd.f32 0.0, %v8688
      %v8690 = vpop.f32.mrf.mxu0
      %8691 = vmatprep.mubr.f32.mxu0 0.0
      %8692 = vmatmul.mubr.f32.gmra.mxu0 %v8461
      %v8693 = vpop.f32.mrf.mxu0
      %v8694 = vadd.f32 0.0, %v8693
      %v8695 = vpop.f32.mrf.mxu0
      %8696 = vmatprep.mubr.f32.mxu0 0.0
      %8697 = vmatmul.mubr.f32.gmra.mxu0 %v8464
      %v8698 = vpop.f32.mrf.mxu0
      %v8699 = vadd.f32 0.0, %v8698
      %v8700 = vpop.f32.mrf.mxu0
      %8701 = vmatprep.mubr.f32.mxu0 0.0
      %8702 = vmatmul.mubr.f32.gmra.mxu0 %v8467
      %v8703 = vpop.f32.mrf.mxu0
      %v8704 = vadd.f32 0.0, %v8703
      %v8705 = vpop.f32.mrf.mxu0
      %8706 = vmatprep.mubr.f32.mxu0 0.0
      %8707 = vmatmul.mubr.f32.gmra.mxu0 %v8470
      %v8708 = vpop.f32.mrf.mxu0
      %v8709 = vadd.f32 0.0, %v8708
      %v8710 = vpop.f32.mrf.mxu0
      %8711 = vmatprep.mubr.f32.mxu0 0.0
      %8712 = vmatmul.mubr.f32.gmra.mxu0 %v8473
      %v8713 = vpop.f32.mrf.mxu0
      %v8714 = vadd.f32 0.0, %v8713
      %v8715 = vpop.f32.mrf.mxu0
      %8716 = vmatprep.mubr.f32.mxu0 0.0
      %8717 = vmatmul.mubr.f32.gmra.mxu0 %v8476
      %v8718 = vpop.f32.mrf.mxu0
      %v8719 = vadd.f32 0.0, %v8718
      %v8720 = vpop.f32.mrf.mxu0
      %8721 = vmatprep.mubr.f32.mxu0 0.0
      %8722 = vmatmul.mubr.f32.gmra.mxu0 %v8479
      %v8723 = vpop.f32.mrf.mxu0
      %v8724 = vadd.f32 0.0, %v8723
      %v8725 = vpop.f32.mrf.mxu0
      %8726 = vmatprep.mubr.f32.mxu0 0.0
      %8727 = vmatmul.mubr.f32.gmra.mxu0 %v8482
      %v8728 = vpop.f32.mrf.mxu0
      %v8729 = vadd.f32 0.0, %v8728
      %v8730 = vpop.f32.mrf.mxu0
      %8731 = vmatprep.mubr.f32.mxu0 0.0
      %8732 = vmatmul.mubr.f32.gmra.mxu0 %v8485
      %v8733 = vpop.f32.mrf.mxu0
      %v8734 = vadd.f32 0.0, %v8733
      %v8735 = vpop.f32.mrf.mxu0
      %8736 = vmatprep.mubr.f32.mxu0 0.0
      %8737 = vmatmul.mubr.f32.gmra.mxu0 %v8488
      %v8738 = vpop.f32.mrf.mxu0
      %v8739 = vadd.f32 0.0, %v8738
      %v8740 = vpop.f32.mrf.mxu0
      %8741 = vmatprep.mubr.f32.mxu0 0.0
      %8742 = vmatmul.mubr.f32.gmra.mxu0 %v8491
      %v8743 = vpop.f32.mrf.mxu0
      %v8744 = vadd.f32 0.0, %v8743
      %v8745 = vpop.f32.mrf.mxu0
      %8746 = vmatprep.mubr.f32.mxu0 0.0
      %8747 = vmatmul.mubr.f32.gmra.mxu0 %v8494
      %v8748 = vpop.f32.mrf.mxu0
      %v8749 = vadd.f32 0.0, %v8748
      %v8750 = vpop.f32.mrf.mxu0
      %8751 = vmatprep.mubr.f32.mxu0 0.0
      %8752 = vmatmul.mubr.f32.gmra.mxu0 %v8497
      %v8753 = vpop.f32.mrf.mxu0
      %v8754 = vadd.f32 0.0, %v8753
      %v8755 = vpop.f32.mrf.mxu0
      %8756 = vmatprep.mubr.f32.mxu0 0.0
      %8757 = vmatmul.mubr.f32.gmra.mxu0 %v8500
      %v8758 = vpop.f32.mrf.mxu0
      %v8759 = vadd.f32 0.0, %v8758
      %v8760 = vpop.f32.mrf.mxu0
      %8761 = vmatprep.mubr.f32.mxu0 0.0
      %8762 = vmatmul.mubr.f32.gmra.mxu0 %v8503
      %v8763 = vpop.f32.mrf.mxu0
      %v8764 = vpop.f32.mrf.mxu0
      %8765 = vmatprep.mubr.f32.mxu0 0.0
      %8766 = vmatmul.mubr.f32.gmra.mxu0 %v8506
      %v8767 = vpop.f32.mrf.mxu0
      %v8768 = vpop.f32.mrf.mxu0
      %8769 = vmatprep.mubr.f32.mxu0 0.0
      %8770 = vmatmul.mubr.f32.gmra.mxu0 %v8509
      %v8771 = vpop.f32.mrf.mxu0
      %v8772 = vpop.f32.mrf.mxu0
      %8773 = vmatprep.mubr.f32.mxu0 0.0
      %8774 = vmatmul.mubr.f32.gmra.mxu0 %v8512
      %v8775 = vpop.f32.mrf.mxu0
      %v8776 = vpop.f32.mrf.mxu0
      %8777 = vmatprep.mubr.f32.mxu0 0.0
      %8778 = vmatmul.mubr.f32.gmra.mxu0 %v8515
      %v8779 = vpop.f32.mrf.mxu0
      %v8780 = vpop.f32.mrf.mxu0
      %8781 = vdwg.mxu0
      %v8782 = vadd.f32 %v8315, %v8584
      %v8783 = vadd.f32 %v8316, %v8589
      %v8784 = vadd.f32 %v8317, %v8594
      %v8785 = vadd.f32 %v8318, %v8599
      %v8786 = vadd.f32 %v8319, %v8604
      %v8787 = vadd.f32 %v8320, %v8609
      %v8788 = vadd.f32 %v8321, %v8614
      %v8789 = vadd.f32 %v8322, %v8619
      %v8790 = vadd.f32 %v8323, %v8624
      %v8791 = vadd.f32 %v8324, %v8629
      %v8792 = vadd.f32 %v8325, %v8634
      %v8793 = vadd.f32 %v8326, %v8639
      %v8794 = vadd.f32 %v8327, %v8644
      %v8795 = vadd.f32 %v8328, %v8649
      %v8796 = vadd.f32 %v8329, %v8654
      %v8797 = vadd.f32 %v8330, %v8659
      %v8798 = vadd.f32 %v8331, %v8664
      %v8799 = vadd.f32 %v8332, %v8669
      %v8800 = vadd.f32 %v8333, %v8674
      %v8801 = vadd.f32 %v8334, %v8679
      %v8802 = vadd.f32 %v8335, %v8684
      %v8803 = vadd.f32 %v8336, %v8689
      %v8804 = vadd.f32 %v8337, %v8694
      %v8805 = vadd.f32 %v8338, %v8699
      %v8806 = vadd.f32 %v8339, %v8704
      %v8807 = vadd.f32 %v8340, %v8709
      %v8808 = vadd.f32 %v8341, %v8714
      %v8809 = vadd.f32 %v8342, %v8719
      %v8810 = vadd.f32 %v8343, %v8724
      %v8811 = vadd.f32 %v8344, %v8729
      %v8812 = vadd.f32 %v8345, %v8734
      %v8813 = vadd.f32 %v8346, %v8739
      %v8814 = vadd.f32 %v8347, %v8744
      %v8815 = vadd.f32 %v8348, %v8749
      %v8816 = vadd.f32 %v8349, %v8754
      %v8817 = vadd.f32 %v8350, %v8759
      %v8818 = vld [vmem:[#allocation3 + $0x26] sm:$0xff]
      %v8819 = vld [vmem:[#allocation3 + $0x2e] sm:$0xff]
      %v8820 = vld [vmem:[#allocation3 + $0x36] sm:$0xff]
      %v8821 = vld [vmem:[#allocation3 + $0x3e] sm:$0xff]
      %v8822 = vld [vmem:[#allocation3 + $0x46] sm:$0xff]
      %v8823 = vld [vmem:[#allocation3 + $0x4e] sm:$0xff]
      %v8824 = vld [vmem:[#allocation3 + $0x56] sm:$0xff]
      %v8825 = vld [vmem:[#allocation3 + $0x5e] sm:$0xff]
      %v8826 = vld [vmem:[#allocation3 + $0x66] sm:$0xff]
      %v8827 = vld [vmem:[#allocation3 + $0x6e] sm:$0xff]
      %v8828 = vld [vmem:[#allocation3 + $0x76] sm:$0xff]
      %v8829 = vld [vmem:[#allocation3 + $0x7e] sm:$0xff]
      %v8830 = vld [vmem:[#allocation3 + $0x86] sm:$0xff]
      %v8831 = vld [vmem:[#allocation3 + $0x8e] sm:$0xff]
      %v8832 = vld [vmem:[#allocation3 + $0x96] sm:$0xff]
      %v8833 = vld [vmem:[#allocation3 + $0x9e] sm:$0xff]
      %v8834 = vld [vmem:[#allocation3 + $0xa6] sm:$0xff]
      %v8835 = vld [vmem:[#allocation3 + $0xae] sm:$0xff]
      %v8836 = vld [vmem:[#allocation3 + $0xb6] sm:$0xff]
      %v8837 = vld [vmem:[#allocation3 + $0xbe] sm:$0xff]
      %v8838 = vld [vmem:[#allocation3 + $0xc6] sm:$0xff]
      %v8839 = vld [vmem:[#allocation3 + $0xce] sm:$0xff]
      %v8840 = vld [vmem:[#allocation3 + $0xd6] sm:$0xff]
      %v8841 = vld [vmem:[#allocation3 + $0xde] sm:$0xff]
      %v8842 = vld [vmem:[#allocation3 + $0xe6] sm:$0xff]
      %v8843 = vld [vmem:[#allocation3 + $0xee] sm:$0xff]
      %v8844 = vld [vmem:[#allocation3 + $0xf6] sm:$0xff]
      %v8845 = vld [vmem:[#allocation3 + $0xfe] sm:$0xff]
      %v8846 = vld [vmem:[#allocation3 + $0x106] sm:$0xff]
      %v8847 = vld [vmem:[#allocation3 + $0x10e] sm:$0xff]
      %v8848 = vld [vmem:[#allocation3 + $0x116] sm:$0xff]
      %v8849 = vld [vmem:[#allocation3 + $0x11e] sm:$0xff]
      %v8850 = vld [vmem:[#allocation3 + $0x126] sm:$0xff]
      %v8851 = vld [vmem:[#allocation3 + $0x12e] sm:$0xff]
      %v8852 = vld [vmem:[#allocation3 + $0x136] sm:$0xff]
      %v8853 = vld [vmem:[#allocation3 + $0x13e] sm:$0xff]
      %v8854 = vld [vmem:[#allocation3 + $0x146] sm:$0xff]
      %v8855 = vld [vmem:[#allocation3 + $0x14e] sm:$0xff]
      %v8856 = vld [vmem:[#allocation3 + $0x156] sm:$0xff]
      %v8857 = vld [vmem:[#allocation3 + $0x15e] sm:$0xff]
      %v8858 = vld [vmem:[#allocation3 + $0x166] sm:$0xf]
      %s8859 = scalar_lea.vmem %s4, 64
      %v8860 = vld [vmem:[%s8859] sm:$0xff]
      %v8862 = vsel %vm5105, %v8818, 0
      %v8865 = vsel %vm5105, %v8819, 0
      %v8868 = vsel %vm5105, %v8820, 0
      %v8871 = vsel %vm5105, %v8821, 0
      %v8874 = vsel %vm5105, %v8822, 0
      %v8877 = vsel %vm5105, %v8823, 0
      %v8880 = vsel %vm5105, %v8824, 0
      %v8883 = vsel %vm5105, %v8825, 0
      %v8886 = vsel %vm5105, %v8826, 0
      %v8889 = vsel %vm5105, %v8827, 0
      %v8892 = vsel %vm5105, %v8828, 0
      %v8895 = vsel %vm5105, %v8829, 0
      %v8898 = vsel %vm5105, %v8830, 0
      %v8901 = vsel %vm5105, %v8831, 0
      %v8904 = vsel %vm5105, %v8832, 0
      %v8907 = vsel %vm5105, %v8833, 0
      %v8910 = vsel %vm5105, %v8834, 0
      %v8913 = vsel %vm5105, %v8835, 0
      %v8916 = vsel %vm5105, %v8836, 0
      %v8919 = vsel %vm5105, %v8837, 0
      %v8922 = vsel %vm5105, %v8838, 0
      %v8925 = vsel %vm5105, %v8839, 0
      %v8928 = vsel %vm5105, %v8840, 0
      %v8931 = vsel %vm5105, %v8841, 0
      %v8934 = vsel %vm5105, %v8842, 0
      %v8937 = vsel %vm5105, %v8843, 0
      %v8940 = vsel %vm5105, %v8844, 0
      %v8943 = vsel %vm5105, %v8845, 0
      %v8946 = vsel %vm5105, %v8846, 0
      %v8949 = vsel %vm5105, %v8847, 0
      %v8952 = vsel %vm5105, %v8848, 0
      %v8955 = vsel %vm5105, %v8849, 0
      %v8958 = vsel %vm5105, %v8850, 0
      %v8961 = vsel %vm5105, %v8851, 0
      %v8964 = vsel %vm5105, %v8852, 0
      %v8967 = vsel %vm5105, %v8853, 0
      %v8970 = vsel %vm5105, %v8854, 0
      %v8973 = vsel %vm5105, %v8855, 0
      %v8976 = vsel %vm5105, %v8856, 0
      %v8979 = vsel %vm5105, %v8857, 0
      %v8982 = vsel %vm5105, %v8858, 0
      %8984 = vmatprep.subr.mxu0 0.0
      %8985 = vmatpush1.msra.mxu0 0.0
      %8986 = vmatprep.subr.mxu0 0.0
      %8987 = vmatpush1.msra.mxu0 0.0
      %8988 = vmatprep.subr.mxu0 0.0
      %8989 = vmatpush1.msra.mxu0 0.0
      %8990 = vmatprep.subr.mxu0 0.0
      %8991 = vmatpush1.msra.mxu0 0.0
      %8992 = vmatprep.subr.mxu0 0.0
      %8993 = vmatpush1.msra.mxu0 0.0
      %8994 = vmatprep.subr.mxu0 0.0
      %8995 = vmatpush1.msra.mxu0 0.0
      %8996 = vmatprep.subr.mxu0 0.0
      %8997 = vmatpush1.msra.mxu0 0.0
      %8998 = vmatprep.subr.mxu0 0.0
      %8999 = vmatpush1.msra.mxu0 0.0
      %9000 = vmatprep.subr.mxu0 0.0
      %9001 = vmatpush1.msra.mxu0 0.0
      %9002 = vmatprep.subr.mxu0 0.0
      %9003 = vmatpush1.msra.mxu0 0.0
      %9004 = vmatprep.subr.mxu0 0.0
      %9005 = vmatpush1.msra.mxu0 0.0
      %9006 = vmatprep.subr.mxu0 0.0
      %9007 = vmatpush1.msra.mxu0 0.0
      %9008 = vmatprep.subr.mxu0 0.0
      %9009 = vmatpush1.msra.mxu0 0.0
      %9010 = vmatprep.subr.mxu0 0.0
      %9011 = vmatpush1.msra.mxu0 0.0
      %9012 = vmatprep.subr.mxu0 0.0
      %9013 = vmatpush1.msra.mxu0 0.0
      %9014 = vmatprep.subr.mxu0 0.0
      %9015 = vmatpush1.msra.mxu0 %v8860
      %9016 = vmatprep.subr.mxu0 0.0
      %9017 = vmatpush2.msra.mxu0 0.0
      %9018 = vmatprep.subr.mxu0 0.0
      %9019 = vmatpush2.msra.mxu0 0.0
      %9020 = vmatprep.subr.mxu0 0.0
      %9021 = vmatpush2.msra.mxu0 0.0
      %9022 = vmatprep.subr.mxu0 0.0
      %9023 = vmatpush2.msra.mxu0 0.0
      %9024 = vmatprep.subr.mxu0 0.0
      %9025 = vmatpush2.msra.mxu0 0.0
      %9026 = vmatprep.subr.mxu0 0.0
      %9027 = vmatpush2.msra.mxu0 0.0
      %9028 = vmatprep.subr.mxu0 0.0
      %9029 = vmatpush2.msra.mxu0 0.0
      %9030 = vmatprep.subr.mxu0 0.0
      %9031 = vmatpush2.msra.mxu0 0.0
      %9032 = vmatprep.subr.mxu0 0.0
      %9033 = vmatpush2.msra.mxu0 0.0
      %9034 = vmatprep.subr.mxu0 0.0
      %9035 = vmatpush2.msra.mxu0 0.0
      %9036 = vmatprep.subr.mxu0 0.0
      %9037 = vmatpush2.msra.mxu0 0.0
      %9038 = vmatprep.subr.mxu0 0.0
      %9039 = vmatpush2.msra.mxu0 0.0
      %9040 = vmatprep.subr.mxu0 0.0
      %9041 = vmatpush2.msra.mxu0 0.0
      %9042 = vmatprep.subr.mxu0 0.0
      %9043 = vmatpush2.msra.mxu0 0.0
      %9044 = vmatprep.subr.mxu0 0.0
      %9045 = vmatpush2.msra.mxu0 0.0
      %9046 = vmatprep.subr.mxu0 0.0
      %9047 = vmatpush2.msra.mxu0 0.0
      %9048 = vmatprep.mubr.f32.mxu0 0.0
      %9049 = vmatmul.mubr.f32.gmra.mxu0 %v8862
      %v9050 = vpop.f32.mrf.mxu0
      %v9051 = vadd.f32 0.0, %v9050
      %v9052 = vpop.f32.mrf.mxu0
      %9053 = vmatprep.mubr.f32.mxu0 0.0
      %9054 = vmatmul.mubr.f32.gmra.mxu0 %v8865
      %v9055 = vpop.f32.mrf.mxu0
      %v9056 = vadd.f32 0.0, %v9055
      %v9057 = vpop.f32.mrf.mxu0
      %9058 = vmatprep.mubr.f32.mxu0 0.0
      %9059 = vmatmul.mubr.f32.gmra.mxu0 %v8868
      %v9060 = vpop.f32.mrf.mxu0
      %v9061 = vadd.f32 0.0, %v9060
      %v9062 = vpop.f32.mrf.mxu0
      %9063 = vmatprep.mubr.f32.mxu0 0.0
      %9064 = vmatmul.mubr.f32.gmra.mxu0 %v8871
      %v9065 = vpop.f32.mrf.mxu0
      %v9066 = vadd.f32 0.0, %v9065
      %v9067 = vpop.f32.mrf.mxu0
      %9068 = vmatprep.mubr.f32.mxu0 0.0
      %9069 = vmatmul.mubr.f32.gmra.mxu0 %v8874
      %v9070 = vpop.f32.mrf.mxu0
      %v9071 = vadd.f32 0.0, %v9070
      %v9072 = vpop.f32.mrf.mxu0
      %9073 = vmatprep.mubr.f32.mxu0 0.0
      %9074 = vmatmul.mubr.f32.gmra.mxu0 %v8877
      %v9075 = vpop.f32.mrf.mxu0
      %v9076 = vadd.f32 0.0, %v9075
      %v9077 = vpop.f32.mrf.mxu0
      %9078 = vmatprep.mubr.f32.mxu0 0.0
      %9079 = vmatmul.mubr.f32.gmra.mxu0 %v8880
      %v9080 = vpop.f32.mrf.mxu0
      %v9081 = vadd.f32 0.0, %v9080
      %v9082 = vpop.f32.mrf.mxu0
      %9083 = vmatprep.mubr.f32.mxu0 0.0
      %9084 = vmatmul.mubr.f32.gmra.mxu0 %v8883
      %v9085 = vpop.f32.mrf.mxu0
      %v9086 = vadd.f32 0.0, %v9085
      %v9087 = vpop.f32.mrf.mxu0
      %9088 = vmatprep.mubr.f32.mxu0 0.0
      %9089 = vmatmul.mubr.f32.gmra.mxu0 %v8886
      %v9090 = vpop.f32.mrf.mxu0
      %v9091 = vadd.f32 0.0, %v9090
      %v9092 = vpop.f32.mrf.mxu0
      %9093 = vmatprep.mubr.f32.mxu0 0.0
      %9094 = vmatmul.mubr.f32.gmra.mxu0 %v8889
      %v9095 = vpop.f32.mrf.mxu0
      %v9096 = vadd.f32 0.0, %v9095
      %v9097 = vpop.f32.mrf.mxu0
      %9098 = vmatprep.mubr.f32.mxu0 0.0
      %9099 = vmatmul.mubr.f32.gmra.mxu0 %v8892
      %v9100 = vpop.f32.mrf.mxu0
      %v9101 = vadd.f32 0.0, %v9100
      %v9102 = vpop.f32.mrf.mxu0
      %9103 = vmatprep.mubr.f32.mxu0 0.0
      %9104 = vmatmul.mubr.f32.gmra.mxu0 %v8895
      %v9105 = vpop.f32.mrf.mxu0
      %v9106 = vadd.f32 0.0, %v9105
      %v9107 = vpop.f32.mrf.mxu0
      %9108 = vmatprep.mubr.f32.mxu0 0.0
      %9109 = vmatmul.mubr.f32.gmra.mxu0 %v8898
      %v9110 = vpop.f32.mrf.mxu0
      %v9111 = vadd.f32 0.0, %v9110
      %v9112 = vpop.f32.mrf.mxu0
      %9113 = vmatprep.mubr.f32.mxu0 0.0
      %9114 = vmatmul.mubr.f32.gmra.mxu0 %v8901
      %v9115 = vpop.f32.mrf.mxu0
      %v9116 = vadd.f32 0.0, %v9115
      %v9117 = vpop.f32.mrf.mxu0
      %9118 = vmatprep.mubr.f32.mxu0 0.0
      %9119 = vmatmul.mubr.f32.gmra.mxu0 %v8904
      %v9120 = vpop.f32.mrf.mxu0
      %v9121 = vadd.f32 0.0, %v9120
      %v9122 = vpop.f32.mrf.mxu0
      %9123 = vmatprep.mubr.f32.mxu0 0.0
      %9124 = vmatmul.mubr.f32.gmra.mxu0 %v8907
      %v9125 = vpop.f32.mrf.mxu0
      %v9126 = vadd.f32 0.0, %v9125
      %v9127 = vpop.f32.mrf.mxu0
      %9128 = vmatprep.mubr.f32.mxu0 0.0
      %9129 = vmatmul.mubr.f32.gmra.mxu0 %v8910
      %v9130 = vpop.f32.mrf.mxu0
      %v9131 = vadd.f32 0.0, %v9130
      %v9132 = vpop.f32.mrf.mxu0
      %9133 = vmatprep.mubr.f32.mxu0 0.0
      %9134 = vmatmul.mubr.f32.gmra.mxu0 %v8913
      %v9135 = vpop.f32.mrf.mxu0
      %v9136 = vadd.f32 0.0, %v9135
      %v9137 = vpop.f32.mrf.mxu0
      %9138 = vmatprep.mubr.f32.mxu0 0.0
      %9139 = vmatmul.mubr.f32.gmra.mxu0 %v8916
      %v9140 = vpop.f32.mrf.mxu0
      %v9141 = vadd.f32 0.0, %v9140
      %v9142 = vpop.f32.mrf.mxu0
      %9143 = vmatprep.mubr.f32.mxu0 0.0
      %9144 = vmatmul.mubr.f32.gmra.mxu0 %v8919
      %v9145 = vpop.f32.mrf.mxu0
      %v9146 = vadd.f32 0.0, %v9145
      %v9147 = vpop.f32.mrf.mxu0
      %9148 = vmatprep.mubr.f32.mxu0 0.0
      %9149 = vmatmul.mubr.f32.gmra.mxu0 %v8922
      %v9150 = vpop.f32.mrf.mxu0
      %v9151 = vadd.f32 0.0, %v9150
      %v9152 = vpop.f32.mrf.mxu0
      %9153 = vmatprep.mubr.f32.mxu0 0.0
      %9154 = vmatmul.mubr.f32.gmra.mxu0 %v8925
      %v9155 = vpop.f32.mrf.mxu0
      %v9156 = vadd.f32 0.0, %v9155
      %v9157 = vpop.f32.mrf.mxu0
      %9158 = vmatprep.mubr.f32.mxu0 0.0
      %9159 = vmatmul.mubr.f32.gmra.mxu0 %v8928
      %v9160 = vpop.f32.mrf.mxu0
      %v9161 = vadd.f32 0.0, %v9160
      %v9162 = vpop.f32.mrf.mxu0
      %9163 = vmatprep.mubr.f32.mxu0 0.0
      %9164 = vmatmul.mubr.f32.gmra.mxu0 %v8931
      %v9165 = vpop.f32.mrf.mxu0
      %v9166 = vadd.f32 0.0, %v9165
      %v9167 = vpop.f32.mrf.mxu0
      %9168 = vmatprep.mubr.f32.mxu0 0.0
      %9169 = vmatmul.mubr.f32.gmra.mxu0 %v8934
      %v9170 = vpop.f32.mrf.mxu0
      %v9171 = vadd.f32 0.0, %v9170
      %v9172 = vpop.f32.mrf.mxu0
      %9173 = vmatprep.mubr.f32.mxu0 0.0
      %9174 = vmatmul.mubr.f32.gmra.mxu0 %v8937
      %v9175 = vpop.f32.mrf.mxu0
      %v9176 = vadd.f32 0.0, %v9175
      %v9177 = vpop.f32.mrf.mxu0
      %9178 = vmatprep.mubr.f32.mxu0 0.0
      %9179 = vmatmul.mubr.f32.gmra.mxu0 %v8940
      %v9180 = vpop.f32.mrf.mxu0
      %v9181 = vadd.f32 0.0, %v9180
      %v9182 = vpop.f32.mrf.mxu0
      %9183 = vmatprep.mubr.f32.mxu0 0.0
      %9184 = vmatmul.mubr.f32.gmra.mxu0 %v8943
      %v9185 = vpop.f32.mrf.mxu0
      %v9186 = vadd.f32 0.0, %v9185
      %v9187 = vpop.f32.mrf.mxu0
      %9188 = vmatprep.mubr.f32.mxu0 0.0
      %9189 = vmatmul.mubr.f32.gmra.mxu0 %v8946
      %v9190 = vpop.f32.mrf.mxu0
      %v9191 = vadd.f32 0.0, %v9190
      %v9192 = vpop.f32.mrf.mxu0
      %9193 = vmatprep.mubr.f32.mxu0 0.0
      %9194 = vmatmul.mubr.f32.gmra.mxu0 %v8949
      %v9195 = vpop.f32.mrf.mxu0
      %v9196 = vadd.f32 0.0, %v9195
      %v9197 = vpop.f32.mrf.mxu0
      %9198 = vmatprep.mubr.f32.mxu0 0.0
      %9199 = vmatmul.mubr.f32.gmra.mxu0 %v8952
      %v9200 = vpop.f32.mrf.mxu0
      %v9201 = vadd.f32 0.0, %v9200
      %v9202 = vpop.f32.mrf.mxu0
      %9203 = vmatprep.mubr.f32.mxu0 0.0
      %9204 = vmatmul.mubr.f32.gmra.mxu0 %v8955
      %v9205 = vpop.f32.mrf.mxu0
      %v9206 = vadd.f32 0.0, %v9205
      %v9207 = vpop.f32.mrf.mxu0
      %9208 = vmatprep.mubr.f32.mxu0 0.0
      %9209 = vmatmul.mubr.f32.gmra.mxu0 %v8958
      %v9210 = vpop.f32.mrf.mxu0
      %v9211 = vadd.f32 0.0, %v9210
      %v9212 = vpop.f32.mrf.mxu0
      %9213 = vmatprep.mubr.f32.mxu0 0.0
      %9214 = vmatmul.mubr.f32.gmra.mxu0 %v8961
      %v9215 = vpop.f32.mrf.mxu0
      %v9216 = vadd.f32 0.0, %v9215
      %v9217 = vpop.f32.mrf.mxu0
      %9218 = vmatprep.mubr.f32.mxu0 0.0
      %9219 = vmatmul.mubr.f32.gmra.mxu0 %v8964
      %v9220 = vpop.f32.mrf.mxu0
      %v9221 = vadd.f32 0.0, %v9220
      %v9222 = vpop.f32.mrf.mxu0
      %9223 = vmatprep.mubr.f32.mxu0 0.0
      %9224 = vmatmul.mubr.f32.gmra.mxu0 %v8967
      %v9225 = vpop.f32.mrf.mxu0
      %v9226 = vadd.f32 0.0, %v9225
      %v9227 = vpop.f32.mrf.mxu0
      %9228 = vmatprep.mubr.f32.mxu0 0.0
      %9229 = vmatmul.mubr.f32.gmra.mxu0 %v8970
      %v9230 = vpop.f32.mrf.mxu0
      %v9231 = vpop.f32.mrf.mxu0
      %9232 = vmatprep.mubr.f32.mxu0 0.0
      %9233 = vmatmul.mubr.f32.gmra.mxu0 %v8973
      %v9234 = vpop.f32.mrf.mxu0
      %v9235 = vpop.f32.mrf.mxu0
      %9236 = vmatprep.mubr.f32.mxu0 0.0
      %9237 = vmatmul.mubr.f32.gmra.mxu0 %v8976
      %v9238 = vpop.f32.mrf.mxu0
      %v9239 = vpop.f32.mrf.mxu0
      %9240 = vmatprep.mubr.f32.mxu0 0.0
      %9241 = vmatmul.mubr.f32.gmra.mxu0 %v8979
      %v9242 = vpop.f32.mrf.mxu0
      %v9243 = vpop.f32.mrf.mxu0
      %9244 = vmatprep.mubr.f32.mxu0 0.0
      %9245 = vmatmul.mubr.f32.gmra.mxu0 %v8982
      %v9246 = vpop.f32.mrf.mxu0
      %v9247 = vpop.f32.mrf.mxu0
      %9248 = vdwg.mxu0
      %v9249 = vadd.f32 %v8782, %v9051
      %v9250 = vadd.f32 %v8783, %v9056
      %v9251 = vadd.f32 %v8784, %v9061
      %v9252 = vadd.f32 %v8785, %v9066
      %v9253 = vadd.f32 %v8786, %v9071
      %v9254 = vadd.f32 %v8787, %v9076
      %v9255 = vadd.f32 %v8788, %v9081
      %v9256 = vadd.f32 %v8789, %v9086
      %v9257 = vadd.f32 %v8790, %v9091
      %v9258 = vadd.f32 %v8791, %v9096
      %v9259 = vadd.f32 %v8792, %v9101
      %v9260 = vadd.f32 %v8793, %v9106
      %v9261 = vadd.f32 %v8794, %v9111
      %v9262 = vadd.f32 %v8795, %v9116
      %v9263 = vadd.f32 %v8796, %v9121
      %v9264 = vadd.f32 %v8797, %v9126
      %v9265 = vadd.f32 %v8798, %v9131
      %v9266 = vadd.f32 %v8799, %v9136
      %v9267 = vadd.f32 %v8800, %v9141
      %v9268 = vadd.f32 %v8801, %v9146
      %v9269 = vadd.f32 %v8802, %v9151
      %v9270 = vadd.f32 %v8803, %v9156
      %v9271 = vadd.f32 %v8804, %v9161
      %v9272 = vadd.f32 %v8805, %v9166
      %v9273 = vadd.f32 %v8806, %v9171
      %v9274 = vadd.f32 %v8807, %v9176
      %v9275 = vadd.f32 %v8808, %v9181
      %v9276 = vadd.f32 %v8809, %v9186
      %v9277 = vadd.f32 %v8810, %v9191
      %v9278 = vadd.f32 %v8811, %v9196
      %v9279 = vadd.f32 %v8812, %v9201
      %v9280 = vadd.f32 %v8813, %v9206
      %v9281 = vadd.f32 %v8814, %v9211
      %v9282 = vadd.f32 %v8815, %v9216
      %v9283 = vadd.f32 %v8816, %v9221
      %v9284 = vadd.f32 %v8817, %v9226
      %v9285 = vld [vmem:[%s5] sm:$0x1]
      %v9287 = vlaneseq
      %v9288 = vshrl.u32 %v9287, 7
      %v9289 = vsub.s32 0, %v9288
      %v9290 = vrot.slane %v9285, %v9289
      %v9292 = vmul.f32 %v9249, %v9290
      %v9293 = vmul.f32 %v9250, %v9290
      %v9294 = vmul.f32 %v9251, %v9290
      %v9295 = vmul.f32 %v9252, %v9290
      %v9296 = vmul.f32 %v9253, %v9290
      %v9297 = vmul.f32 %v9254, %v9290
      %v9298 = vmul.f32 %v9255, %v9290
      %v9299 = vmul.f32 %v9256, %v9290
      %v9300 = vmul.f32 %v9257, %v9290
      %v9301 = vmul.f32 %v9258, %v9290
      %v9302 = vmul.f32 %v9259, %v9290
      %v9303 = vmul.f32 %v9260, %v9290
      %v9304 = vmul.f32 %v9261, %v9290
      %v9305 = vmul.f32 %v9262, %v9290
      %v9306 = vmul.f32 %v9263, %v9290
      %v9307 = vmul.f32 %v9264, %v9290
      %v9308 = vmul.f32 %v9265, %v9290
      %v9309 = vmul.f32 %v9266, %v9290
      %v9310 = vmul.f32 %v9267, %v9290
      %v9311 = vmul.f32 %v9268, %v9290
      %v9312 = vmul.f32 %v9269, %v9290
      %v9313 = vmul.f32 %v9270, %v9290
      %v9314 = vmul.f32 %v9271, %v9290
      %v9315 = vmul.f32 %v9272, %v9290
      %v9316 = vmul.f32 %v9273, %v9290
      %v9317 = vmul.f32 %v9274, %v9290
      %v9318 = vmul.f32 %v9275, %v9290
      %v9319 = vmul.f32 %v9276, %v9290
      %v9320 = vmul.f32 %v9277, %v9290
      %v9321 = vmul.f32 %v9278, %v9290
      %v9322 = vmul.f32 %v9279, %v9290
      %v9323 = vmul.f32 %v9280, %v9290
      %v9324 = vmul.f32 %v9281, %v9290
      %v9325 = vmul.f32 %v9282, %v9290
      %v9326 = vmul.f32 %v9283, %v9290
      %v9327 = vmul.f32 %v9284, %v9290
      %v9328 = vld [vmem:[%s6] sm:$0x1]
      %v9330 = vlaneseq
      %v9331 = vshrl.u32 %v9330, 7
      %v9332 = vsub.s32 0, %v9331
      %v9333 = vrot.slane %v9328, %v9332
      %v9335 = vadd.f32 %v9292, %v9333
      %v9336 = vadd.f32 %v9293, %v9333
      %v9337 = vadd.f32 %v9294, %v9333
      %v9338 = vadd.f32 %v9295, %v9333
      %v9339 = vadd.f32 %v9296, %v9333
      %v9340 = vadd.f32 %v9297, %v9333
      %v9341 = vadd.f32 %v9298, %v9333
      %v9342 = vadd.f32 %v9299, %v9333
      %v9343 = vadd.f32 %v9300, %v9333
      %v9344 = vadd.f32 %v9301, %v9333
      %v9345 = vadd.f32 %v9302, %v9333
      %v9346 = vadd.f32 %v9303, %v9333
      %v9347 = vadd.f32 %v9304, %v9333
      %v9348 = vadd.f32 %v9305, %v9333
      %v9349 = vadd.f32 %v9306, %v9333
      %v9350 = vadd.f32 %v9307, %v9333
      %v9351 = vadd.f32 %v9308, %v9333
      %v9352 = vadd.f32 %v9309, %v9333
      %v9353 = vadd.f32 %v9310, %v9333
      %v9354 = vadd.f32 %v9311, %v9333
      %v9355 = vadd.f32 %v9312, %v9333
      %v9356 = vadd.f32 %v9313, %v9333
      %v9357 = vadd.f32 %v9314, %v9333
      %v9358 = vadd.f32 %v9315, %v9333
      %v9359 = vadd.f32 %v9316, %v9333
      %v9360 = vadd.f32 %v9317, %v9333
      %v9361 = vadd.f32 %v9318, %v9333
      %v9362 = vadd.f32 %v9319, %v9333
      %v9363 = vadd.f32 %v9320, %v9333
      %v9364 = vadd.f32 %v9321, %v9333
      %v9365 = vadd.f32 %v9322, %v9333
      %v9366 = vadd.f32 %v9323, %v9333
      %v9367 = vadd.f32 %v9324, %v9333
      %v9368 = vadd.f32 %v9325, %v9333
      %v9369 = vadd.f32 %v9326, %v9333
      %v9370 = vadd.f32 %v9327, %v9333
      %v9371 = vmax.f32 %v9335, 0.0
      %v9372 = vmax.f32 %v9336, 0.0
      %v9373 = vmax.f32 %v9337, 0.0
      %v9374 = vmax.f32 %v9338, 0.0
      %v9375 = vmax.f32 %v9339, 0.0
      %v9376 = vmax.f32 %v9340, 0.0
      %v9377 = vmax.f32 %v9341, 0.0
      %v9378 = vmax.f32 %v9342, 0.0
      %v9379 = vmax.f32 %v9343, 0.0
      %v9380 = vmax.f32 %v9344, 0.0
      %v9381 = vmax.f32 %v9345, 0.0
      %v9382 = vmax.f32 %v9346, 0.0
      %v9383 = vmax.f32 %v9347, 0.0
      %v9384 = vmax.f32 %v9348, 0.0
      %v9385 = vmax.f32 %v9349, 0.0
      %v9386 = vmax.f32 %v9350, 0.0
      %v9387 = vmax.f32 %v9351, 0.0
      %v9388 = vmax.f32 %v9352, 0.0
      %v9389 = vmax.f32 %v9353, 0.0
      %v9390 = vmax.f32 %v9354, 0.0
      %v9391 = vmax.f32 %v9355, 0.0
      %v9392 = vmax.f32 %v9356, 0.0
      %v9393 = vmax.f32 %v9357, 0.0
      %v9394 = vmax.f32 %v9358, 0.0
      %v9395 = vmax.f32 %v9359, 0.0
      %v9396 = vmax.f32 %v9360, 0.0
      %v9397 = vmax.f32 %v9361, 0.0
      %v9398 = vmax.f32 %v9362, 0.0
      %v9399 = vmax.f32 %v9363, 0.0
      %v9400 = vmax.f32 %v9364, 0.0
      %v9401 = vmax.f32 %v9365, 0.0
      %v9402 = vmax.f32 %v9366, 0.0
      %v9403 = vmax.f32 %v9367, 0.0
      %v9404 = vmax.f32 %v9368, 0.0
      %v9405 = vmax.f32 %v9369, 0.0
      %v9406 = vmax.f32 %v9370, 0.0
      %9407 = vst.msk [vmem:[%s305] sm:$0xff] %vm5105, %v9371
      %9408 = vst.msk [vmem:[%s305 + $0x8] sm:$0xff] %vm5105, %v9372
      %vm9409 = vcmask 64514
      %9410 = vst.msk [vmem:[%s305 + $0xe] sm:$0xfc] %vm9409, %v9373
      %9411 = vst.msk [vmem:[%s305 + $0x16] sm:$0xff] %vm5105, %v9374
      %vm9412 = vcmask 58368
      %9413 = vst.msk [vmem:[%s305 + $0x1e] sm:$0x3] %vm9412, %v9375
      %vm9414 = vcmask 64516
      %9415 = vst.msk [vmem:[%s305 + $0x1c] sm:$0xf0] %vm9414, %v9375
      %9416 = vst.msk [vmem:[%s305 + $0x24] sm:$0xff] %vm5105, %v9376
      %9417 = vst.msk [vmem:[%s305 + $0x2c] sm:$0xf] %vm5150, %v9377
      %vm9418 = vcmask 64518
      %9419 = vst.msk [vmem:[%s305 + $0x2a] sm:$0xc0] %vm9418, %v9377
      %9420 = vst.msk [vmem:[%s305 + $0x32] sm:$0xff] %vm5105, %v9378
      %vm9421 = vcmask 62464
      %9422 = vst.msk [vmem:[%s305 + $0x3a] sm:$0x3f] %vm9421, %v9379
      %9423 = vst.msk [vmem:[%s305 + $0x40] sm:$0xff] %vm5105, %v9380
      %9424 = vst.msk [vmem:[%s305 + $0x48] sm:$0xff] %vm5105, %v9381
      %9425 = vst.msk [vmem:[%s305 + $0x4e] sm:$0xfc] %vm9409, %v9382
      %9426 = vst.msk [vmem:[%s305 + $0x56] sm:$0xff] %vm5105, %v9383
      %9427 = vst.msk [vmem:[%s305 + $0x5e] sm:$0x3] %vm9412, %v9384
      %9428 = vst.msk [vmem:[%s305 + $0x5c] sm:$0xf0] %vm9414, %v9384
      %9429 = vst.msk [vmem:[%s305 + $0x64] sm:$0xff] %vm5105, %v9385
      %9430 = vst.msk [vmem:[%s305 + $0x6c] sm:$0xf] %vm5150, %v9386
      %9431 = vst.msk [vmem:[%s305 + $0x6a] sm:$0xc0] %vm9418, %v9386
      %9432 = vst.msk [vmem:[%s305 + $0x72] sm:$0xff] %vm5105, %v9387
      %9433 = vst.msk [vmem:[%s305 + $0x7a] sm:$0x3f] %vm9421, %v9388
      %9434 = vst.msk [vmem:[%s305 + $0x80] sm:$0xff] %vm5105, %v9389
      %9435 = vst.msk [vmem:[%s305 + $0x88] sm:$0xff] %vm5105, %v9390
      %9436 = vst.msk [vmem:[%s305 + $0x8e] sm:$0xfc] %vm9409, %v9391
      %9437 = vst.msk [vmem:[%s305 + $0x96] sm:$0xff] %vm5105, %v9392
      %9438 = vst.msk [vmem:[%s305 + $0x9e] sm:$0x3] %vm9412, %v9393
      %9439 = vst.msk [vmem:[%s305 + $0x9c] sm:$0xf0] %vm9414, %v9393
      %9440 = vst.msk [vmem:[%s305 + $0xa4] sm:$0xff] %vm5105, %v9394
      %9441 = vst.msk [vmem:[%s305 + $0xac] sm:$0xf] %vm5150, %v9395
      %9442 = vst.msk [vmem:[%s305 + $0xaa] sm:$0xc0] %vm9418, %v9395
      %9443 = vst.msk [vmem:[%s305 + $0xb2] sm:$0xff] %vm5105, %v9396
      %9444 = vst.msk [vmem:[%s305 + $0xba] sm:$0x3f] %vm9421, %v9397
      %9445 = vst.msk [vmem:[%s305 + $0xc0] sm:$0xff] %vm5105, %v9398
      %9446 = vst.msk [vmem:[%s305 + $0xc8] sm:$0xff] %vm5105, %v9399
      %9447 = vst.msk [vmem:[%s305 + $0xce] sm:$0xfc] %vm9409, %v9400
      %9448 = vst.msk [vmem:[%s305 + $0xd6] sm:$0xff] %vm5105, %v9401
      %9449 = vst.msk [vmem:[%s305 + $0xde] sm:$0x3] %vm9412, %v9402
      %9450 = vst.msk [vmem:[%s305 + $0xdc] sm:$0xf0] %vm9414, %v9402
      %9451 = vst.msk [vmem:[%s305 + $0xe4] sm:$0xff] %vm5105, %v9403
      %9452 = vst.msk [vmem:[%s305 + $0xec] sm:$0xf] %vm5150, %v9404
      %9453 = vst.msk [vmem:[%s305 + $0xea] sm:$0xc0] %vm9418, %v9404
      %9454 = vst.msk [vmem:[%s305 + $0xf2] sm:$0xff] %vm5105, %v9405
      %9455 = vst.msk [vmem:[%s305 + $0xfa] sm:$0x3f] %vm9421, %v9406
      %p9456 = scmp.lt.s32.totalorder %s19, 1
      %s9457 = scalar_select %p9456, %s19, 1
      %s9458 = smul.addr %s9457, 32
      %s9459 = smul.addr %s9458, 8
      %s9460 = scalar_lea.vmem %s8, %s9459
      // Predicated region
      $region53: #{tpu_custom_call.1} parent=51 // pred_check
        %p9461 = pneg %p210
      $region54: #{tpu_custom_call.1} parent=51 // pred_check_branch
        %9463 = sbr.rel (%p9461) target = $region56
      $region55: #{tpu_custom_call.1} parent=51 // pred_region
        _
      $region56: #{tpu_custom_call.1} parent=51 // pred_fallthru
        _
    $region52: #{tpu_custom_call.1} parent=5 // pred_fallthru
      _
    %p9464 = scmp.le.s32.totalorder 2, %s14
    // Predicated region
    $region57: #{tpu_custom_call.1} parent=5 // pred_check
      %p9465 = pneg %p9464
    $region58: #{tpu_custom_call.1} parent=5 // pred_check_branch
      %9467 = sbr.rel (%p9465) target = $region60
    $region59: #{tpu_custom_call.1} parent=5 // pred_region
      %s9468 = ssub.s32 %s14, 2
      // Predicated region
      $region61: #{tpu_custom_call.1} parent=59 // pred_check
        %p9469 = pneg %p216
      $region62: #{tpu_custom_call.1} parent=59 // pred_check_branch
        %9471 = sbr.rel (%p9469) target = $region64
      $region63: #{tpu_custom_call.1} parent=59 // pred_region
        %p9472 = scmp.lt.s32.totalorder %s20, 1
        %s9473 = scalar_select %p9472, %s20, 1
        %s9474 = smul.addr %s9473, 32
        %s9475 = smul.addr %s9474, 8
        %s9476 = scalar_lea.vmem %s8, %s9475
      $region64: #{tpu_custom_call.1} parent=59 // pred_fallthru
        _
    $region60: #{tpu_custom_call.1} parent=5 // pred_fallthru
      _
  $region6: #{tpu_custom_call.1} parent=0 // loop_footer
    %s18 = sadd.s32 1, %s14
  $region7: #{tpu_custom_call.1} parent=0 // loop_footer_branch
    %13 = sbr.rel target = $region3
  $region8: #{tpu_custom_call.1} parent=0 // loop_exit
    _

</llo_original>
